<compile_context>
chip_gen: v6e
topology: v6e:2x2x1
jax: 0.10.0
libtpu: 0.0.40
codegen_flags: <defaults>
</compile_context>

<pallas_src>
import functools

import jax
import jax.numpy as jnp
from jax.experimental import pallas as pl
from jax.experimental.pallas import tpu as pltpu

DROPOUT_P = 0.2
VMEM_LIMIT = 32 * 1024 * 1024  # safe on v5e/v6e/v7x


def _round_up(x, m):
    return (x + m - 1) // m * m


def _pad_k(k):
    """Pad contraction dim to a multiple of 128 (and of 512 when K-tiled)."""
    kp = _round_up(k, 128)
    if kp > 2048:
        kp = _round_up(kp, 512)
    return kp


# ---------------------------------------------------------------------------
# Pallas kernels
# ---------------------------------------------------------------------------
def _fused_matmul_kernel(x_ref, w_ref, b_ref, o_ref, acc_ref, *, apply_relu):
    """out_tile = [relu]( sum_k x_tile @ w_tile + bias ) with f32 accumulator."""
    @pl.when(pl.program_id(1) == 0)
    def _():
        acc_ref[...] = jnp.zeros_like(acc_ref)

    acc_ref[...] += jnp.dot(x_ref[...], w_ref[...],
                            preferred_element_type=jnp.float32)

    @pl.when(pl.program_id(1) == pl.num_programs(1) - 1)
    def _():
        y = acc_ref[...] + b_ref[...]
        if apply_relu:
            y = jnp.maximum(y, 0.0)
        o_ref[...] = y.astype(o_ref.dtype)


def fused_matmul(x, w, b, *, apply_relu, out_dtype):
    """x:[M,K] @ w:[K_pad,Co] (bf16, zero-padded rows) + b:[1,Co] (f32).

    Grid: (M tiles 'parallel', K tiles 'arbitrary'); bf16 MXU operands,
    f32 epilogue, lane-dense Co output.
    """
    M, K = x.shape
    K_pad, Co = w.shape

    x = x.astype(jnp.bfloat16)
    if K_pad != K:  # padded weight rows are zero, so zero-padding x is exact
        x = jnp.pad(x, ((0, 0), (0, K_pad - K)))

    tm = 256 if M >= 256 else _round_up(M, 8)
    m_pad = _round_up(M, tm)
    if m_pad != M:
        x = jnp.pad(x, ((0, m_pad - M), (0, 0)))

    tk = K_pad if K_pad <= 2048 else 512
    assert K_pad % tk == 0
    grid = (m_pad // tm, K_pad // tk)

    flops = 2 * m_pad * K_pad * Co
    bytes_accessed = (x.size * x.dtype.itemsize + w.size * w.dtype.itemsize
                      + b.size * 4 + m_pad * Co * jnp.dtype(out_dtype).itemsize)

    out = pl.pallas_call(
        functools.partial(_fused_matmul_kernel, apply_relu=apply_relu),
        out_shape=jax.ShapeDtypeStruct((m_pad, Co), out_dtype),
        grid_spec=pltpu.PrefetchScalarGridSpec(
            num_scalar_prefetch=0,
            grid=grid,
            in_specs=[
                pl.BlockSpec((tm, tk), lambda i, k: (i, k)),
                pl.BlockSpec((tk, Co), lambda i, k: (k, 0)),
                pl.BlockSpec((1, Co), lambda i, k: (0, 0)),
            ],
            out_specs=pl.BlockSpec((tm, Co), lambda i, k: (i, 0)),
            scratch_shapes=[pltpu.VMEM((tm, Co), jnp.float32)],
        ),
        compiler_params=pltpu.CompilerParams(
            dimension_semantics=("parallel", "arbitrary"),
            vmem_limit_bytes=VMEM_LIMIT),
        cost_estimate=pl.CostEstimate(flops=flops, transcendentals=0,
                                      bytes_accessed=bytes_accessed),
    )(x, w, b)
    return out[:M] if m_pad != M else out


def _maxpool_dropout_kernel(a_ref, b_ref, c_ref, d_ref, u_ref, o_ref, *, rate):
    """max over the four 2x2-window taps + inverted dropout (keep prob 1-p)."""
    m = jnp.maximum(jnp.maximum(a_ref[...], b_ref[...]),
                    jnp.maximum(c_ref[...], d_ref[...])).astype(jnp.float32)
    keep = u_ref[...] >= rate
    o_ref[...] = jnp.where(keep, m * (1.0 / (1.0 - rate)),
                           0.0).astype(o_ref.dtype)


def maxpool2x2_dropout(x, rate, key):
    """MaxPool2d(2,2) + Dropout(p) fused into one elementwise Pallas kernel.

    The four window taps are strided views (cheap XLA slices); max, mask and
    1/(1-p) scaling run on the VPU inside the kernel.  Random bits come from
    jax.random (TPU hardware PRNG is unavailable in interpret mode).
    # TODO(synk): dropout RNG stream differs from PyTorch's; semantics match.
    """
    N, H, W, C = x.shape
    Ho, Wo = H // 2, W // 2
    M = N * Ho * Wo
    views = [x[:, dy::2, dx::2, :].reshape(M, C)
             for dy in (0, 1) for dx in (0, 1)]
    u = jax.random.uniform(key, (M, C), dtype=jnp.float32)

    tm = min(512, _round_up(M, 8))
    m_pad = _round_up(M, tm)
    if m_pad != M:
        views = [jnp.pad(v, ((0, m_pad - M), (0, 0))) for v in views]
        u = jnp.pad(u, ((0, m_pad - M), (0, 0)), constant_values=1.0)

    out = pl.pallas_call(
        functools.partial(_maxpool_dropout_kernel, rate=rate),
        out_shape=jax.ShapeDtypeStruct((m_pad, C), x.dtype),
        grid_spec=pltpu.PrefetchScalarGridSpec(
            num_scalar_prefetch=0,
            grid=(m_pad // tm,),
            in_specs=[pl.BlockSpec((tm, C), lambda i: (i, 0))] * 5,
            out_specs=pl.BlockSpec((tm, C), lambda i: (i, 0)),
        ),
        compiler_params=pltpu.CompilerParams(
            dimension_semantics=("parallel",),
            vmem_limit_bytes=VMEM_LIMIT),
    )(*views, u)
    out = out[:M] if m_pad != M else out
    return out.reshape(N, Ho, Wo, C)


# ---------------------------------------------------------------------------
# Glue: im2col patch extraction + layer composition
# ---------------------------------------------------------------------------
def _im2col(x, kh, kw, stride, pad):
    """NHWC -> im2col patches [N*Ho*Wo, kh*kw*C] (tap order dy, dx, ci).

    # TODO(synk): at large batch/resolution replace the HBM-materialized
    # im2col with an in-kernel halo conv (per-tap matmuls accumulated in
    # VMEM); at these toy shapes the XLA slicing cost is negligible.
    """
    N, H, W, C = x.shape
    xp = jnp.pad(x, ((0, 0), (pad, pad), (pad, pad), (0, 0)))
    Ho = (H + 2 * pad - kh) // stride + 1
    Wo = (W + 2 * pad - kw) // stride + 1
    cols = []
    for dy in range(kh):
        for dx in range(kw):
            cols.append(xp[:, dy:dy + stride * Ho:stride,
                           dx:dx + stride * Wo:stride, :])
    patches = jnp.concatenate(cols, axis=-1)
    return patches.reshape(N * Ho * Wo, kh * kw * C), N, Ho, Wo


def conv2d_relu(x, p, *, kh, kw, stride, pad, apply_relu=True):
    patches, N, Ho, Wo = _im2col(x, kh, kw, stride, pad)
    co = p['w'].shape[1]
    out = fused_matmul(patches, p['w'], p['b'],
                       apply_relu=apply_relu, out_dtype=jnp.bfloat16)
    return out.reshape(N, Ho, Wo, co)


def net_forward(params, x_nchw, dropout_key):
    k1, k2 = jax.random.split(dropout_key)
    x = jnp.transpose(x_nchw, (0, 2, 3, 1)).astype(jnp.bfloat16)   # NCHW->NHWC

    x = conv2d_relu(x, params['conv1'], kh=7, kw=7, stride=2, pad=3)   # 32->16
    x = conv2d_relu(x, params['conv2'], kh=3, kw=3, stride=1, pad=1)
    x = maxpool2x2_dropout(x, DROPOUT_P, k1)                           # 16->8
    x = conv2d_relu(x, params['conv3'], kh=3, kw=3, stride=1, pad=1)
    x = conv2d_relu(x, params['conv4'], kh=3, kw=3, stride=1, pad=1)
    x = maxpool2x2_dropout(x, DROPOUT_P, k2)                           # 8->4

    # nn.Flatten flattens in NCHW order.
    N, H, W, C = x.shape
    flat = jnp.transpose(x, (0, 3, 1, 2)).reshape(N, C * H * W)

    h = fused_matmul(flat, params['fc1']['w'], params['fc1']['b'],
                     apply_relu=True, out_dtype=jnp.bfloat16)
    logits = fused_matmul(h, params['fc2']['w'], params['fc2']['b'],
                          apply_relu=False, out_dtype=jnp.float32)
    return logits


# ---------------------------------------------------------------------------
# Deterministic synthetic parameter initialization (matmul-ready layout:
# bf16 weights flattened to [K_pad, Co] with zero-padded K rows, f32 bias).
# ---------------------------------------------------------------------------
def init_conv(key, kh, kw, cin, cout):
    wk, bk = jax.random.split(key)
    fan_in = kh * kw * cin
    w = jax.random.normal(wk, (kh, kw, cin, cout), jnp.float32) * (2.0 / fan_in) ** 0.5
    b = jax.random.normal(bk, (cout,), jnp.float32) * 0.01
    k = kh * kw * cin
    kp = _pad_k(k)
    w_mat = jnp.pad(w.reshape(k, cout), ((0, kp - k), (0, 0))).astype(jnp.bfloat16)
    return {'w': w_mat, 'b': b.reshape(1, cout)}


def init_fc(key, din, dout):
    wk, bk = jax.random.split(key)
    w = jax.random.normal(wk, (din, dout), jnp.float32) * (1.0 / din) ** 0.5
    b = jax.random.normal(bk, (dout,), jnp.float32) * 0.01
    kp = _pad_k(din)
    w_mat = jnp.pad(w, ((0, kp - din), (0, 0))).astype(jnp.bfloat16)
    return {'w': w_mat, 'b': b.reshape(1, dout)}


def init_net(key, num_classes=10):
    ks = jax.random.split(key, 6)
    return {
        'conv1': init_conv(ks[0], 7, 7, 3, 32),
        'conv2': init_conv(ks[1], 3, 3, 32, 64),
        'conv3': init_conv(ks[2], 3, 3, 64, 128),
        'conv4': init_conv(ks[3], 3, 3, 128, 256),
        'fc1': init_fc(ks[4], 256 * 4 * 4, 128),
        'fc2': init_fc(ks[5], 128, num_classes),
    }


if __name__ == "__main__":
    key = jax.random.PRNGKey(0)
    pkey, xkey, dkey = jax.random.split(key, 3)
    params = init_net(pkey, num_classes=10)
    # The Linear(256*4*4, 128) fixes the spatial size at 32x32 (3 channels).
    x = jax.random.normal(xkey, (2, 3, 32, 32), jnp.float32)   # NCHW like PyTorch
    fwd = jax.jit(net_forward)
    out = fwd(params, x, dkey)
    jax.block_until_ready(out)
    assert out.shape == (2, 10) and out.dtype == jnp.float32
    print("KERNEL_OK")
</pallas_src>

<mosaic_0001>
module attributes {stable_mosaic.version = 11 : i64} {
  func.func @_fused_matmul_kernel(%arg0: i32, %arg1: i32, %arg2: memref<256x256xbf16, #tpu.memory_space<vmem>>, %arg3: memref<256x32xbf16, #tpu.memory_space<vmem>>, %arg4: memref<1x32xf32, #tpu.memory_space<vmem>>, %arg5: memref<256x32xbf16, #tpu.memory_space<vmem>>, %arg6: memref<256x32xf32, #tpu.memory_space<vmem>>) attributes {dimension_semantics = [#tpu.dimension_semantics<parallel>, #tpu.dimension_semantics<arbitrary>], iteration_bounds = array<i64: 2, 1>, scalar_prefetch = 0 : i64, scratch_operands = 1 : i64, tpu.core_type = #tpu.core_type<tc>, window_params = [{transform_indices = @transform_0, window_bounds = array<i64: 256, 256>}, {transform_indices = @transform_1, window_bounds = array<i64: 256, 32>}, {pipeline_mode = #tpu.pipeline_mode<synchronous>, transform_indices = @transform_2, window_bounds = array<i64: 1, 32>}, {transform_indices = @transform_3, window_bounds = array<i64: 256, 32>}]} {
    %c0_i32 = arith.constant 0 : i32
    %0 = arith.cmpi eq, %arg1, %c0_i32 : i32
    %1 = arith.extui %0 : i1 to i32
    %c0_i32_0 = arith.constant 0 : i32
    %2 = arith.cmpi ne, %1, %c0_i32_0 : i32
    scf.if %2 {
      %cst_10 = arith.constant 0.000000e+00 : f32
      %12 = vector.broadcast %cst_10 : f32 to vector<256x32xf32>
      %c0_11 = arith.constant 0 : index
      %c0_12 = arith.constant 0 : index
      %13 = vector.load %arg6[%c0_11, %c0_12] : memref<256x32xf32, #tpu.memory_space<vmem>>, vector<256x32xf32>
      tpu.vector_store %arg6[%c0_11, %c0_12], %12 {strides = array<i32>} : memref<256x32xf32, #tpu.memory_space<vmem>>, vector<256x32xf32>,
    } else {
    }
    %c0 = arith.constant 0 : index
    %c0_1 = arith.constant 0 : index
    %3 = vector.load %arg6[%c0, %c0_1] : memref<256x32xf32, #tpu.memory_space<vmem>>, vector<256x32xf32>
    %c0_2 = arith.constant 0 : index
    %c0_3 = arith.constant 0 : index
    %4 = vector.load %arg2[%c0_2, %c0_3] : memref<256x256xbf16, #tpu.memory_space<vmem>>, vector<256x256xbf16>
    %c0_4 = arith.constant 0 : index
    %c0_5 = arith.constant 0 : index
    %5 = vector.load %arg3[%c0_4, %c0_5] : memref<256x32xbf16, #tpu.memory_space<vmem>>, vector<256x32xbf16>
    %cst = arith.constant dense<0.000000e+00> : vector<256x32xf32>
    %6 = tpu.matmul %4, %5, %cst {dimension_numbers = #tpu.dot_dimension_numbers<[1], [0], [0], [1], [0, 0, 1, 1], [], []>} : vector<256x256xbf16>, vector<256x32xbf16>, vector<256x32xf32> -> vector<256x32xf32>
    %7 = arith.addf %3, %6 : vector<256x32xf32>
    %c0_6 = arith.constant 0 : index
    %c0_7 = arith.constant 0 : index
    %8 = vector.load %arg6[%c0_6, %c0_7] : memref<256x32xf32, #tpu.memory_space<vmem>>, vector<256x32xf32>
    tpu.vector_store %arg6[%c0_6, %c0_7], %7 {strides = array<i32>} : memref<256x32xf32, #tpu.memory_space<vmem>>, vector<256x32xf32>,
    %c0_i32_8 = arith.constant 0 : i32
    %9 = arith.cmpi eq, %arg1, %c0_i32_8 : i32
    %10 = arith.extui %9 : i1 to i32
    %c0_i32_9 = arith.constant 0 : i32
    %11 = arith.cmpi ne, %10, %c0_i32_9 : i32
    scf.if %11 {
      %c0_10 = arith.constant 0 : index
      %c0_11 = arith.constant 0 : index
      %12 = vector.load %arg6[%c0_10, %c0_11] : memref<256x32xf32, #tpu.memory_space<vmem>>, vector<256x32xf32>
      %c0_12 = arith.constant 0 : index
      %c0_13 = arith.constant 0 : index
      %13 = vector.load %arg4[%c0_12, %c0_13] : memref<1x32xf32, #tpu.memory_space<vmem>>, vector<1x32xf32>
      %14 = vector.broadcast %13 : vector<1x32xf32> to vector<256x32xf32>
      %15 = arith.addf %12, %14 : vector<256x32xf32>
      %cst_14 = arith.constant 0.000000e+00 : f32
      %16 = vector.broadcast %cst_14 : f32 to vector<256x32xf32>
      %17 = arith.maximumf %15, %16 : vector<256x32xf32>
      %18 = arith.truncf %17 : vector<256x32xf32> to vector<256x32xbf16>
      %c0_15 = arith.constant 0 : index
      %c0_16 = arith.constant 0 : index
      %19 = vector.load %arg5[%c0_15, %c0_16] : memref<256x32xbf16, #tpu.memory_space<vmem>>, vector<256x32xbf16>
      tpu.vector_store %arg5[%c0_15, %c0_16], %18 {strides = array<i32>} : memref<256x32xbf16, #tpu.memory_space<vmem>>, vector<256x32xbf16>,
    } else {
    }
    return
  }
  func.func @transform_0(%arg0: i32, %arg1: i32) -> (i32, i32) {
    %c0_i32 = arith.constant 0 : i32
    return %arg0, %arg1 : i32, i32
  }
  func.func @transform_1(%arg0: i32, %arg1: i32) -> (i32, i32) {
    %c0_i32 = arith.constant 0 : i32
    %c0_i32_0 = arith.constant 0 : i32
    return %arg1, %c0_i32 : i32, i32
  }
  func.func @transform_2(%arg0: i32, %arg1: i32) -> (i32, i32) {
    %c0_i32 = arith.constant 0 : i32
    %c0_i32_0 = arith.constant 0 : i32
    %c0_i32_1 = arith.constant 0 : i32
    return %c0_i32, %c0_i32_0 : i32, i32
  }
  func.func @transform_3(%arg0: i32, %arg1: i32) -> (i32, i32) {
    %c0_i32 = arith.constant 0 : i32
    %c0_i32_0 = arith.constant 0 : i32
    return %arg0, %c0_i32 : i32, i32
  }
}

module attributes {stable_mosaic.version = 11 : i64} {
  func.func @_fused_matmul_kernel(%arg0: i32, %arg1: i32, %arg2: memref<256x384xbf16, #tpu.memory_space<vmem>>, %arg3: memref<384x64xbf16, #tpu.memory_space<vmem>>, %arg4: memref<1x64xf32, #tpu.memory_space<vmem>>, %arg5: memref<256x64xbf16, #tpu.memory_space<vmem>>, %arg6: memref<256x64xf32, #tpu.memory_space<vmem>>) attributes {dimension_semantics = [#tpu.dimension_semantics<parallel>, #tpu.dimension_semantics<arbitrary>], iteration_bounds = array<i64: 2, 1>, scalar_prefetch = 0 : i64, scratch_operands = 1 : i64, tpu.core_type = #tpu.core_type<tc>, window_params = [{transform_indices = @transform_0, window_bounds = array<i64: 256, 384>}, {transform_indices = @transform_1, window_bounds = array<i64: 384, 64>}, {pipeline_mode = #tpu.pipeline_mode<synchronous>, transform_indices = @transform_2, window_bounds = array<i64: 1, 64>}, {transform_indices = @transform_3, window_bounds = array<i64: 256, 64>}]} {
    %c0_i32 = arith.constant 0 : i32
    %0 = arith.cmpi eq, %arg1, %c0_i32 : i32
    %1 = arith.extui %0 : i1 to i32
    %c0_i32_0 = arith.constant 0 : i32
    %2 = arith.cmpi ne, %1, %c0_i32_0 : i32
    scf.if %2 {
      %cst_10 = arith.constant 0.000000e+00 : f32
      %12 = vector.broadcast %cst_10 : f32 to vector<256x64xf32>
      %c0_11 = arith.constant 0 : index
      %c0_12 = arith.constant 0 : index
      %13 = vector.load %arg6[%c0_11, %c0_12] : memref<256x64xf32, #tpu.memory_space<vmem>>, vector<256x64xf32>
      tpu.vector_store %arg6[%c0_11, %c0_12], %12 {strides = array<i32>} : memref<256x64xf32, #tpu.memory_space<vmem>>, vector<256x64xf32>,
    } else {
    }
    %c0 = arith.constant 0 : index
    %c0_1 = arith.constant 0 : index
    %3 = vector.load %arg6[%c0, %c0_1] : memref<256x64xf32, #tpu.memory_space<vmem>>, vector<256x64xf32>
    %c0_2 = arith.constant 0 : index
    %c0_3 = arith.constant 0 : index
    %4 = vector.load %arg2[%c0_2, %c0_3] : memref<256x384xbf16, #tpu.memory_space<vmem>>, vector<256x384xbf16>
    %c0_4 = arith.constant 0 : index
    %c0_5 = arith.constant 0 : index
    %5 = vector.load %arg3[%c0_4, %c0_5] : memref<384x64xbf16, #tpu.memory_space<vmem>>, vector<384x64xbf16>
    %cst = arith.constant dense<0.000000e+00> : vector<256x64xf32>
    %6 = tpu.matmul %4, %5, %cst {dimension_numbers = #tpu.dot_dimension_numbers<[1], [0], [0], [1], [0, 0, 1, 1], [], []>} : vector<256x384xbf16>, vector<384x64xbf16>, vector<256x64xf32> -> vector<256x64xf32>
    %7 = arith.addf %3, %6 : vector<256x64xf32>
    %c0_6 = arith.constant 0 : index
    %c0_7 = arith.constant 0 : index
    %8 = vector.load %arg6[%c0_6, %c0_7] : memref<256x64xf32, #tpu.memory_space<vmem>>, vector<256x64xf32>
    tpu.vector_store %arg6[%c0_6, %c0_7], %7 {strides = array<i32>} : memref<256x64xf32, #tpu.memory_space<vmem>>, vector<256x64xf32>,
    %c0_i32_8 = arith.constant 0 : i32
    %9 = arith.cmpi eq, %arg1, %c0_i32_8 : i32
    %10 = arith.extui %9 : i1 to i32
    %c0_i32_9 = arith.constant 0 : i32
    %11 = arith.cmpi ne, %10, %c0_i32_9 : i32
    scf.if %11 {
      %c0_10 = arith.constant 0 : index
      %c0_11 = arith.constant 0 : index
      %12 = vector.load %arg6[%c0_10, %c0_11] : memref<256x64xf32, #tpu.memory_space<vmem>>, vector<256x64xf32>
      %c0_12 = arith.constant 0 : index
      %c0_13 = arith.constant 0 : index
      %13 = vector.load %arg4[%c0_12, %c0_13] : memref<1x64xf32, #tpu.memory_space<vmem>>, vector<1x64xf32>
      %14 = vector.broadcast %13 : vector<1x64xf32> to vector<256x64xf32>
      %15 = arith.addf %12, %14 : vector<256x64xf32>
      %cst_14 = arith.constant 0.000000e+00 : f32
      %16 = vector.broadcast %cst_14 : f32 to vector<256x64xf32>
      %17 = arith.maximumf %15, %16 : vector<256x64xf32>
      %18 = arith.truncf %17 : vector<256x64xf32> to vector<256x64xbf16>
      %c0_15 = arith.constant 0 : index
      %c0_16 = arith.constant 0 : index
      %19 = vector.load %arg5[%c0_15, %c0_16] : memref<256x64xbf16, #tpu.memory_space<vmem>>, vector<256x64xbf16>
      tpu.vector_store %arg5[%c0_15, %c0_16], %18 {strides = array<i32>} : memref<256x64xbf16, #tpu.memory_space<vmem>>, vector<256x64xbf16>,
    } else {
    }
    return
  }
  func.func @transform_0(%arg0: i32, %arg1: i32) -> (i32, i32) {
    %c0_i32 = arith.constant 0 : i32
    return %arg0, %arg1 : i32, i32
  }
  func.func @transform_1(%arg0: i32, %arg1: i32) -> (i32, i32) {
    %c0_i32 = arith.constant 0 : i32
    %c0_i32_0 = arith.constant 0 : i32
    return %arg1, %c0_i32 : i32, i32
  }
  func.func @transform_2(%arg0: i32, %arg1: i32) -> (i32, i32) {
    %c0_i32 = arith.constant 0 : i32
    %c0_i32_0 = arith.constant 0 : i32
    %c0_i32_1 = arith.constant 0 : i32
    return %c0_i32, %c0_i32_0 : i32, i32
  }
  func.func @transform_3(%arg0: i32, %arg1: i32) -> (i32, i32) {
    %c0_i32 = arith.constant 0 : i32
    %c0_i32_0 = arith.constant 0 : i32
    return %arg0, %c0_i32 : i32, i32
  }
}

module attributes {stable_mosaic.version = 11 : i64} {
  func.func @_maxpool_dropout_kernel(%arg0: i32, %arg1: memref<128x64xbf16, #tpu.memory_space<vmem>>, %arg2: memref<128x64xbf16, #tpu.memory_space<vmem>>, %arg3: memref<128x64xbf16, #tpu.memory_space<vmem>>, %arg4: memref<128x64xbf16, #tpu.memory_space<vmem>>, %arg5: memref<128x64xf32, #tpu.memory_space<vmem>>, %arg6: memref<128x64xbf16, #tpu.memory_space<vmem>>) attributes {dimension_semantics = [#tpu.dimension_semantics<parallel>], iteration_bounds = array<i64: 1>, scalar_prefetch = 0 : i64, scratch_operands = 0 : i64, tpu.core_type = #tpu.core_type<tc>, window_params = [{transform_indices = @transform_0, window_bounds = array<i64: 128, 64>}, {transform_indices = @transform_1, window_bounds = array<i64: 128, 64>}, {transform_indices = @transform_2, window_bounds = array<i64: 128, 64>}, {transform_indices = @transform_3, window_bounds = array<i64: 128, 64>}, {transform_indices = @transform_4, window_bounds = array<i64: 128, 64>}, {transform_indices = @transform_5, window_bounds = array<i64: 128, 64>}]} {
    %c0 = arith.constant 0 : index
    %c0_0 = arith.constant 0 : index
    %0 = vector.load %arg1[%c0, %c0_0] : memref<128x64xbf16, #tpu.memory_space<vmem>>, vector<128x64xbf16>
    %c0_1 = arith.constant 0 : index
    %c0_2 = arith.constant 0 : index
    %1 = vector.load %arg2[%c0_1, %c0_2] : memref<128x64xbf16, #tpu.memory_space<vmem>>, vector<128x64xbf16>
    %2 = arith.maximumf %0, %1 : vector<128x64xbf16>
    %c0_3 = arith.constant 0 : index
    %c0_4 = arith.constant 0 : index
    %3 = vector.load %arg3[%c0_3, %c0_4] : memref<128x64xbf16, #tpu.memory_space<vmem>>, vector<128x64xbf16>
    %c0_5 = arith.constant 0 : index
    %c0_6 = arith.constant 0 : index
    %4 = vector.load %arg4[%c0_5, %c0_6] : memref<128x64xbf16, #tpu.memory_space<vmem>>, vector<128x64xbf16>
    %5 = arith.maximumf %3, %4 : vector<128x64xbf16>
    %6 = arith.maximumf %2, %5 : vector<128x64xbf16>
    %7 = arith.extf %6 : vector<128x64xbf16> to vector<128x64xf32>
    %c0_7 = arith.constant 0 : index
    %c0_8 = arith.constant 0 : index
    %8 = vector.load %arg5[%c0_7, %c0_8] : memref<128x64xf32, #tpu.memory_space<vmem>>, vector<128x64xf32>
    %cst = arith.constant 2.000000e-01 : f32
    %9 = vector.broadcast %cst : f32 to vector<128x64xf32>
    %10 = arith.cmpf oge, %8, %9 : vector<128x64xf32>
    %cst_9 = arith.constant 1.250000e+00 : f32
    %11 = vector.broadcast %cst_9 : f32 to vector<128x64xf32>
    %12 = arith.mulf %7, %11 : vector<128x64xf32>
    %cst_10 = arith.constant 0.000000e+00 : f32
    %13 = vector.broadcast %cst_10 : f32 to vector<128x64xf32>
    %14 = arith.select %10, %12, %13 : vector<128x64xi1>, vector<128x64xf32>
    %15 = arith.truncf %14 : vector<128x64xf32> to vector<128x64xbf16>
    %c0_11 = arith.constant 0 : index
    %c0_12 = arith.constant 0 : index
    %16 = vector.load %arg6[%c0_11, %c0_12] : memref<128x64xbf16, #tpu.memory_space<vmem>>, vector<128x64xbf16>
    tpu.vector_store %arg6[%c0_11, %c0_12], %15 {strides = array<i32>} : memref<128x64xbf16, #tpu.memory_space<vmem>>, vector<128x64xbf16>,
    return
  }
  func.func @transform_0(%arg0: i32) -> (i32, i32) {
    %c0_i32 = arith.constant 0 : i32
    %c0_i32_0 = arith.constant 0 : i32
    return %arg0, %c0_i32 : i32, i32
  }
  func.func @transform_1(%arg0: i32) -> (i32, i32) {
    %c0_i32 = arith.constant 0 : i32
    %c0_i32_0 = arith.constant 0 : i32
    return %arg0, %c0_i32 : i32, i32
  }
  func.func @transform_2(%arg0: i32) -> (i32, i32) {
    %c0_i32 = arith.constant 0 : i32
    %c0_i32_0 = arith.constant 0 : i32
    return %arg0, %c0_i32 : i32, i32
  }
  func.func @transform_3(%arg0: i32) -> (i32, i32) {
    %c0_i32 = arith.constant 0 : i32
    %c0_i32_0 = arith.constant 0 : i32
    return %arg0, %c0_i32 : i32, i32
  }
  func.func @transform_4(%arg0: i32) -> (i32, i32) {
    %c0_i32 = arith.constant 0 : i32
    %c0_i32_0 = arith.constant 0 : i32
    return %arg0, %c0_i32 : i32, i32
  }
  func.func @transform_5(%arg0: i32) -> (i32, i32) {
    %c0_i32 = arith.constant 0 : i32
    %c0_i32_0 = arith.constant 0 : i32
    return %arg0, %c0_i32 : i32, i32
  }
}

module attributes {stable_mosaic.version = 11 : i64} {
  func.func @_fused_matmul_kernel(%arg0: i32, %arg1: i32, %arg2: memref<128x640xbf16, #tpu.memory_space<vmem>>, %arg3: memref<640x128xbf16, #tpu.memory_space<vmem>>, %arg4: memref<1x128xf32, #tpu.memory_space<vmem>>, %arg5: memref<128x128xbf16, #tpu.memory_space<vmem>>, %arg6: memref<128x128xf32, #tpu.memory_space<vmem>>) attributes {dimension_semantics = [#tpu.dimension_semantics<parallel>, #tpu.dimension_semantics<arbitrary>], iteration_bounds = array<i64: 1, 1>, scalar_prefetch = 0 : i64, scratch_operands = 1 : i64, tpu.core_type = #tpu.core_type<tc>, window_params = [{transform_indices = @transform_0, window_bounds = array<i64: 128, 640>}, {transform_indices = @transform_1, window_bounds = array<i64: 640, 128>}, {pipeline_mode = #tpu.pipeline_mode<synchronous>, transform_indices = @transform_2, window_bounds = array<i64: 1, 128>}, {transform_indices = @transform_3, window_bounds = array<i64: 128, 128>}]} {
    %c0_i32 = arith.constant 0 : i32
    %0 = arith.cmpi eq, %arg1, %c0_i32 : i32
    %1 = arith.extui %0 : i1 to i32
    %c0_i32_0 = arith.constant 0 : i32
    %2 = arith.cmpi ne, %1, %c0_i32_0 : i32
    scf.if %2 {
      %cst_10 = arith.constant 0.000000e+00 : f32
      %12 = vector.broadcast %cst_10 : f32 to vector<128x128xf32>
      %c0_11 = arith.constant 0 : index
      %c0_12 = arith.constant 0 : index
      %13 = vector.load %arg6[%c0_11, %c0_12] : memref<128x128xf32, #tpu.memory_space<vmem>>, vector<128x128xf32>
      tpu.vector_store %arg6[%c0_11, %c0_12], %12 {strides = array<i32>} : memref<128x128xf32, #tpu.memory_space<vmem>>, vector<128x128xf32>,
    } else {
    }
    %c0 = arith.constant 0 : index
    %c0_1 = arith.constant 0 : index
    %3 = vector.load %arg6[%c0, %c0_1] : memref<128x128xf32, #tpu.memory_space<vmem>>, vector<128x128xf32>
    %c0_2 = arith.constant 0 : index
    %c0_3 = arith.constant 0 : index
    %4 = vector.load %arg2[%c0_2, %c0_3] : memref<128x640xbf16, #tpu.memory_space<vmem>>, vector<128x640xbf16>
    %c0_4 = arith.constant 0 : index
    %c0_5 = arith.constant 0 : index
    %5 = vector.load %arg3[%c0_4, %c0_5] : memref<640x128xbf16, #tpu.memory_space<vmem>>, vector<640x128xbf16>
    %cst = arith.constant dense<0.000000e+00> : vector<128x128xf32>
    %6 = tpu.matmul %4, %5, %cst {dimension_numbers = #tpu.dot_dimension_numbers<[1], [0], [0], [1], [0, 0, 1, 1], [], []>} : vector<128x640xbf16>, vector<640x128xbf16>, vector<128x128xf32> -> vector<128x128xf32>
    %7 = arith.addf %3, %6 : vector<128x128xf32>
    %c0_6 = arith.constant 0 : index
    %c0_7 = arith.constant 0 : index
    %8 = vector.load %arg6[%c0_6, %c0_7] : memref<128x128xf32, #tpu.memory_space<vmem>>, vector<128x128xf32>
    tpu.vector_store %arg6[%c0_6, %c0_7], %7 {strides = array<i32>} : memref<128x128xf32, #tpu.memory_space<vmem>>, vector<128x128xf32>,
    %c0_i32_8 = arith.constant 0 : i32
    %9 = arith.cmpi eq, %arg1, %c0_i32_8 : i32
    %10 = arith.extui %9 : i1 to i32
    %c0_i32_9 = arith.constant 0 : i32
    %11 = arith.cmpi ne, %10, %c0_i32_9 : i32
    scf.if %11 {
      %c0_10 = arith.constant 0 : index
      %c0_11 = arith.constant 0 : index
      %12 = vector.load %arg6[%c0_10, %c0_11] : memref<128x128xf32, #tpu.memory_space<vmem>>, vector<128x128xf32>
      %c0_12 = arith.constant 0 : index
      %c0_13 = arith.constant 0 : index
      %13 = vector.load %arg4[%c0_12, %c0_13] : memref<1x128xf32, #tpu.memory_space<vmem>>, vector<1x128xf32>
      %14 = vector.broadcast %13 : vector<1x128xf32> to vector<128x128xf32>
      %15 = arith.addf %12, %14 : vector<128x128xf32>
      %cst_14 = arith.constant 0.000000e+00 : f32
      %16 = vector.broadcast %cst_14 : f32 to vector<128x128xf32>
      %17 = arith.maximumf %15, %16 : vector<128x128xf32>
      %18 = arith.truncf %17 : vector<128x128xf32> to vector<128x128xbf16>
      %c0_15 = arith.constant 0 : index
      %c0_16 = arith.constant 0 : index
      %19 = vector.load %arg5[%c0_15, %c0_16] : memref<128x128xbf16, #tpu.memory_space<vmem>>, vector<128x128xbf16>
      tpu.vector_store %arg5[%c0_15, %c0_16], %18 {strides = array<i32>} : memref<128x128xbf16, #tpu.memory_space<vmem>>, vector<128x128xbf16>,
    } else {
    }
    return
  }
  func.func @transform_0(%arg0: i32, %arg1: i32) -> (i32, i32) {
    %c0_i32 = arith.constant 0 : i32
    return %arg0, %arg1 : i32, i32
  }
  func.func @transform_1(%arg0: i32, %arg1: i32) -> (i32, i32) {
    %c0_i32 = arith.constant 0 : i32
    %c0_i32_0 = arith.constant 0 : i32
    return %arg1, %c0_i32 : i32, i32
  }
  func.func @transform_2(%arg0: i32, %arg1: i32) -> (i32, i32) {
    %c0_i32 = arith.constant 0 : i32
    %c0_i32_0 = arith.constant 0 : i32
    %c0_i32_1 = arith.constant 0 : i32
    return %c0_i32, %c0_i32_0 : i32, i32
  }
  func.func @transform_3(%arg0: i32, %arg1: i32) -> (i32, i32) {
    %c0_i32 = arith.constant 0 : i32
    %c0_i32_0 = arith.constant 0 : i32
    return %arg0, %c0_i32 : i32, i32
  }
}

module attributes {stable_mosaic.version = 11 : i64} {
  func.func @_fused_matmul_kernel(%arg0: i32, %arg1: i32, %arg2: memref<128x1152xbf16, #tpu.memory_space<vmem>>, %arg3: memref<1152x256xbf16, #tpu.memory_space<vmem>>, %arg4: memref<1x256xf32, #tpu.memory_space<vmem>>, %arg5: memref<128x256xbf16, #tpu.memory_space<vmem>>, %arg6: memref<128x256xf32, #tpu.memory_space<vmem>>) attributes {dimension_semantics = [#tpu.dimension_semantics<parallel>, #tpu.dimension_semantics<arbitrary>], iteration_bounds = array<i64: 1, 1>, scalar_prefetch = 0 : i64, scratch_operands = 1 : i64, tpu.core_type = #tpu.core_type<tc>, window_params = [{transform_indices = @transform_0, window_bounds = array<i64: 128, 1152>}, {transform_indices = @transform_1, window_bounds = array<i64: 1152, 256>}, {pipeline_mode = #tpu.pipeline_mode<synchronous>, transform_indices = @transform_2, window_bounds = array<i64: 1, 256>}, {transform_indices = @transform_3, window_bounds = array<i64: 128, 256>}]} {
    %c0_i32 = arith.constant 0 : i32
    %0 = arith.cmpi eq, %arg1, %c0_i32 : i32
    %1 = arith.extui %0 : i1 to i32
    %c0_i32_0 = arith.constant 0 : i32
    %2 = arith.cmpi ne, %1, %c0_i32_0 : i32
    scf.if %2 {
      %cst_10 = arith.constant 0.000000e+00 : f32
      %12 = vector.broadcast %cst_10 : f32 to vector<128x256xf32>
      %c0_11 = arith.constant 0 : index
      %c0_12 = arith.constant 0 : index
      %13 = vector.load %arg6[%c0_11, %c0_12] : memref<128x256xf32, #tpu.memory_space<vmem>>, vector<128x256xf32>
      tpu.vector_store %arg6[%c0_11, %c0_12], %12 {strides = array<i32>} : memref<128x256xf32, #tpu.memory_space<vmem>>, vector<128x256xf32>,
    } else {
    }
    %c0 = arith.constant 0 : index
    %c0_1 = arith.constant 0 : index
    %3 = vector.load %arg6[%c0, %c0_1] : memref<128x256xf32, #tpu.memory_space<vmem>>, vector<128x256xf32>
    %c0_2 = arith.constant 0 : index
    %c0_3 = arith.constant 0 : index
    %4 = vector.load %arg2[%c0_2, %c0_3] : memref<128x1152xbf16, #tpu.memory_space<vmem>>, vector<128x1152xbf16>
    %c0_4 = arith.constant 0 : index
    %c0_5 = arith.constant 0 : index
    %5 = vector.load %arg3[%c0_4, %c0_5] : memref<1152x256xbf16, #tpu.memory_space<vmem>>, vector<1152x256xbf16>
    %cst = arith.constant dense<0.000000e+00> : vector<128x256xf32>
    %6 = tpu.matmul %4, %5, %cst {dimension_numbers = #tpu.dot_dimension_numbers<[1], [0], [0], [1], [0, 0, 1, 1], [], []>} : vector<128x1152xbf16>, vector<1152x256xbf16>, vector<128x256xf32> -> vector<128x256xf32>
    %7 = arith.addf %3, %6 : vector<128x256xf32>
    %c0_6 = arith.constant 0 : index
    %c0_7 = arith.constant 0 : index
    %8 = vector.load %arg6[%c0_6, %c0_7] : memref<128x256xf32, #tpu.memory_space<vmem>>, vector<128x256xf32>
    tpu.vector_store %arg6[%c0_6, %c0_7], %7 {strides = array<i32>} : memref<128x256xf32, #tpu.memory_space<vmem>>, vector<128x256xf32>,
    %c0_i32_8 = arith.constant 0 : i32
    %9 = arith.cmpi eq, %arg1, %c0_i32_8 : i32
    %10 = arith.extui %9 : i1 to i32
    %c0_i32_9 = arith.constant 0 : i32
    %11 = arith.cmpi ne, %10, %c0_i32_9 : i32
    scf.if %11 {
      %c0_10 = arith.constant 0 : index
      %c0_11 = arith.constant 0 : index
      %12 = vector.load %arg6[%c0_10, %c0_11] : memref<128x256xf32, #tpu.memory_space<vmem>>, vector<128x256xf32>
      %c0_12 = arith.constant 0 : index
      %c0_13 = arith.constant 0 : index
      %13 = vector.load %arg4[%c0_12, %c0_13] : memref<1x256xf32, #tpu.memory_space<vmem>>, vector<1x256xf32>
      %14 = vector.broadcast %13 : vector<1x256xf32> to vector<128x256xf32>
      %15 = arith.addf %12, %14 : vector<128x256xf32>
      %cst_14 = arith.constant 0.000000e+00 : f32
      %16 = vector.broadcast %cst_14 : f32 to vector<128x256xf32>
      %17 = arith.maximumf %15, %16 : vector<128x256xf32>
      %18 = arith.truncf %17 : vector<128x256xf32> to vector<128x256xbf16>
      %c0_15 = arith.constant 0 : index
      %c0_16 = arith.constant 0 : index
      %19 = vector.load %arg5[%c0_15, %c0_16] : memref<128x256xbf16, #tpu.memory_space<vmem>>, vector<128x256xbf16>
      tpu.vector_store %arg5[%c0_15, %c0_16], %18 {strides = array<i32>} : memref<128x256xbf16, #tpu.memory_space<vmem>>, vector<128x256xbf16>,
    } else {
    }
    return
  }
  func.func @transform_0(%arg0: i32, %arg1: i32) -> (i32, i32) {
    %c0_i32 = arith.constant 0 : i32
    return %arg0, %arg1 : i32, i32
  }
  func.func @transform_1(%arg0: i32, %arg1: i32) -> (i32, i32) {
    %c0_i32 = arith.constant 0 : i32
    %c0_i32_0 = arith.constant 0 : i32
    return %arg1, %c0_i32 : i32, i32
  }
  func.func @transform_2(%arg0: i32, %arg1: i32) -> (i32, i32) {
    %c0_i32 = arith.constant 0 : i32
    %c0_i32_0 = arith.constant 0 : i32
    %c0_i32_1 = arith.constant 0 : i32
    return %c0_i32, %c0_i32_0 : i32, i32
  }
  func.func @transform_3(%arg0: i32, %arg1: i32) -> (i32, i32) {
    %c0_i32 = arith.constant 0 : i32
    %c0_i32_0 = arith.constant 0 : i32
    return %arg0, %c0_i32 : i32, i32
  }
}

module attributes {stable_mosaic.version = 11 : i64} {
  func.func @_maxpool_dropout_kernel(%arg0: i32, %arg1: memref<32x256xbf16, #tpu.memory_space<vmem>>, %arg2: memref<32x256xbf16, #tpu.memory_space<vmem>>, %arg3: memref<32x256xbf16, #tpu.memory_space<vmem>>, %arg4: memref<32x256xbf16, #tpu.memory_space<vmem>>, %arg5: memref<32x256xf32, #tpu.memory_space<vmem>>, %arg6: memref<32x256xbf16, #tpu.memory_space<vmem>>) attributes {dimension_semantics = [#tpu.dimension_semantics<parallel>], iteration_bounds = array<i64: 1>, scalar_prefetch = 0 : i64, scratch_operands = 0 : i64, tpu.core_type = #tpu.core_type<tc>, window_params = [{transform_indices = @transform_0, window_bounds = array<i64: 32, 256>}, {transform_indices = @transform_1, window_bounds = array<i64: 32, 256>}, {transform_indices = @transform_2, window_bounds = array<i64: 32, 256>}, {transform_indices = @transform_3, window_bounds = array<i64: 32, 256>}, {transform_indices = @transform_4, window_bounds = array<i64: 32, 256>}, {transform_indices = @transform_5, window_bounds = array<i64: 32, 256>}]} {
    %c0 = arith.constant 0 : index
    %c0_0 = arith.constant 0 : index
    %0 = vector.load %arg1[%c0, %c0_0] : memref<32x256xbf16, #tpu.memory_space<vmem>>, vector<32x256xbf16>
    %c0_1 = arith.constant 0 : index
    %c0_2 = arith.constant 0 : index
    %1 = vector.load %arg2[%c0_1, %c0_2] : memref<32x256xbf16, #tpu.memory_space<vmem>>, vector<32x256xbf16>
    %2 = arith.maximumf %0, %1 : vector<32x256xbf16>
    %c0_3 = arith.constant 0 : index
    %c0_4 = arith.constant 0 : index
    %3 = vector.load %arg3[%c0_3, %c0_4] : memref<32x256xbf16, #tpu.memory_space<vmem>>, vector<32x256xbf16>
    %c0_5 = arith.constant 0 : index
    %c0_6 = arith.constant 0 : index
    %4 = vector.load %arg4[%c0_5, %c0_6] : memref<32x256xbf16, #tpu.memory_space<vmem>>, vector<32x256xbf16>
    %5 = arith.maximumf %3, %4 : vector<32x256xbf16>
    %6 = arith.maximumf %2, %5 : vector<32x256xbf16>
    %7 = arith.extf %6 : vector<32x256xbf16> to vector<32x256xf32>
    %c0_7 = arith.constant 0 : index
    %c0_8 = arith.constant 0 : index
    %8 = vector.load %arg5[%c0_7, %c0_8] : memref<32x256xf32, #tpu.memory_space<vmem>>, vector<32x256xf32>
    %cst = arith.constant 2.000000e-01 : f32
    %9 = vector.broadcast %cst : f32 to vector<32x256xf32>
    %10 = arith.cmpf oge, %8, %9 : vector<32x256xf32>
    %cst_9 = arith.constant 1.250000e+00 : f32
    %11 = vector.broadcast %cst_9 : f32 to vector<32x256xf32>
    %12 = arith.mulf %7, %11 : vector<32x256xf32>
    %cst_10 = arith.constant 0.000000e+00 : f32
    %13 = vector.broadcast %cst_10 : f32 to vector<32x256xf32>
    %14 = arith.select %10, %12, %13 : vector<32x256xi1>, vector<32x256xf32>
    %15 = arith.truncf %14 : vector<32x256xf32> to vector<32x256xbf16>
    %c0_11 = arith.constant 0 : index
    %c0_12 = arith.constant 0 : index
    %16 = vector.load %arg6[%c0_11, %c0_12] : memref<32x256xbf16, #tpu.memory_space<vmem>>, vector<32x256xbf16>
    tpu.vector_store %arg6[%c0_11, %c0_12], %15 {strides = array<i32>} : memref<32x256xbf16, #tpu.memory_space<vmem>>, vector<32x256xbf16>,
    return
  }
  func.func @transform_0(%arg0: i32) -> (i32, i32) {
    %c0_i32 = arith.constant 0 : i32
    %c0_i32_0 = arith.constant 0 : i32
    return %arg0, %c0_i32 : i32, i32
  }
  func.func @transform_1(%arg0: i32) -> (i32, i32) {
    %c0_i32 = arith.constant 0 : i32
    %c0_i32_0 = arith.constant 0 : i32
    return %arg0, %c0_i32 : i32, i32
  }
  func.func @transform_2(%arg0: i32) -> (i32, i32) {
    %c0_i32 = arith.constant 0 : i32
    %c0_i32_0 = arith.constant 0 : i32
    return %arg0, %c0_i32 : i32, i32
  }
  func.func @transform_3(%arg0: i32) -> (i32, i32) {
    %c0_i32 = arith.constant 0 : i32
    %c0_i32_0 = arith.constant 0 : i32
    return %arg0, %c0_i32 : i32, i32
  }
  func.func @transform_4(%arg0: i32) -> (i32, i32) {
    %c0_i32 = arith.constant 0 : i32
    %c0_i32_0 = arith.constant 0 : i32
    return %arg0, %c0_i32 : i32, i32
  }
  func.func @transform_5(%arg0: i32) -> (i32, i32) {
    %c0_i32 = arith.constant 0 : i32
    %c0_i32_0 = arith.constant 0 : i32
    return %arg0, %c0_i32 : i32, i32
  }
}

module attributes {stable_mosaic.version = 11 : i64} {
  func.func @_fused_matmul_kernel(%arg0: i32, %arg1: i32, %arg2: memref<8x512xbf16, #tpu.memory_space<vmem>>, %arg3: memref<512x128xbf16, #tpu.memory_space<vmem>>, %arg4: memref<1x128xf32, #tpu.memory_space<vmem>>, %arg5: memref<8x128xbf16, #tpu.memory_space<vmem>>, %arg6: memref<8x128xf32, #tpu.memory_space<vmem>>) attributes {dimension_semantics = [#tpu.dimension_semantics<parallel>, #tpu.dimension_semantics<arbitrary>], iteration_bounds = array<i64: 1, 8>, scalar_prefetch = 0 : i64, scratch_operands = 1 : i64, tpu.core_type = #tpu.core_type<tc>, window_params = [{transform_indices = @transform_0, window_bounds = array<i64: 8, 512>}, {transform_indices = @transform_1, window_bounds = array<i64: 512, 128>}, {pipeline_mode = #tpu.pipeline_mode<synchronous>, transform_indices = @transform_2, window_bounds = array<i64: 1, 128>}, {transform_indices = @transform_3, window_bounds = array<i64: 8, 128>}]} {
    %c0_i32 = arith.constant 0 : i32
    %0 = arith.cmpi eq, %arg1, %c0_i32 : i32
    %1 = arith.extui %0 : i1 to i32
    %c0_i32_0 = arith.constant 0 : i32
    %2 = arith.cmpi ne, %1, %c0_i32_0 : i32
    scf.if %2 {
      %cst_9 = arith.constant 0.000000e+00 : f32
      %12 = vector.broadcast %cst_9 : f32 to vector<8x128xf32>
      %c0_10 = arith.constant 0 : index
      %c0_11 = arith.constant 0 : index
      %13 = vector.load %arg6[%c0_10, %c0_11] : memref<8x128xf32, #tpu.memory_space<vmem>>, vector<8x128xf32>
      tpu.vector_store %arg6[%c0_10, %c0_11], %12 {strides = array<i32>} : memref<8x128xf32, #tpu.memory_space<vmem>>, vector<8x128xf32>,
    } else {
    }
    %c0 = arith.constant 0 : index
    %c0_1 = arith.constant 0 : index
    %3 = vector.load %arg6[%c0, %c0_1] : memref<8x128xf32, #tpu.memory_space<vmem>>, vector<8x128xf32>
    %c0_2 = arith.constant 0 : index
    %c0_3 = arith.constant 0 : index
    %4 = vector.load %arg2[%c0_2, %c0_3] : memref<8x512xbf16, #tpu.memory_space<vmem>>, vector<8x512xbf16>
    %c0_4 = arith.constant 0 : index
    %c0_5 = arith.constant 0 : index
    %5 = vector.load %arg3[%c0_4, %c0_5] : memref<512x128xbf16, #tpu.memory_space<vmem>>, vector<512x128xbf16>
    %cst = arith.constant dense<0.000000e+00> : vector<8x128xf32>
    %6 = tpu.matmul %4, %5, %cst {dimension_numbers = #tpu.dot_dimension_numbers<[1], [0], [0], [1], [0, 0, 1, 1], [], []>} : vector<8x512xbf16>, vector<512x128xbf16>, vector<8x128xf32> -> vector<8x128xf32>
    %7 = arith.addf %3, %6 : vector<8x128xf32>
    %c0_6 = arith.constant 0 : index
    %c0_7 = arith.constant 0 : index
    %8 = vector.load %arg6[%c0_6, %c0_7] : memref<8x128xf32, #tpu.memory_space<vmem>>, vector<8x128xf32>
    tpu.vector_store %arg6[%c0_6, %c0_7], %7 {strides = array<i32>} : memref<8x128xf32, #tpu.memory_space<vmem>>, vector<8x128xf32>,
    %c7_i32 = arith.constant 7 : i32
    %9 = arith.cmpi eq, %arg1, %c7_i32 : i32
    %10 = arith.extui %9 : i1 to i32
    %c0_i32_8 = arith.constant 0 : i32
    %11 = arith.cmpi ne, %10, %c0_i32_8 : i32
    scf.if %11 {
      %c0_9 = arith.constant 0 : index
      %c0_10 = arith.constant 0 : index
      %12 = vector.load %arg6[%c0_9, %c0_10] : memref<8x128xf32, #tpu.memory_space<vmem>>, vector<8x128xf32>
      %c0_11 = arith.constant 0 : index
      %c0_12 = arith.constant 0 : index
      %13 = vector.load %arg4[%c0_11, %c0_12] : memref<1x128xf32, #tpu.memory_space<vmem>>, vector<1x128xf32>
      %14 = vector.broadcast %13 : vector<1x128xf32> to vector<8x128xf32>
      %15 = arith.addf %12, %14 : vector<8x128xf32>
      %cst_13 = arith.constant 0.000000e+00 : f32
      %16 = vector.broadcast %cst_13 : f32 to vector<8x128xf32>
      %17 = arith.maximumf %15, %16 : vector<8x128xf32>
      %18 = arith.truncf %17 : vector<8x128xf32> to vector<8x128xbf16>
      %c0_14 = arith.constant 0 : index
      %c0_15 = arith.constant 0 : index
      %19 = vector.load %arg5[%c0_14, %c0_15] : memref<8x128xbf16, #tpu.memory_space<vmem>>, vector<8x128xbf16>
      tpu.vector_store %arg5[%c0_14, %c0_15], %18 {strides = array<i32>} : memref<8x128xbf16, #tpu.memory_space<vmem>>, vector<8x128xbf16>,
    } else {
    }
    return
  }
  func.func @transform_0(%arg0: i32, %arg1: i32) -> (i32, i32) {
    %c0_i32 = arith.constant 0 : i32
    return %arg0, %arg1 : i32, i32
  }
  func.func @transform_1(%arg0: i32, %arg1: i32) -> (i32, i32) {
    %c0_i32 = arith.constant 0 : i32
    %c0_i32_0 = arith.constant 0 : i32
    return %arg1, %c0_i32 : i32, i32
  }
  func.func @transform_2(%arg0: i32, %arg1: i32) -> (i32, i32) {
    %c0_i32 = arith.constant 0 : i32
    %c0_i32_0 = arith.constant 0 : i32
    %c0_i32_1 = arith.constant 0 : i32
    return %c0_i32, %c0_i32_0 : i32, i32
  }
  func.func @transform_3(%arg0: i32, %arg1: i32) -> (i32, i32) {
    %c0_i32 = arith.constant 0 : i32
    %c0_i32_0 = arith.constant 0 : i32
    return %arg0, %c0_i32 : i32, i32
  }
}

module attributes {stable_mosaic.version = 11 : i64} {
  func.func @_fused_matmul_kernel(%arg0: i32, %arg1: i32, %arg2: memref<8x128xbf16, #tpu.memory_space<vmem>>, %arg3: memref<128x10xbf16, #tpu.memory_space<vmem>>, %arg4: memref<1x10xf32, #tpu.memory_space<vmem>>, %arg5: memref<8x10xf32, #tpu.memory_space<vmem>>, %arg6: memref<8x10xf32, #tpu.memory_space<vmem>>) attributes {dimension_semantics = [#tpu.dimension_semantics<parallel>, #tpu.dimension_semantics<arbitrary>], iteration_bounds = array<i64: 1, 1>, scalar_prefetch = 0 : i64, scratch_operands = 1 : i64, tpu.core_type = #tpu.core_type<tc>, window_params = [{transform_indices = @transform_0, window_bounds = array<i64: 8, 128>}, {transform_indices = @transform_1, window_bounds = array<i64: 128, 10>}, {pipeline_mode = #tpu.pipeline_mode<synchronous>, transform_indices = @transform_2, window_bounds = array<i64: 1, 10>}, {transform_indices = @transform_3, window_bounds = array<i64: 8, 10>}]} {
    %c0_i32 = arith.constant 0 : i32
    %0 = arith.cmpi eq, %arg1, %c0_i32 : i32
    %1 = arith.extui %0 : i1 to i32
    %c0_i32_0 = arith.constant 0 : i32
    %2 = arith.cmpi ne, %1, %c0_i32_0 : i32
    scf.if %2 {
      %cst_10 = arith.constant 0.000000e+00 : f32
      %12 = vector.broadcast %cst_10 : f32 to vector<8x10xf32>
      %c0_11 = arith.constant 0 : index
      %c0_12 = arith.constant 0 : index
      %13 = vector.load %arg6[%c0_11, %c0_12] : memref<8x10xf32, #tpu.memory_space<vmem>>, vector<8x10xf32>
      tpu.vector_store %arg6[%c0_11, %c0_12], %12 {strides = array<i32>} : memref<8x10xf32, #tpu.memory_space<vmem>>, vector<8x10xf32>,
    } else {
    }
    %c0 = arith.constant 0 : index
    %c0_1 = arith.constant 0 : index
    %3 = vector.load %arg6[%c0, %c0_1] : memref<8x10xf32, #tpu.memory_space<vmem>>, vector<8x10xf32>
    %c0_2 = arith.constant 0 : index
    %c0_3 = arith.constant 0 : index
    %4 = vector.load %arg2[%c0_2, %c0_3] : memref<8x128xbf16, #tpu.memory_space<vmem>>, vector<8x128xbf16>
    %c0_4 = arith.constant 0 : index
    %c0_5 = arith.constant 0 : index
    %5 = vector.load %arg3[%c0_4, %c0_5] : memref<128x10xbf16, #tpu.memory_space<vmem>>, vector<128x10xbf16>
    %cst = arith.constant dense<0.000000e+00> : vector<8x10xf32>
    %6 = tpu.matmul %4, %5, %cst {dimension_numbers = #tpu.dot_dimension_numbers<[1], [0], [0], [1], [0, 0, 1, 1], [], []>} : vector<8x128xbf16>, vector<128x10xbf16>, vector<8x10xf32> -> vector<8x10xf32>
    %7 = arith.addf %3, %6 : vector<8x10xf32>
    %c0_6 = arith.constant 0 : index
    %c0_7 = arith.constant 0 : index
    %8 = vector.load %arg6[%c0_6, %c0_7] : memref<8x10xf32, #tpu.memory_space<vmem>>, vector<8x10xf32>
    tpu.vector_store %arg6[%c0_6, %c0_7], %7 {strides = array<i32>} : memref<8x10xf32, #tpu.memory_space<vmem>>, vector<8x10xf32>,
    %c0_i32_8 = arith.constant 0 : i32
    %9 = arith.cmpi eq, %arg1, %c0_i32_8 : i32
    %10 = arith.extui %9 : i1 to i32
    %c0_i32_9 = arith.constant 0 : i32
    %11 = arith.cmpi ne, %10, %c0_i32_9 : i32
    scf.if %11 {
      %c0_10 = arith.constant 0 : index
      %c0_11 = arith.constant 0 : index
      %12 = vector.load %arg6[%c0_10, %c0_11] : memref<8x10xf32, #tpu.memory_space<vmem>>, vector<8x10xf32>
      %c0_12 = arith.constant 0 : index
      %c0_13 = arith.constant 0 : index
      %13 = vector.load %arg4[%c0_12, %c0_13] : memref<1x10xf32, #tpu.memory_space<vmem>>, vector<1x10xf32>
      %14 = vector.broadcast %13 : vector<1x10xf32> to vector<8x10xf32>
      %15 = arith.addf %12, %14 : vector<8x10xf32>
      %c0_14 = arith.constant 0 : index
      %c0_15 = arith.constant 0 : index
      %16 = vector.load %arg5[%c0_14, %c0_15] : memref<8x10xf32, #tpu.memory_space<vmem>>, vector<8x10xf32>
      tpu.vector_store %arg5[%c0_14, %c0_15], %15 {strides = array<i32>} : memref<8x10xf32, #tpu.memory_space<vmem>>, vector<8x10xf32>,
    } else {
    }
    return
  }
  func.func @transform_0(%arg0: i32, %arg1: i32) -> (i32, i32) {
    %c0_i32 = arith.constant 0 : i32
    return %arg0, %arg1 : i32, i32
  }
  func.func @transform_1(%arg0: i32, %arg1: i32) -> (i32, i32) {
    %c0_i32 = arith.constant 0 : i32
    %c0_i32_0 = arith.constant 0 : i32
    return %arg1, %c0_i32 : i32, i32
  }
  func.func @transform_2(%arg0: i32, %arg1: i32) -> (i32, i32) {
    %c0_i32 = arith.constant 0 : i32
    %c0_i32_0 = arith.constant 0 : i32
    %c0_i32_1 = arith.constant 0 : i32
    return %c0_i32, %c0_i32_0 : i32, i32
  }
  func.func @transform_3(%arg0: i32, %arg1: i32) -> (i32, i32) {
    %c0_i32 = arith.constant 0 : i32
    %c0_i32_0 = arith.constant 0 : i32
    return %arg0, %c0_i32 : i32, i32
  }
}

</mosaic_0001>

<llo_original>
// kernel: net_forward.10
$region0: #{net_forward.10}
  #allocation0 [shape = 'u32[]', space=smem, size = 0x4, offset = 0x4, fixed_abs, tag = 'smem constant byte address 0x4 - core index']
  #allocation1 [shape = 'u32[144,128]{1,0:T(1,128)}', space=vmem, size = 0x12000, scoped, tag = 'internal scratch']
  #allocation2 [shape = 'f32[256,32]{1,0:T(8,128)}', space=vmem, size = 0x20000, scoped, tag = 'scratch operand']
  %s0 = inlined_call_operand.vmem [shape: bf16[512,256], index: 0, kind: input, shape index: {}]
  %s1 = inlined_call_operand.vmem [shape: bf16[256,32], index: 1, kind: input, shape index: {}]
  %s2 = inlined_call_operand.vmem [shape: f32[1,32], index: 2, kind: input, shape index: {}]
  %s3 = inlined_call_operand.vmem [shape: bf16[512,32], index: 3, kind: output, shape index: {}]
  %s4 = sld [smem:[#allocation0]]
  $region53: #{net_forward.10} parent=0
    _
  %s6 = ssub.s32 1, %s4
  %s7 = scalar_select 0, %s6, %s4
  loop: start=0, step=1, limit=4
  $region2: #{net_forward.10} parent=0 // loop_pre_header
    _
  $region3: #{net_forward.10} parent=0 // loop_header
    %s9 = sphi 0, %s13
    %p10 = scmp.ge.s32.totalorder %s9, 4
    %s16 = sphi 0, %s28
    %s17 = sphi 0, %s24
    %s18 = sphi 0, %s16
    %s19 = sphi 0, %s17
    %s20 = sphi 0, %s18
    %s21 = sphi 0, %s19
    %s33 = sphi 0, %s35
    %s36 = sphi 0, %s33
    %s37 = sphi 0, %s36
    %s53 = sphi 0, %s37
    %s59 = sphi 0, %s61
    %s62 = sphi 0, %s59
    %s63 = sphi 0, %s62
    %s79 = sphi 0, %s63
    %s83 = sphi 0, %s83
    %s85 = sphi 0, %s83
    %s86 = sphi 0, %s85
    %s100 = sphi 0, %s86
    %s106 = sphi 0, %s108
    %s109 = sphi 0, %s106
    %s110 = sphi 0, %s109
    %s126 = sphi 0, %s110
  $region4: #{net_forward.10} parent=0 // loop_header_branch
    %12 = sbr.rel (%p10) target = $region8
  $region5: #{net_forward.10} parent=0 // loop_body
    %s14 = ssub.s32 %s9, 1
    %s15 = ssub.s32 %s9, 2
    %s22 = sadd.s32 1, %s17
    %p23 = scmp.ge.s32.totalorder %s22, 1
    %s24 = scalar_select %p23, 0, %s22
    %s25 = sadd.s32 1, %s16
    %s26 = scalar_select %p23, %s25, %s16
    %p27 = scmp.ge.s32.totalorder %s26, 2
    %s28 = scalar_select %p27, 0, %s26
    %s29 = ssub.s32 %s16, %s28
    %s30 = ssub.s32 %s17, %s24
    %s31 = sor.u32 %s29, %s30
    %p32 = scmp.eq.s32.totalorder %s31, 0
    %s34 = sadd.s32 %s33, 1
    %s35 = scalar_select %p32, %s33, %s34
    %p38 = pneg %p32
    %p39 = scmp.eq.s32.totalorder %s9, 1
    %p40 = por %p38, %p39
    %p41 = scmp.ne.s32.totalorder %s33, %s36
    %p42 = scmp.eq.s32.totalorder %s9, 0
    %p43 = por %p41, %p42
    %p44 = scmp.ne.s32.totalorder %s33, %s36
    %p45 = scmp.eq.s32.totalorder %s14, 1
    %p46 = por %p44, %p45
    %p47 = scmp.ne.s32.totalorder %s36, %s37
    %p48 = scmp.eq.s32.totalorder %s14, 0
    %p49 = por %p47, %p48
    %p50 = scmp.ne.s32.totalorder %s36, %s37
    %p51 = scmp.eq.s32.totalorder %s15, 1
    %p52 = por %p50, %p51
    %p54 = scmp.ne.s32.totalorder %s37, %s53
    %p55 = scmp.eq.s32.totalorder %s15, 0
    %p56 = por %p54, %p55
    %s57 = ssub.s32 %s17, %s24
    %p58 = scmp.eq.s32.totalorder %s57, 0
    %s60 = sadd.s32 %s59, 1
    %s61 = scalar_select %p58, %s59, %s60
    %p64 = pneg %p58
    %p65 = scmp.eq.s32.totalorder %s9, 1
    %p66 = por %p64, %p65
    %p67 = scmp.ne.s32.totalorder %s59, %s62
    %p68 = scmp.eq.s32.totalorder %s9, 0
    %p69 = por %p67, %p68
    %p70 = scmp.ne.s32.totalorder %s59, %s62
    %p71 = scmp.eq.s32.totalorder %s14, 1
    %p72 = por %p70, %p71
    %p73 = scmp.ne.s32.totalorder %s62, %s63
    %p74 = scmp.eq.s32.totalorder %s14, 0
    %p75 = por %p73, %p74
    %p76 = scmp.ne.s32.totalorder %s62, %s63
    %p77 = scmp.eq.s32.totalorder %s15, 1
    %p78 = por %p76, %p77
    %p80 = scmp.ne.s32.totalorder %s63, %s79
    %p81 = scmp.eq.s32.totalorder %s15, 0
    %p82 = por %p80, %p81
    %s84 = sadd.s32 %s83, 1
    %p87 = scmp.eq.s32.totalorder %s9, 1
    %p88 = scmp.ne.s32.totalorder %s83, %s85
    %p89 = scmp.eq.s32.totalorder %s9, 0
    %p90 = por %p88, %p89
    %p91 = scmp.ne.s32.totalorder %s83, %s85
    %p92 = scmp.eq.s32.totalorder %s14, 1
    %p93 = por %p91, %p92
    %p94 = scmp.ne.s32.totalorder %s85, %s86
    %p95 = scmp.eq.s32.totalorder %s14, 0
    %p96 = por %p94, %p95
    %p97 = scmp.ne.s32.totalorder %s85, %s86
    %p98 = scmp.eq.s32.totalorder %s15, 1
    %p99 = por %p97, %p98
    %p101 = scmp.ne.s32.totalorder %s86, %s100
    %p102 = scmp.eq.s32.totalorder %s15, 0
    %p103 = por %p101, %p102
    %s104 = ssub.s32 %s16, %s28
    %p105 = scmp.eq.s32.totalorder %s104, 0
    %s107 = sadd.s32 %s106, 1
    %s108 = scalar_select %p105, %s106, %s107
    %p111 = pneg %p105
    %p112 = scmp.eq.s32.totalorder %s9, 1
    %p113 = por %p111, %p112
    %p114 = scmp.ne.s32.totalorder %s106, %s109
    %p115 = scmp.eq.s32.totalorder %s9, 0
    %p116 = por %p114, %p115
    %p117 = scmp.ne.s32.totalorder %s106, %s109
    %p118 = scmp.eq.s32.totalorder %s14, 1
    %p119 = por %p117, %p118
    %p120 = scmp.ne.s32.totalorder %s109, %s110
    %p121 = scmp.eq.s32.totalorder %s14, 0
    %p122 = por %p120, %p121
    %p123 = scmp.ne.s32.totalorder %s109, %s110
    %p124 = scmp.eq.s32.totalorder %s15, 1
    %p125 = por %p123, %p124
    %p127 = scmp.ne.s32.totalorder %s110, %s126
    %p128 = scmp.eq.s32.totalorder %s15, 0
    %p129 = por %p127, %p128
    %p130 = scmp.le.s32.totalorder 1, %s9
    %p131 = scmp.lt.s32.totalorder %s9, 3
    %p132 = pnand %p130, %p131
    %p133 = pneg %p132
    // Predicated region
    $region9: #{net_forward.10} parent=5 // pred_check
      _
    $region10: #{net_forward.10} parent=5 // pred_check_branch
      %135 = sbr.rel (%p132) target = $region12
    $region11: #{net_forward.10} parent=5 // pred_region
      %s136 = ssub.s32 %s9, 1
      // Predicated region
      $region13: #{net_forward.10} parent=11 // pred_check
        %p137 = pneg %p75
      $region14: #{net_forward.10} parent=11 // pred_check_branch
        %139 = sbr.rel (%p137) target = $region16
      $region15: #{net_forward.10} parent=11 // pred_region
        %s140 = smul.u32 32, %s19
        %p141 = scmp.lt.s32.totalorder %s140, 31
        %s142 = scalar_select %p141, %s140, 31
        %s143 = smul.addr %s142, 4
        %s144 = scalar_lea.vmem %s1, %s143
        %s145 = smul.u32 32, %s19
      $region16: #{net_forward.10} parent=11 // pred_fallthru
        _
      // Predicated region
      $region17: #{net_forward.10} parent=11 // pred_check
        %p146 = pneg %p96
      $region18: #{net_forward.10} parent=11 // pred_check_branch
        %148 = sbr.rel (%p146) target = $region20
      $region19: #{net_forward.10} parent=11 // pred_region
        _
      $region20: #{net_forward.10} parent=11 // pred_fallthru
        _
    $region12: #{net_forward.10} parent=5 // pred_fallthru
      _
    %p149 = scmp.lt.s32.totalorder %s9, 2
    // Predicated region
    $region21: #{net_forward.10} parent=5 // pred_check
      %p150 = pneg %p149
    $region22: #{net_forward.10} parent=5 // pred_check_branch
      %152 = sbr.rel (%p150) target = $region24
    $region23: #{net_forward.10} parent=5 // pred_region
      // Predicated region
      $region25: #{net_forward.10} parent=23 // pred_check
        %p153 = pneg %p43
      $region26: #{net_forward.10} parent=23 // pred_check_branch
        %155 = sbr.rel (%p153) target = $region28
      $region27: #{net_forward.10} parent=23 // pred_region
        %s156 = smul.u32 32, %s16
        %s157 = smul.u32 2, %s17
        %p158 = scmp.lt.s32.totalorder %s156, 63
        %s159 = scalar_select %p158, %s156, 63
        %p160 = scmp.lt.s32.totalorder %s157, 1
        %s161 = scalar_select %p160, %s157, 1
        %s162 = smul.addr %s159, 2
        %s163 = sadd.s32 %s161, %s162
        %s164 = smul.addr %s163, 4
        %s165 = scalar_lea.vmem %s0, %s164
        %s166 = smul.u32 32, %s16
        %s167 = smul.u32 2, %s17
      $region28: #{net_forward.10} parent=23 // pred_fallthru
        _
    $region24: #{net_forward.10} parent=5 // pred_fallthru
      _
    %p168 = scmp.le.s32.totalorder 1, %s9
    %p169 = scmp.lt.s32.totalorder %s9, 3
    %p170 = pnand %p168, %p169
    %p171 = pneg %p170
    // Predicated region
    $region29: #{net_forward.10} parent=5 // pred_check
      _
    $region30: #{net_forward.10} parent=5 // pred_check_branch
      %173 = sbr.rel (%p170) target = $region32
    $region31: #{net_forward.10} parent=5 // pred_region
      %s174 = ssub.s32 %s9, 1
      %s175 = smul.u32 32, %s18
      %s176 = smul.u32 2, %s19
      %p177 = scmp.lt.s32.totalorder %s175, 63
      %s178 = scalar_select %p177, %s175, 63
      %p179 = scmp.lt.s32.totalorder %s176, 1
      %s180 = scalar_select %p179, %s176, 1
      %s181 = smul.addr %s178, 2
      %s182 = sadd.s32 %s180, %s181
      %s183 = smul.addr %s182, 4
      %s184 = scalar_lea.vmem %s0, %s183
      %p185 = pneg %p49
      %p186 = pneg %p46
      %s187 = smul.u32 32, %s19
      %p188 = scmp.lt.s32.totalorder %s187, 31
      %s189 = scalar_select %p188, %s187, 31
      %s190 = smul.addr %s189, 4
      %s191 = scalar_lea.vmem %s1, %s190
      %p192 = pneg %p75
      %p193 = pneg %p72
      %p194 = pneg %p96
      %p195 = pneg %p93
      %p196 = pneg %p122
      %p197 = pneg %p119
      %s198 = smul.u32 32, %s18
      %p199 = scmp.lt.s32.totalorder %s198, 63
      %s200 = scalar_select %p199, %s198, 63
      %s201 = smul.addr %s200, 4
      %s202 = scalar_lea.vmem %s3, %s201
      %s203 = smul.u32 32, %s18
      %s204 = smul.u32 2, %s19
      %p205 = scmp.lt.s32.totalorder %s203, 63
      %s206 = scalar_select %p205, %s203, 63
      %p207 = scmp.lt.s32.totalorder %s204, 1
      %s208 = scalar_select %p207, %s204, 1
      %s209 = smul.addr %s206, 2
      %s210 = sadd.s32 %s208, %s209
      %s211 = smul.addr %s210, 4
      %s212 = scalar_lea.vmem %s0, %s211
      %s213 = smul.u32 32, %s18
      %s214 = smul.u32 2, %s19
      %s215 = smul.u32 32, %s19
      %p216 = scmp.lt.s32.totalorder %s215, 31
      %s217 = scalar_select %p216, %s215, 31
      %s218 = smul.addr %s217, 4
      %s219 = scalar_lea.vmem %s1, %s218
      %s220 = smul.u32 32, %s19
      %s221 = smul.u32 32, %s18
      %p222 = scmp.lt.s32.totalorder %s221, 63
      %s223 = scalar_select %p222, %s221, 63
      %s224 = smul.addr %s223, 4
      %s225 = scalar_lea.vmem %s3, %s224
      %s226 = smul.u32 32, %s18
      %p228 = scmp.eq.s32.totalorder %s19, 0
      // Predicated region
      $region33: #{net_forward.10} parent=31 // pred_check
        %p229 = pneg %p228
      $region34: #{net_forward.10} parent=31 // pred_check_branch
        %231 = sbr.rel (%p229) target = $region36
      $region35: #{net_forward.10} parent=31 // pred_region
        %vm232 = vcmask 261120
        %233 = vst.msk [vmem:[#allocation2] sm:$0xff] %vm232, 0.0
        %234 = vst.msk [vmem:[#allocation2 + $0x8] sm:$0xff] %vm232, 0.0
        %235 = vst.msk [vmem:[#allocation2 + $0x10] sm:$0xff] %vm232, 0.0
        %236 = vst.msk [vmem:[#allocation2 + $0x18] sm:$0xff] %vm232, 0.0
        %237 = vst.msk [vmem:[#allocation2 + $0x20] sm:$0xff] %vm232, 0.0
        %238 = vst.msk [vmem:[#allocation2 + $0x28] sm:$0xff] %vm232, 0.0
        %239 = vst.msk [vmem:[#allocation2 + $0x30] sm:$0xff] %vm232, 0.0
        %240 = vst.msk [vmem:[#allocation2 + $0x38] sm:$0xff] %vm232, 0.0
        %241 = vst.msk [vmem:[#allocation2 + $0x40] sm:$0xff] %vm232, 0.0
        %242 = vst.msk [vmem:[#allocation2 + $0x48] sm:$0xff] %vm232, 0.0
        %243 = vst.msk [vmem:[#allocation2 + $0x50] sm:$0xff] %vm232, 0.0
        %244 = vst.msk [vmem:[#allocation2 + $0x58] sm:$0xff] %vm232, 0.0
        %245 = vst.msk [vmem:[#allocation2 + $0x60] sm:$0xff] %vm232, 0.0
        %246 = vst.msk [vmem:[#allocation2 + $0x68] sm:$0xff] %vm232, 0.0
        %247 = vst.msk [vmem:[#allocation2 + $0x70] sm:$0xff] %vm232, 0.0
        %248 = vst.msk [vmem:[#allocation2 + $0x78] sm:$0xff] %vm232, 0.0
        %249 = vst.msk [vmem:[#allocation2 + $0x80] sm:$0xff] %vm232, 0.0
        %250 = vst.msk [vmem:[#allocation2 + $0x88] sm:$0xff] %vm232, 0.0
        %251 = vst.msk [vmem:[#allocation2 + $0x90] sm:$0xff] %vm232, 0.0
        %252 = vst.msk [vmem:[#allocation2 + $0x98] sm:$0xff] %vm232, 0.0
        %253 = vst.msk [vmem:[#allocation2 + $0xa0] sm:$0xff] %vm232, 0.0
        %254 = vst.msk [vmem:[#allocation2 + $0xa8] sm:$0xff] %vm232, 0.0
        %255 = vst.msk [vmem:[#allocation2 + $0xb0] sm:$0xff] %vm232, 0.0
        %256 = vst.msk [vmem:[#allocation2 + $0xb8] sm:$0xff] %vm232, 0.0
        %257 = vst.msk [vmem:[#allocation2 + $0xc0] sm:$0xff] %vm232, 0.0
        %258 = vst.msk [vmem:[#allocation2 + $0xc8] sm:$0xff] %vm232, 0.0
        %259 = vst.msk [vmem:[#allocation2 + $0xd0] sm:$0xff] %vm232, 0.0
        %260 = vst.msk [vmem:[#allocation2 + $0xd8] sm:$0xff] %vm232, 0.0
        %261 = vst.msk [vmem:[#allocation2 + $0xe0] sm:$0xff] %vm232, 0.0
        %262 = vst.msk [vmem:[#allocation2 + $0xe8] sm:$0xff] %vm232, 0.0
        %263 = vst.msk [vmem:[#allocation2 + $0xf0] sm:$0xff] %vm232, 0.0
        %264 = vst.msk [vmem:[#allocation2 + $0xf8] sm:$0xff] %vm232, 0.0
      $region36: #{net_forward.10} parent=31 // pred_fallthru
        _
      %v265 = vld [vmem:[#allocation2] sm:$0xff]
      %v266 = vld [vmem:[#allocation2 + $0x8] sm:$0xff]
      %v267 = vld [vmem:[#allocation2 + $0x10] sm:$0xff]
      %v268 = vld [vmem:[#allocation2 + $0x18] sm:$0xff]
      %v269 = vld [vmem:[#allocation2 + $0x20] sm:$0xff]
      %v270 = vld [vmem:[#allocation2 + $0x28] sm:$0xff]
      %v271 = vld [vmem:[#allocation2 + $0x30] sm:$0xff]
      %v272 = vld [vmem:[#allocation2 + $0x38] sm:$0xff]
      %v273 = vld [vmem:[#allocation2 + $0x40] sm:$0xff]
      %v274 = vld [vmem:[#allocation2 + $0x48] sm:$0xff]
      %v275 = vld [vmem:[#allocation2 + $0x50] sm:$0xff]
      %v276 = vld [vmem:[#allocation2 + $0x58] sm:$0xff]
      %v277 = vld [vmem:[#allocation2 + $0x60] sm:$0xff]
      %v278 = vld [vmem:[#allocation2 + $0x68] sm:$0xff]
      %v279 = vld [vmem:[#allocation2 + $0x70] sm:$0xff]
      %v280 = vld [vmem:[#allocation2 + $0x78] sm:$0xff]
      %v281 = vld [vmem:[#allocation2 + $0x80] sm:$0xff]
      %v282 = vld [vmem:[#allocation2 + $0x88] sm:$0xff]
      %v283 = vld [vmem:[#allocation2 + $0x90] sm:$0xff]
      %v284 = vld [vmem:[#allocation2 + $0x98] sm:$0xff]
      %v285 = vld [vmem:[#allocation2 + $0xa0] sm:$0xff]
      %v286 = vld [vmem:[#allocation2 + $0xa8] sm:$0xff]
      %v287 = vld [vmem:[#allocation2 + $0xb0] sm:$0xff]
      %v288 = vld [vmem:[#allocation2 + $0xb8] sm:$0xff]
      %v289 = vld [vmem:[#allocation2 + $0xc0] sm:$0xff]
      %v290 = vld [vmem:[#allocation2 + $0xc8] sm:$0xff]
      %v291 = vld [vmem:[#allocation2 + $0xd0] sm:$0xff]
      %v292 = vld [vmem:[#allocation2 + $0xd8] sm:$0xff]
      %v293 = vld [vmem:[#allocation2 + $0xe0] sm:$0xff]
      %v294 = vld [vmem:[#allocation2 + $0xe8] sm:$0xff]
      %v295 = vld [vmem:[#allocation2 + $0xf0] sm:$0xff]
      %v296 = vld [vmem:[#allocation2 + $0xf8] sm:$0xff]
      %v297 = vld [vmem:[%s212] sm:$0xff]
      %v298 = vld [vmem:[%s212 + $0x8] sm:$0xff]
      %v299 = vld [vmem:[%s212 + $0x10] sm:$0xff]
      %v300 = vld [vmem:[%s212 + $0x18] sm:$0xff]
      %v301 = vld [vmem:[%s212 + $0x20] sm:$0xff]
      %v302 = vld [vmem:[%s212 + $0x28] sm:$0xff]
      %v303 = vld [vmem:[%s212 + $0x30] sm:$0xff]
      %v304 = vld [vmem:[%s212 + $0x38] sm:$0xff]
      %v305 = vld [vmem:[%s212 + $0x40] sm:$0xff]
      %v306 = vld [vmem:[%s212 + $0x48] sm:$0xff]
      %v307 = vld [vmem:[%s212 + $0x50] sm:$0xff]
      %v308 = vld [vmem:[%s212 + $0x58] sm:$0xff]
      %v309 = vld [vmem:[%s212 + $0x60] sm:$0xff]
      %v310 = vld [vmem:[%s212 + $0x68] sm:$0xff]
      %v311 = vld [vmem:[%s212 + $0x70] sm:$0xff]
      %v312 = vld [vmem:[%s212 + $0x78] sm:$0xff]
      %v313 = vld [vmem:[%s212 + $0x80] sm:$0xff]
      %v314 = vld [vmem:[%s212 + $0x88] sm:$0xff]
      %v315 = vld [vmem:[%s212 + $0x90] sm:$0xff]
      %v316 = vld [vmem:[%s212 + $0x98] sm:$0xff]
      %v317 = vld [vmem:[%s212 + $0xa0] sm:$0xff]
      %v318 = vld [vmem:[%s212 + $0xa8] sm:$0xff]
      %v319 = vld [vmem:[%s212 + $0xb0] sm:$0xff]
      %v320 = vld [vmem:[%s212 + $0xb8] sm:$0xff]
      %v321 = vld [vmem:[%s212 + $0xc0] sm:$0xff]
      %v322 = vld [vmem:[%s212 + $0xc8] sm:$0xff]
      %v323 = vld [vmem:[%s212 + $0xd0] sm:$0xff]
      %v324 = vld [vmem:[%s212 + $0xd8] sm:$0xff]
      %v325 = vld [vmem:[%s212 + $0xe0] sm:$0xff]
      %v326 = vld [vmem:[%s212 + $0xe8] sm:$0xff]
      %v327 = vld [vmem:[%s212 + $0xf0] sm:$0xff]
      %v328 = vld [vmem:[%s212 + $0xf8] sm:$0xff]
      %v329 = vld [vmem:[%s219] sm:$0xf]
      %v330 = vld [vmem:[%s219 + $0x4] sm:$0xf]
      %v331 = vld [vmem:[%s219 + $0x8] sm:$0xf]
      %v332 = vld [vmem:[%s219 + $0xc] sm:$0xf]
      %v333 = vld [vmem:[%s219 + $0x10] sm:$0xf]
      %v334 = vld [vmem:[%s219 + $0x14] sm:$0xf]
      %v335 = vld [vmem:[%s219 + $0x18] sm:$0xf]
      %v336 = vld [vmem:[%s219 + $0x1c] sm:$0xf]
      %v337 = vld [vmem:[%s219 + $0x20] sm:$0xf]
      %v338 = vld [vmem:[%s219 + $0x24] sm:$0xf]
      %v339 = vld [vmem:[%s219 + $0x28] sm:$0xf]
      %v340 = vld [vmem:[%s219 + $0x2c] sm:$0xf]
      %v341 = vld [vmem:[%s219 + $0x30] sm:$0xf]
      %v342 = vld [vmem:[%s219 + $0x34] sm:$0xf]
      %v343 = vld [vmem:[%s219 + $0x38] sm:$0xf]
      %v344 = vld [vmem:[%s219 + $0x3c] sm:$0xf]
      %v345 = vld [vmem:[%s219 + $0x40] sm:$0xf]
      %v346 = vld [vmem:[%s219 + $0x44] sm:$0xf]
      %v347 = vld [vmem:[%s219 + $0x48] sm:$0xf]
      %v348 = vld [vmem:[%s219 + $0x4c] sm:$0xf]
      %v349 = vld [vmem:[%s219 + $0x50] sm:$0xf]
      %v350 = vld [vmem:[%s219 + $0x54] sm:$0xf]
      %v351 = vld [vmem:[%s219 + $0x58] sm:$0xf]
      %v352 = vld [vmem:[%s219 + $0x5c] sm:$0xf]
      %v353 = vld [vmem:[%s219 + $0x60] sm:$0xf]
      %v354 = vld [vmem:[%s219 + $0x64] sm:$0xf]
      %v355 = vld [vmem:[%s219 + $0x68] sm:$0xf]
      %v356 = vld [vmem:[%s219 + $0x6c] sm:$0xf]
      %v357 = vld [vmem:[%s219 + $0x70] sm:$0xf]
      %v358 = vld [vmem:[%s219 + $0x74] sm:$0xf]
      %v359 = vld [vmem:[%s219 + $0x78] sm:$0xf]
      %v360 = vld [vmem:[%s219 + $0x7c] sm:$0xf]
      %v393 = vunpack.c.l.b16 %v297
      %v394 = vunpack.c.h.b16 %v297
      %v395 = vunpack.c.l.b16 %v298
      %v396 = vunpack.c.h.b16 %v298
      %v397 = vunpack.c.l.b16 %v299
      %v398 = vunpack.c.h.b16 %v299
      %v399 = vunpack.c.l.b16 %v300
      %v400 = vunpack.c.h.b16 %v300
      %v401 = vunpack.c.l.b16 %v301
      %v402 = vunpack.c.h.b16 %v301
      %v403 = vunpack.c.l.b16 %v302
      %v404 = vunpack.c.h.b16 %v302
      %v405 = vunpack.c.l.b16 %v303
      %v406 = vunpack.c.h.b16 %v303
      %v407 = vunpack.c.l.b16 %v304
      %v408 = vunpack.c.h.b16 %v304
      %v409 = vunpack.c.l.b16 %v305
      %v410 = vunpack.c.h.b16 %v305
      %v411 = vunpack.c.l.b16 %v306
      %v412 = vunpack.c.h.b16 %v306
      %v413 = vunpack.c.l.b16 %v307
      %v414 = vunpack.c.h.b16 %v307
      %v415 = vunpack.c.l.b16 %v308
      %v416 = vunpack.c.h.b16 %v308
      %v417 = vunpack.c.l.b16 %v309
      %v418 = vunpack.c.h.b16 %v309
      %v419 = vunpack.c.l.b16 %v310
      %v420 = vunpack.c.h.b16 %v310
      %v421 = vunpack.c.l.b16 %v311
      %v422 = vunpack.c.h.b16 %v311
      %v423 = vunpack.c.l.b16 %v312
      %v424 = vunpack.c.h.b16 %v312
      %v425 = vunpack.c.l.b16 %v313
      %v426 = vunpack.c.h.b16 %v313
      %v427 = vunpack.c.l.b16 %v314
      %v428 = vunpack.c.h.b16 %v314
      %v429 = vunpack.c.l.b16 %v315
      %v430 = vunpack.c.h.b16 %v315
      %v431 = vunpack.c.l.b16 %v316
      %v432 = vunpack.c.h.b16 %v316
      %v433 = vunpack.c.l.b16 %v317
      %v434 = vunpack.c.h.b16 %v317
      %v435 = vunpack.c.l.b16 %v318
      %v436 = vunpack.c.h.b16 %v318
      %v437 = vunpack.c.l.b16 %v319
      %v438 = vunpack.c.h.b16 %v319
      %v439 = vunpack.c.l.b16 %v320
      %v440 = vunpack.c.h.b16 %v320
      %v441 = vunpack.c.l.b16 %v321
      %v442 = vunpack.c.h.b16 %v321
      %v443 = vunpack.c.l.b16 %v322
      %v444 = vunpack.c.h.b16 %v322
      %v445 = vunpack.c.l.b16 %v323
      %v446 = vunpack.c.h.b16 %v323
      %v447 = vunpack.c.l.b16 %v324
      %v448 = vunpack.c.h.b16 %v324
      %v449 = vunpack.c.l.b16 %v325
      %v450 = vunpack.c.h.b16 %v325
      %v451 = vunpack.c.l.b16 %v326
      %v452 = vunpack.c.h.b16 %v326
      %v453 = vunpack.c.l.b16 %v327
      %v454 = vunpack.c.h.b16 %v327
      %v455 = vunpack.c.l.b16 %v328
      %v456 = vunpack.c.h.b16 %v328
      %v457 = vpack.c.b16 %v395, %v393
      %v458 = vpack.c.b16 %v396, %v394
      %v459 = vpack.c.b16 %v399, %v397
      %v460 = vpack.c.b16 %v400, %v398
      %v461 = vpack.c.b16 %v403, %v401
      %v462 = vpack.c.b16 %v404, %v402
      %v463 = vpack.c.b16 %v407, %v405
      %v464 = vpack.c.b16 %v408, %v406
      %v465 = vpack.c.b16 %v411, %v409
      %v466 = vpack.c.b16 %v412, %v410
      %v467 = vpack.c.b16 %v415, %v413
      %v468 = vpack.c.b16 %v416, %v414
      %v469 = vpack.c.b16 %v419, %v417
      %v470 = vpack.c.b16 %v420, %v418
      %v471 = vpack.c.b16 %v423, %v421
      %v472 = vpack.c.b16 %v424, %v422
      %v473 = vpack.c.b16 %v427, %v425
      %v474 = vpack.c.b16 %v428, %v426
      %v475 = vpack.c.b16 %v431, %v429
      %v476 = vpack.c.b16 %v432, %v430
      %v477 = vpack.c.b16 %v435, %v433
      %v478 = vpack.c.b16 %v436, %v434
      %v479 = vpack.c.b16 %v439, %v437
      %v480 = vpack.c.b16 %v440, %v438
      %v481 = vpack.c.b16 %v443, %v441
      %v482 = vpack.c.b16 %v444, %v442
      %v483 = vpack.c.b16 %v447, %v445
      %v484 = vpack.c.b16 %v448, %v446
      %v485 = vpack.c.b16 %v451, %v449
      %v486 = vpack.c.b16 %v452, %v450
      %v487 = vpack.c.b16 %v455, %v453
      %v488 = vpack.c.b16 %v456, %v454
      %v553 = vunpack.c.l.b16 %v329
      %v554 = vunpack.c.l.b16 %v330
      %v555 = vunpack.c.l.b16 %v331
      %v556 = vunpack.c.l.b16 %v332
      %v557 = vunpack.c.l.b16 %v333
      %v558 = vunpack.c.l.b16 %v334
      %v559 = vunpack.c.l.b16 %v335
      %v560 = vunpack.c.l.b16 %v336
      %v561 = vunpack.c.l.b16 %v337
      %v562 = vunpack.c.l.b16 %v338
      %v563 = vunpack.c.l.b16 %v339
      %v564 = vunpack.c.l.b16 %v340
      %v565 = vunpack.c.l.b16 %v341
      %v566 = vunpack.c.l.b16 %v342
      %v567 = vunpack.c.l.b16 %v343
      %v568 = vunpack.c.l.b16 %v344
      %v569 = vunpack.c.l.b16 %v345
      %v570 = vunpack.c.l.b16 %v346
      %v571 = vunpack.c.l.b16 %v347
      %v572 = vunpack.c.l.b16 %v348
      %v573 = vunpack.c.l.b16 %v349
      %v574 = vunpack.c.l.b16 %v350
      %v575 = vunpack.c.l.b16 %v351
      %v576 = vunpack.c.l.b16 %v352
      %v577 = vunpack.c.l.b16 %v353
      %v578 = vunpack.c.l.b16 %v354
      %v579 = vunpack.c.l.b16 %v355
      %v580 = vunpack.c.l.b16 %v356
      %v581 = vunpack.c.l.b16 %v357
      %v582 = vunpack.c.l.b16 %v358
      %v583 = vunpack.c.l.b16 %v359
      %v584 = vunpack.c.l.b16 %v360
      %v585 = vpack.c.b16 %v554, %v553
      %v586 = vpack.c.b16 %v556, %v555
      %v587 = vpack.c.b16 %v558, %v557
      %v588 = vpack.c.b16 %v560, %v559
      %v589 = vpack.c.b16 %v562, %v561
      %v590 = vpack.c.b16 %v564, %v563
      %v591 = vpack.c.b16 %v566, %v565
      %v592 = vpack.c.b16 %v568, %v567
      %v593 = vpack.c.b16 %v570, %v569
      %v594 = vpack.c.b16 %v572, %v571
      %v595 = vpack.c.b16 %v574, %v573
      %v596 = vpack.c.b16 %v576, %v575
      %v597 = vpack.c.b16 %v578, %v577
      %v598 = vpack.c.b16 %v580, %v579
      %v599 = vpack.c.b16 %v582, %v581
      %v600 = vpack.c.b16 %v584, %v583
      %617 = vmatprep.subr.bf16.mxu0 0
      %618 = vmatpush1.bf16.msra.mxu0 %v592
      %619 = vmatprep.subr.bf16.mxu0 0
      %620 = vmatpush1.bf16.msra.mxu0 %v591
      %621 = vmatprep.subr.bf16.mxu0 0
      %622 = vmatpush1.bf16.msra.mxu0 %v590
      %623 = vmatprep.subr.bf16.mxu0 0
      %624 = vmatpush1.bf16.msra.mxu0 %v589
      %625 = vmatprep.subr.bf16.mxu0 0
      %626 = vmatpush1.bf16.msra.mxu0 %v588
      %627 = vmatprep.subr.bf16.mxu0 0
      %628 = vmatpush1.bf16.msra.mxu0 %v587
      %629 = vmatprep.subr.bf16.mxu0 0
      %630 = vmatpush1.bf16.msra.mxu0 %v586
      %631 = vmatprep.subr.bf16.mxu0 0
      %632 = vmatpush1.bf16.msra.mxu0 %v585
      %633 = vmatprep.subr.bf16.mxu0 0
      %634 = vmatpush2.bf16.msra.mxu0 %v600
      %635 = vmatprep.subr.bf16.mxu0 0
      %636 = vmatpush2.bf16.msra.mxu0 %v599
      %637 = vmatprep.subr.bf16.mxu0 0
      %638 = vmatpush2.bf16.msra.mxu0 %v598
      %639 = vmatprep.subr.bf16.mxu0 0
      %640 = vmatpush2.bf16.msra.mxu0 %v597
      %641 = vmatprep.subr.bf16.mxu0 0
      %642 = vmatpush2.bf16.msra.mxu0 %v596
      %643 = vmatprep.subr.bf16.mxu0 0
      %644 = vmatpush2.bf16.msra.mxu0 %v595
      %645 = vmatprep.subr.bf16.mxu0 0
      %646 = vmatpush2.bf16.msra.mxu0 %v594
      %647 = vmatprep.subr.bf16.mxu0 0
      %648 = vmatpush2.bf16.msra.mxu0 %v593
      %649 = vmatprep.mubr.bf16.mxu0 %v458
      %650 = vmatmul.mubr.bf16.gmra.mxu0 %v457
      %v651 = vpop.f32.mrf.mxu0
      %v652 = vadd.f32 0.0, %v651
      %v653 = vpop.f32.mrf.mxu0
      %v654 = vpop.f32.mrf.mxu0
      %v655 = vadd.f32 0.0, %v654
      %v656 = vpop.f32.mrf.mxu0
      %657 = vmatprep.mubr.bf16.mxu0 %v460
      %658 = vmatmul.mubr.bf16.gmra.mxu0 %v459
      %v659 = vpop.f32.mrf.mxu0
      %v660 = vadd.f32 0.0, %v659
      %v661 = vpop.f32.mrf.mxu0
      %v662 = vpop.f32.mrf.mxu0
      %v663 = vadd.f32 0.0, %v662
      %v664 = vpop.f32.mrf.mxu0
      %665 = vmatprep.mubr.bf16.mxu0 %v462
      %666 = vmatmul.mubr.bf16.gmra.mxu0 %v461
      %v667 = vpop.f32.mrf.mxu0
      %v668 = vadd.f32 0.0, %v667
      %v669 = vpop.f32.mrf.mxu0
      %v670 = vpop.f32.mrf.mxu0
      %v671 = vadd.f32 0.0, %v670
      %v672 = vpop.f32.mrf.mxu0
      %673 = vmatprep.mubr.bf16.mxu0 %v464
      %674 = vmatmul.mubr.bf16.gmra.mxu0 %v463
      %v675 = vpop.f32.mrf.mxu0
      %v676 = vadd.f32 0.0, %v675
      %v677 = vpop.f32.mrf.mxu0
      %v678 = vpop.f32.mrf.mxu0
      %v679 = vadd.f32 0.0, %v678
      %v680 = vpop.f32.mrf.mxu0
      %681 = vmatprep.mubr.bf16.mxu0 %v466
      %682 = vmatmul.mubr.bf16.gmra.mxu0 %v465
      %v683 = vpop.f32.mrf.mxu0
      %v684 = vadd.f32 0.0, %v683
      %v685 = vpop.f32.mrf.mxu0
      %v686 = vpop.f32.mrf.mxu0
      %v687 = vadd.f32 0.0, %v686
      %v688 = vpop.f32.mrf.mxu0
      %689 = vmatprep.mubr.bf16.mxu0 %v468
      %690 = vmatmul.mubr.bf16.gmra.mxu0 %v467
      %v691 = vpop.f32.mrf.mxu0
      %v692 = vadd.f32 0.0, %v691
      %v693 = vpop.f32.mrf.mxu0
      %v694 = vpop.f32.mrf.mxu0
      %v695 = vadd.f32 0.0, %v694
      %v696 = vpop.f32.mrf.mxu0
      %697 = vmatprep.mubr.bf16.mxu0 %v470
      %698 = vmatmul.mubr.bf16.gmra.mxu0 %v469
      %v699 = vpop.f32.mrf.mxu0
      %v700 = vadd.f32 0.0, %v699
      %v701 = vpop.f32.mrf.mxu0
      %v702 = vpop.f32.mrf.mxu0
      %v703 = vadd.f32 0.0, %v702
      %v704 = vpop.f32.mrf.mxu0
      %705 = vmatprep.mubr.bf16.mxu0 %v472
      %706 = vmatmul.mubr.bf16.gmra.mxu0 %v471
      %v707 = vpop.f32.mrf.mxu0
      %v708 = vadd.f32 0.0, %v707
      %v709 = vpop.f32.mrf.mxu0
      %v710 = vpop.f32.mrf.mxu0
      %v711 = vadd.f32 0.0, %v710
      %v712 = vpop.f32.mrf.mxu0
      %713 = vmatprep.mubr.bf16.mxu0 %v474
      %714 = vmatmul.mubr.bf16.gmra.mxu0 %v473
      %v715 = vpop.f32.mrf.mxu0
      %v716 = vadd.f32 0.0, %v715
      %v717 = vpop.f32.mrf.mxu0
      %v718 = vpop.f32.mrf.mxu0
      %v719 = vadd.f32 0.0, %v718
      %v720 = vpop.f32.mrf.mxu0
      %721 = vmatprep.mubr.bf16.mxu0 %v476
      %722 = vmatmul.mubr.bf16.gmra.mxu0 %v475
      %v723 = vpop.f32.mrf.mxu0
      %v724 = vadd.f32 0.0, %v723
      %v725 = vpop.f32.mrf.mxu0
      %v726 = vpop.f32.mrf.mxu0
      %v727 = vadd.f32 0.0, %v726
      %v728 = vpop.f32.mrf.mxu0
      %729 = vmatprep.mubr.bf16.mxu0 %v478
      %730 = vmatmul.mubr.bf16.gmra.mxu0 %v477
      %v731 = vpop.f32.mrf.mxu0
      %v732 = vadd.f32 0.0, %v731
      %v733 = vpop.f32.mrf.mxu0
      %v734 = vpop.f32.mrf.mxu0
      %v735 = vadd.f32 0.0, %v734
      %v736 = vpop.f32.mrf.mxu0
      %737 = vmatprep.mubr.bf16.mxu0 %v480
      %738 = vmatmul.mubr.bf16.gmra.mxu0 %v479
      %v739 = vpop.f32.mrf.mxu0
      %v740 = vadd.f32 0.0, %v739
      %v741 = vpop.f32.mrf.mxu0
      %v742 = vpop.f32.mrf.mxu0
      %v743 = vadd.f32 0.0, %v742
      %v744 = vpop.f32.mrf.mxu0
      %745 = vmatprep.mubr.bf16.mxu0 %v482
      %746 = vmatmul.mubr.bf16.gmra.mxu0 %v481
      %v747 = vpop.f32.mrf.mxu0
      %v748 = vadd.f32 0.0, %v747
      %v749 = vpop.f32.mrf.mxu0
      %v750 = vpop.f32.mrf.mxu0
      %v751 = vadd.f32 0.0, %v750
      %v752 = vpop.f32.mrf.mxu0
      %753 = vmatprep.mubr.bf16.mxu0 %v484
      %754 = vmatmul.mubr.bf16.gmra.mxu0 %v483
      %v755 = vpop.f32.mrf.mxu0
      %v756 = vadd.f32 0.0, %v755
      %v757 = vpop.f32.mrf.mxu0
      %v758 = vpop.f32.mrf.mxu0
      %v759 = vadd.f32 0.0, %v758
      %v760 = vpop.f32.mrf.mxu0
      %761 = vmatprep.mubr.bf16.mxu0 %v486
      %762 = vmatmul.mubr.bf16.gmra.mxu0 %v485
      %v763 = vpop.f32.mrf.mxu0
      %v764 = vadd.f32 0.0, %v763
      %v765 = vpop.f32.mrf.mxu0
      %v766 = vpop.f32.mrf.mxu0
      %v767 = vadd.f32 0.0, %v766
      %v768 = vpop.f32.mrf.mxu0
      %769 = vmatprep.mubr.bf16.mxu0 %v488
      %770 = vmatmul.mubr.bf16.gmra.mxu0 %v487
      %v771 = vpop.f32.mrf.mxu0
      %v772 = vadd.f32 0.0, %v771
      %v773 = vpop.f32.mrf.mxu0
      %v774 = vpop.f32.mrf.mxu0
      %v775 = vadd.f32 0.0, %v774
      %v776 = vpop.f32.mrf.mxu0
      %777 = vdwg.mxu0
      %v778 = vadd.f32 %v265, %v652
      %v779 = vadd.f32 %v266, %v655
      %v780 = vadd.f32 %v267, %v660
      %v781 = vadd.f32 %v268, %v663
      %v782 = vadd.f32 %v269, %v668
      %v783 = vadd.f32 %v270, %v671
      %v784 = vadd.f32 %v271, %v676
      %v785 = vadd.f32 %v272, %v679
      %v786 = vadd.f32 %v273, %v684
      %v787 = vadd.f32 %v274, %v687
      %v788 = vadd.f32 %v275, %v692
      %v789 = vadd.f32 %v276, %v695
      %v790 = vadd.f32 %v277, %v700
      %v791 = vadd.f32 %v278, %v703
      %v792 = vadd.f32 %v279, %v708
      %v793 = vadd.f32 %v280, %v711
      %v794 = vadd.f32 %v281, %v716
      %v795 = vadd.f32 %v282, %v719
      %v796 = vadd.f32 %v283, %v724
      %v797 = vadd.f32 %v284, %v727
      %v798 = vadd.f32 %v285, %v732
      %v799 = vadd.f32 %v286, %v735
      %v800 = vadd.f32 %v287, %v740
      %v801 = vadd.f32 %v288, %v743
      %v802 = vadd.f32 %v289, %v748
      %v803 = vadd.f32 %v290, %v751
      %v804 = vadd.f32 %v291, %v756
      %v805 = vadd.f32 %v292, %v759
      %v806 = vadd.f32 %v293, %v764
      %v807 = vadd.f32 %v294, %v767
      %v808 = vadd.f32 %v295, %v772
      %v809 = vadd.f32 %v296, %v775
      %vm810 = vcmask 261120
      %811 = vst.msk [vmem:[#allocation2] sm:$0xff] %vm810, %v778
      %812 = vst.msk [vmem:[#allocation2 + $0x8] sm:$0xff] %vm810, %v779
      %813 = vst.msk [vmem:[#allocation2 + $0x10] sm:$0xff] %vm810, %v780
      %814 = vst.msk [vmem:[#allocation2 + $0x18] sm:$0xff] %vm810, %v781
      %815 = vst.msk [vmem:[#allocation2 + $0x20] sm:$0xff] %vm810, %v782
      %816 = vst.msk [vmem:[#allocation2 + $0x28] sm:$0xff] %vm810, %v783
      %817 = vst.msk [vmem:[#allocation2 + $0x30] sm:$0xff] %vm810, %v784
      %818 = vst.msk [vmem:[#allocation2 + $0x38] sm:$0xff] %vm810, %v785
      %819 = vst.msk [vmem:[#allocation2 + $0x40] sm:$0xff] %vm810, %v786
      %820 = vst.msk [vmem:[#allocation2 + $0x48] sm:$0xff] %vm810, %v787
      %821 = vst.msk [vmem:[#allocation2 + $0x50] sm:$0xff] %vm810, %v788
      %822 = vst.msk [vmem:[#allocation2 + $0x58] sm:$0xff] %vm810, %v789
      %823 = vst.msk [vmem:[#allocation2 + $0x60] sm:$0xff] %vm810, %v790
      %824 = vst.msk [vmem:[#allocation2 + $0x68] sm:$0xff] %vm810, %v791
      %825 = vst.msk [vmem:[#allocation2 + $0x70] sm:$0xff] %vm810, %v792
      %826 = vst.msk [vmem:[#allocation2 + $0x78] sm:$0xff] %vm810, %v793
      %827 = vst.msk [vmem:[#allocation2 + $0x80] sm:$0xff] %vm810, %v794
      %828 = vst.msk [vmem:[#allocation2 + $0x88] sm:$0xff] %vm810, %v795
      %829 = vst.msk [vmem:[#allocation2 + $0x90] sm:$0xff] %vm810, %v796
      %830 = vst.msk [vmem:[#allocation2 + $0x98] sm:$0xff] %vm810, %v797
      %831 = vst.msk [vmem:[#allocation2 + $0xa0] sm:$0xff] %vm810, %v798
      %832 = vst.msk [vmem:[#allocation2 + $0xa8] sm:$0xff] %vm810, %v799
      %833 = vst.msk [vmem:[#allocation2 + $0xb0] sm:$0xff] %vm810, %v800
      %834 = vst.msk [vmem:[#allocation2 + $0xb8] sm:$0xff] %vm810, %v801
      %835 = vst.msk [vmem:[#allocation2 + $0xc0] sm:$0xff] %vm810, %v802
      %836 = vst.msk [vmem:[#allocation2 + $0xc8] sm:$0xff] %vm810, %v803
      %837 = vst.msk [vmem:[#allocation2 + $0xd0] sm:$0xff] %vm810, %v804
      %838 = vst.msk [vmem:[#allocation2 + $0xd8] sm:$0xff] %vm810, %v805
      %839 = vst.msk [vmem:[#allocation2 + $0xe0] sm:$0xff] %vm810, %v806
      %840 = vst.msk [vmem:[#allocation2 + $0xe8] sm:$0xff] %vm810, %v807
      %841 = vst.msk [vmem:[#allocation2 + $0xf0] sm:$0xff] %vm810, %v808
      %842 = vst.msk [vmem:[#allocation2 + $0xf8] sm:$0xff] %vm810, %v809
      // Predicated region
      $region37: #{net_forward.10} parent=31 // pred_check
        %p843 = pneg %p228
      $region38: #{net_forward.10} parent=31 // pred_check_branch
        %845 = sbr.rel (%p843) target = $region40
      $region39: #{net_forward.10} parent=31 // pred_region
        %v846 = vld [vmem:[#allocation2] sm:$0xff]
        %v847 = vld [vmem:[#allocation2 + $0x8] sm:$0xff]
        %v848 = vld [vmem:[#allocation2 + $0x10] sm:$0xff]
        %v849 = vld [vmem:[#allocation2 + $0x18] sm:$0xff]
        %v850 = vld [vmem:[#allocation2 + $0x20] sm:$0xff]
        %v851 = vld [vmem:[#allocation2 + $0x28] sm:$0xff]
        %v852 = vld [vmem:[#allocation2 + $0x30] sm:$0xff]
        %v853 = vld [vmem:[#allocation2 + $0x38] sm:$0xff]
        %v854 = vld [vmem:[#allocation2 + $0x40] sm:$0xff]
        %v855 = vld [vmem:[#allocation2 + $0x48] sm:$0xff]
        %v856 = vld [vmem:[#allocation2 + $0x50] sm:$0xff]
        %v857 = vld [vmem:[#allocation2 + $0x58] sm:$0xff]
        %v858 = vld [vmem:[#allocation2 + $0x60] sm:$0xff]
        %v859 = vld [vmem:[#allocation2 + $0x68] sm:$0xff]
        %v860 = vld [vmem:[#allocation2 + $0x70] sm:$0xff]
        %v861 = vld [vmem:[#allocation2 + $0x78] sm:$0xff]
        %v862 = vld [vmem:[#allocation2 + $0x80] sm:$0xff]
        %v863 = vld [vmem:[#allocation2 + $0x88] sm:$0xff]
        %v864 = vld [vmem:[#allocation2 + $0x90] sm:$0xff]
        %v865 = vld [vmem:[#allocation2 + $0x98] sm:$0xff]
        %v866 = vld [vmem:[#allocation2 + $0xa0] sm:$0xff]
        %v867 = vld [vmem:[#allocation2 + $0xa8] sm:$0xff]
        %v868 = vld [vmem:[#allocation2 + $0xb0] sm:$0xff]
        %v869 = vld [vmem:[#allocation2 + $0xb8] sm:$0xff]
        %v870 = vld [vmem:[#allocation2 + $0xc0] sm:$0xff]
        %v871 = vld [vmem:[#allocation2 + $0xc8] sm:$0xff]
        %v872 = vld [vmem:[#allocation2 + $0xd0] sm:$0xff]
        %v873 = vld [vmem:[#allocation2 + $0xd8] sm:$0xff]
        %v874 = vld [vmem:[#allocation2 + $0xe0] sm:$0xff]
        %v875 = vld [vmem:[#allocation2 + $0xe8] sm:$0xff]
        %v876 = vld [vmem:[#allocation2 + $0xf0] sm:$0xff]
        %v877 = vld [vmem:[#allocation2 + $0xf8] sm:$0xff]
        %v878 = vld [vmem:[%s2] sm:$0x1]
        %v880 = vlaneseq
        %v881 = vshrl.u32 %v880, 7
        %v882 = vsub.s32 0, %v881
        %v883 = vrot.slane %v878, %v882
        %v885 = vadd.f32 %v846, %v883
        %v886 = vadd.f32 %v847, %v883
        %v887 = vadd.f32 %v848, %v883
        %v888 = vadd.f32 %v849, %v883
        %v889 = vadd.f32 %v850, %v883
        %v890 = vadd.f32 %v851, %v883
        %v891 = vadd.f32 %v852, %v883
        %v892 = vadd.f32 %v853, %v883
        %v893 = vadd.f32 %v854, %v883
        %v894 = vadd.f32 %v855, %v883
        %v895 = vadd.f32 %v856, %v883
        %v896 = vadd.f32 %v857, %v883
        %v897 = vadd.f32 %v858, %v883
        %v898 = vadd.f32 %v859, %v883
        %v899 = vadd.f32 %v860, %v883
        %v900 = vadd.f32 %v861, %v883
        %v901 = vadd.f32 %v862, %v883
        %v902 = vadd.f32 %v863, %v883
        %v903 = vadd.f32 %v864, %v883
        %v904 = vadd.f32 %v865, %v883
        %v905 = vadd.f32 %v866, %v883
        %v906 = vadd.f32 %v867, %v883
        %v907 = vadd.f32 %v868, %v883
        %v908 = vadd.f32 %v869, %v883
        %v909 = vadd.f32 %v870, %v883
        %v910 = vadd.f32 %v871, %v883
        %v911 = vadd.f32 %v872, %v883
        %v912 = vadd.f32 %v873, %v883
        %v913 = vadd.f32 %v874, %v883
        %v914 = vadd.f32 %v875, %v883
        %v915 = vadd.f32 %v876, %v883
        %v916 = vadd.f32 %v877, %v883
        %v917 = vmax.f32 %v885, 0.0
        %v918 = vmax.f32 %v886, 0.0
        %v919 = vmax.f32 %v887, 0.0
        %v920 = vmax.f32 %v888, 0.0
        %v921 = vmax.f32 %v889, 0.0
        %v922 = vmax.f32 %v890, 0.0
        %v923 = vmax.f32 %v891, 0.0
        %v924 = vmax.f32 %v892, 0.0
        %v925 = vmax.f32 %v893, 0.0
        %v926 = vmax.f32 %v894, 0.0
        %v927 = vmax.f32 %v895, 0.0
        %v928 = vmax.f32 %v896, 0.0
        %v929 = vmax.f32 %v897, 0.0
        %v930 = vmax.f32 %v898, 0.0
        %v931 = vmax.f32 %v899, 0.0
        %v932 = vmax.f32 %v900, 0.0
        %v933 = vmax.f32 %v901, 0.0
        %v934 = vmax.f32 %v902, 0.0
        %v935 = vmax.f32 %v903, 0.0
        %v936 = vmax.f32 %v904, 0.0
        %v937 = vmax.f32 %v905, 0.0
        %v938 = vmax.f32 %v906, 0.0
        %v939 = vmax.f32 %v907, 0.0
        %v940 = vmax.f32 %v908, 0.0
        %v941 = vmax.f32 %v909, 0.0
        %v942 = vmax.f32 %v910, 0.0
        %v943 = vmax.f32 %v911, 0.0
        %v944 = vmax.f32 %v912, 0.0
        %v945 = vmax.f32 %v913, 0.0
        %v946 = vmax.f32 %v914, 0.0
        %v947 = vmax.f32 %v915, 0.0
        %v948 = vmax.f32 %v916, 0.0
        %v949 = vpack.c.bf16 %v918, %v917
        %v950 = vpack.c.bf16 %v920, %v919
        %v951 = vpack.c.bf16 %v922, %v921
        %v952 = vpack.c.bf16 %v924, %v923
        %v953 = vpack.c.bf16 %v926, %v925
        %v954 = vpack.c.bf16 %v928, %v927
        %v955 = vpack.c.bf16 %v930, %v929
        %v956 = vpack.c.bf16 %v932, %v931
        %v957 = vpack.c.bf16 %v934, %v933
        %v958 = vpack.c.bf16 %v936, %v935
        %v959 = vpack.c.bf16 %v938, %v937
        %v960 = vpack.c.bf16 %v940, %v939
        %v961 = vpack.c.bf16 %v942, %v941
        %v962 = vpack.c.bf16 %v944, %v943
        %v963 = vpack.c.bf16 %v946, %v945
        %v964 = vpack.c.bf16 %v948, %v947
        %v981 = vunpack.c.l.b16 %v949
        %v982 = vunpack.c.h.b16 %v949
        %v983 = vunpack.c.l.b16 %v950
        %v984 = vunpack.c.h.b16 %v950
        %v985 = vunpack.c.l.b16 %v951
        %v986 = vunpack.c.h.b16 %v951
        %v987 = vunpack.c.l.b16 %v952
        %v988 = vunpack.c.h.b16 %v952
        %v989 = vunpack.c.l.b16 %v953
        %v990 = vunpack.c.h.b16 %v953
        %v991 = vunpack.c.l.b16 %v954
        %v992 = vunpack.c.h.b16 %v954
        %v993 = vunpack.c.l.b16 %v955
        %v994 = vunpack.c.h.b16 %v955
        %v995 = vunpack.c.l.b16 %v956
        %v996 = vunpack.c.h.b16 %v956
        %v997 = vunpack.c.l.b16 %v957
        %v998 = vunpack.c.h.b16 %v957
        %v999 = vunpack.c.l.b16 %v958
        %v1000 = vunpack.c.h.b16 %v958
        %v1001 = vunpack.c.l.b16 %v959
        %v1002 = vunpack.c.h.b16 %v959
        %v1003 = vunpack.c.l.b16 %v960
        %v1004 = vunpack.c.h.b16 %v960
        %v1005 = vunpack.c.l.b16 %v961
        %v1006 = vunpack.c.h.b16 %v961
        %v1007 = vunpack.c.l.b16 %v962
        %v1008 = vunpack.c.h.b16 %v962
        %v1009 = vunpack.c.l.b16 %v963
        %v1010 = vunpack.c.h.b16 %v963
        %v1011 = vunpack.c.l.b16 %v964
        %v1012 = vunpack.c.h.b16 %v964
        %v1013 = vpack.c.b16 %v981, %v981
        %v1014 = vpack.c.b16 %v982, %v982
        %v1015 = vpack.c.b16 %v983, %v983
        %v1016 = vpack.c.b16 %v984, %v984
        %v1017 = vpack.c.b16 %v985, %v985
        %v1018 = vpack.c.b16 %v986, %v986
        %v1019 = vpack.c.b16 %v987, %v987
        %v1020 = vpack.c.b16 %v988, %v988
        %v1021 = vpack.c.b16 %v989, %v989
        %v1022 = vpack.c.b16 %v990, %v990
        %v1023 = vpack.c.b16 %v991, %v991
        %v1024 = vpack.c.b16 %v992, %v992
        %v1025 = vpack.c.b16 %v993, %v993
        %v1026 = vpack.c.b16 %v994, %v994
        %v1027 = vpack.c.b16 %v995, %v995
        %v1028 = vpack.c.b16 %v996, %v996
        %v1029 = vpack.c.b16 %v997, %v997
        %v1030 = vpack.c.b16 %v998, %v998
        %v1031 = vpack.c.b16 %v999, %v999
        %v1032 = vpack.c.b16 %v1000, %v1000
        %v1033 = vpack.c.b16 %v1001, %v1001
        %v1034 = vpack.c.b16 %v1002, %v1002
        %v1035 = vpack.c.b16 %v1003, %v1003
        %v1036 = vpack.c.b16 %v1004, %v1004
        %v1037 = vpack.c.b16 %v1005, %v1005
        %v1038 = vpack.c.b16 %v1006, %v1006
        %v1039 = vpack.c.b16 %v1007, %v1007
        %v1040 = vpack.c.b16 %v1008, %v1008
        %v1041 = vpack.c.b16 %v1009, %v1009
        %v1042 = vpack.c.b16 %v1010, %v1010
        %v1043 = vpack.c.b16 %v1011, %v1011
        %v1044 = vpack.c.b16 %v1012, %v1012
        %vm1077 = vcmask 257024
        %1078 = vst.msk [vmem:[%s225] sm:$0xf] %vm1077, %v1013
        %1079 = vst.msk [vmem:[%s225 + $0x4] sm:$0xf] %vm1077, %v1014
        %1080 = vst.msk [vmem:[%s225 + $0x8] sm:$0xf] %vm1077, %v1015
        %1081 = vst.msk [vmem:[%s225 + $0xc] sm:$0xf] %vm1077, %v1016
        %1082 = vst.msk [vmem:[%s225 + $0x10] sm:$0xf] %vm1077, %v1017
        %1083 = vst.msk [vmem:[%s225 + $0x14] sm:$0xf] %vm1077, %v1018
        %1084 = vst.msk [vmem:[%s225 + $0x18] sm:$0xf] %vm1077, %v1019
        %1085 = vst.msk [vmem:[%s225 + $0x1c] sm:$0xf] %vm1077, %v1020
        %1086 = vst.msk [vmem:[%s225 + $0x20] sm:$0xf] %vm1077, %v1021
        %1087 = vst.msk [vmem:[%s225 + $0x24] sm:$0xf] %vm1077, %v1022
        %1088 = vst.msk [vmem:[%s225 + $0x28] sm:$0xf] %vm1077, %v1023
        %1089 = vst.msk [vmem:[%s225 + $0x2c] sm:$0xf] %vm1077, %v1024
        %1090 = vst.msk [vmem:[%s225 + $0x30] sm:$0xf] %vm1077, %v1025
        %1091 = vst.msk [vmem:[%s225 + $0x34] sm:$0xf] %vm1077, %v1026
        %1092 = vst.msk [vmem:[%s225 + $0x38] sm:$0xf] %vm1077, %v1027
        %1093 = vst.msk [vmem:[%s225 + $0x3c] sm:$0xf] %vm1077, %v1028
        %1094 = vst.msk [vmem:[%s225 + $0x40] sm:$0xf] %vm1077, %v1029
        %1095 = vst.msk [vmem:[%s225 + $0x44] sm:$0xf] %vm1077, %v1030
        %1096 = vst.msk [vmem:[%s225 + $0x48] sm:$0xf] %vm1077, %v1031
        %1097 = vst.msk [vmem:[%s225 + $0x4c] sm:$0xf] %vm1077, %v1032
        %1098 = vst.msk [vmem:[%s225 + $0x50] sm:$0xf] %vm1077, %v1033
        %1099 = vst.msk [vmem:[%s225 + $0x54] sm:$0xf] %vm1077, %v1034
        %1100 = vst.msk [vmem:[%s225 + $0x58] sm:$0xf] %vm1077, %v1035
        %1101 = vst.msk [vmem:[%s225 + $0x5c] sm:$0xf] %vm1077, %v1036
        %1102 = vst.msk [vmem:[%s225 + $0x60] sm:$0xf] %vm1077, %v1037
        %1103 = vst.msk [vmem:[%s225 + $0x64] sm:$0xf] %vm1077, %v1038
        %1104 = vst.msk [vmem:[%s225 + $0x68] sm:$0xf] %vm1077, %v1039
        %1105 = vst.msk [vmem:[%s225 + $0x6c] sm:$0xf] %vm1077, %v1040
        %1106 = vst.msk [vmem:[%s225 + $0x70] sm:$0xf] %vm1077, %v1041
        %1107 = vst.msk [vmem:[%s225 + $0x74] sm:$0xf] %vm1077, %v1042
        %1108 = vst.msk [vmem:[%s225 + $0x78] sm:$0xf] %vm1077, %v1043
        %1109 = vst.msk [vmem:[%s225 + $0x7c] sm:$0xf] %vm1077, %v1044
      $region40: #{net_forward.10} parent=31 // pred_fallthru
        _
      %s1110 = smul.u32 32, %s18
      %p1111 = scmp.lt.s32.totalorder %s1110, 63
      %s1112 = scalar_select %p1111, %s1110, 63
      %s1113 = smul.addr %s1112, 4
      %s1114 = scalar_lea.vmem %s3, %s1113
      // Predicated region
      $region41: #{net_forward.10} parent=31 // pred_check
        %p1115 = pneg %p119
      $region42: #{net_forward.10} parent=31 // pred_check_branch
        %1117 = sbr.rel (%p1115) target = $region44
      $region43: #{net_forward.10} parent=31 // pred_region
        %s1118 = smul.u32 32, %s18
      $region44: #{net_forward.10} parent=31 // pred_fallthru
        _
    $region32: #{net_forward.10} parent=5 // pred_fallthru
      _
    %p1119 = scmp.le.s32.totalorder 2, %s9
    // Predicated region
    $region45: #{net_forward.10} parent=5 // pred_check
      %p1120 = pneg %p1119
    $region46: #{net_forward.10} parent=5 // pred_check_branch
      %1122 = sbr.rel (%p1120) target = $region48
    $region47: #{net_forward.10} parent=5 // pred_region
      %s1123 = ssub.s32 %s9, 2
      // Predicated region
      $region49: #{net_forward.10} parent=47 // pred_check
        %p1124 = pneg %p125
      $region50: #{net_forward.10} parent=47 // pred_check_branch
        %1126 = sbr.rel (%p1124) target = $region52
      $region51: #{net_forward.10} parent=47 // pred_region
        %s1127 = smul.u32 32, %s20
        %p1128 = scmp.lt.s32.totalorder %s1127, 63
        %s1129 = scalar_select %p1128, %s1127, 63
        %s1130 = smul.addr %s1129, 4
        %s1131 = scalar_lea.vmem %s3, %s1130
      $region52: #{net_forward.10} parent=47 // pred_fallthru
        _
    $region48: #{net_forward.10} parent=5 // pred_fallthru
      _
  $region6: #{net_forward.10} parent=0 // loop_footer
    %s13 = sadd.s32 1, %s9
  $region7: #{net_forward.10} parent=0 // loop_footer_branch
    %8 = sbr.rel target = $region3
  $region8: #{net_forward.10} parent=0 // loop_exit
    _

// kernel: net_forward.11
$region0: #{net_forward.11}
  #allocation0 [shape = 'u32[]', space=smem, size = 0x4, offset = 0x4, fixed_abs, tag = 'smem constant byte address 0x4 - core index']
  #allocation1 [shape = 'u32[144,128]{1,0:T(1,128)}', space=vmem, size = 0x12000, scoped, tag = 'internal scratch']
  #allocation2 [shape = 'f32[256,64]{1,0:T(8,128)}', space=vmem, size = 0x20000, scoped, tag = 'scratch operand']
  %s0 = inlined_call_operand.vmem [shape: bf16[512,384], index: 0, kind: input, shape index: {}]
  %s1 = inlined_call_operand.vmem [shape: bf16[384,64], index: 1, kind: input, shape index: {}]
  %s2 = inlined_call_operand.vmem [shape: f32[1,64], index: 2, kind: input, shape index: {}]
  %s3 = inlined_call_operand.vmem [shape: bf16[512,64], index: 3, kind: output, shape index: {}]
  %s4 = sld [smem:[#allocation0]]
  $region53: #{net_forward.11} parent=0
    _
  %s6 = ssub.s32 1, %s4
  %s7 = scalar_select 0, %s6, %s4
  loop: start=0, step=1, limit=4
  $region2: #{net_forward.11} parent=0 // loop_pre_header
    _
  $region3: #{net_forward.11} parent=0 // loop_header
    %s9 = sphi 0, %s13
    %p10 = scmp.ge.s32.totalorder %s9, 4
    %s16 = sphi 0, %s28
    %s17 = sphi 0, %s24
    %s18 = sphi 0, %s16
    %s19 = sphi 0, %s17
    %s20 = sphi 0, %s18
    %s21 = sphi 0, %s19
    %s33 = sphi 0, %s35
    %s36 = sphi 0, %s33
    %s37 = sphi 0, %s36
    %s53 = sphi 0, %s37
    %s59 = sphi 0, %s61
    %s62 = sphi 0, %s59
    %s63 = sphi 0, %s62
    %s79 = sphi 0, %s63
    %s83 = sphi 0, %s83
    %s85 = sphi 0, %s83
    %s86 = sphi 0, %s85
    %s100 = sphi 0, %s86
    %s106 = sphi 0, %s108
    %s109 = sphi 0, %s106
    %s110 = sphi 0, %s109
    %s126 = sphi 0, %s110
  $region4: #{net_forward.11} parent=0 // loop_header_branch
    %12 = sbr.rel (%p10) target = $region8
  $region5: #{net_forward.11} parent=0 // loop_body
    %s14 = ssub.s32 %s9, 1
    %s15 = ssub.s32 %s9, 2
    %s22 = sadd.s32 1, %s17
    %p23 = scmp.ge.s32.totalorder %s22, 1
    %s24 = scalar_select %p23, 0, %s22
    %s25 = sadd.s32 1, %s16
    %s26 = scalar_select %p23, %s25, %s16
    %p27 = scmp.ge.s32.totalorder %s26, 2
    %s28 = scalar_select %p27, 0, %s26
    %s29 = ssub.s32 %s16, %s28
    %s30 = ssub.s32 %s17, %s24
    %s31 = sor.u32 %s29, %s30
    %p32 = scmp.eq.s32.totalorder %s31, 0
    %s34 = sadd.s32 %s33, 1
    %s35 = scalar_select %p32, %s33, %s34
    %p38 = pneg %p32
    %p39 = scmp.eq.s32.totalorder %s9, 1
    %p40 = por %p38, %p39
    %p41 = scmp.ne.s32.totalorder %s33, %s36
    %p42 = scmp.eq.s32.totalorder %s9, 0
    %p43 = por %p41, %p42
    %p44 = scmp.ne.s32.totalorder %s33, %s36
    %p45 = scmp.eq.s32.totalorder %s14, 1
    %p46 = por %p44, %p45
    %p47 = scmp.ne.s32.totalorder %s36, %s37
    %p48 = scmp.eq.s32.totalorder %s14, 0
    %p49 = por %p47, %p48
    %p50 = scmp.ne.s32.totalorder %s36, %s37
    %p51 = scmp.eq.s32.totalorder %s15, 1
    %p52 = por %p50, %p51
    %p54 = scmp.ne.s32.totalorder %s37, %s53
    %p55 = scmp.eq.s32.totalorder %s15, 0
    %p56 = por %p54, %p55
    %s57 = ssub.s32 %s17, %s24
    %p58 = scmp.eq.s32.totalorder %s57, 0
    %s60 = sadd.s32 %s59, 1
    %s61 = scalar_select %p58, %s59, %s60
    %p64 = pneg %p58
    %p65 = scmp.eq.s32.totalorder %s9, 1
    %p66 = por %p64, %p65
    %p67 = scmp.ne.s32.totalorder %s59, %s62
    %p68 = scmp.eq.s32.totalorder %s9, 0
    %p69 = por %p67, %p68
    %p70 = scmp.ne.s32.totalorder %s59, %s62
    %p71 = scmp.eq.s32.totalorder %s14, 1
    %p72 = por %p70, %p71
    %p73 = scmp.ne.s32.totalorder %s62, %s63
    %p74 = scmp.eq.s32.totalorder %s14, 0
    %p75 = por %p73, %p74
    %p76 = scmp.ne.s32.totalorder %s62, %s63
    %p77 = scmp.eq.s32.totalorder %s15, 1
    %p78 = por %p76, %p77
    %p80 = scmp.ne.s32.totalorder %s63, %s79
    %p81 = scmp.eq.s32.totalorder %s15, 0
    %p82 = por %p80, %p81
    %s84 = sadd.s32 %s83, 1
    %p87 = scmp.eq.s32.totalorder %s9, 1
    %p88 = scmp.ne.s32.totalorder %s83, %s85
    %p89 = scmp.eq.s32.totalorder %s9, 0
    %p90 = por %p88, %p89
    %p91 = scmp.ne.s32.totalorder %s83, %s85
    %p92 = scmp.eq.s32.totalorder %s14, 1
    %p93 = por %p91, %p92
    %p94 = scmp.ne.s32.totalorder %s85, %s86
    %p95 = scmp.eq.s32.totalorder %s14, 0
    %p96 = por %p94, %p95
    %p97 = scmp.ne.s32.totalorder %s85, %s86
    %p98 = scmp.eq.s32.totalorder %s15, 1
    %p99 = por %p97, %p98
    %p101 = scmp.ne.s32.totalorder %s86, %s100
    %p102 = scmp.eq.s32.totalorder %s15, 0
    %p103 = por %p101, %p102
    %s104 = ssub.s32 %s16, %s28
    %p105 = scmp.eq.s32.totalorder %s104, 0
    %s107 = sadd.s32 %s106, 1
    %s108 = scalar_select %p105, %s106, %s107
    %p111 = pneg %p105
    %p112 = scmp.eq.s32.totalorder %s9, 1
    %p113 = por %p111, %p112
    %p114 = scmp.ne.s32.totalorder %s106, %s109
    %p115 = scmp.eq.s32.totalorder %s9, 0
    %p116 = por %p114, %p115
    %p117 = scmp.ne.s32.totalorder %s106, %s109
    %p118 = scmp.eq.s32.totalorder %s14, 1
    %p119 = por %p117, %p118
    %p120 = scmp.ne.s32.totalorder %s109, %s110
    %p121 = scmp.eq.s32.totalorder %s14, 0
    %p122 = por %p120, %p121
    %p123 = scmp.ne.s32.totalorder %s109, %s110
    %p124 = scmp.eq.s32.totalorder %s15, 1
    %p125 = por %p123, %p124
    %p127 = scmp.ne.s32.totalorder %s110, %s126
    %p128 = scmp.eq.s32.totalorder %s15, 0
    %p129 = por %p127, %p128
    %p130 = scmp.le.s32.totalorder 1, %s9
    %p131 = scmp.lt.s32.totalorder %s9, 3
    %p132 = pnand %p130, %p131
    %p133 = pneg %p132
    // Predicated region
    $region9: #{net_forward.11} parent=5 // pred_check
      _
    $region10: #{net_forward.11} parent=5 // pred_check_branch
      %135 = sbr.rel (%p132) target = $region12
    $region11: #{net_forward.11} parent=5 // pred_region
      %s136 = ssub.s32 %s9, 1
      // Predicated region
      $region13: #{net_forward.11} parent=11 // pred_check
        %p137 = pneg %p75
      $region14: #{net_forward.11} parent=11 // pred_check_branch
        %139 = sbr.rel (%p137) target = $region16
      $region15: #{net_forward.11} parent=11 // pred_region
        %s140 = smul.u32 48, %s19
        %p141 = scmp.lt.s32.totalorder %s140, 47
        %s142 = scalar_select %p141, %s140, 47
        %s143 = smul.addr %s142, 4
        %s144 = scalar_lea.vmem %s1, %s143
        %s145 = smul.u32 48, %s19
      $region16: #{net_forward.11} parent=11 // pred_fallthru
        _
      // Predicated region
      $region17: #{net_forward.11} parent=11 // pred_check
        %p146 = pneg %p96
      $region18: #{net_forward.11} parent=11 // pred_check_branch
        %148 = sbr.rel (%p146) target = $region20
      $region19: #{net_forward.11} parent=11 // pred_region
        _
      $region20: #{net_forward.11} parent=11 // pred_fallthru
        _
    $region12: #{net_forward.11} parent=5 // pred_fallthru
      _
    %p149 = scmp.lt.s32.totalorder %s9, 2
    // Predicated region
    $region21: #{net_forward.11} parent=5 // pred_check
      %p150 = pneg %p149
    $region22: #{net_forward.11} parent=5 // pred_check_branch
      %152 = sbr.rel (%p150) target = $region24
    $region23: #{net_forward.11} parent=5 // pred_region
      // Predicated region
      $region25: #{net_forward.11} parent=23 // pred_check
        %p153 = pneg %p43
      $region26: #{net_forward.11} parent=23 // pred_check_branch
        %155 = sbr.rel (%p153) target = $region28
      $region27: #{net_forward.11} parent=23 // pred_region
        %s156 = smul.u32 32, %s16
        %s157 = smul.u32 3, %s17
        %p158 = scmp.lt.s32.totalorder %s156, 63
        %s159 = scalar_select %p158, %s156, 63
        %p160 = scmp.lt.s32.totalorder %s157, 2
        %s161 = scalar_select %p160, %s157, 2
        %s162 = smul.addr %s159, 3
        %s163 = sadd.s32 %s161, %s162
        %s164 = smul.addr %s163, 4
        %s165 = scalar_lea.vmem %s0, %s164
        %s166 = smul.u32 32, %s16
        %s167 = smul.u32 3, %s17
      $region28: #{net_forward.11} parent=23 // pred_fallthru
        _
    $region24: #{net_forward.11} parent=5 // pred_fallthru
      _
    %p168 = scmp.le.s32.totalorder 1, %s9
    %p169 = scmp.lt.s32.totalorder %s9, 3
    %p170 = pnand %p168, %p169
    %p171 = pneg %p170
    // Predicated region
    $region29: #{net_forward.11} parent=5 // pred_check
      _
    $region30: #{net_forward.11} parent=5 // pred_check_branch
      %173 = sbr.rel (%p170) target = $region32
    $region31: #{net_forward.11} parent=5 // pred_region
      %s174 = ssub.s32 %s9, 1
      %s175 = smul.u32 32, %s18
      %s176 = smul.u32 3, %s19
      %p177 = scmp.lt.s32.totalorder %s175, 63
      %s178 = scalar_select %p177, %s175, 63
      %p179 = scmp.lt.s32.totalorder %s176, 2
      %s180 = scalar_select %p179, %s176, 2
      %s181 = smul.addr %s178, 3
      %s182 = sadd.s32 %s180, %s181
      %s183 = smul.addr %s182, 4
      %s184 = scalar_lea.vmem %s0, %s183
      %p185 = pneg %p49
      %p186 = pneg %p46
      %s187 = smul.u32 48, %s19
      %p188 = scmp.lt.s32.totalorder %s187, 47
      %s189 = scalar_select %p188, %s187, 47
      %s190 = smul.addr %s189, 4
      %s191 = scalar_lea.vmem %s1, %s190
      %p192 = pneg %p75
      %p193 = pneg %p72
      %p194 = pneg %p96
      %p195 = pneg %p93
      %p196 = pneg %p122
      %p197 = pneg %p119
      %s198 = smul.u32 32, %s18
      %p199 = scmp.lt.s32.totalorder %s198, 63
      %s200 = scalar_select %p199, %s198, 63
      %s201 = smul.addr %s200, 4
      %s202 = scalar_lea.vmem %s3, %s201
      %s203 = smul.u32 32, %s18
      %s204 = smul.u32 3, %s19
      %p205 = scmp.lt.s32.totalorder %s203, 63
      %s206 = scalar_select %p205, %s203, 63
      %p207 = scmp.lt.s32.totalorder %s204, 2
      %s208 = scalar_select %p207, %s204, 2
      %s209 = smul.addr %s206, 3
      %s210 = sadd.s32 %s208, %s209
      %s211 = smul.addr %s210, 4
      %s212 = scalar_lea.vmem %s0, %s211
      %s213 = smul.u32 32, %s18
      %s214 = smul.u32 3, %s19
      %s215 = smul.u32 48, %s19
      %p216 = scmp.lt.s32.totalorder %s215, 47
      %s217 = scalar_select %p216, %s215, 47
      %s218 = smul.addr %s217, 4
      %s219 = scalar_lea.vmem %s1, %s218
      %s220 = smul.u32 48, %s19
      %s221 = smul.u32 32, %s18
      %p222 = scmp.lt.s32.totalorder %s221, 63
      %s223 = scalar_select %p222, %s221, 63
      %s224 = smul.addr %s223, 4
      %s225 = scalar_lea.vmem %s3, %s224
      %s226 = smul.u32 32, %s18
      %p228 = scmp.eq.s32.totalorder %s19, 0
      // Predicated region
      $region33: #{net_forward.11} parent=31 // pred_check
        %p229 = pneg %p228
      $region34: #{net_forward.11} parent=31 // pred_check_branch
        %231 = sbr.rel (%p229) target = $region36
      $region35: #{net_forward.11} parent=31 // pred_region
        %vm232 = vcmask 523264
        %233 = vst.msk [vmem:[#allocation2] sm:$0xff] %vm232, 0.0
        %234 = vst.msk [vmem:[#allocation2 + $0x8] sm:$0xff] %vm232, 0.0
        %235 = vst.msk [vmem:[#allocation2 + $0x10] sm:$0xff] %vm232, 0.0
        %236 = vst.msk [vmem:[#allocation2 + $0x18] sm:$0xff] %vm232, 0.0
        %237 = vst.msk [vmem:[#allocation2 + $0x20] sm:$0xff] %vm232, 0.0
        %238 = vst.msk [vmem:[#allocation2 + $0x28] sm:$0xff] %vm232, 0.0
        %239 = vst.msk [vmem:[#allocation2 + $0x30] sm:$0xff] %vm232, 0.0
        %240 = vst.msk [vmem:[#allocation2 + $0x38] sm:$0xff] %vm232, 0.0
        %241 = vst.msk [vmem:[#allocation2 + $0x40] sm:$0xff] %vm232, 0.0
        %242 = vst.msk [vmem:[#allocation2 + $0x48] sm:$0xff] %vm232, 0.0
        %243 = vst.msk [vmem:[#allocation2 + $0x50] sm:$0xff] %vm232, 0.0
        %244 = vst.msk [vmem:[#allocation2 + $0x58] sm:$0xff] %vm232, 0.0
        %245 = vst.msk [vmem:[#allocation2 + $0x60] sm:$0xff] %vm232, 0.0
        %246 = vst.msk [vmem:[#allocation2 + $0x68] sm:$0xff] %vm232, 0.0
        %247 = vst.msk [vmem:[#allocation2 + $0x70] sm:$0xff] %vm232, 0.0
        %248 = vst.msk [vmem:[#allocation2 + $0x78] sm:$0xff] %vm232, 0.0
        %249 = vst.msk [vmem:[#allocation2 + $0x80] sm:$0xff] %vm232, 0.0
        %250 = vst.msk [vmem:[#allocation2 + $0x88] sm:$0xff] %vm232, 0.0
        %251 = vst.msk [vmem:[#allocation2 + $0x90] sm:$0xff] %vm232, 0.0
        %252 = vst.msk [vmem:[#allocation2 + $0x98] sm:$0xff] %vm232, 0.0
        %253 = vst.msk [vmem:[#allocation2 + $0xa0] sm:$0xff] %vm232, 0.0
        %254 = vst.msk [vmem:[#allocation2 + $0xa8] sm:$0xff] %vm232, 0.0
        %255 = vst.msk [vmem:[#allocation2 + $0xb0] sm:$0xff] %vm232, 0.0
        %256 = vst.msk [vmem:[#allocation2 + $0xb8] sm:$0xff] %vm232, 0.0
        %257 = vst.msk [vmem:[#allocation2 + $0xc0] sm:$0xff] %vm232, 0.0
        %258 = vst.msk [vmem:[#allocation2 + $0xc8] sm:$0xff] %vm232, 0.0
        %259 = vst.msk [vmem:[#allocation2 + $0xd0] sm:$0xff] %vm232, 0.0
        %260 = vst.msk [vmem:[#allocation2 + $0xd8] sm:$0xff] %vm232, 0.0
        %261 = vst.msk [vmem:[#allocation2 + $0xe0] sm:$0xff] %vm232, 0.0
        %262 = vst.msk [vmem:[#allocation2 + $0xe8] sm:$0xff] %vm232, 0.0
        %263 = vst.msk [vmem:[#allocation2 + $0xf0] sm:$0xff] %vm232, 0.0
        %264 = vst.msk [vmem:[#allocation2 + $0xf8] sm:$0xff] %vm232, 0.0
      $region36: #{net_forward.11} parent=31 // pred_fallthru
        _
      %v265 = vld [vmem:[#allocation2] sm:$0xff]
      %v266 = vld [vmem:[#allocation2 + $0x8] sm:$0xff]
      %v267 = vld [vmem:[#allocation2 + $0x10] sm:$0xff]
      %v268 = vld [vmem:[#allocation2 + $0x18] sm:$0xff]
      %v269 = vld [vmem:[#allocation2 + $0x20] sm:$0xff]
      %v270 = vld [vmem:[#allocation2 + $0x28] sm:$0xff]
      %v271 = vld [vmem:[#allocation2 + $0x30] sm:$0xff]
      %v272 = vld [vmem:[#allocation2 + $0x38] sm:$0xff]
      %v273 = vld [vmem:[#allocation2 + $0x40] sm:$0xff]
      %v274 = vld [vmem:[#allocation2 + $0x48] sm:$0xff]
      %v275 = vld [vmem:[#allocation2 + $0x50] sm:$0xff]
      %v276 = vld [vmem:[#allocation2 + $0x58] sm:$0xff]
      %v277 = vld [vmem:[#allocation2 + $0x60] sm:$0xff]
      %v278 = vld [vmem:[#allocation2 + $0x68] sm:$0xff]
      %v279 = vld [vmem:[#allocation2 + $0x70] sm:$0xff]
      %v280 = vld [vmem:[#allocation2 + $0x78] sm:$0xff]
      %v281 = vld [vmem:[#allocation2 + $0x80] sm:$0xff]
      %v282 = vld [vmem:[#allocation2 + $0x88] sm:$0xff]
      %v283 = vld [vmem:[#allocation2 + $0x90] sm:$0xff]
      %v284 = vld [vmem:[#allocation2 + $0x98] sm:$0xff]
      %v285 = vld [vmem:[#allocation2 + $0xa0] sm:$0xff]
      %v286 = vld [vmem:[#allocation2 + $0xa8] sm:$0xff]
      %v287 = vld [vmem:[#allocation2 + $0xb0] sm:$0xff]
      %v288 = vld [vmem:[#allocation2 + $0xb8] sm:$0xff]
      %v289 = vld [vmem:[#allocation2 + $0xc0] sm:$0xff]
      %v290 = vld [vmem:[#allocation2 + $0xc8] sm:$0xff]
      %v291 = vld [vmem:[#allocation2 + $0xd0] sm:$0xff]
      %v292 = vld [vmem:[#allocation2 + $0xd8] sm:$0xff]
      %v293 = vld [vmem:[#allocation2 + $0xe0] sm:$0xff]
      %v294 = vld [vmem:[#allocation2 + $0xe8] sm:$0xff]
      %v295 = vld [vmem:[#allocation2 + $0xf0] sm:$0xff]
      %v296 = vld [vmem:[#allocation2 + $0xf8] sm:$0xff]
      %v297 = vld [vmem:[%s212] sm:$0xff]
      %v298 = vld [vmem:[%s212 + $0x8] sm:$0xf]
      %v299 = vld [vmem:[%s212 + $0xc] sm:$0xff]
      %v300 = vld [vmem:[%s212 + $0x14] sm:$0xf]
      %v301 = vld [vmem:[%s212 + $0x18] sm:$0xff]
      %v302 = vld [vmem:[%s212 + $0x20] sm:$0xf]
      %v303 = vld [vmem:[%s212 + $0x24] sm:$0xff]
      %v304 = vld [vmem:[%s212 + $0x2c] sm:$0xf]
      %v305 = vld [vmem:[%s212 + $0x30] sm:$0xff]
      %v306 = vld [vmem:[%s212 + $0x38] sm:$0xf]
      %v307 = vld [vmem:[%s212 + $0x3c] sm:$0xff]
      %v308 = vld [vmem:[%s212 + $0x44] sm:$0xf]
      %v309 = vld [vmem:[%s212 + $0x48] sm:$0xff]
      %v310 = vld [vmem:[%s212 + $0x50] sm:$0xf]
      %v311 = vld [vmem:[%s212 + $0x54] sm:$0xff]
      %v312 = vld [vmem:[%s212 + $0x5c] sm:$0xf]
      %v313 = vld [vmem:[%s212 + $0x60] sm:$0xff]
      %v314 = vld [vmem:[%s212 + $0x68] sm:$0xf]
      %v315 = vld [vmem:[%s212 + $0x6c] sm:$0xff]
      %v316 = vld [vmem:[%s212 + $0x74] sm:$0xf]
      %v317 = vld [vmem:[%s212 + $0x78] sm:$0xff]
      %v318 = vld [vmem:[%s212 + $0x80] sm:$0xf]
      %v319 = vld [vmem:[%s212 + $0x84] sm:$0xff]
      %v320 = vld [vmem:[%s212 + $0x8c] sm:$0xf]
      %v321 = vld [vmem:[%s212 + $0x90] sm:$0xff]
      %v322 = vld [vmem:[%s212 + $0x98] sm:$0xf]
      %v323 = vld [vmem:[%s212 + $0x9c] sm:$0xff]
      %v324 = vld [vmem:[%s212 + $0xa4] sm:$0xf]
      %v325 = vld [vmem:[%s212 + $0xa8] sm:$0xff]
      %v326 = vld [vmem:[%s212 + $0xb0] sm:$0xf]
      %v327 = vld [vmem:[%s212 + $0xb4] sm:$0xff]
      %v328 = vld [vmem:[%s212 + $0xbc] sm:$0xf]
      %v329 = vld [vmem:[%s212 + $0xc0] sm:$0xff]
      %v330 = vld [vmem:[%s212 + $0xc8] sm:$0xf]
      %v331 = vld [vmem:[%s212 + $0xcc] sm:$0xff]
      %v332 = vld [vmem:[%s212 + $0xd4] sm:$0xf]
      %v333 = vld [vmem:[%s212 + $0xd8] sm:$0xff]
      %v334 = vld [vmem:[%s212 + $0xe0] sm:$0xf]
      %v335 = vld [vmem:[%s212 + $0xe4] sm:$0xff]
      %v336 = vld [vmem:[%s212 + $0xec] sm:$0xf]
      %v337 = vld [vmem:[%s212 + $0xf0] sm:$0xff]
      %v338 = vld [vmem:[%s212 + $0xf8] sm:$0xf]
      %v339 = vld [vmem:[%s212 + $0xfc] sm:$0xff]
      %v340 = vld [vmem:[%s212 + $0x104] sm:$0xf]
      %v341 = vld [vmem:[%s212 + $0x108] sm:$0xff]
      %v342 = vld [vmem:[%s212 + $0x110] sm:$0xf]
      %v343 = vld [vmem:[%s212 + $0x114] sm:$0xff]
      %v344 = vld [vmem:[%s212 + $0x11c] sm:$0xf]
      %v345 = vld [vmem:[%s212 + $0x120] sm:$0xff]
      %v346 = vld [vmem:[%s212 + $0x128] sm:$0xf]
      %v347 = vld [vmem:[%s212 + $0x12c] sm:$0xff]
      %v348 = vld [vmem:[%s212 + $0x134] sm:$0xf]
      %v349 = vld [vmem:[%s212 + $0x138] sm:$0xff]
      %v350 = vld [vmem:[%s212 + $0x140] sm:$0xf]
      %v351 = vld [vmem:[%s212 + $0x144] sm:$0xff]
      %v352 = vld [vmem:[%s212 + $0x14c] sm:$0xf]
      %v353 = vld [vmem:[%s212 + $0x150] sm:$0xff]
      %v354 = vld [vmem:[%s212 + $0x158] sm:$0xf]
      %v355 = vld [vmem:[%s212 + $0x15c] sm:$0xff]
      %v356 = vld [vmem:[%s212 + $0x164] sm:$0xf]
      %v357 = vld [vmem:[%s212 + $0x168] sm:$0xff]
      %v358 = vld [vmem:[%s212 + $0x170] sm:$0xf]
      %v359 = vld [vmem:[%s212 + $0x174] sm:$0xff]
      %v360 = vld [vmem:[%s212 + $0x17c] sm:$0xf]
      %v361 = vld [vmem:[%s219] sm:$0xf]
      %v362 = vld [vmem:[%s219 + $0x4] sm:$0xf]
      %v363 = vld [vmem:[%s219 + $0x8] sm:$0xf]
      %v364 = vld [vmem:[%s219 + $0xc] sm:$0xf]
      %v365 = vld [vmem:[%s219 + $0x10] sm:$0xf]
      %v366 = vld [vmem:[%s219 + $0x14] sm:$0xf]
      %v367 = vld [vmem:[%s219 + $0x18] sm:$0xf]
      %v368 = vld [vmem:[%s219 + $0x1c] sm:$0xf]
      %v369 = vld [vmem:[%s219 + $0x20] sm:$0xf]
      %v370 = vld [vmem:[%s219 + $0x24] sm:$0xf]
      %v371 = vld [vmem:[%s219 + $0x28] sm:$0xf]
      %v372 = vld [vmem:[%s219 + $0x2c] sm:$0xf]
      %v373 = vld [vmem:[%s219 + $0x30] sm:$0xf]
      %v374 = vld [vmem:[%s219 + $0x34] sm:$0xf]
      %v375 = vld [vmem:[%s219 + $0x38] sm:$0xf]
      %v376 = vld [vmem:[%s219 + $0x3c] sm:$0xf]
      %v377 = vld [vmem:[%s219 + $0x40] sm:$0xf]
      %v378 = vld [vmem:[%s219 + $0x44] sm:$0xf]
      %v379 = vld [vmem:[%s219 + $0x48] sm:$0xf]
      %v380 = vld [vmem:[%s219 + $0x4c] sm:$0xf]
      %v381 = vld [vmem:[%s219 + $0x50] sm:$0xf]
      %v382 = vld [vmem:[%s219 + $0x54] sm:$0xf]
      %v383 = vld [vmem:[%s219 + $0x58] sm:$0xf]
      %v384 = vld [vmem:[%s219 + $0x5c] sm:$0xf]
      %v385 = vld [vmem:[%s219 + $0x60] sm:$0xf]
      %v386 = vld [vmem:[%s219 + $0x64] sm:$0xf]
      %v387 = vld [vmem:[%s219 + $0x68] sm:$0xf]
      %v388 = vld [vmem:[%s219 + $0x6c] sm:$0xf]
      %v389 = vld [vmem:[%s219 + $0x70] sm:$0xf]
      %v390 = vld [vmem:[%s219 + $0x74] sm:$0xf]
      %v391 = vld [vmem:[%s219 + $0x78] sm:$0xf]
      %v392 = vld [vmem:[%s219 + $0x7c] sm:$0xf]
      %v393 = vld [vmem:[%s219 + $0x80] sm:$0xf]
      %v394 = vld [vmem:[%s219 + $0x84] sm:$0xf]
      %v395 = vld [vmem:[%s219 + $0x88] sm:$0xf]
      %v396 = vld [vmem:[%s219 + $0x8c] sm:$0xf]
      %v397 = vld [vmem:[%s219 + $0x90] sm:$0xf]
      %v398 = vld [vmem:[%s219 + $0x94] sm:$0xf]
      %v399 = vld [vmem:[%s219 + $0x98] sm:$0xf]
      %v400 = vld [vmem:[%s219 + $0x9c] sm:$0xf]
      %v401 = vld [vmem:[%s219 + $0xa0] sm:$0xf]
      %v402 = vld [vmem:[%s219 + $0xa4] sm:$0xf]
      %v403 = vld [vmem:[%s219 + $0xa8] sm:$0xf]
      %v404 = vld [vmem:[%s219 + $0xac] sm:$0xf]
      %v405 = vld [vmem:[%s219 + $0xb0] sm:$0xf]
      %v406 = vld [vmem:[%s219 + $0xb4] sm:$0xf]
      %v407 = vld [vmem:[%s219 + $0xb8] sm:$0xf]
      %v408 = vld [vmem:[%s219 + $0xbc] sm:$0xf]
      %v473 = vunpack.c.l.b16 %v297
      %v474 = vunpack.c.h.b16 %v297
      %v475 = vunpack.c.l.b16 %v298
      %v476 = vunpack.c.l.b16 %v299
      %v477 = vunpack.c.h.b16 %v299
      %v478 = vunpack.c.l.b16 %v300
      %v479 = vunpack.c.l.b16 %v301
      %v480 = vunpack.c.h.b16 %v301
      %v481 = vunpack.c.l.b16 %v302
      %v482 = vunpack.c.l.b16 %v303
      %v483 = vunpack.c.h.b16 %v303
      %v484 = vunpack.c.l.b16 %v304
      %v485 = vunpack.c.l.b16 %v305
      %v486 = vunpack.c.h.b16 %v305
      %v487 = vunpack.c.l.b16 %v306
      %v488 = vunpack.c.l.b16 %v307
      %v489 = vunpack.c.h.b16 %v307
      %v490 = vunpack.c.l.b16 %v308
      %v491 = vunpack.c.l.b16 %v309
      %v492 = vunpack.c.h.b16 %v309
      %v493 = vunpack.c.l.b16 %v310
      %v494 = vunpack.c.l.b16 %v311
      %v495 = vunpack.c.h.b16 %v311
      %v496 = vunpack.c.l.b16 %v312
      %v497 = vunpack.c.l.b16 %v313
      %v498 = vunpack.c.h.b16 %v313
      %v499 = vunpack.c.l.b16 %v314
      %v500 = vunpack.c.l.b16 %v315
      %v501 = vunpack.c.h.b16 %v315
      %v502 = vunpack.c.l.b16 %v316
      %v503 = vunpack.c.l.b16 %v317
      %v504 = vunpack.c.h.b16 %v317
      %v505 = vunpack.c.l.b16 %v318
      %v506 = vunpack.c.l.b16 %v319
      %v507 = vunpack.c.h.b16 %v319
      %v508 = vunpack.c.l.b16 %v320
      %v509 = vunpack.c.l.b16 %v321
      %v510 = vunpack.c.h.b16 %v321
      %v511 = vunpack.c.l.b16 %v322
      %v512 = vunpack.c.l.b16 %v323
      %v513 = vunpack.c.h.b16 %v323
      %v514 = vunpack.c.l.b16 %v324
      %v515 = vunpack.c.l.b16 %v325
      %v516 = vunpack.c.h.b16 %v325
      %v517 = vunpack.c.l.b16 %v326
      %v518 = vunpack.c.l.b16 %v327
      %v519 = vunpack.c.h.b16 %v327
      %v520 = vunpack.c.l.b16 %v328
      %v521 = vunpack.c.l.b16 %v329
      %v522 = vunpack.c.h.b16 %v329
      %v523 = vunpack.c.l.b16 %v330
      %v524 = vunpack.c.l.b16 %v331
      %v525 = vunpack.c.h.b16 %v331
      %v526 = vunpack.c.l.b16 %v332
      %v527 = vunpack.c.l.b16 %v333
      %v528 = vunpack.c.h.b16 %v333
      %v529 = vunpack.c.l.b16 %v334
      %v530 = vunpack.c.l.b16 %v335
      %v531 = vunpack.c.h.b16 %v335
      %v532 = vunpack.c.l.b16 %v336
      %v533 = vunpack.c.l.b16 %v337
      %v534 = vunpack.c.h.b16 %v337
      %v535 = vunpack.c.l.b16 %v338
      %v536 = vunpack.c.l.b16 %v339
      %v537 = vunpack.c.h.b16 %v339
      %v538 = vunpack.c.l.b16 %v340
      %v539 = vunpack.c.l.b16 %v341
      %v540 = vunpack.c.h.b16 %v341
      %v541 = vunpack.c.l.b16 %v342
      %v542 = vunpack.c.l.b16 %v343
      %v543 = vunpack.c.h.b16 %v343
      %v544 = vunpack.c.l.b16 %v344
      %v545 = vunpack.c.l.b16 %v345
      %v546 = vunpack.c.h.b16 %v345
      %v547 = vunpack.c.l.b16 %v346
      %v548 = vunpack.c.l.b16 %v347
      %v549 = vunpack.c.h.b16 %v347
      %v550 = vunpack.c.l.b16 %v348
      %v551 = vunpack.c.l.b16 %v349
      %v552 = vunpack.c.h.b16 %v349
      %v553 = vunpack.c.l.b16 %v350
      %v554 = vunpack.c.l.b16 %v351
      %v555 = vunpack.c.h.b16 %v351
      %v556 = vunpack.c.l.b16 %v352
      %v557 = vunpack.c.l.b16 %v353
      %v558 = vunpack.c.h.b16 %v353
      %v559 = vunpack.c.l.b16 %v354
      %v560 = vunpack.c.l.b16 %v355
      %v561 = vunpack.c.h.b16 %v355
      %v562 = vunpack.c.l.b16 %v356
      %v563 = vunpack.c.l.b16 %v357
      %v564 = vunpack.c.h.b16 %v357
      %v565 = vunpack.c.l.b16 %v358
      %v566 = vunpack.c.l.b16 %v359
      %v567 = vunpack.c.h.b16 %v359
      %v568 = vunpack.c.l.b16 %v360
      %v569 = vpack.c.b16 %v476, %v473
      %v570 = vpack.c.b16 %v477, %v474
      %v571 = vpack.c.b16 %v478, %v475
      %v572 = vpack.c.b16 %v482, %v479
      %v573 = vpack.c.b16 %v483, %v480
      %v574 = vpack.c.b16 %v484, %v481
      %v575 = vpack.c.b16 %v488, %v485
      %v576 = vpack.c.b16 %v489, %v486
      %v577 = vpack.c.b16 %v490, %v487
      %v578 = vpack.c.b16 %v494, %v491
      %v579 = vpack.c.b16 %v495, %v492
      %v580 = vpack.c.b16 %v496, %v493
      %v581 = vpack.c.b16 %v500, %v497
      %v582 = vpack.c.b16 %v501, %v498
      %v583 = vpack.c.b16 %v502, %v499
      %v584 = vpack.c.b16 %v506, %v503
      %v585 = vpack.c.b16 %v507, %v504
      %v586 = vpack.c.b16 %v508, %v505
      %v587 = vpack.c.b16 %v512, %v509
      %v588 = vpack.c.b16 %v513, %v510
      %v589 = vpack.c.b16 %v514, %v511
      %v590 = vpack.c.b16 %v518, %v515
      %v591 = vpack.c.b16 %v519, %v516
      %v592 = vpack.c.b16 %v520, %v517
      %v593 = vpack.c.b16 %v524, %v521
      %v594 = vpack.c.b16 %v525, %v522
      %v595 = vpack.c.b16 %v526, %v523
      %v596 = vpack.c.b16 %v530, %v527
      %v597 = vpack.c.b16 %v531, %v528
      %v598 = vpack.c.b16 %v532, %v529
      %v599 = vpack.c.b16 %v536, %v533
      %v600 = vpack.c.b16 %v537, %v534
      %v601 = vpack.c.b16 %v538, %v535
      %v602 = vpack.c.b16 %v542, %v539
      %v603 = vpack.c.b16 %v543, %v540
      %v604 = vpack.c.b16 %v544, %v541
      %v605 = vpack.c.b16 %v548, %v545
      %v606 = vpack.c.b16 %v549, %v546
      %v607 = vpack.c.b16 %v550, %v547
      %v608 = vpack.c.b16 %v554, %v551
      %v609 = vpack.c.b16 %v555, %v552
      %v610 = vpack.c.b16 %v556, %v553
      %v611 = vpack.c.b16 %v560, %v557
      %v612 = vpack.c.b16 %v561, %v558
      %v613 = vpack.c.b16 %v562, %v559
      %v614 = vpack.c.b16 %v566, %v563
      %v615 = vpack.c.b16 %v567, %v564
      %v616 = vpack.c.b16 %v568, %v565
      %v713 = vunpack.c.l.b16 %v361
      %v714 = vunpack.c.l.b16 %v362
      %v715 = vunpack.c.l.b16 %v363
      %v716 = vunpack.c.l.b16 %v364
      %v717 = vunpack.c.l.b16 %v365
      %v718 = vunpack.c.l.b16 %v366
      %v719 = vunpack.c.l.b16 %v367
      %v720 = vunpack.c.l.b16 %v368
      %v721 = vunpack.c.l.b16 %v369
      %v722 = vunpack.c.l.b16 %v370
      %v723 = vunpack.c.l.b16 %v371
      %v724 = vunpack.c.l.b16 %v372
      %v725 = vunpack.c.l.b16 %v373
      %v726 = vunpack.c.l.b16 %v374
      %v727 = vunpack.c.l.b16 %v375
      %v728 = vunpack.c.l.b16 %v376
      %v729 = vunpack.c.l.b16 %v377
      %v730 = vunpack.c.l.b16 %v378
      %v731 = vunpack.c.l.b16 %v379
      %v732 = vunpack.c.l.b16 %v380
      %v733 = vunpack.c.l.b16 %v381
      %v734 = vunpack.c.l.b16 %v382
      %v735 = vunpack.c.l.b16 %v383
      %v736 = vunpack.c.l.b16 %v384
      %v737 = vunpack.c.l.b16 %v385
      %v738 = vunpack.c.l.b16 %v386
      %v739 = vunpack.c.l.b16 %v387
      %v740 = vunpack.c.l.b16 %v388
      %v741 = vunpack.c.l.b16 %v389
      %v742 = vunpack.c.l.b16 %v390
      %v743 = vunpack.c.l.b16 %v391
      %v744 = vunpack.c.l.b16 %v392
      %v745 = vunpack.c.l.b16 %v393
      %v746 = vunpack.c.l.b16 %v394
      %v747 = vunpack.c.l.b16 %v395
      %v748 = vunpack.c.l.b16 %v396
      %v749 = vunpack.c.l.b16 %v397
      %v750 = vunpack.c.l.b16 %v398
      %v751 = vunpack.c.l.b16 %v399
      %v752 = vunpack.c.l.b16 %v400
      %v753 = vunpack.c.l.b16 %v401
      %v754 = vunpack.c.l.b16 %v402
      %v755 = vunpack.c.l.b16 %v403
      %v756 = vunpack.c.l.b16 %v404
      %v757 = vunpack.c.l.b16 %v405
      %v758 = vunpack.c.l.b16 %v406
      %v759 = vunpack.c.l.b16 %v407
      %v760 = vunpack.c.l.b16 %v408
      %v761 = vpack.c.b16 %v714, %v713
      %v762 = vpack.c.b16 %v716, %v715
      %v763 = vpack.c.b16 %v718, %v717
      %v764 = vpack.c.b16 %v720, %v719
      %v765 = vpack.c.b16 %v722, %v721
      %v766 = vpack.c.b16 %v724, %v723
      %v767 = vpack.c.b16 %v726, %v725
      %v768 = vpack.c.b16 %v728, %v727
      %v769 = vpack.c.b16 %v730, %v729
      %v770 = vpack.c.b16 %v732, %v731
      %v771 = vpack.c.b16 %v734, %v733
      %v772 = vpack.c.b16 %v736, %v735
      %v773 = vpack.c.b16 %v738, %v737
      %v774 = vpack.c.b16 %v740, %v739
      %v775 = vpack.c.b16 %v742, %v741
      %v776 = vpack.c.b16 %v744, %v743
      %v777 = vpack.c.b16 %v746, %v745
      %v778 = vpack.c.b16 %v748, %v747
      %v779 = vpack.c.b16 %v750, %v749
      %v780 = vpack.c.b16 %v752, %v751
      %v781 = vpack.c.b16 %v754, %v753
      %v782 = vpack.c.b16 %v756, %v755
      %v783 = vpack.c.b16 %v758, %v757
      %v784 = vpack.c.b16 %v760, %v759
      %809 = vmatprep.subr.bf16.mxu0 0
      %810 = vmatpush1.bf16.msra.mxu0 %v768
      %811 = vmatprep.subr.bf16.mxu0 0
      %812 = vmatpush1.bf16.msra.mxu0 %v767
      %813 = vmatprep.subr.bf16.mxu0 0
      %814 = vmatpush1.bf16.msra.mxu0 %v766
      %815 = vmatprep.subr.bf16.mxu0 0
      %816 = vmatpush1.bf16.msra.mxu0 %v765
      %817 = vmatprep.subr.bf16.mxu0 0
      %818 = vmatpush1.bf16.msra.mxu0 %v764
      %819 = vmatprep.subr.bf16.mxu0 0
      %820 = vmatpush1.bf16.msra.mxu0 %v763
      %821 = vmatprep.subr.bf16.mxu0 0
      %822 = vmatpush1.bf16.msra.mxu0 %v762
      %823 = vmatprep.subr.bf16.mxu0 0
      %824 = vmatpush1.bf16.msra.mxu0 %v761
      %825 = vmatprep.subr.bf16.mxu0 0
      %826 = vmatpush2.bf16.msra.mxu0 %v776
      %827 = vmatprep.subr.bf16.mxu0 0
      %828 = vmatpush2.bf16.msra.mxu0 %v775
      %829 = vmatprep.subr.bf16.mxu0 0
      %830 = vmatpush2.bf16.msra.mxu0 %v774
      %831 = vmatprep.subr.bf16.mxu0 0
      %832 = vmatpush2.bf16.msra.mxu0 %v773
      %833 = vmatprep.subr.bf16.mxu0 0
      %834 = vmatpush2.bf16.msra.mxu0 %v772
      %835 = vmatprep.subr.bf16.mxu0 0
      %836 = vmatpush2.bf16.msra.mxu0 %v771
      %837 = vmatprep.subr.bf16.mxu0 0
      %838 = vmatpush2.bf16.msra.mxu0 %v770
      %839 = vmatprep.subr.bf16.mxu0 0
      %840 = vmatpush2.bf16.msra.mxu0 %v769
      %841 = vmatprep.mubr.bf16.mxu0 %v570
      %842 = vmatmul.mubr.bf16.gmra.mxu0 %v569
      %v843 = vpop.f32.mrf.mxu0
      %v844 = vadd.f32 0.0, %v843
      %v845 = vpop.f32.mrf.mxu0
      %v846 = vpop.f32.mrf.mxu0
      %v847 = vadd.f32 0.0, %v846
      %v848 = vpop.f32.mrf.mxu0
      %849 = vmatprep.mubr.bf16.mxu0 %v573
      %850 = vmatmul.mubr.bf16.gmra.mxu0 %v572
      %v851 = vpop.f32.mrf.mxu0
      %v852 = vadd.f32 0.0, %v851
      %v853 = vpop.f32.mrf.mxu0
      %v854 = vpop.f32.mrf.mxu0
      %v855 = vadd.f32 0.0, %v854
      %v856 = vpop.f32.mrf.mxu0
      %857 = vmatprep.mubr.bf16.mxu0 %v576
      %858 = vmatmul.mubr.bf16.gmra.mxu0 %v575
      %v859 = vpop.f32.mrf.mxu0
      %v860 = vadd.f32 0.0, %v859
      %v861 = vpop.f32.mrf.mxu0
      %v862 = vpop.f32.mrf.mxu0
      %v863 = vadd.f32 0.0, %v862
      %v864 = vpop.f32.mrf.mxu0
      %865 = vmatprep.mubr.bf16.mxu0 %v579
      %866 = vmatmul.mubr.bf16.gmra.mxu0 %v578
      %v867 = vpop.f32.mrf.mxu0
      %v868 = vadd.f32 0.0, %v867
      %v869 = vpop.f32.mrf.mxu0
      %v870 = vpop.f32.mrf.mxu0
      %v871 = vadd.f32 0.0, %v870
      %v872 = vpop.f32.mrf.mxu0
      %873 = vmatprep.mubr.bf16.mxu0 %v582
      %874 = vmatmul.mubr.bf16.gmra.mxu0 %v581
      %v875 = vpop.f32.mrf.mxu0
      %v876 = vadd.f32 0.0, %v875
      %v877 = vpop.f32.mrf.mxu0
      %v878 = vpop.f32.mrf.mxu0
      %v879 = vadd.f32 0.0, %v878
      %v880 = vpop.f32.mrf.mxu0
      %881 = vmatprep.mubr.bf16.mxu0 %v585
      %882 = vmatmul.mubr.bf16.gmra.mxu0 %v584
      %v883 = vpop.f32.mrf.mxu0
      %v884 = vadd.f32 0.0, %v883
      %v885 = vpop.f32.mrf.mxu0
      %v886 = vpop.f32.mrf.mxu0
      %v887 = vadd.f32 0.0, %v886
      %v888 = vpop.f32.mrf.mxu0
      %889 = vmatprep.mubr.bf16.mxu0 %v588
      %890 = vmatmul.mubr.bf16.gmra.mxu0 %v587
      %v891 = vpop.f32.mrf.mxu0
      %v892 = vadd.f32 0.0, %v891
      %v893 = vpop.f32.mrf.mxu0
      %v894 = vpop.f32.mrf.mxu0
      %v895 = vadd.f32 0.0, %v894
      %v896 = vpop.f32.mrf.mxu0
      %897 = vmatprep.mubr.bf16.mxu0 %v591
      %898 = vmatmul.mubr.bf16.gmra.mxu0 %v590
      %v899 = vpop.f32.mrf.mxu0
      %v900 = vadd.f32 0.0, %v899
      %v901 = vpop.f32.mrf.mxu0
      %v902 = vpop.f32.mrf.mxu0
      %v903 = vadd.f32 0.0, %v902
      %v904 = vpop.f32.mrf.mxu0
      %905 = vmatprep.mubr.bf16.mxu0 %v594
      %906 = vmatmul.mubr.bf16.gmra.mxu0 %v593
      %v907 = vpop.f32.mrf.mxu0
      %v908 = vadd.f32 0.0, %v907
      %v909 = vpop.f32.mrf.mxu0
      %v910 = vpop.f32.mrf.mxu0
      %v911 = vadd.f32 0.0, %v910
      %v912 = vpop.f32.mrf.mxu0
      %913 = vmatprep.mubr.bf16.mxu0 %v597
      %914 = vmatmul.mubr.bf16.gmra.mxu0 %v596
      %v915 = vpop.f32.mrf.mxu0
      %v916 = vadd.f32 0.0, %v915
      %v917 = vpop.f32.mrf.mxu0
      %v918 = vpop.f32.mrf.mxu0
      %v919 = vadd.f32 0.0, %v918
      %v920 = vpop.f32.mrf.mxu0
      %921 = vmatprep.mubr.bf16.mxu0 %v600
      %922 = vmatmul.mubr.bf16.gmra.mxu0 %v599
      %v923 = vpop.f32.mrf.mxu0
      %v924 = vadd.f32 0.0, %v923
      %v925 = vpop.f32.mrf.mxu0
      %v926 = vpop.f32.mrf.mxu0
      %v927 = vadd.f32 0.0, %v926
      %v928 = vpop.f32.mrf.mxu0
      %929 = vmatprep.mubr.bf16.mxu0 %v603
      %930 = vmatmul.mubr.bf16.gmra.mxu0 %v602
      %v931 = vpop.f32.mrf.mxu0
      %v932 = vadd.f32 0.0, %v931
      %v933 = vpop.f32.mrf.mxu0
      %v934 = vpop.f32.mrf.mxu0
      %v935 = vadd.f32 0.0, %v934
      %v936 = vpop.f32.mrf.mxu0
      %937 = vmatprep.mubr.bf16.mxu0 %v606
      %938 = vmatmul.mubr.bf16.gmra.mxu0 %v605
      %v939 = vpop.f32.mrf.mxu0
      %v940 = vadd.f32 0.0, %v939
      %v941 = vpop.f32.mrf.mxu0
      %v942 = vpop.f32.mrf.mxu0
      %v943 = vadd.f32 0.0, %v942
      %v944 = vpop.f32.mrf.mxu0
      %945 = vmatprep.mubr.bf16.mxu0 %v609
      %946 = vmatmul.mubr.bf16.gmra.mxu0 %v608
      %v947 = vpop.f32.mrf.mxu0
      %v948 = vadd.f32 0.0, %v947
      %v949 = vpop.f32.mrf.mxu0
      %v950 = vpop.f32.mrf.mxu0
      %v951 = vadd.f32 0.0, %v950
      %v952 = vpop.f32.mrf.mxu0
      %953 = vmatprep.mubr.bf16.mxu0 %v612
      %954 = vmatmul.mubr.bf16.gmra.mxu0 %v611
      %v955 = vpop.f32.mrf.mxu0
      %v956 = vadd.f32 0.0, %v955
      %v957 = vpop.f32.mrf.mxu0
      %v958 = vpop.f32.mrf.mxu0
      %v959 = vadd.f32 0.0, %v958
      %v960 = vpop.f32.mrf.mxu0
      %961 = vmatprep.mubr.bf16.mxu0 %v615
      %962 = vmatmul.mubr.bf16.gmra.mxu0 %v614
      %v963 = vpop.f32.mrf.mxu0
      %v964 = vadd.f32 0.0, %v963
      %v965 = vpop.f32.mrf.mxu0
      %v966 = vpop.f32.mrf.mxu0
      %v967 = vadd.f32 0.0, %v966
      %v968 = vpop.f32.mrf.mxu0
      %969 = vdwg.mxu0
      %970 = vmatprep.subr.bf16.mxu0 0
      %971 = vmatpush1.bf16.msra.mxu0 %v784
      %972 = vmatprep.subr.bf16.mxu0 0
      %973 = vmatpush1.bf16.msra.mxu0 %v783
      %974 = vmatprep.subr.bf16.mxu0 0
      %975 = vmatpush1.bf16.msra.mxu0 %v782
      %976 = vmatprep.subr.bf16.mxu0 0
      %977 = vmatpush1.bf16.msra.mxu0 %v781
      %978 = vmatprep.subr.bf16.mxu0 0
      %979 = vmatpush1.bf16.msra.mxu0 %v780
      %980 = vmatprep.subr.bf16.mxu0 0
      %981 = vmatpush1.bf16.msra.mxu0 %v779
      %982 = vmatprep.subr.bf16.mxu0 0
      %983 = vmatpush1.bf16.msra.mxu0 %v778
      %984 = vmatprep.subr.bf16.mxu0 0
      %985 = vmatpush1.bf16.msra.mxu0 %v777
      %986 = vmatprep.subr.bf16.mxu0 0
      %987 = vmatpush2.bf16.msra.mxu0 0
      %988 = vmatprep.subr.bf16.mxu0 0
      %989 = vmatpush2.bf16.msra.mxu0 0
      %990 = vmatprep.subr.bf16.mxu0 0
      %991 = vmatpush2.bf16.msra.mxu0 0
      %992 = vmatprep.subr.bf16.mxu0 0
      %993 = vmatpush2.bf16.msra.mxu0 0
      %994 = vmatprep.subr.bf16.mxu0 0
      %995 = vmatpush2.bf16.msra.mxu0 0
      %996 = vmatprep.subr.bf16.mxu0 0
      %997 = vmatpush2.bf16.msra.mxu0 0
      %998 = vmatprep.subr.bf16.mxu0 0
      %999 = vmatpush2.bf16.msra.mxu0 0
      %1000 = vmatprep.subr.bf16.mxu0 0
      %1001 = vmatpush2.bf16.msra.mxu0 0
      %1002 = vmatprep.mubr.bf16.mxu0 0
      %1003 = vmatmul.mubr.bf16.gmra.mxu0 %v571
      %v1004 = vpop.f32.mrf.mxu0
      %v1005 = vadd.f32 %v844, %v1004
      %v1006 = vpop.f32.mrf.mxu0
      %v1007 = vpop.f32.mrf.mxu0
      %v1008 = vadd.f32 %v847, %v1007
      %v1009 = vpop.f32.mrf.mxu0
      %1010 = vmatprep.mubr.bf16.mxu0 0
      %1011 = vmatmul.mubr.bf16.gmra.mxu0 %v574
      %v1012 = vpop.f32.mrf.mxu0
      %v1013 = vadd.f32 %v852, %v1012
      %v1014 = vpop.f32.mrf.mxu0
      %v1015 = vpop.f32.mrf.mxu0
      %v1016 = vadd.f32 %v855, %v1015
      %v1017 = vpop.f32.mrf.mxu0
      %1018 = vmatprep.mubr.bf16.mxu0 0
      %1019 = vmatmul.mubr.bf16.gmra.mxu0 %v577
      %v1020 = vpop.f32.mrf.mxu0
      %v1021 = vadd.f32 %v860, %v1020
      %v1022 = vpop.f32.mrf.mxu0
      %v1023 = vpop.f32.mrf.mxu0
      %v1024 = vadd.f32 %v863, %v1023
      %v1025 = vpop.f32.mrf.mxu0
      %1026 = vmatprep.mubr.bf16.mxu0 0
      %1027 = vmatmul.mubr.bf16.gmra.mxu0 %v580
      %v1028 = vpop.f32.mrf.mxu0
      %v1029 = vadd.f32 %v868, %v1028
      %v1030 = vpop.f32.mrf.mxu0
      %v1031 = vpop.f32.mrf.mxu0
      %v1032 = vadd.f32 %v871, %v1031
      %v1033 = vpop.f32.mrf.mxu0
      %1034 = vmatprep.mubr.bf16.mxu0 0
      %1035 = vmatmul.mubr.bf16.gmra.mxu0 %v583
      %v1036 = vpop.f32.mrf.mxu0
      %v1037 = vadd.f32 %v876, %v1036
      %v1038 = vpop.f32.mrf.mxu0
      %v1039 = vpop.f32.mrf.mxu0
      %v1040 = vadd.f32 %v879, %v1039
      %v1041 = vpop.f32.mrf.mxu0
      %1042 = vmatprep.mubr.bf16.mxu0 0
      %1043 = vmatmul.mubr.bf16.gmra.mxu0 %v586
      %v1044 = vpop.f32.mrf.mxu0
      %v1045 = vadd.f32 %v884, %v1044
      %v1046 = vpop.f32.mrf.mxu0
      %v1047 = vpop.f32.mrf.mxu0
      %v1048 = vadd.f32 %v887, %v1047
      %v1049 = vpop.f32.mrf.mxu0
      %1050 = vmatprep.mubr.bf16.mxu0 0
      %1051 = vmatmul.mubr.bf16.gmra.mxu0 %v589
      %v1052 = vpop.f32.mrf.mxu0
      %v1053 = vadd.f32 %v892, %v1052
      %v1054 = vpop.f32.mrf.mxu0
      %v1055 = vpop.f32.mrf.mxu0
      %v1056 = vadd.f32 %v895, %v1055
      %v1057 = vpop.f32.mrf.mxu0
      %1058 = vmatprep.mubr.bf16.mxu0 0
      %1059 = vmatmul.mubr.bf16.gmra.mxu0 %v592
      %v1060 = vpop.f32.mrf.mxu0
      %v1061 = vadd.f32 %v900, %v1060
      %v1062 = vpop.f32.mrf.mxu0
      %v1063 = vpop.f32.mrf.mxu0
      %v1064 = vadd.f32 %v903, %v1063
      %v1065 = vpop.f32.mrf.mxu0
      %1066 = vmatprep.mubr.bf16.mxu0 0
      %1067 = vmatmul.mubr.bf16.gmra.mxu0 %v595
      %v1068 = vpop.f32.mrf.mxu0
      %v1069 = vadd.f32 %v908, %v1068
      %v1070 = vpop.f32.mrf.mxu0
      %v1071 = vpop.f32.mrf.mxu0
      %v1072 = vadd.f32 %v911, %v1071
      %v1073 = vpop.f32.mrf.mxu0
      %1074 = vmatprep.mubr.bf16.mxu0 0
      %1075 = vmatmul.mubr.bf16.gmra.mxu0 %v598
      %v1076 = vpop.f32.mrf.mxu0
      %v1077 = vadd.f32 %v916, %v1076
      %v1078 = vpop.f32.mrf.mxu0
      %v1079 = vpop.f32.mrf.mxu0
      %v1080 = vadd.f32 %v919, %v1079
      %v1081 = vpop.f32.mrf.mxu0
      %1082 = vmatprep.mubr.bf16.mxu0 0
      %1083 = vmatmul.mubr.bf16.gmra.mxu0 %v601
      %v1084 = vpop.f32.mrf.mxu0
      %v1085 = vadd.f32 %v924, %v1084
      %v1086 = vpop.f32.mrf.mxu0
      %v1087 = vpop.f32.mrf.mxu0
      %v1088 = vadd.f32 %v927, %v1087
      %v1089 = vpop.f32.mrf.mxu0
      %1090 = vmatprep.mubr.bf16.mxu0 0
      %1091 = vmatmul.mubr.bf16.gmra.mxu0 %v604
      %v1092 = vpop.f32.mrf.mxu0
      %v1093 = vadd.f32 %v932, %v1092
      %v1094 = vpop.f32.mrf.mxu0
      %v1095 = vpop.f32.mrf.mxu0
      %v1096 = vadd.f32 %v935, %v1095
      %v1097 = vpop.f32.mrf.mxu0
      %1098 = vmatprep.mubr.bf16.mxu0 0
      %1099 = vmatmul.mubr.bf16.gmra.mxu0 %v607
      %v1100 = vpop.f32.mrf.mxu0
      %v1101 = vadd.f32 %v940, %v1100
      %v1102 = vpop.f32.mrf.mxu0
      %v1103 = vpop.f32.mrf.mxu0
      %v1104 = vadd.f32 %v943, %v1103
      %v1105 = vpop.f32.mrf.mxu0
      %1106 = vmatprep.mubr.bf16.mxu0 0
      %1107 = vmatmul.mubr.bf16.gmra.mxu0 %v610
      %v1108 = vpop.f32.mrf.mxu0
      %v1109 = vadd.f32 %v948, %v1108
      %v1110 = vpop.f32.mrf.mxu0
      %v1111 = vpop.f32.mrf.mxu0
      %v1112 = vadd.f32 %v951, %v1111
      %v1113 = vpop.f32.mrf.mxu0
      %1114 = vmatprep.mubr.bf16.mxu0 0
      %1115 = vmatmul.mubr.bf16.gmra.mxu0 %v613
      %v1116 = vpop.f32.mrf.mxu0
      %v1117 = vadd.f32 %v956, %v1116
      %v1118 = vpop.f32.mrf.mxu0
      %v1119 = vpop.f32.mrf.mxu0
      %v1120 = vadd.f32 %v959, %v1119
      %v1121 = vpop.f32.mrf.mxu0
      %1122 = vmatprep.mubr.bf16.mxu0 0
      %1123 = vmatmul.mubr.bf16.gmra.mxu0 %v616
      %v1124 = vpop.f32.mrf.mxu0
      %v1125 = vadd.f32 %v964, %v1124
      %v1126 = vpop.f32.mrf.mxu0
      %v1127 = vpop.f32.mrf.mxu0
      %v1128 = vadd.f32 %v967, %v1127
      %v1129 = vpop.f32.mrf.mxu0
      %1130 = vdwg.mxu0
      %v1131 = vadd.f32 %v265, %v1005
      %v1132 = vadd.f32 %v266, %v1008
      %v1133 = vadd.f32 %v267, %v1013
      %v1134 = vadd.f32 %v268, %v1016
      %v1135 = vadd.f32 %v269, %v1021
      %v1136 = vadd.f32 %v270, %v1024
      %v1137 = vadd.f32 %v271, %v1029
      %v1138 = vadd.f32 %v272, %v1032
      %v1139 = vadd.f32 %v273, %v1037
      %v1140 = vadd.f32 %v274, %v1040
      %v1141 = vadd.f32 %v275, %v1045
      %v1142 = vadd.f32 %v276, %v1048
      %v1143 = vadd.f32 %v277, %v1053
      %v1144 = vadd.f32 %v278, %v1056
      %v1145 = vadd.f32 %v279, %v1061
      %v1146 = vadd.f32 %v280, %v1064
      %v1147 = vadd.f32 %v281, %v1069
      %v1148 = vadd.f32 %v282, %v1072
      %v1149 = vadd.f32 %v283, %v1077
      %v1150 = vadd.f32 %v284, %v1080
      %v1151 = vadd.f32 %v285, %v1085
      %v1152 = vadd.f32 %v286, %v1088
      %v1153 = vadd.f32 %v287, %v1093
      %v1154 = vadd.f32 %v288, %v1096
      %v1155 = vadd.f32 %v289, %v1101
      %v1156 = vadd.f32 %v290, %v1104
      %v1157 = vadd.f32 %v291, %v1109
      %v1158 = vadd.f32 %v292, %v1112
      %v1159 = vadd.f32 %v293, %v1117
      %v1160 = vadd.f32 %v294, %v1120
      %v1161 = vadd.f32 %v295, %v1125
      %v1162 = vadd.f32 %v296, %v1128
      %vm1163 = vcmask 523264
      %1164 = vst.msk [vmem:[#allocation2] sm:$0xff] %vm1163, %v1131
      %1165 = vst.msk [vmem:[#allocation2 + $0x8] sm:$0xff] %vm1163, %v1132
      %1166 = vst.msk [vmem:[#allocation2 + $0x10] sm:$0xff] %vm1163, %v1133
      %1167 = vst.msk [vmem:[#allocation2 + $0x18] sm:$0xff] %vm1163, %v1134
      %1168 = vst.msk [vmem:[#allocation2 + $0x20] sm:$0xff] %vm1163, %v1135
      %1169 = vst.msk [vmem:[#allocation2 + $0x28] sm:$0xff] %vm1163, %v1136
      %1170 = vst.msk [vmem:[#allocation2 + $0x30] sm:$0xff] %vm1163, %v1137
      %1171 = vst.msk [vmem:[#allocation2 + $0x38] sm:$0xff] %vm1163, %v1138
      %1172 = vst.msk [vmem:[#allocation2 + $0x40] sm:$0xff] %vm1163, %v1139
      %1173 = vst.msk [vmem:[#allocation2 + $0x48] sm:$0xff] %vm1163, %v1140
      %1174 = vst.msk [vmem:[#allocation2 + $0x50] sm:$0xff] %vm1163, %v1141
      %1175 = vst.msk [vmem:[#allocation2 + $0x58] sm:$0xff] %vm1163, %v1142
      %1176 = vst.msk [vmem:[#allocation2 + $0x60] sm:$0xff] %vm1163, %v1143
      %1177 = vst.msk [vmem:[#allocation2 + $0x68] sm:$0xff] %vm1163, %v1144
      %1178 = vst.msk [vmem:[#allocation2 + $0x70] sm:$0xff] %vm1163, %v1145
      %1179 = vst.msk [vmem:[#allocation2 + $0x78] sm:$0xff] %vm1163, %v1146
      %1180 = vst.msk [vmem:[#allocation2 + $0x80] sm:$0xff] %vm1163, %v1147
      %1181 = vst.msk [vmem:[#allocation2 + $0x88] sm:$0xff] %vm1163, %v1148
      %1182 = vst.msk [vmem:[#allocation2 + $0x90] sm:$0xff] %vm1163, %v1149
      %1183 = vst.msk [vmem:[#allocation2 + $0x98] sm:$0xff] %vm1163, %v1150
      %1184 = vst.msk [vmem:[#allocation2 + $0xa0] sm:$0xff] %vm1163, %v1151
      %1185 = vst.msk [vmem:[#allocation2 + $0xa8] sm:$0xff] %vm1163, %v1152
      %1186 = vst.msk [vmem:[#allocation2 + $0xb0] sm:$0xff] %vm1163, %v1153
      %1187 = vst.msk [vmem:[#allocation2 + $0xb8] sm:$0xff] %vm1163, %v1154
      %1188 = vst.msk [vmem:[#allocation2 + $0xc0] sm:$0xff] %vm1163, %v1155
      %1189 = vst.msk [vmem:[#allocation2 + $0xc8] sm:$0xff] %vm1163, %v1156
      %1190 = vst.msk [vmem:[#allocation2 + $0xd0] sm:$0xff] %vm1163, %v1157
      %1191 = vst.msk [vmem:[#allocation2 + $0xd8] sm:$0xff] %vm1163, %v1158
      %1192 = vst.msk [vmem:[#allocation2 + $0xe0] sm:$0xff] %vm1163, %v1159
      %1193 = vst.msk [vmem:[#allocation2 + $0xe8] sm:$0xff] %vm1163, %v1160
      %1194 = vst.msk [vmem:[#allocation2 + $0xf0] sm:$0xff] %vm1163, %v1161
      %1195 = vst.msk [vmem:[#allocation2 + $0xf8] sm:$0xff] %vm1163, %v1162
      // Predicated region
      $region37: #{net_forward.11} parent=31 // pred_check
        %p1196 = pneg %p228
      $region38: #{net_forward.11} parent=31 // pred_check_branch
        %1198 = sbr.rel (%p1196) target = $region40
      $region39: #{net_forward.11} parent=31 // pred_region
        %v1199 = vld [vmem:[#allocation2] sm:$0xff]
        %v1200 = vld [vmem:[#allocation2 + $0x8] sm:$0xff]
        %v1201 = vld [vmem:[#allocation2 + $0x10] sm:$0xff]
        %v1202 = vld [vmem:[#allocation2 + $0x18] sm:$0xff]
        %v1203 = vld [vmem:[#allocation2 + $0x20] sm:$0xff]
        %v1204 = vld [vmem:[#allocation2 + $0x28] sm:$0xff]
        %v1205 = vld [vmem:[#allocation2 + $0x30] sm:$0xff]
        %v1206 = vld [vmem:[#allocation2 + $0x38] sm:$0xff]
        %v1207 = vld [vmem:[#allocation2 + $0x40] sm:$0xff]
        %v1208 = vld [vmem:[#allocation2 + $0x48] sm:$0xff]
        %v1209 = vld [vmem:[#allocation2 + $0x50] sm:$0xff]
        %v1210 = vld [vmem:[#allocation2 + $0x58] sm:$0xff]
        %v1211 = vld [vmem:[#allocation2 + $0x60] sm:$0xff]
        %v1212 = vld [vmem:[#allocation2 + $0x68] sm:$0xff]
        %v1213 = vld [vmem:[#allocation2 + $0x70] sm:$0xff]
        %v1214 = vld [vmem:[#allocation2 + $0x78] sm:$0xff]
        %v1215 = vld [vmem:[#allocation2 + $0x80] sm:$0xff]
        %v1216 = vld [vmem:[#allocation2 + $0x88] sm:$0xff]
        %v1217 = vld [vmem:[#allocation2 + $0x90] sm:$0xff]
        %v1218 = vld [vmem:[#allocation2 + $0x98] sm:$0xff]
        %v1219 = vld [vmem:[#allocation2 + $0xa0] sm:$0xff]
        %v1220 = vld [vmem:[#allocation2 + $0xa8] sm:$0xff]
        %v1221 = vld [vmem:[#allocation2 + $0xb0] sm:$0xff]
        %v1222 = vld [vmem:[#allocation2 + $0xb8] sm:$0xff]
        %v1223 = vld [vmem:[#allocation2 + $0xc0] sm:$0xff]
        %v1224 = vld [vmem:[#allocation2 + $0xc8] sm:$0xff]
        %v1225 = vld [vmem:[#allocation2 + $0xd0] sm:$0xff]
        %v1226 = vld [vmem:[#allocation2 + $0xd8] sm:$0xff]
        %v1227 = vld [vmem:[#allocation2 + $0xe0] sm:$0xff]
        %v1228 = vld [vmem:[#allocation2 + $0xe8] sm:$0xff]
        %v1229 = vld [vmem:[#allocation2 + $0xf0] sm:$0xff]
        %v1230 = vld [vmem:[#allocation2 + $0xf8] sm:$0xff]
        %v1231 = vld [vmem:[%s2] sm:$0x1]
        %v1233 = vlaneseq
        %v1234 = vshrl.u32 %v1233, 7
        %v1235 = vsub.s32 0, %v1234
        %v1236 = vrot.slane %v1231, %v1235
        %v1238 = vadd.f32 %v1199, %v1236
        %v1239 = vadd.f32 %v1200, %v1236
        %v1240 = vadd.f32 %v1201, %v1236
        %v1241 = vadd.f32 %v1202, %v1236
        %v1242 = vadd.f32 %v1203, %v1236
        %v1243 = vadd.f32 %v1204, %v1236
        %v1244 = vadd.f32 %v1205, %v1236
        %v1245 = vadd.f32 %v1206, %v1236
        %v1246 = vadd.f32 %v1207, %v1236
        %v1247 = vadd.f32 %v1208, %v1236
        %v1248 = vadd.f32 %v1209, %v1236
        %v1249 = vadd.f32 %v1210, %v1236
        %v1250 = vadd.f32 %v1211, %v1236
        %v1251 = vadd.f32 %v1212, %v1236
        %v1252 = vadd.f32 %v1213, %v1236
        %v1253 = vadd.f32 %v1214, %v1236
        %v1254 = vadd.f32 %v1215, %v1236
        %v1255 = vadd.f32 %v1216, %v1236
        %v1256 = vadd.f32 %v1217, %v1236
        %v1257 = vadd.f32 %v1218, %v1236
        %v1258 = vadd.f32 %v1219, %v1236
        %v1259 = vadd.f32 %v1220, %v1236
        %v1260 = vadd.f32 %v1221, %v1236
        %v1261 = vadd.f32 %v1222, %v1236
        %v1262 = vadd.f32 %v1223, %v1236
        %v1263 = vadd.f32 %v1224, %v1236
        %v1264 = vadd.f32 %v1225, %v1236
        %v1265 = vadd.f32 %v1226, %v1236
        %v1266 = vadd.f32 %v1227, %v1236
        %v1267 = vadd.f32 %v1228, %v1236
        %v1268 = vadd.f32 %v1229, %v1236
        %v1269 = vadd.f32 %v1230, %v1236
        %v1270 = vmax.f32 %v1238, 0.0
        %v1271 = vmax.f32 %v1239, 0.0
        %v1272 = vmax.f32 %v1240, 0.0
        %v1273 = vmax.f32 %v1241, 0.0
        %v1274 = vmax.f32 %v1242, 0.0
        %v1275 = vmax.f32 %v1243, 0.0
        %v1276 = vmax.f32 %v1244, 0.0
        %v1277 = vmax.f32 %v1245, 0.0
        %v1278 = vmax.f32 %v1246, 0.0
        %v1279 = vmax.f32 %v1247, 0.0
        %v1280 = vmax.f32 %v1248, 0.0
        %v1281 = vmax.f32 %v1249, 0.0
        %v1282 = vmax.f32 %v1250, 0.0
        %v1283 = vmax.f32 %v1251, 0.0
        %v1284 = vmax.f32 %v1252, 0.0
        %v1285 = vmax.f32 %v1253, 0.0
        %v1286 = vmax.f32 %v1254, 0.0
        %v1287 = vmax.f32 %v1255, 0.0
        %v1288 = vmax.f32 %v1256, 0.0
        %v1289 = vmax.f32 %v1257, 0.0
        %v1290 = vmax.f32 %v1258, 0.0
        %v1291 = vmax.f32 %v1259, 0.0
        %v1292 = vmax.f32 %v1260, 0.0
        %v1293 = vmax.f32 %v1261, 0.0
        %v1294 = vmax.f32 %v1262, 0.0
        %v1295 = vmax.f32 %v1263, 0.0
        %v1296 = vmax.f32 %v1264, 0.0
        %v1297 = vmax.f32 %v1265, 0.0
        %v1298 = vmax.f32 %v1266, 0.0
        %v1299 = vmax.f32 %v1267, 0.0
        %v1300 = vmax.f32 %v1268, 0.0
        %v1301 = vmax.f32 %v1269, 0.0
        %v1302 = vpack.c.bf16 %v1271, %v1270
        %v1303 = vpack.c.bf16 %v1273, %v1272
        %v1304 = vpack.c.bf16 %v1275, %v1274
        %v1305 = vpack.c.bf16 %v1277, %v1276
        %v1306 = vpack.c.bf16 %v1279, %v1278
        %v1307 = vpack.c.bf16 %v1281, %v1280
        %v1308 = vpack.c.bf16 %v1283, %v1282
        %v1309 = vpack.c.bf16 %v1285, %v1284
        %v1310 = vpack.c.bf16 %v1287, %v1286
        %v1311 = vpack.c.bf16 %v1289, %v1288
        %v1312 = vpack.c.bf16 %v1291, %v1290
        %v1313 = vpack.c.bf16 %v1293, %v1292
        %v1314 = vpack.c.bf16 %v1295, %v1294
        %v1315 = vpack.c.bf16 %v1297, %v1296
        %v1316 = vpack.c.bf16 %v1299, %v1298
        %v1317 = vpack.c.bf16 %v1301, %v1300
        %v1334 = vunpack.c.l.b16 %v1302
        %v1335 = vunpack.c.h.b16 %v1302
        %v1336 = vunpack.c.l.b16 %v1303
        %v1337 = vunpack.c.h.b16 %v1303
        %v1338 = vunpack.c.l.b16 %v1304
        %v1339 = vunpack.c.h.b16 %v1304
        %v1340 = vunpack.c.l.b16 %v1305
        %v1341 = vunpack.c.h.b16 %v1305
        %v1342 = vunpack.c.l.b16 %v1306
        %v1343 = vunpack.c.h.b16 %v1306
        %v1344 = vunpack.c.l.b16 %v1307
        %v1345 = vunpack.c.h.b16 %v1307
        %v1346 = vunpack.c.l.b16 %v1308
        %v1347 = vunpack.c.h.b16 %v1308
        %v1348 = vunpack.c.l.b16 %v1309
        %v1349 = vunpack.c.h.b16 %v1309
        %v1350 = vunpack.c.l.b16 %v1310
        %v1351 = vunpack.c.h.b16 %v1310
        %v1352 = vunpack.c.l.b16 %v1311
        %v1353 = vunpack.c.h.b16 %v1311
        %v1354 = vunpack.c.l.b16 %v1312
        %v1355 = vunpack.c.h.b16 %v1312
        %v1356 = vunpack.c.l.b16 %v1313
        %v1357 = vunpack.c.h.b16 %v1313
        %v1358 = vunpack.c.l.b16 %v1314
        %v1359 = vunpack.c.h.b16 %v1314
        %v1360 = vunpack.c.l.b16 %v1315
        %v1361 = vunpack.c.h.b16 %v1315
        %v1362 = vunpack.c.l.b16 %v1316
        %v1363 = vunpack.c.h.b16 %v1316
        %v1364 = vunpack.c.l.b16 %v1317
        %v1365 = vunpack.c.h.b16 %v1317
        %v1366 = vpack.c.b16 %v1334, %v1334
        %v1367 = vpack.c.b16 %v1335, %v1335
        %v1368 = vpack.c.b16 %v1336, %v1336
        %v1369 = vpack.c.b16 %v1337, %v1337
        %v1370 = vpack.c.b16 %v1338, %v1338
        %v1371 = vpack.c.b16 %v1339, %v1339
        %v1372 = vpack.c.b16 %v1340, %v1340
        %v1373 = vpack.c.b16 %v1341, %v1341
        %v1374 = vpack.c.b16 %v1342, %v1342
        %v1375 = vpack.c.b16 %v1343, %v1343
        %v1376 = vpack.c.b16 %v1344, %v1344
        %v1377 = vpack.c.b16 %v1345, %v1345
        %v1378 = vpack.c.b16 %v1346, %v1346
        %v1379 = vpack.c.b16 %v1347, %v1347
        %v1380 = vpack.c.b16 %v1348, %v1348
        %v1381 = vpack.c.b16 %v1349, %v1349
        %v1382 = vpack.c.b16 %v1350, %v1350
        %v1383 = vpack.c.b16 %v1351, %v1351
        %v1384 = vpack.c.b16 %v1352, %v1352
        %v1385 = vpack.c.b16 %v1353, %v1353
        %v1386 = vpack.c.b16 %v1354, %v1354
        %v1387 = vpack.c.b16 %v1355, %v1355
        %v1388 = vpack.c.b16 %v1356, %v1356
        %v1389 = vpack.c.b16 %v1357, %v1357
        %v1390 = vpack.c.b16 %v1358, %v1358
        %v1391 = vpack.c.b16 %v1359, %v1359
        %v1392 = vpack.c.b16 %v1360, %v1360
        %v1393 = vpack.c.b16 %v1361, %v1361
        %v1394 = vpack.c.b16 %v1362, %v1362
        %v1395 = vpack.c.b16 %v1363, %v1363
        %v1396 = vpack.c.b16 %v1364, %v1364
        %v1397 = vpack.c.b16 %v1365, %v1365
        %vm1430 = vcmask 519168
        %1431 = vst.msk [vmem:[%s225] sm:$0xf] %vm1430, %v1366
        %1432 = vst.msk [vmem:[%s225 + $0x4] sm:$0xf] %vm1430, %v1367
        %1433 = vst.msk [vmem:[%s225 + $0x8] sm:$0xf] %vm1430, %v1368
        %1434 = vst.msk [vmem:[%s225 + $0xc] sm:$0xf] %vm1430, %v1369
        %1435 = vst.msk [vmem:[%s225 + $0x10] sm:$0xf] %vm1430, %v1370
        %1436 = vst.msk [vmem:[%s225 + $0x14] sm:$0xf] %vm1430, %v1371
        %1437 = vst.msk [vmem:[%s225 + $0x18] sm:$0xf] %vm1430, %v1372
        %1438 = vst.msk [vmem:[%s225 + $0x1c] sm:$0xf] %vm1430, %v1373
        %1439 = vst.msk [vmem:[%s225 + $0x20] sm:$0xf] %vm1430, %v1374
        %1440 = vst.msk [vmem:[%s225 + $0x24] sm:$0xf] %vm1430, %v1375
        %1441 = vst.msk [vmem:[%s225 + $0x28] sm:$0xf] %vm1430, %v1376
        %1442 = vst.msk [vmem:[%s225 + $0x2c] sm:$0xf] %vm1430, %v1377
        %1443 = vst.msk [vmem:[%s225 + $0x30] sm:$0xf] %vm1430, %v1378
        %1444 = vst.msk [vmem:[%s225 + $0x34] sm:$0xf] %vm1430, %v1379
        %1445 = vst.msk [vmem:[%s225 + $0x38] sm:$0xf] %vm1430, %v1380
        %1446 = vst.msk [vmem:[%s225 + $0x3c] sm:$0xf] %vm1430, %v1381
        %1447 = vst.msk [vmem:[%s225 + $0x40] sm:$0xf] %vm1430, %v1382
        %1448 = vst.msk [vmem:[%s225 + $0x44] sm:$0xf] %vm1430, %v1383
        %1449 = vst.msk [vmem:[%s225 + $0x48] sm:$0xf] %vm1430, %v1384
        %1450 = vst.msk [vmem:[%s225 + $0x4c] sm:$0xf] %vm1430, %v1385
        %1451 = vst.msk [vmem:[%s225 + $0x50] sm:$0xf] %vm1430, %v1386
        %1452 = vst.msk [vmem:[%s225 + $0x54] sm:$0xf] %vm1430, %v1387
        %1453 = vst.msk [vmem:[%s225 + $0x58] sm:$0xf] %vm1430, %v1388
        %1454 = vst.msk [vmem:[%s225 + $0x5c] sm:$0xf] %vm1430, %v1389
        %1455 = vst.msk [vmem:[%s225 + $0x60] sm:$0xf] %vm1430, %v1390
        %1456 = vst.msk [vmem:[%s225 + $0x64] sm:$0xf] %vm1430, %v1391
        %1457 = vst.msk [vmem:[%s225 + $0x68] sm:$0xf] %vm1430, %v1392
        %1458 = vst.msk [vmem:[%s225 + $0x6c] sm:$0xf] %vm1430, %v1393
        %1459 = vst.msk [vmem:[%s225 + $0x70] sm:$0xf] %vm1430, %v1394
        %1460 = vst.msk [vmem:[%s225 + $0x74] sm:$0xf] %vm1430, %v1395
        %1461 = vst.msk [vmem:[%s225 + $0x78] sm:$0xf] %vm1430, %v1396
        %1462 = vst.msk [vmem:[%s225 + $0x7c] sm:$0xf] %vm1430, %v1397
      $region40: #{net_forward.11} parent=31 // pred_fallthru
        _
      %s1463 = smul.u32 32, %s18
      %p1464 = scmp.lt.s32.totalorder %s1463, 63
      %s1465 = scalar_select %p1464, %s1463, 63
      %s1466 = smul.addr %s1465, 4
      %s1467 = scalar_lea.vmem %s3, %s1466
      // Predicated region
      $region41: #{net_forward.11} parent=31 // pred_check
        %p1468 = pneg %p119
      $region42: #{net_forward.11} parent=31 // pred_check_branch
        %1470 = sbr.rel (%p1468) target = $region44
      $region43: #{net_forward.11} parent=31 // pred_region
        %s1471 = smul.u32 32, %s18
      $region44: #{net_forward.11} parent=31 // pred_fallthru
        _
    $region32: #{net_forward.11} parent=5 // pred_fallthru
      _
    %p1472 = scmp.le.s32.totalorder 2, %s9
    // Predicated region
    $region45: #{net_forward.11} parent=5 // pred_check
      %p1473 = pneg %p1472
    $region46: #{net_forward.11} parent=5 // pred_check_branch
      %1475 = sbr.rel (%p1473) target = $region48
    $region47: #{net_forward.11} parent=5 // pred_region
      %s1476 = ssub.s32 %s9, 2
      // Predicated region
      $region49: #{net_forward.11} parent=47 // pred_check
        %p1477 = pneg %p125
      $region50: #{net_forward.11} parent=47 // pred_check_branch
        %1479 = sbr.rel (%p1477) target = $region52
      $region51: #{net_forward.11} parent=47 // pred_region
        %s1480 = smul.u32 32, %s20
        %p1481 = scmp.lt.s32.totalorder %s1480, 63
        %s1482 = scalar_select %p1481, %s1480, 63
        %s1483 = smul.addr %s1482, 4
        %s1484 = scalar_lea.vmem %s3, %s1483
      $region52: #{net_forward.11} parent=47 // pred_fallthru
        _
    $region48: #{net_forward.11} parent=5 // pred_fallthru
      _
  $region6: #{net_forward.11} parent=0 // loop_footer
    %s13 = sadd.s32 1, %s9
  $region7: #{net_forward.11} parent=0 // loop_footer_branch
    %8 = sbr.rel target = $region3
  $region8: #{net_forward.11} parent=0 // loop_exit
    _

// kernel: net_forward.12
$region0: #{net_forward.12}
  #allocation0 [shape = 'u32[]', space=smem, size = 0x4, offset = 0x4, fixed_abs, tag = 'smem constant byte address 0x4 - core index']
  #allocation1 [shape = 'u32[144,128]{1,0:T(1,128)}', space=vmem, size = 0x12000, scoped, tag = 'internal scratch']
  %s0 = inlined_call_operand.vmem [shape: bf16[128,64], index: 0, kind: input, shape index: {}]
  %s1 = inlined_call_operand.vmem [shape: bf16[128,64], index: 1, kind: input, shape index: {}]
  %s2 = inlined_call_operand.vmem [shape: bf16[128,64], index: 2, kind: input, shape index: {}]
  %s3 = inlined_call_operand.vmem [shape: bf16[128,64], index: 3, kind: input, shape index: {}]
  %s4 = inlined_call_operand.vmem [shape: f32[128,64], index: 4, kind: input, shape index: {}]
  %s5 = inlined_call_operand.vmem [shape: bf16[128,64], index: 5, kind: output, shape index: {}]
  %s6 = sld [smem:[#allocation0]]
  $region30: #{net_forward.12} parent=0
    _
  %s8 = ssub.s32 1, %s6
  %s9 = scalar_select 0, %s8, %s6
  // Predicated region
  $region2: #{net_forward.12} parent=0 // pred_check
    _
  $region3: #{net_forward.12} parent=0 // pred_check_branch
    %11 = sbr.rel (0) target = $region5
  $region4: #{net_forward.12} parent=0 // pred_region
    _
  $region5: #{net_forward.12} parent=0 // pred_fallthru
    _
  // Predicated region
  $region6: #{net_forward.12} parent=0 // pred_check
    _
  $region7: #{net_forward.12} parent=0 // pred_check_branch
    %13 = sbr.rel (0) target = $region9
  $region8: #{net_forward.12} parent=0 // pred_region
    _
  $region9: #{net_forward.12} parent=0 // pred_fallthru
    _
  // Predicated region
  $region10: #{net_forward.12} parent=0 // pred_check
    _
  $region11: #{net_forward.12} parent=0 // pred_check_branch
    %15 = sbr.rel (0) target = $region13
  $region12: #{net_forward.12} parent=0 // pred_region
    _
  $region13: #{net_forward.12} parent=0 // pred_fallthru
    _
  // Predicated region
  $region14: #{net_forward.12} parent=0 // pred_check
    _
  $region15: #{net_forward.12} parent=0 // pred_check_branch
    %17 = sbr.rel (0) target = $region17
  $region16: #{net_forward.12} parent=0 // pred_region
    _
  $region17: #{net_forward.12} parent=0 // pred_fallthru
    _
  // Predicated region
  $region18: #{net_forward.12} parent=0 // pred_check
    _
  $region19: #{net_forward.12} parent=0 // pred_check_branch
    %19 = sbr.rel (0) target = $region21
  $region20: #{net_forward.12} parent=0 // pred_region
    _
  $region21: #{net_forward.12} parent=0 // pred_fallthru
    _
  %v20 = vld [vmem:[%s0] sm:$0xf]
  %v21 = vld [vmem:[%s0 + $0x4] sm:$0xf]
  %v22 = vld [vmem:[%s0 + $0x8] sm:$0xf]
  %v23 = vld [vmem:[%s0 + $0xc] sm:$0xf]
  %v24 = vld [vmem:[%s0 + $0x10] sm:$0xf]
  %v25 = vld [vmem:[%s0 + $0x14] sm:$0xf]
  %v26 = vld [vmem:[%s0 + $0x18] sm:$0xf]
  %v27 = vld [vmem:[%s0 + $0x1c] sm:$0xf]
  %v28 = vld [vmem:[%s0 + $0x20] sm:$0xf]
  %v29 = vld [vmem:[%s0 + $0x24] sm:$0xf]
  %v30 = vld [vmem:[%s0 + $0x28] sm:$0xf]
  %v31 = vld [vmem:[%s0 + $0x2c] sm:$0xf]
  %v32 = vld [vmem:[%s0 + $0x30] sm:$0xf]
  %v33 = vld [vmem:[%s0 + $0x34] sm:$0xf]
  %v34 = vld [vmem:[%s0 + $0x38] sm:$0xf]
  %v35 = vld [vmem:[%s0 + $0x3c] sm:$0xf]
  %v36 = vld [vmem:[%s1] sm:$0xf]
  %v37 = vld [vmem:[%s1 + $0x4] sm:$0xf]
  %v38 = vld [vmem:[%s1 + $0x8] sm:$0xf]
  %v39 = vld [vmem:[%s1 + $0xc] sm:$0xf]
  %v40 = vld [vmem:[%s1 + $0x10] sm:$0xf]
  %v41 = vld [vmem:[%s1 + $0x14] sm:$0xf]
  %v42 = vld [vmem:[%s1 + $0x18] sm:$0xf]
  %v43 = vld [vmem:[%s1 + $0x1c] sm:$0xf]
  %v44 = vld [vmem:[%s1 + $0x20] sm:$0xf]
  %v45 = vld [vmem:[%s1 + $0x24] sm:$0xf]
  %v46 = vld [vmem:[%s1 + $0x28] sm:$0xf]
  %v47 = vld [vmem:[%s1 + $0x2c] sm:$0xf]
  %v48 = vld [vmem:[%s1 + $0x30] sm:$0xf]
  %v49 = vld [vmem:[%s1 + $0x34] sm:$0xf]
  %v50 = vld [vmem:[%s1 + $0x38] sm:$0xf]
  %v51 = vld [vmem:[%s1 + $0x3c] sm:$0xf]
  %v52 = vmax.bf16 %v20, %v36
  %v53 = vmax.bf16 %v21, %v37
  %v54 = vmax.bf16 %v22, %v38
  %v55 = vmax.bf16 %v23, %v39
  %v56 = vmax.bf16 %v24, %v40
  %v57 = vmax.bf16 %v25, %v41
  %v58 = vmax.bf16 %v26, %v42
  %v59 = vmax.bf16 %v27, %v43
  %v60 = vmax.bf16 %v28, %v44
  %v61 = vmax.bf16 %v29, %v45
  %v62 = vmax.bf16 %v30, %v46
  %v63 = vmax.bf16 %v31, %v47
  %v64 = vmax.bf16 %v32, %v48
  %v65 = vmax.bf16 %v33, %v49
  %v66 = vmax.bf16 %v34, %v50
  %v67 = vmax.bf16 %v35, %v51
  %v68 = vld [vmem:[%s2] sm:$0xf]
  %v69 = vld [vmem:[%s2 + $0x4] sm:$0xf]
  %v70 = vld [vmem:[%s2 + $0x8] sm:$0xf]
  %v71 = vld [vmem:[%s2 + $0xc] sm:$0xf]
  %v72 = vld [vmem:[%s2 + $0x10] sm:$0xf]
  %v73 = vld [vmem:[%s2 + $0x14] sm:$0xf]
  %v74 = vld [vmem:[%s2 + $0x18] sm:$0xf]
  %v75 = vld [vmem:[%s2 + $0x1c] sm:$0xf]
  %v76 = vld [vmem:[%s2 + $0x20] sm:$0xf]
  %v77 = vld [vmem:[%s2 + $0x24] sm:$0xf]
  %v78 = vld [vmem:[%s2 + $0x28] sm:$0xf]
  %v79 = vld [vmem:[%s2 + $0x2c] sm:$0xf]
  %v80 = vld [vmem:[%s2 + $0x30] sm:$0xf]
  %v81 = vld [vmem:[%s2 + $0x34] sm:$0xf]
  %v82 = vld [vmem:[%s2 + $0x38] sm:$0xf]
  %v83 = vld [vmem:[%s2 + $0x3c] sm:$0xf]
  %v84 = vld [vmem:[%s3] sm:$0xf]
  %v85 = vld [vmem:[%s3 + $0x4] sm:$0xf]
  %v86 = vld [vmem:[%s3 + $0x8] sm:$0xf]
  %v87 = vld [vmem:[%s3 + $0xc] sm:$0xf]
  %v88 = vld [vmem:[%s3 + $0x10] sm:$0xf]
  %v89 = vld [vmem:[%s3 + $0x14] sm:$0xf]
  %v90 = vld [vmem:[%s3 + $0x18] sm:$0xf]
  %v91 = vld [vmem:[%s3 + $0x1c] sm:$0xf]
  %v92 = vld [vmem:[%s3 + $0x20] sm:$0xf]
  %v93 = vld [vmem:[%s3 + $0x24] sm:$0xf]
  %v94 = vld [vmem:[%s3 + $0x28] sm:$0xf]
  %v95 = vld [vmem:[%s3 + $0x2c] sm:$0xf]
  %v96 = vld [vmem:[%s3 + $0x30] sm:$0xf]
  %v97 = vld [vmem:[%s3 + $0x34] sm:$0xf]
  %v98 = vld [vmem:[%s3 + $0x38] sm:$0xf]
  %v99 = vld [vmem:[%s3 + $0x3c] sm:$0xf]
  %v100 = vmax.bf16 %v68, %v84
  %v101 = vmax.bf16 %v69, %v85
  %v102 = vmax.bf16 %v70, %v86
  %v103 = vmax.bf16 %v71, %v87
  %v104 = vmax.bf16 %v72, %v88
  %v105 = vmax.bf16 %v73, %v89
  %v106 = vmax.bf16 %v74, %v90
  %v107 = vmax.bf16 %v75, %v91
  %v108 = vmax.bf16 %v76, %v92
  %v109 = vmax.bf16 %v77, %v93
  %v110 = vmax.bf16 %v78, %v94
  %v111 = vmax.bf16 %v79, %v95
  %v112 = vmax.bf16 %v80, %v96
  %v113 = vmax.bf16 %v81, %v97
  %v114 = vmax.bf16 %v82, %v98
  %v115 = vmax.bf16 %v83, %v99
  %v116 = vmax.bf16 %v52, %v100
  %v117 = vmax.bf16 %v53, %v101
  %v118 = vmax.bf16 %v54, %v102
  %v119 = vmax.bf16 %v55, %v103
  %v120 = vmax.bf16 %v56, %v104
  %v121 = vmax.bf16 %v57, %v105
  %v122 = vmax.bf16 %v58, %v106
  %v123 = vmax.bf16 %v59, %v107
  %v124 = vmax.bf16 %v60, %v108
  %v125 = vmax.bf16 %v61, %v109
  %v126 = vmax.bf16 %v62, %v110
  %v127 = vmax.bf16 %v63, %v111
  %v128 = vmax.bf16 %v64, %v112
  %v129 = vmax.bf16 %v65, %v113
  %v130 = vmax.bf16 %v66, %v114
  %v131 = vmax.bf16 %v67, %v115
  %v132 = vunpack.c.l.bf16 %v116
  %v133 = vunpack.c.l.bf16 %v117
  %v134 = vunpack.c.l.bf16 %v118
  %v135 = vunpack.c.l.bf16 %v119
  %v136 = vunpack.c.l.bf16 %v120
  %v137 = vunpack.c.l.bf16 %v121
  %v138 = vunpack.c.l.bf16 %v122
  %v139 = vunpack.c.l.bf16 %v123
  %v140 = vunpack.c.l.bf16 %v124
  %v141 = vunpack.c.l.bf16 %v125
  %v142 = vunpack.c.l.bf16 %v126
  %v143 = vunpack.c.l.bf16 %v127
  %v144 = vunpack.c.l.bf16 %v128
  %v145 = vunpack.c.l.bf16 %v129
  %v146 = vunpack.c.l.bf16 %v130
  %v147 = vunpack.c.l.bf16 %v131
  %v148 = vld [vmem:[%s4] sm:$0xff]
  %v149 = vld [vmem:[%s4 + $0x8] sm:$0xff]
  %v150 = vld [vmem:[%s4 + $0x10] sm:$0xff]
  %v151 = vld [vmem:[%s4 + $0x18] sm:$0xff]
  %v152 = vld [vmem:[%s4 + $0x20] sm:$0xff]
  %v153 = vld [vmem:[%s4 + $0x28] sm:$0xff]
  %v154 = vld [vmem:[%s4 + $0x30] sm:$0xff]
  %v155 = vld [vmem:[%s4 + $0x38] sm:$0xff]
  %v156 = vld [vmem:[%s4 + $0x40] sm:$0xff]
  %v157 = vld [vmem:[%s4 + $0x48] sm:$0xff]
  %v158 = vld [vmem:[%s4 + $0x50] sm:$0xff]
  %v159 = vld [vmem:[%s4 + $0x58] sm:$0xff]
  %v160 = vld [vmem:[%s4 + $0x60] sm:$0xff]
  %v161 = vld [vmem:[%s4 + $0x68] sm:$0xff]
  %v162 = vld [vmem:[%s4 + $0x70] sm:$0xff]
  %v163 = vld [vmem:[%s4 + $0x78] sm:$0xff]
  %vm164 = vcmp.ge.f32.partialorder %v148, 0.2
  %vm165 = vcmp.ge.f32.partialorder %v149, 0.2
  %vm166 = vcmp.ge.f32.partialorder %v150, 0.2
  %vm167 = vcmp.ge.f32.partialorder %v151, 0.2
  %vm168 = vcmp.ge.f32.partialorder %v152, 0.2
  %vm169 = vcmp.ge.f32.partialorder %v153, 0.2
  %vm170 = vcmp.ge.f32.partialorder %v154, 0.2
  %vm171 = vcmp.ge.f32.partialorder %v155, 0.2
  %vm172 = vcmp.ge.f32.partialorder %v156, 0.2
  %vm173 = vcmp.ge.f32.partialorder %v157, 0.2
  %vm174 = vcmp.ge.f32.partialorder %v158, 0.2
  %vm175 = vcmp.ge.f32.partialorder %v159, 0.2
  %vm176 = vcmp.ge.f32.partialorder %v160, 0.2
  %vm177 = vcmp.ge.f32.partialorder %v161, 0.2
  %vm178 = vcmp.ge.f32.partialorder %v162, 0.2
  %vm179 = vcmp.ge.f32.partialorder %v163, 0.2
  %v180 = vmul.f32 %v132, 1.25
  %v181 = vmul.f32 %v133, 1.25
  %v182 = vmul.f32 %v134, 1.25
  %v183 = vmul.f32 %v135, 1.25
  %v184 = vmul.f32 %v136, 1.25
  %v185 = vmul.f32 %v137, 1.25
  %v186 = vmul.f32 %v138, 1.25
  %v187 = vmul.f32 %v139, 1.25
  %v188 = vmul.f32 %v140, 1.25
  %v189 = vmul.f32 %v141, 1.25
  %v190 = vmul.f32 %v142, 1.25
  %v191 = vmul.f32 %v143, 1.25
  %v192 = vmul.f32 %v144, 1.25
  %v193 = vmul.f32 %v145, 1.25
  %v194 = vmul.f32 %v146, 1.25
  %v195 = vmul.f32 %v147, 1.25
  %v196 = vsel %vm164, %v180, 0.0
  %v197 = vsel %vm165, %v181, 0.0
  %v198 = vsel %vm166, %v182, 0.0
  %v199 = vsel %vm167, %v183, 0.0
  %v200 = vsel %vm168, %v184, 0.0
  %v201 = vsel %vm169, %v185, 0.0
  %v202 = vsel %vm170, %v186, 0.0
  %v203 = vsel %vm171, %v187, 0.0
  %v204 = vsel %vm172, %v188, 0.0
  %v205 = vsel %vm173, %v189, 0.0
  %v206 = vsel %vm174, %v190, 0.0
  %v207 = vsel %vm175, %v191, 0.0
  %v208 = vsel %vm176, %v192, 0.0
  %v209 = vsel %vm177, %v193, 0.0
  %v210 = vsel %vm178, %v194, 0.0
  %v211 = vsel %vm179, %v195, 0.0
  %v212 = vpack.c.bf16 %v197, %v196
  %v213 = vpack.c.bf16 %v199, %v198
  %v214 = vpack.c.bf16 %v201, %v200
  %v215 = vpack.c.bf16 %v203, %v202
  %v216 = vpack.c.bf16 %v205, %v204
  %v217 = vpack.c.bf16 %v207, %v206
  %v218 = vpack.c.bf16 %v209, %v208
  %v219 = vpack.c.bf16 %v211, %v210
  %v228 = vunpack.c.l.b16 %v212
  %v229 = vunpack.c.h.b16 %v212
  %v230 = vunpack.c.l.b16 %v213
  %v231 = vunpack.c.h.b16 %v213
  %v232 = vunpack.c.l.b16 %v214
  %v233 = vunpack.c.h.b16 %v214
  %v234 = vunpack.c.l.b16 %v215
  %v235 = vunpack.c.h.b16 %v215
  %v236 = vunpack.c.l.b16 %v216
  %v237 = vunpack.c.h.b16 %v216
  %v238 = vunpack.c.l.b16 %v217
  %v239 = vunpack.c.h.b16 %v217
  %v240 = vunpack.c.l.b16 %v218
  %v241 = vunpack.c.h.b16 %v218
  %v242 = vunpack.c.l.b16 %v219
  %v243 = vunpack.c.h.b16 %v219
  %v244 = vpack.c.b16 %v228, %v228
  %v245 = vpack.c.b16 %v229, %v229
  %v246 = vpack.c.b16 %v230, %v230
  %v247 = vpack.c.b16 %v231, %v231
  %v248 = vpack.c.b16 %v232, %v232
  %v249 = vpack.c.b16 %v233, %v233
  %v250 = vpack.c.b16 %v234, %v234
  %v251 = vpack.c.b16 %v235, %v235
  %v252 = vpack.c.b16 %v236, %v236
  %v253 = vpack.c.b16 %v237, %v237
  %v254 = vpack.c.b16 %v238, %v238
  %v255 = vpack.c.b16 %v239, %v239
  %v256 = vpack.c.b16 %v240, %v240
  %v257 = vpack.c.b16 %v241, %v241
  %v258 = vpack.c.b16 %v242, %v242
  %v259 = vpack.c.b16 %v243, %v243
  %vm276 = vcmask 519168
  %277 = vst.msk [vmem:[%s5] sm:$0xf] %vm276, %v244
  %278 = vst.msk [vmem:[%s5 + $0x4] sm:$0xf] %vm276, %v245
  %279 = vst.msk [vmem:[%s5 + $0x8] sm:$0xf] %vm276, %v246
  %280 = vst.msk [vmem:[%s5 + $0xc] sm:$0xf] %vm276, %v247
  %281 = vst.msk [vmem:[%s5 + $0x10] sm:$0xf] %vm276, %v248
  %282 = vst.msk [vmem:[%s5 + $0x14] sm:$0xf] %vm276, %v249
  %283 = vst.msk [vmem:[%s5 + $0x18] sm:$0xf] %vm276, %v250
  %284 = vst.msk [vmem:[%s5 + $0x1c] sm:$0xf] %vm276, %v251
  %285 = vst.msk [vmem:[%s5 + $0x20] sm:$0xf] %vm276, %v252
  %286 = vst.msk [vmem:[%s5 + $0x24] sm:$0xf] %vm276, %v253
  %287 = vst.msk [vmem:[%s5 + $0x28] sm:$0xf] %vm276, %v254
  %288 = vst.msk [vmem:[%s5 + $0x2c] sm:$0xf] %vm276, %v255
  %289 = vst.msk [vmem:[%s5 + $0x30] sm:$0xf] %vm276, %v256
  %290 = vst.msk [vmem:[%s5 + $0x34] sm:$0xf] %vm276, %v257
  %291 = vst.msk [vmem:[%s5 + $0x38] sm:$0xf] %vm276, %v258
  %292 = vst.msk [vmem:[%s5 + $0x3c] sm:$0xf] %vm276, %v259
  // Predicated region
  $region22: #{net_forward.12} parent=0 // pred_check
    _
  $region23: #{net_forward.12} parent=0 // pred_check_branch
    %294 = sbr.rel (0) target = $region25
  $region24: #{net_forward.12} parent=0 // pred_region
    _
  $region25: #{net_forward.12} parent=0 // pred_fallthru
    _
  // Predicated region
  $region26: #{net_forward.12} parent=0 // pred_check
    _
  $region27: #{net_forward.12} parent=0 // pred_check_branch
    %296 = sbr.rel (0) target = $region29
  $region28: #{net_forward.12} parent=0 // pred_region
    _
  $region29: #{net_forward.12} parent=0 // pred_fallthru
    _

// kernel: net_forward.13
$region0: #{net_forward.13}
  #allocation0 [shape = 'u32[]', space=smem, size = 0x4, offset = 0x4, fixed_abs, tag = 'smem constant byte address 0x4 - core index']
  #allocation1 [shape = 'u32[144,128]{1,0:T(1,128)}', space=vmem, size = 0x12000, scoped, tag = 'internal scratch']
  #allocation2 [shape = 'f32[128,128]{1,0:T(8,128)}', space=vmem, size = 0x10000, scoped, tag = 'scratch operand']
  %s0 = inlined_call_operand.vmem [shape: bf16[128,640], index: 0, kind: input, shape index: {}]
  %s1 = inlined_call_operand.vmem [shape: bf16[640,128], index: 1, kind: input, shape index: {}]
  %s2 = inlined_call_operand.vmem [shape: f32[1,128], index: 2, kind: input, shape index: {}]
  %s3 = inlined_call_operand.vmem [shape: bf16[128,128], index: 3, kind: output, shape index: {}]
  %s4 = sld [smem:[#allocation0]]
  $region30: #{net_forward.13} parent=0
    _
  %s6 = ssub.s32 1, %s4
  %s7 = scalar_select 0, %s6, %s4
  // Predicated region
  $region2: #{net_forward.13} parent=0 // pred_check
    _
  $region3: #{net_forward.13} parent=0 // pred_check_branch
    %9 = sbr.rel (0) target = $region5
  $region4: #{net_forward.13} parent=0 // pred_region
    _
  $region5: #{net_forward.13} parent=0 // pred_fallthru
    _
  // Predicated region
  $region6: #{net_forward.13} parent=0 // pred_check
    _
  $region7: #{net_forward.13} parent=0 // pred_check_branch
    %11 = sbr.rel (0) target = $region9
  $region8: #{net_forward.13} parent=0 // pred_region
    _
  $region9: #{net_forward.13} parent=0 // pred_fallthru
    _
  // Predicated region
  $region10: #{net_forward.13} parent=0 // pred_check
    _
  $region11: #{net_forward.13} parent=0 // pred_check_branch
    %13 = sbr.rel (0) target = $region13
  $region12: #{net_forward.13} parent=0 // pred_region
    _
  $region13: #{net_forward.13} parent=0 // pred_fallthru
    _
  %p15 = scmp.eq.s32.totalorder 0, 0
  // Predicated region
  $region14: #{net_forward.13} parent=0 // pred_check
    %p16 = pneg %p15
  $region15: #{net_forward.13} parent=0 // pred_check_branch
    %18 = sbr.rel (%p16) target = $region17
  $region16: #{net_forward.13} parent=0 // pred_region
    %19 = vst [vmem:[#allocation2] sm:$0xff] 0.0
    %20 = vst [vmem:[#allocation2 + $0x8] sm:$0xff] 0.0
    %21 = vst [vmem:[#allocation2 + $0x10] sm:$0xff] 0.0
    %22 = vst [vmem:[#allocation2 + $0x18] sm:$0xff] 0.0
    %23 = vst [vmem:[#allocation2 + $0x20] sm:$0xff] 0.0
    %24 = vst [vmem:[#allocation2 + $0x28] sm:$0xff] 0.0
    %25 = vst [vmem:[#allocation2 + $0x30] sm:$0xff] 0.0
    %26 = vst [vmem:[#allocation2 + $0x38] sm:$0xff] 0.0
    %27 = vst [vmem:[#allocation2 + $0x40] sm:$0xff] 0.0
    %28 = vst [vmem:[#allocation2 + $0x48] sm:$0xff] 0.0
    %29 = vst [vmem:[#allocation2 + $0x50] sm:$0xff] 0.0
    %30 = vst [vmem:[#allocation2 + $0x58] sm:$0xff] 0.0
    %31 = vst [vmem:[#allocation2 + $0x60] sm:$0xff] 0.0
    %32 = vst [vmem:[#allocation2 + $0x68] sm:$0xff] 0.0
    %33 = vst [vmem:[#allocation2 + $0x70] sm:$0xff] 0.0
    %34 = vst [vmem:[#allocation2 + $0x78] sm:$0xff] 0.0
  $region17: #{net_forward.13} parent=0 // pred_fallthru
    _
  %v35 = vld [vmem:[#allocation2] sm:$0xff]
  %v36 = vld [vmem:[#allocation2 + $0x8] sm:$0xff]
  %v37 = vld [vmem:[#allocation2 + $0x10] sm:$0xff]
  %v38 = vld [vmem:[#allocation2 + $0x18] sm:$0xff]
  %v39 = vld [vmem:[#allocation2 + $0x20] sm:$0xff]
  %v40 = vld [vmem:[#allocation2 + $0x28] sm:$0xff]
  %v41 = vld [vmem:[#allocation2 + $0x30] sm:$0xff]
  %v42 = vld [vmem:[#allocation2 + $0x38] sm:$0xff]
  %v43 = vld [vmem:[#allocation2 + $0x40] sm:$0xff]
  %v44 = vld [vmem:[#allocation2 + $0x48] sm:$0xff]
  %v45 = vld [vmem:[#allocation2 + $0x50] sm:$0xff]
  %v46 = vld [vmem:[#allocation2 + $0x58] sm:$0xff]
  %v47 = vld [vmem:[#allocation2 + $0x60] sm:$0xff]
  %v48 = vld [vmem:[#allocation2 + $0x68] sm:$0xff]
  %v49 = vld [vmem:[#allocation2 + $0x70] sm:$0xff]
  %v50 = vld [vmem:[#allocation2 + $0x78] sm:$0xff]
  %v51 = vld [vmem:[%s0] sm:$0xff]
  %v52 = vld [vmem:[%s0 + $0x8] sm:$0xff]
  %v53 = vld [vmem:[%s0 + $0x10] sm:$0xf]
  %v54 = vld [vmem:[%s0 + $0x14] sm:$0xff]
  %v55 = vld [vmem:[%s0 + $0x1c] sm:$0xff]
  %v56 = vld [vmem:[%s0 + $0x24] sm:$0xf]
  %v57 = vld [vmem:[%s0 + $0x28] sm:$0xff]
  %v58 = vld [vmem:[%s0 + $0x30] sm:$0xff]
  %v59 = vld [vmem:[%s0 + $0x38] sm:$0xf]
  %v60 = vld [vmem:[%s0 + $0x3c] sm:$0xff]
  %v61 = vld [vmem:[%s0 + $0x44] sm:$0xff]
  %v62 = vld [vmem:[%s0 + $0x4c] sm:$0xf]
  %v63 = vld [vmem:[%s0 + $0x50] sm:$0xff]
  %v64 = vld [vmem:[%s0 + $0x58] sm:$0xff]
  %v65 = vld [vmem:[%s0 + $0x60] sm:$0xf]
  %v66 = vld [vmem:[%s0 + $0x64] sm:$0xff]
  %v67 = vld [vmem:[%s0 + $0x6c] sm:$0xff]
  %v68 = vld [vmem:[%s0 + $0x74] sm:$0xf]
  %v69 = vld [vmem:[%s0 + $0x78] sm:$0xff]
  %v70 = vld [vmem:[%s0 + $0x80] sm:$0xff]
  %v71 = vld [vmem:[%s0 + $0x88] sm:$0xf]
  %v72 = vld [vmem:[%s0 + $0x8c] sm:$0xff]
  %v73 = vld [vmem:[%s0 + $0x94] sm:$0xff]
  %v74 = vld [vmem:[%s0 + $0x9c] sm:$0xf]
  %v75 = vld [vmem:[%s0 + $0xa0] sm:$0xff]
  %v76 = vld [vmem:[%s0 + $0xa8] sm:$0xff]
  %v77 = vld [vmem:[%s0 + $0xb0] sm:$0xf]
  %v78 = vld [vmem:[%s0 + $0xb4] sm:$0xff]
  %v79 = vld [vmem:[%s0 + $0xbc] sm:$0xff]
  %v80 = vld [vmem:[%s0 + $0xc4] sm:$0xf]
  %v81 = vld [vmem:[%s0 + $0xc8] sm:$0xff]
  %v82 = vld [vmem:[%s0 + $0xd0] sm:$0xff]
  %v83 = vld [vmem:[%s0 + $0xd8] sm:$0xf]
  %v84 = vld [vmem:[%s0 + $0xdc] sm:$0xff]
  %v85 = vld [vmem:[%s0 + $0xe4] sm:$0xff]
  %v86 = vld [vmem:[%s0 + $0xec] sm:$0xf]
  %v87 = vld [vmem:[%s0 + $0xf0] sm:$0xff]
  %v88 = vld [vmem:[%s0 + $0xf8] sm:$0xff]
  %v89 = vld [vmem:[%s0 + $0x100] sm:$0xf]
  %v90 = vld [vmem:[%s0 + $0x104] sm:$0xff]
  %v91 = vld [vmem:[%s0 + $0x10c] sm:$0xff]
  %v92 = vld [vmem:[%s0 + $0x114] sm:$0xf]
  %v93 = vld [vmem:[%s0 + $0x118] sm:$0xff]
  %v94 = vld [vmem:[%s0 + $0x120] sm:$0xff]
  %v95 = vld [vmem:[%s0 + $0x128] sm:$0xf]
  %v96 = vld [vmem:[%s0 + $0x12c] sm:$0xff]
  %v97 = vld [vmem:[%s0 + $0x134] sm:$0xff]
  %v98 = vld [vmem:[%s0 + $0x13c] sm:$0xf]
  %v99 = vld [vmem:[%s1] sm:$0xf]
  %v100 = vld [vmem:[%s1 + $0x4] sm:$0xf]
  %v101 = vld [vmem:[%s1 + $0x8] sm:$0xf]
  %v102 = vld [vmem:[%s1 + $0xc] sm:$0xf]
  %v103 = vld [vmem:[%s1 + $0x10] sm:$0xf]
  %v104 = vld [vmem:[%s1 + $0x14] sm:$0xf]
  %v105 = vld [vmem:[%s1 + $0x18] sm:$0xf]
  %v106 = vld [vmem:[%s1 + $0x1c] sm:$0xf]
  %v107 = vld [vmem:[%s1 + $0x20] sm:$0xf]
  %v108 = vld [vmem:[%s1 + $0x24] sm:$0xf]
  %v109 = vld [vmem:[%s1 + $0x28] sm:$0xf]
  %v110 = vld [vmem:[%s1 + $0x2c] sm:$0xf]
  %v111 = vld [vmem:[%s1 + $0x30] sm:$0xf]
  %v112 = vld [vmem:[%s1 + $0x34] sm:$0xf]
  %v113 = vld [vmem:[%s1 + $0x38] sm:$0xf]
  %v114 = vld [vmem:[%s1 + $0x3c] sm:$0xf]
  %v115 = vld [vmem:[%s1 + $0x40] sm:$0xf]
  %v116 = vld [vmem:[%s1 + $0x44] sm:$0xf]
  %v117 = vld [vmem:[%s1 + $0x48] sm:$0xf]
  %v118 = vld [vmem:[%s1 + $0x4c] sm:$0xf]
  %v119 = vld [vmem:[%s1 + $0x50] sm:$0xf]
  %v120 = vld [vmem:[%s1 + $0x54] sm:$0xf]
  %v121 = vld [vmem:[%s1 + $0x58] sm:$0xf]
  %v122 = vld [vmem:[%s1 + $0x5c] sm:$0xf]
  %v123 = vld [vmem:[%s1 + $0x60] sm:$0xf]
  %v124 = vld [vmem:[%s1 + $0x64] sm:$0xf]
  %v125 = vld [vmem:[%s1 + $0x68] sm:$0xf]
  %v126 = vld [vmem:[%s1 + $0x6c] sm:$0xf]
  %v127 = vld [vmem:[%s1 + $0x70] sm:$0xf]
  %v128 = vld [vmem:[%s1 + $0x74] sm:$0xf]
  %v129 = vld [vmem:[%s1 + $0x78] sm:$0xf]
  %v130 = vld [vmem:[%s1 + $0x7c] sm:$0xf]
  %v131 = vld [vmem:[%s1 + $0x80] sm:$0xf]
  %v132 = vld [vmem:[%s1 + $0x84] sm:$0xf]
  %v133 = vld [vmem:[%s1 + $0x88] sm:$0xf]
  %v134 = vld [vmem:[%s1 + $0x8c] sm:$0xf]
  %v135 = vld [vmem:[%s1 + $0x90] sm:$0xf]
  %v136 = vld [vmem:[%s1 + $0x94] sm:$0xf]
  %v137 = vld [vmem:[%s1 + $0x98] sm:$0xf]
  %v138 = vld [vmem:[%s1 + $0x9c] sm:$0xf]
  %v139 = vld [vmem:[%s1 + $0xa0] sm:$0xf]
  %v140 = vld [vmem:[%s1 + $0xa4] sm:$0xf]
  %v141 = vld [vmem:[%s1 + $0xa8] sm:$0xf]
  %v142 = vld [vmem:[%s1 + $0xac] sm:$0xf]
  %v143 = vld [vmem:[%s1 + $0xb0] sm:$0xf]
  %v144 = vld [vmem:[%s1 + $0xb4] sm:$0xf]
  %v145 = vld [vmem:[%s1 + $0xb8] sm:$0xf]
  %v146 = vld [vmem:[%s1 + $0xbc] sm:$0xf]
  %v147 = vld [vmem:[%s1 + $0xc0] sm:$0xf]
  %v148 = vld [vmem:[%s1 + $0xc4] sm:$0xf]
  %v149 = vld [vmem:[%s1 + $0xc8] sm:$0xf]
  %v150 = vld [vmem:[%s1 + $0xcc] sm:$0xf]
  %v151 = vld [vmem:[%s1 + $0xd0] sm:$0xf]
  %v152 = vld [vmem:[%s1 + $0xd4] sm:$0xf]
  %v153 = vld [vmem:[%s1 + $0xd8] sm:$0xf]
  %v154 = vld [vmem:[%s1 + $0xdc] sm:$0xf]
  %v155 = vld [vmem:[%s1 + $0xe0] sm:$0xf]
  %v156 = vld [vmem:[%s1 + $0xe4] sm:$0xf]
  %v157 = vld [vmem:[%s1 + $0xe8] sm:$0xf]
  %v158 = vld [vmem:[%s1 + $0xec] sm:$0xf]
  %v159 = vld [vmem:[%s1 + $0xf0] sm:$0xf]
  %v160 = vld [vmem:[%s1 + $0xf4] sm:$0xf]
  %v161 = vld [vmem:[%s1 + $0xf8] sm:$0xf]
  %v162 = vld [vmem:[%s1 + $0xfc] sm:$0xf]
  %v163 = vld [vmem:[%s1 + $0x100] sm:$0xf]
  %v164 = vld [vmem:[%s1 + $0x104] sm:$0xf]
  %v165 = vld [vmem:[%s1 + $0x108] sm:$0xf]
  %v166 = vld [vmem:[%s1 + $0x10c] sm:$0xf]
  %v167 = vld [vmem:[%s1 + $0x110] sm:$0xf]
  %v168 = vld [vmem:[%s1 + $0x114] sm:$0xf]
  %v169 = vld [vmem:[%s1 + $0x118] sm:$0xf]
  %v170 = vld [vmem:[%s1 + $0x11c] sm:$0xf]
  %v171 = vld [vmem:[%s1 + $0x120] sm:$0xf]
  %v172 = vld [vmem:[%s1 + $0x124] sm:$0xf]
  %v173 = vld [vmem:[%s1 + $0x128] sm:$0xf]
  %v174 = vld [vmem:[%s1 + $0x12c] sm:$0xf]
  %v175 = vld [vmem:[%s1 + $0x130] sm:$0xf]
  %v176 = vld [vmem:[%s1 + $0x134] sm:$0xf]
  %v177 = vld [vmem:[%s1 + $0x138] sm:$0xf]
  %v178 = vld [vmem:[%s1 + $0x13c] sm:$0xf]
  %v227 = vunpack.c.l.b16 %v51
  %v228 = vunpack.c.h.b16 %v51
  %v229 = vunpack.c.l.b16 %v52
  %v230 = vunpack.c.h.b16 %v52
  %v231 = vunpack.c.l.b16 %v53
  %v232 = vunpack.c.l.b16 %v54
  %v233 = vunpack.c.h.b16 %v54
  %v234 = vunpack.c.l.b16 %v55
  %v235 = vunpack.c.h.b16 %v55
  %v236 = vunpack.c.l.b16 %v56
  %v237 = vunpack.c.l.b16 %v57
  %v238 = vunpack.c.h.b16 %v57
  %v239 = vunpack.c.l.b16 %v58
  %v240 = vunpack.c.h.b16 %v58
  %v241 = vunpack.c.l.b16 %v59
  %v242 = vunpack.c.l.b16 %v60
  %v243 = vunpack.c.h.b16 %v60
  %v244 = vunpack.c.l.b16 %v61
  %v245 = vunpack.c.h.b16 %v61
  %v246 = vunpack.c.l.b16 %v62
  %v247 = vunpack.c.l.b16 %v63
  %v248 = vunpack.c.h.b16 %v63
  %v249 = vunpack.c.l.b16 %v64
  %v250 = vunpack.c.h.b16 %v64
  %v251 = vunpack.c.l.b16 %v65
  %v252 = vunpack.c.l.b16 %v66
  %v253 = vunpack.c.h.b16 %v66
  %v254 = vunpack.c.l.b16 %v67
  %v255 = vunpack.c.h.b16 %v67
  %v256 = vunpack.c.l.b16 %v68
  %v257 = vunpack.c.l.b16 %v69
  %v258 = vunpack.c.h.b16 %v69
  %v259 = vunpack.c.l.b16 %v70
  %v260 = vunpack.c.h.b16 %v70
  %v261 = vunpack.c.l.b16 %v71
  %v262 = vunpack.c.l.b16 %v72
  %v263 = vunpack.c.h.b16 %v72
  %v264 = vunpack.c.l.b16 %v73
  %v265 = vunpack.c.h.b16 %v73
  %v266 = vunpack.c.l.b16 %v74
  %v267 = vunpack.c.l.b16 %v75
  %v268 = vunpack.c.h.b16 %v75
  %v269 = vunpack.c.l.b16 %v76
  %v270 = vunpack.c.h.b16 %v76
  %v271 = vunpack.c.l.b16 %v77
  %v272 = vunpack.c.l.b16 %v78
  %v273 = vunpack.c.h.b16 %v78
  %v274 = vunpack.c.l.b16 %v79
  %v275 = vunpack.c.h.b16 %v79
  %v276 = vunpack.c.l.b16 %v80
  %v277 = vunpack.c.l.b16 %v81
  %v278 = vunpack.c.h.b16 %v81
  %v279 = vunpack.c.l.b16 %v82
  %v280 = vunpack.c.h.b16 %v82
  %v281 = vunpack.c.l.b16 %v83
  %v282 = vunpack.c.l.b16 %v84
  %v283 = vunpack.c.h.b16 %v84
  %v284 = vunpack.c.l.b16 %v85
  %v285 = vunpack.c.h.b16 %v85
  %v286 = vunpack.c.l.b16 %v86
  %v287 = vunpack.c.l.b16 %v87
  %v288 = vunpack.c.h.b16 %v87
  %v289 = vunpack.c.l.b16 %v88
  %v290 = vunpack.c.h.b16 %v88
  %v291 = vunpack.c.l.b16 %v89
  %v292 = vunpack.c.l.b16 %v90
  %v293 = vunpack.c.h.b16 %v90
  %v294 = vunpack.c.l.b16 %v91
  %v295 = vunpack.c.h.b16 %v91
  %v296 = vunpack.c.l.b16 %v92
  %v297 = vunpack.c.l.b16 %v93
  %v298 = vunpack.c.h.b16 %v93
  %v299 = vunpack.c.l.b16 %v94
  %v300 = vunpack.c.h.b16 %v94
  %v301 = vunpack.c.l.b16 %v95
  %v302 = vunpack.c.l.b16 %v96
  %v303 = vunpack.c.h.b16 %v96
  %v304 = vunpack.c.l.b16 %v97
  %v305 = vunpack.c.h.b16 %v97
  %v306 = vunpack.c.l.b16 %v98
  %v307 = vpack.c.b16 %v232, %v227
  %v308 = vpack.c.b16 %v233, %v228
  %v309 = vpack.c.b16 %v234, %v229
  %v310 = vpack.c.b16 %v235, %v230
  %v311 = vpack.c.b16 %v236, %v231
  %v312 = vpack.c.b16 %v242, %v237
  %v313 = vpack.c.b16 %v243, %v238
  %v314 = vpack.c.b16 %v244, %v239
  %v315 = vpack.c.b16 %v245, %v240
  %v316 = vpack.c.b16 %v246, %v241
  %v317 = vpack.c.b16 %v252, %v247
  %v318 = vpack.c.b16 %v253, %v248
  %v319 = vpack.c.b16 %v254, %v249
  %v320 = vpack.c.b16 %v255, %v250
  %v321 = vpack.c.b16 %v256, %v251
  %v322 = vpack.c.b16 %v262, %v257
  %v323 = vpack.c.b16 %v263, %v258
  %v324 = vpack.c.b16 %v264, %v259
  %v325 = vpack.c.b16 %v265, %v260
  %v326 = vpack.c.b16 %v266, %v261
  %v327 = vpack.c.b16 %v272, %v267
  %v328 = vpack.c.b16 %v273, %v268
  %v329 = vpack.c.b16 %v274, %v269
  %v330 = vpack.c.b16 %v275, %v270
  %v331 = vpack.c.b16 %v276, %v271
  %v332 = vpack.c.b16 %v282, %v277
  %v333 = vpack.c.b16 %v283, %v278
  %v334 = vpack.c.b16 %v284, %v279
  %v335 = vpack.c.b16 %v285, %v280
  %v336 = vpack.c.b16 %v286, %v281
  %v337 = vpack.c.b16 %v292, %v287
  %v338 = vpack.c.b16 %v293, %v288
  %v339 = vpack.c.b16 %v294, %v289
  %v340 = vpack.c.b16 %v295, %v290
  %v341 = vpack.c.b16 %v296, %v291
  %v342 = vpack.c.b16 %v302, %v297
  %v343 = vpack.c.b16 %v303, %v298
  %v344 = vpack.c.b16 %v304, %v299
  %v345 = vpack.c.b16 %v305, %v300
  %v346 = vpack.c.b16 %v306, %v301
  %v467 = vunpack.c.l.b16 %v99
  %v468 = vunpack.c.l.b16 %v100
  %v469 = vunpack.c.l.b16 %v101
  %v470 = vunpack.c.l.b16 %v102
  %v471 = vunpack.c.l.b16 %v103
  %v472 = vunpack.c.l.b16 %v104
  %v473 = vunpack.c.l.b16 %v105
  %v474 = vunpack.c.l.b16 %v106
  %v475 = vunpack.c.l.b16 %v107
  %v476 = vunpack.c.l.b16 %v108
  %v477 = vunpack.c.l.b16 %v109
  %v478 = vunpack.c.l.b16 %v110
  %v479 = vunpack.c.l.b16 %v111
  %v480 = vunpack.c.l.b16 %v112
  %v481 = vunpack.c.l.b16 %v113
  %v482 = vunpack.c.l.b16 %v114
  %v483 = vunpack.c.l.b16 %v115
  %v484 = vunpack.c.l.b16 %v116
  %v485 = vunpack.c.l.b16 %v117
  %v486 = vunpack.c.l.b16 %v118
  %v487 = vunpack.c.l.b16 %v119
  %v488 = vunpack.c.l.b16 %v120
  %v489 = vunpack.c.l.b16 %v121
  %v490 = vunpack.c.l.b16 %v122
  %v491 = vunpack.c.l.b16 %v123
  %v492 = vunpack.c.l.b16 %v124
  %v493 = vunpack.c.l.b16 %v125
  %v494 = vunpack.c.l.b16 %v126
  %v495 = vunpack.c.l.b16 %v127
  %v496 = vunpack.c.l.b16 %v128
  %v497 = vunpack.c.l.b16 %v129
  %v498 = vunpack.c.l.b16 %v130
  %v499 = vunpack.c.l.b16 %v131
  %v500 = vunpack.c.l.b16 %v132
  %v501 = vunpack.c.l.b16 %v133
  %v502 = vunpack.c.l.b16 %v134
  %v503 = vunpack.c.l.b16 %v135
  %v504 = vunpack.c.l.b16 %v136
  %v505 = vunpack.c.l.b16 %v137
  %v506 = vunpack.c.l.b16 %v138
  %v507 = vunpack.c.l.b16 %v139
  %v508 = vunpack.c.l.b16 %v140
  %v509 = vunpack.c.l.b16 %v141
  %v510 = vunpack.c.l.b16 %v142
  %v511 = vunpack.c.l.b16 %v143
  %v512 = vunpack.c.l.b16 %v144
  %v513 = vunpack.c.l.b16 %v145
  %v514 = vunpack.c.l.b16 %v146
  %v515 = vunpack.c.l.b16 %v147
  %v516 = vunpack.c.l.b16 %v148
  %v517 = vunpack.c.l.b16 %v149
  %v518 = vunpack.c.l.b16 %v150
  %v519 = vunpack.c.l.b16 %v151
  %v520 = vunpack.c.l.b16 %v152
  %v521 = vunpack.c.l.b16 %v153
  %v522 = vunpack.c.l.b16 %v154
  %v523 = vunpack.c.l.b16 %v155
  %v524 = vunpack.c.l.b16 %v156
  %v525 = vunpack.c.l.b16 %v157
  %v526 = vunpack.c.l.b16 %v158
  %v527 = vunpack.c.l.b16 %v159
  %v528 = vunpack.c.l.b16 %v160
  %v529 = vunpack.c.l.b16 %v161
  %v530 = vunpack.c.l.b16 %v162
  %v531 = vunpack.c.l.b16 %v163
  %v532 = vunpack.c.l.b16 %v164
  %v533 = vunpack.c.l.b16 %v165
  %v534 = vunpack.c.l.b16 %v166
  %v535 = vunpack.c.l.b16 %v167
  %v536 = vunpack.c.l.b16 %v168
  %v537 = vunpack.c.l.b16 %v169
  %v538 = vunpack.c.l.b16 %v170
  %v539 = vunpack.c.l.b16 %v171
  %v540 = vunpack.c.l.b16 %v172
  %v541 = vunpack.c.l.b16 %v173
  %v542 = vunpack.c.l.b16 %v174
  %v543 = vunpack.c.l.b16 %v175
  %v544 = vunpack.c.l.b16 %v176
  %v545 = vunpack.c.l.b16 %v177
  %v546 = vunpack.c.l.b16 %v178
  %v547 = vpack.c.b16 %v468, %v467
  %v548 = vpack.c.b16 %v470, %v469
  %v549 = vpack.c.b16 %v472, %v471
  %v550 = vpack.c.b16 %v474, %v473
  %v551 = vpack.c.b16 %v476, %v475
  %v552 = vpack.c.b16 %v478, %v477
  %v553 = vpack.c.b16 %v480, %v479
  %v554 = vpack.c.b16 %v482, %v481
  %v555 = vpack.c.b16 %v484, %v483
  %v556 = vpack.c.b16 %v486, %v485
  %v557 = vpack.c.b16 %v488, %v487
  %v558 = vpack.c.b16 %v490, %v489
  %v559 = vpack.c.b16 %v492, %v491
  %v560 = vpack.c.b16 %v494, %v493
  %v561 = vpack.c.b16 %v496, %v495
  %v562 = vpack.c.b16 %v498, %v497
  %v563 = vpack.c.b16 %v500, %v499
  %v564 = vpack.c.b16 %v502, %v501
  %v565 = vpack.c.b16 %v504, %v503
  %v566 = vpack.c.b16 %v506, %v505
  %v567 = vpack.c.b16 %v508, %v507
  %v568 = vpack.c.b16 %v510, %v509
  %v569 = vpack.c.b16 %v512, %v511
  %v570 = vpack.c.b16 %v514, %v513
  %v571 = vpack.c.b16 %v516, %v515
  %v572 = vpack.c.b16 %v518, %v517
  %v573 = vpack.c.b16 %v520, %v519
  %v574 = vpack.c.b16 %v522, %v521
  %v575 = vpack.c.b16 %v524, %v523
  %v576 = vpack.c.b16 %v526, %v525
  %v577 = vpack.c.b16 %v528, %v527
  %v578 = vpack.c.b16 %v530, %v529
  %v579 = vpack.c.b16 %v532, %v531
  %v580 = vpack.c.b16 %v534, %v533
  %v581 = vpack.c.b16 %v536, %v535
  %v582 = vpack.c.b16 %v538, %v537
  %v583 = vpack.c.b16 %v540, %v539
  %v584 = vpack.c.b16 %v542, %v541
  %v585 = vpack.c.b16 %v544, %v543
  %v586 = vpack.c.b16 %v546, %v545
  %627 = vmatprep.subr.bf16.mxu0 0
  %628 = vmatpush1.bf16.msra.mxu0 %v554
  %629 = vmatprep.subr.bf16.mxu0 0
  %630 = vmatpush1.bf16.msra.mxu0 %v553
  %631 = vmatprep.subr.bf16.mxu0 0
  %632 = vmatpush1.bf16.msra.mxu0 %v552
  %633 = vmatprep.subr.bf16.mxu0 0
  %634 = vmatpush1.bf16.msra.mxu0 %v551
  %635 = vmatprep.subr.bf16.mxu0 0
  %636 = vmatpush1.bf16.msra.mxu0 %v550
  %637 = vmatprep.subr.bf16.mxu0 0
  %638 = vmatpush1.bf16.msra.mxu0 %v549
  %639 = vmatprep.subr.bf16.mxu0 0
  %640 = vmatpush1.bf16.msra.mxu0 %v548
  %641 = vmatprep.subr.bf16.mxu0 0
  %642 = vmatpush1.bf16.msra.mxu0 %v547
  %643 = vmatprep.subr.bf16.mxu0 0
  %644 = vmatpush2.bf16.msra.mxu0 %v562
  %645 = vmatprep.subr.bf16.mxu0 0
  %646 = vmatpush2.bf16.msra.mxu0 %v561
  %647 = vmatprep.subr.bf16.mxu0 0
  %648 = vmatpush2.bf16.msra.mxu0 %v560
  %649 = vmatprep.subr.bf16.mxu0 0
  %650 = vmatpush2.bf16.msra.mxu0 %v559
  %651 = vmatprep.subr.bf16.mxu0 0
  %652 = vmatpush2.bf16.msra.mxu0 %v558
  %653 = vmatprep.subr.bf16.mxu0 0
  %654 = vmatpush2.bf16.msra.mxu0 %v557
  %655 = vmatprep.subr.bf16.mxu0 0
  %656 = vmatpush2.bf16.msra.mxu0 %v556
  %657 = vmatprep.subr.bf16.mxu0 0
  %658 = vmatpush2.bf16.msra.mxu0 %v555
  %659 = vmatprep.mubr.bf16.mxu0 %v308
  %660 = vmatmul.mubr.bf16.gmra.mxu0 %v307
  %v661 = vpop.f32.mrf.mxu0
  %v662 = vadd.f32 0.0, %v661
  %v663 = vpop.f32.mrf.mxu0
  %v664 = vpop.f32.mrf.mxu0
  %v665 = vadd.f32 0.0, %v664
  %v666 = vpop.f32.mrf.mxu0
  %667 = vmatprep.mubr.bf16.mxu0 %v313
  %668 = vmatmul.mubr.bf16.gmra.mxu0 %v312
  %v669 = vpop.f32.mrf.mxu0
  %v670 = vadd.f32 0.0, %v669
  %v671 = vpop.f32.mrf.mxu0
  %v672 = vpop.f32.mrf.mxu0
  %v673 = vadd.f32 0.0, %v672
  %v674 = vpop.f32.mrf.mxu0
  %675 = vmatprep.mubr.bf16.mxu0 %v318
  %676 = vmatmul.mubr.bf16.gmra.mxu0 %v317
  %v677 = vpop.f32.mrf.mxu0
  %v678 = vadd.f32 0.0, %v677
  %v679 = vpop.f32.mrf.mxu0
  %v680 = vpop.f32.mrf.mxu0
  %v681 = vadd.f32 0.0, %v680
  %v682 = vpop.f32.mrf.mxu0
  %683 = vmatprep.mubr.bf16.mxu0 %v323
  %684 = vmatmul.mubr.bf16.gmra.mxu0 %v322
  %v685 = vpop.f32.mrf.mxu0
  %v686 = vadd.f32 0.0, %v685
  %v687 = vpop.f32.mrf.mxu0
  %v688 = vpop.f32.mrf.mxu0
  %v689 = vadd.f32 0.0, %v688
  %v690 = vpop.f32.mrf.mxu0
  %691 = vmatprep.mubr.bf16.mxu0 %v328
  %692 = vmatmul.mubr.bf16.gmra.mxu0 %v327
  %v693 = vpop.f32.mrf.mxu0
  %v694 = vadd.f32 0.0, %v693
  %v695 = vpop.f32.mrf.mxu0
  %v696 = vpop.f32.mrf.mxu0
  %v697 = vadd.f32 0.0, %v696
  %v698 = vpop.f32.mrf.mxu0
  %699 = vmatprep.mubr.bf16.mxu0 %v333
  %700 = vmatmul.mubr.bf16.gmra.mxu0 %v332
  %v701 = vpop.f32.mrf.mxu0
  %v702 = vadd.f32 0.0, %v701
  %v703 = vpop.f32.mrf.mxu0
  %v704 = vpop.f32.mrf.mxu0
  %v705 = vadd.f32 0.0, %v704
  %v706 = vpop.f32.mrf.mxu0
  %707 = vmatprep.mubr.bf16.mxu0 %v338
  %708 = vmatmul.mubr.bf16.gmra.mxu0 %v337
  %v709 = vpop.f32.mrf.mxu0
  %v710 = vadd.f32 0.0, %v709
  %v711 = vpop.f32.mrf.mxu0
  %v712 = vpop.f32.mrf.mxu0
  %v713 = vadd.f32 0.0, %v712
  %v714 = vpop.f32.mrf.mxu0
  %715 = vmatprep.mubr.bf16.mxu0 %v343
  %716 = vmatmul.mubr.bf16.gmra.mxu0 %v342
  %v717 = vpop.f32.mrf.mxu0
  %v718 = vadd.f32 0.0, %v717
  %v719 = vpop.f32.mrf.mxu0
  %v720 = vpop.f32.mrf.mxu0
  %v721 = vadd.f32 0.0, %v720
  %v722 = vpop.f32.mrf.mxu0
  %723 = vdwg.mxu0
  %724 = vmatprep.subr.bf16.mxu0 0
  %725 = vmatpush1.bf16.msra.mxu0 %v570
  %726 = vmatprep.subr.bf16.mxu0 0
  %727 = vmatpush1.bf16.msra.mxu0 %v569
  %728 = vmatprep.subr.bf16.mxu0 0
  %729 = vmatpush1.bf16.msra.mxu0 %v568
  %730 = vmatprep.subr.bf16.mxu0 0
  %731 = vmatpush1.bf16.msra.mxu0 %v567
  %732 = vmatprep.subr.bf16.mxu0 0
  %733 = vmatpush1.bf16.msra.mxu0 %v566
  %734 = vmatprep.subr.bf16.mxu0 0
  %735 = vmatpush1.bf16.msra.mxu0 %v565
  %736 = vmatprep.subr.bf16.mxu0 0
  %737 = vmatpush1.bf16.msra.mxu0 %v564
  %738 = vmatprep.subr.bf16.mxu0 0
  %739 = vmatpush1.bf16.msra.mxu0 %v563
  %740 = vmatprep.subr.bf16.mxu0 0
  %741 = vmatpush2.bf16.msra.mxu0 %v578
  %742 = vmatprep.subr.bf16.mxu0 0
  %743 = vmatpush2.bf16.msra.mxu0 %v577
  %744 = vmatprep.subr.bf16.mxu0 0
  %745 = vmatpush2.bf16.msra.mxu0 %v576
  %746 = vmatprep.subr.bf16.mxu0 0
  %747 = vmatpush2.bf16.msra.mxu0 %v575
  %748 = vmatprep.subr.bf16.mxu0 0
  %749 = vmatpush2.bf16.msra.mxu0 %v574
  %750 = vmatprep.subr.bf16.mxu0 0
  %751 = vmatpush2.bf16.msra.mxu0 %v573
  %752 = vmatprep.subr.bf16.mxu0 0
  %753 = vmatpush2.bf16.msra.mxu0 %v572
  %754 = vmatprep.subr.bf16.mxu0 0
  %755 = vmatpush2.bf16.msra.mxu0 %v571
  %756 = vmatprep.mubr.bf16.mxu0 %v310
  %757 = vmatmul.mubr.bf16.gmra.mxu0 %v309
  %v758 = vpop.f32.mrf.mxu0
  %v759 = vadd.f32 %v662, %v758
  %v760 = vpop.f32.mrf.mxu0
  %v761 = vpop.f32.mrf.mxu0
  %v762 = vadd.f32 %v665, %v761
  %v763 = vpop.f32.mrf.mxu0
  %764 = vmatprep.mubr.bf16.mxu0 %v315
  %765 = vmatmul.mubr.bf16.gmra.mxu0 %v314
  %v766 = vpop.f32.mrf.mxu0
  %v767 = vadd.f32 %v670, %v766
  %v768 = vpop.f32.mrf.mxu0
  %v769 = vpop.f32.mrf.mxu0
  %v770 = vadd.f32 %v673, %v769
  %v771 = vpop.f32.mrf.mxu0
  %772 = vmatprep.mubr.bf16.mxu0 %v320
  %773 = vmatmul.mubr.bf16.gmra.mxu0 %v319
  %v774 = vpop.f32.mrf.mxu0
  %v775 = vadd.f32 %v678, %v774
  %v776 = vpop.f32.mrf.mxu0
  %v777 = vpop.f32.mrf.mxu0
  %v778 = vadd.f32 %v681, %v777
  %v779 = vpop.f32.mrf.mxu0
  %780 = vmatprep.mubr.bf16.mxu0 %v325
  %781 = vmatmul.mubr.bf16.gmra.mxu0 %v324
  %v782 = vpop.f32.mrf.mxu0
  %v783 = vadd.f32 %v686, %v782
  %v784 = vpop.f32.mrf.mxu0
  %v785 = vpop.f32.mrf.mxu0
  %v786 = vadd.f32 %v689, %v785
  %v787 = vpop.f32.mrf.mxu0
  %788 = vmatprep.mubr.bf16.mxu0 %v330
  %789 = vmatmul.mubr.bf16.gmra.mxu0 %v329
  %v790 = vpop.f32.mrf.mxu0
  %v791 = vadd.f32 %v694, %v790
  %v792 = vpop.f32.mrf.mxu0
  %v793 = vpop.f32.mrf.mxu0
  %v794 = vadd.f32 %v697, %v793
  %v795 = vpop.f32.mrf.mxu0
  %796 = vmatprep.mubr.bf16.mxu0 %v335
  %797 = vmatmul.mubr.bf16.gmra.mxu0 %v334
  %v798 = vpop.f32.mrf.mxu0
  %v799 = vadd.f32 %v702, %v798
  %v800 = vpop.f32.mrf.mxu0
  %v801 = vpop.f32.mrf.mxu0
  %v802 = vadd.f32 %v705, %v801
  %v803 = vpop.f32.mrf.mxu0
  %804 = vmatprep.mubr.bf16.mxu0 %v340
  %805 = vmatmul.mubr.bf16.gmra.mxu0 %v339
  %v806 = vpop.f32.mrf.mxu0
  %v807 = vadd.f32 %v710, %v806
  %v808 = vpop.f32.mrf.mxu0
  %v809 = vpop.f32.mrf.mxu0
  %v810 = vadd.f32 %v713, %v809
  %v811 = vpop.f32.mrf.mxu0
  %812 = vmatprep.mubr.bf16.mxu0 %v345
  %813 = vmatmul.mubr.bf16.gmra.mxu0 %v344
  %v814 = vpop.f32.mrf.mxu0
  %v815 = vadd.f32 %v718, %v814
  %v816 = vpop.f32.mrf.mxu0
  %v817 = vpop.f32.mrf.mxu0
  %v818 = vadd.f32 %v721, %v817
  %v819 = vpop.f32.mrf.mxu0
  %820 = vdwg.mxu0
  %821 = vmatprep.subr.bf16.mxu0 0
  %822 = vmatpush1.bf16.msra.mxu0 %v586
  %823 = vmatprep.subr.bf16.mxu0 0
  %824 = vmatpush1.bf16.msra.mxu0 %v585
  %825 = vmatprep.subr.bf16.mxu0 0
  %826 = vmatpush1.bf16.msra.mxu0 %v584
  %827 = vmatprep.subr.bf16.mxu0 0
  %828 = vmatpush1.bf16.msra.mxu0 %v583
  %829 = vmatprep.subr.bf16.mxu0 0
  %830 = vmatpush1.bf16.msra.mxu0 %v582
  %831 = vmatprep.subr.bf16.mxu0 0
  %832 = vmatpush1.bf16.msra.mxu0 %v581
  %833 = vmatprep.subr.bf16.mxu0 0
  %834 = vmatpush1.bf16.msra.mxu0 %v580
  %835 = vmatprep.subr.bf16.mxu0 0
  %836 = vmatpush1.bf16.msra.mxu0 %v579
  %837 = vmatprep.subr.bf16.mxu0 0
  %838 = vmatpush2.bf16.msra.mxu0 0
  %839 = vmatprep.subr.bf16.mxu0 0
  %840 = vmatpush2.bf16.msra.mxu0 0
  %841 = vmatprep.subr.bf16.mxu0 0
  %842 = vmatpush2.bf16.msra.mxu0 0
  %843 = vmatprep.subr.bf16.mxu0 0
  %844 = vmatpush2.bf16.msra.mxu0 0
  %845 = vmatprep.subr.bf16.mxu0 0
  %846 = vmatpush2.bf16.msra.mxu0 0
  %847 = vmatprep.subr.bf16.mxu0 0
  %848 = vmatpush2.bf16.msra.mxu0 0
  %849 = vmatprep.subr.bf16.mxu0 0
  %850 = vmatpush2.bf16.msra.mxu0 0
  %851 = vmatprep.subr.bf16.mxu0 0
  %852 = vmatpush2.bf16.msra.mxu0 0
  %853 = vmatprep.mubr.bf16.mxu0 0
  %854 = vmatmul.mubr.bf16.gmra.mxu0 %v311
  %v855 = vpop.f32.mrf.mxu0
  %v856 = vadd.f32 %v759, %v855
  %v857 = vpop.f32.mrf.mxu0
  %v858 = vpop.f32.mrf.mxu0
  %v859 = vadd.f32 %v762, %v858
  %v860 = vpop.f32.mrf.mxu0
  %861 = vmatprep.mubr.bf16.mxu0 0
  %862 = vmatmul.mubr.bf16.gmra.mxu0 %v316
  %v863 = vpop.f32.mrf.mxu0
  %v864 = vadd.f32 %v767, %v863
  %v865 = vpop.f32.mrf.mxu0
  %v866 = vpop.f32.mrf.mxu0
  %v867 = vadd.f32 %v770, %v866
  %v868 = vpop.f32.mrf.mxu0
  %869 = vmatprep.mubr.bf16.mxu0 0
  %870 = vmatmul.mubr.bf16.gmra.mxu0 %v321
  %v871 = vpop.f32.mrf.mxu0
  %v872 = vadd.f32 %v775, %v871
  %v873 = vpop.f32.mrf.mxu0
  %v874 = vpop.f32.mrf.mxu0
  %v875 = vadd.f32 %v778, %v874
  %v876 = vpop.f32.mrf.mxu0
  %877 = vmatprep.mubr.bf16.mxu0 0
  %878 = vmatmul.mubr.bf16.gmra.mxu0 %v326
  %v879 = vpop.f32.mrf.mxu0
  %v880 = vadd.f32 %v783, %v879
  %v881 = vpop.f32.mrf.mxu0
  %v882 = vpop.f32.mrf.mxu0
  %v883 = vadd.f32 %v786, %v882
  %v884 = vpop.f32.mrf.mxu0
  %885 = vmatprep.mubr.bf16.mxu0 0
  %886 = vmatmul.mubr.bf16.gmra.mxu0 %v331
  %v887 = vpop.f32.mrf.mxu0
  %v888 = vadd.f32 %v791, %v887
  %v889 = vpop.f32.mrf.mxu0
  %v890 = vpop.f32.mrf.mxu0
  %v891 = vadd.f32 %v794, %v890
  %v892 = vpop.f32.mrf.mxu0
  %893 = vmatprep.mubr.bf16.mxu0 0
  %894 = vmatmul.mubr.bf16.gmra.mxu0 %v336
  %v895 = vpop.f32.mrf.mxu0
  %v896 = vadd.f32 %v799, %v895
  %v897 = vpop.f32.mrf.mxu0
  %v898 = vpop.f32.mrf.mxu0
  %v899 = vadd.f32 %v802, %v898
  %v900 = vpop.f32.mrf.mxu0
  %901 = vmatprep.mubr.bf16.mxu0 0
  %902 = vmatmul.mubr.bf16.gmra.mxu0 %v341
  %v903 = vpop.f32.mrf.mxu0
  %v904 = vadd.f32 %v807, %v903
  %v905 = vpop.f32.mrf.mxu0
  %v906 = vpop.f32.mrf.mxu0
  %v907 = vadd.f32 %v810, %v906
  %v908 = vpop.f32.mrf.mxu0
  %909 = vmatprep.mubr.bf16.mxu0 0
  %910 = vmatmul.mubr.bf16.gmra.mxu0 %v346
  %v911 = vpop.f32.mrf.mxu0
  %v912 = vadd.f32 %v815, %v911
  %v913 = vpop.f32.mrf.mxu0
  %v914 = vpop.f32.mrf.mxu0
  %v915 = vadd.f32 %v818, %v914
  %v916 = vpop.f32.mrf.mxu0
  %917 = vdwg.mxu0
  %v918 = vadd.f32 %v35, %v856
  %v919 = vadd.f32 %v36, %v859
  %v920 = vadd.f32 %v37, %v864
  %v921 = vadd.f32 %v38, %v867
  %v922 = vadd.f32 %v39, %v872
  %v923 = vadd.f32 %v40, %v875
  %v924 = vadd.f32 %v41, %v880
  %v925 = vadd.f32 %v42, %v883
  %v926 = vadd.f32 %v43, %v888
  %v927 = vadd.f32 %v44, %v891
  %v928 = vadd.f32 %v45, %v896
  %v929 = vadd.f32 %v46, %v899
  %v930 = vadd.f32 %v47, %v904
  %v931 = vadd.f32 %v48, %v907
  %v932 = vadd.f32 %v49, %v912
  %v933 = vadd.f32 %v50, %v915
  %934 = vst [vmem:[#allocation2] sm:$0xff] %v918
  %935 = vst [vmem:[#allocation2 + $0x8] sm:$0xff] %v919
  %936 = vst [vmem:[#allocation2 + $0x10] sm:$0xff] %v920
  %937 = vst [vmem:[#allocation2 + $0x18] sm:$0xff] %v921
  %938 = vst [vmem:[#allocation2 + $0x20] sm:$0xff] %v922
  %939 = vst [vmem:[#allocation2 + $0x28] sm:$0xff] %v923
  %940 = vst [vmem:[#allocation2 + $0x30] sm:$0xff] %v924
  %941 = vst [vmem:[#allocation2 + $0x38] sm:$0xff] %v925
  %942 = vst [vmem:[#allocation2 + $0x40] sm:$0xff] %v926
  %943 = vst [vmem:[#allocation2 + $0x48] sm:$0xff] %v927
  %944 = vst [vmem:[#allocation2 + $0x50] sm:$0xff] %v928
  %945 = vst [vmem:[#allocation2 + $0x58] sm:$0xff] %v929
  %946 = vst [vmem:[#allocation2 + $0x60] sm:$0xff] %v930
  %947 = vst [vmem:[#allocation2 + $0x68] sm:$0xff] %v931
  %948 = vst [vmem:[#allocation2 + $0x70] sm:$0xff] %v932
  %949 = vst [vmem:[#allocation2 + $0x78] sm:$0xff] %v933
  // Predicated region
  $region18: #{net_forward.13} parent=0 // pred_check
    %p950 = pneg %p15
  $region19: #{net_forward.13} parent=0 // pred_check_branch
    %952 = sbr.rel (%p950) target = $region21
  $region20: #{net_forward.13} parent=0 // pred_region
    %v953 = vld [vmem:[#allocation2] sm:$0xff]
    %v954 = vld [vmem:[#allocation2 + $0x8] sm:$0xff]
    %v955 = vld [vmem:[#allocation2 + $0x10] sm:$0xff]
    %v956 = vld [vmem:[#allocation2 + $0x18] sm:$0xff]
    %v957 = vld [vmem:[#allocation2 + $0x20] sm:$0xff]
    %v958 = vld [vmem:[#allocation2 + $0x28] sm:$0xff]
    %v959 = vld [vmem:[#allocation2 + $0x30] sm:$0xff]
    %v960 = vld [vmem:[#allocation2 + $0x38] sm:$0xff]
    %v961 = vld [vmem:[#allocation2 + $0x40] sm:$0xff]
    %v962 = vld [vmem:[#allocation2 + $0x48] sm:$0xff]
    %v963 = vld [vmem:[#allocation2 + $0x50] sm:$0xff]
    %v964 = vld [vmem:[#allocation2 + $0x58] sm:$0xff]
    %v965 = vld [vmem:[#allocation2 + $0x60] sm:$0xff]
    %v966 = vld [vmem:[#allocation2 + $0x68] sm:$0xff]
    %v967 = vld [vmem:[#allocation2 + $0x70] sm:$0xff]
    %v968 = vld [vmem:[#allocation2 + $0x78] sm:$0xff]
    %v969 = vld [vmem:[%s2] sm:$0x1]
    %v971 = vlaneseq
    %v972 = vshrl.u32 %v971, 7
    %v973 = vsub.s32 0, %v972
    %v974 = vrot.slane %v969, %v973
    %v976 = vadd.f32 %v953, %v974
    %v977 = vadd.f32 %v954, %v974
    %v978 = vadd.f32 %v955, %v974
    %v979 = vadd.f32 %v956, %v974
    %v980 = vadd.f32 %v957, %v974
    %v981 = vadd.f32 %v958, %v974
    %v982 = vadd.f32 %v959, %v974
    %v983 = vadd.f32 %v960, %v974
    %v984 = vadd.f32 %v961, %v974
    %v985 = vadd.f32 %v962, %v974
    %v986 = vadd.f32 %v963, %v974
    %v987 = vadd.f32 %v964, %v974
    %v988 = vadd.f32 %v965, %v974
    %v989 = vadd.f32 %v966, %v974
    %v990 = vadd.f32 %v967, %v974
    %v991 = vadd.f32 %v968, %v974
    %v992 = vmax.f32 %v976, 0.0
    %v993 = vmax.f32 %v977, 0.0
    %v994 = vmax.f32 %v978, 0.0
    %v995 = vmax.f32 %v979, 0.0
    %v996 = vmax.f32 %v980, 0.0
    %v997 = vmax.f32 %v981, 0.0
    %v998 = vmax.f32 %v982, 0.0
    %v999 = vmax.f32 %v983, 0.0
    %v1000 = vmax.f32 %v984, 0.0
    %v1001 = vmax.f32 %v985, 0.0
    %v1002 = vmax.f32 %v986, 0.0
    %v1003 = vmax.f32 %v987, 0.0
    %v1004 = vmax.f32 %v988, 0.0
    %v1005 = vmax.f32 %v989, 0.0
    %v1006 = vmax.f32 %v990, 0.0
    %v1007 = vmax.f32 %v991, 0.0
    %v1008 = vpack.c.bf16 %v993, %v992
    %v1009 = vpack.c.bf16 %v995, %v994
    %v1010 = vpack.c.bf16 %v997, %v996
    %v1011 = vpack.c.bf16 %v999, %v998
    %v1012 = vpack.c.bf16 %v1001, %v1000
    %v1013 = vpack.c.bf16 %v1003, %v1002
    %v1014 = vpack.c.bf16 %v1005, %v1004
    %v1015 = vpack.c.bf16 %v1007, %v1006
    %v1024 = vunpack.c.l.b16 %v1008
    %v1025 = vunpack.c.h.b16 %v1008
    %v1026 = vunpack.c.l.b16 %v1009
    %v1027 = vunpack.c.h.b16 %v1009
    %v1028 = vunpack.c.l.b16 %v1010
    %v1029 = vunpack.c.h.b16 %v1010
    %v1030 = vunpack.c.l.b16 %v1011
    %v1031 = vunpack.c.h.b16 %v1011
    %v1032 = vunpack.c.l.b16 %v1012
    %v1033 = vunpack.c.h.b16 %v1012
    %v1034 = vunpack.c.l.b16 %v1013
    %v1035 = vunpack.c.h.b16 %v1013
    %v1036 = vunpack.c.l.b16 %v1014
    %v1037 = vunpack.c.h.b16 %v1014
    %v1038 = vunpack.c.l.b16 %v1015
    %v1039 = vunpack.c.h.b16 %v1015
    %v1040 = vpack.c.b16 %v1024, %v1024
    %v1041 = vpack.c.b16 %v1025, %v1025
    %v1042 = vpack.c.b16 %v1026, %v1026
    %v1043 = vpack.c.b16 %v1027, %v1027
    %v1044 = vpack.c.b16 %v1028, %v1028
    %v1045 = vpack.c.b16 %v1029, %v1029
    %v1046 = vpack.c.b16 %v1030, %v1030
    %v1047 = vpack.c.b16 %v1031, %v1031
    %v1048 = vpack.c.b16 %v1032, %v1032
    %v1049 = vpack.c.b16 %v1033, %v1033
    %v1050 = vpack.c.b16 %v1034, %v1034
    %v1051 = vpack.c.b16 %v1035, %v1035
    %v1052 = vpack.c.b16 %v1036, %v1036
    %v1053 = vpack.c.b16 %v1037, %v1037
    %v1054 = vpack.c.b16 %v1038, %v1038
    %v1055 = vpack.c.b16 %v1039, %v1039
    %1072 = vst [vmem:[%s3] sm:$0xf] %v1040
    %1073 = vst [vmem:[%s3 + $0x4] sm:$0xf] %v1041
    %1074 = vst [vmem:[%s3 + $0x8] sm:$0xf] %v1042
    %1075 = vst [vmem:[%s3 + $0xc] sm:$0xf] %v1043
    %1076 = vst [vmem:[%s3 + $0x10] sm:$0xf] %v1044
    %1077 = vst [vmem:[%s3 + $0x14] sm:$0xf] %v1045
    %1078 = vst [vmem:[%s3 + $0x18] sm:$0xf] %v1046
    %1079 = vst [vmem:[%s3 + $0x1c] sm:$0xf] %v1047
    %1080 = vst [vmem:[%s3 + $0x20] sm:$0xf] %v1048
    %1081 = vst [vmem:[%s3 + $0x24] sm:$0xf] %v1049
    %1082 = vst [vmem:[%s3 + $0x28] sm:$0xf] %v1050
    %1083 = vst [vmem:[%s3 + $0x2c] sm:$0xf] %v1051
    %1084 = vst [vmem:[%s3 + $0x30] sm:$0xf] %v1052
    %1085 = vst [vmem:[%s3 + $0x34] sm:$0xf] %v1053
    %1086 = vst [vmem:[%s3 + $0x38] sm:$0xf] %v1054
    %1087 = vst [vmem:[%s3 + $0x3c] sm:$0xf] %v1055
  $region21: #{net_forward.13} parent=0 // pred_fallthru
    _
  // Predicated region
  $region22: #{net_forward.13} parent=0 // pred_check
    _
  $region23: #{net_forward.13} parent=0 // pred_check_branch
    %1089 = sbr.rel (0) target = $region25
  $region24: #{net_forward.13} parent=0 // pred_region
    _
  $region25: #{net_forward.13} parent=0 // pred_fallthru
    _
  // Predicated region
  $region26: #{net_forward.13} parent=0 // pred_check
    _
  $region27: #{net_forward.13} parent=0 // pred_check_branch
    %1091 = sbr.rel (0) target = $region29
  $region28: #{net_forward.13} parent=0 // pred_region
    _
  $region29: #{net_forward.13} parent=0 // pred_fallthru
    _

// kernel: net_forward.15
$region0: #{net_forward.15}
  #allocation0 [shape = 'u32[]', space=smem, size = 0x4, offset = 0x4, fixed_abs, tag = 'smem constant byte address 0x4 - core index']
  #allocation1 [shape = 'u32[144,128]{1,0:T(1,128)}', space=vmem, size = 0x12000, scoped, tag = 'internal scratch']
  %s0 = inlined_call_operand.vmem [shape: bf16[32,256], index: 0, kind: input, shape index: {}]
  %s1 = inlined_call_operand.vmem [shape: bf16[32,256], index: 1, kind: input, shape index: {}]
  %s2 = inlined_call_operand.vmem [shape: bf16[32,256], index: 2, kind: input, shape index: {}]
  %s3 = inlined_call_operand.vmem [shape: bf16[32,256], index: 3, kind: input, shape index: {}]
  %s4 = inlined_call_operand.vmem [shape: f32[32,256], index: 4, kind: input, shape index: {}]
  %s5 = inlined_call_operand.vmem [shape: bf16[32,256], index: 5, kind: output, shape index: {}]
  %s6 = sld [smem:[#allocation0]]
  $region30: #{net_forward.15} parent=0
    _
  %s8 = ssub.s32 1, %s6
  %s9 = scalar_select 0, %s8, %s6
  // Predicated region
  $region2: #{net_forward.15} parent=0 // pred_check
    _
  $region3: #{net_forward.15} parent=0 // pred_check_branch
    %11 = sbr.rel (0) target = $region5
  $region4: #{net_forward.15} parent=0 // pred_region
    _
  $region5: #{net_forward.15} parent=0 // pred_fallthru
    _
  // Predicated region
  $region6: #{net_forward.15} parent=0 // pred_check
    _
  $region7: #{net_forward.15} parent=0 // pred_check_branch
    %13 = sbr.rel (0) target = $region9
  $region8: #{net_forward.15} parent=0 // pred_region
    _
  $region9: #{net_forward.15} parent=0 // pred_fallthru
    _
  // Predicated region
  $region10: #{net_forward.15} parent=0 // pred_check
    _
  $region11: #{net_forward.15} parent=0 // pred_check_branch
    %15 = sbr.rel (0) target = $region13
  $region12: #{net_forward.15} parent=0 // pred_region
    _
  $region13: #{net_forward.15} parent=0 // pred_fallthru
    _
  // Predicated region
  $region14: #{net_forward.15} parent=0 // pred_check
    _
  $region15: #{net_forward.15} parent=0 // pred_check_branch
    %17 = sbr.rel (0) target = $region17
  $region16: #{net_forward.15} parent=0 // pred_region
    _
  $region17: #{net_forward.15} parent=0 // pred_fallthru
    _
  // Predicated region
  $region18: #{net_forward.15} parent=0 // pred_check
    _
  $region19: #{net_forward.15} parent=0 // pred_check_branch
    %19 = sbr.rel (0) target = $region21
  $region20: #{net_forward.15} parent=0 // pred_region
    _
  $region21: #{net_forward.15} parent=0 // pred_fallthru
    _
  %v20 = vld [vmem:[%s0] sm:$0xff]
  %v21 = vld [vmem:[%s0 + $0x8] sm:$0xff]
  %v22 = vld [vmem:[%s0 + $0x10] sm:$0xff]
  %v23 = vld [vmem:[%s0 + $0x18] sm:$0xff]
  %v24 = vld [vmem:[%s1] sm:$0xff]
  %v25 = vld [vmem:[%s1 + $0x8] sm:$0xff]
  %v26 = vld [vmem:[%s1 + $0x10] sm:$0xff]
  %v27 = vld [vmem:[%s1 + $0x18] sm:$0xff]
  %v28 = vmax.bf16 %v20, %v24
  %v29 = vmax.bf16 %v21, %v25
  %v30 = vmax.bf16 %v22, %v26
  %v31 = vmax.bf16 %v23, %v27
  %v32 = vld [vmem:[%s2] sm:$0xff]
  %v33 = vld [vmem:[%s2 + $0x8] sm:$0xff]
  %v34 = vld [vmem:[%s2 + $0x10] sm:$0xff]
  %v35 = vld [vmem:[%s2 + $0x18] sm:$0xff]
  %v36 = vld [vmem:[%s3] sm:$0xff]
  %v37 = vld [vmem:[%s3 + $0x8] sm:$0xff]
  %v38 = vld [vmem:[%s3 + $0x10] sm:$0xff]
  %v39 = vld [vmem:[%s3 + $0x18] sm:$0xff]
  %v40 = vmax.bf16 %v32, %v36
  %v41 = vmax.bf16 %v33, %v37
  %v42 = vmax.bf16 %v34, %v38
  %v43 = vmax.bf16 %v35, %v39
  %v44 = vmax.bf16 %v28, %v40
  %v45 = vmax.bf16 %v29, %v41
  %v46 = vmax.bf16 %v30, %v42
  %v47 = vmax.bf16 %v31, %v43
  %v48 = vunpack.c.l.bf16 %v44
  %v49 = vunpack.c.h.bf16 %v44
  %v50 = vunpack.c.l.bf16 %v45
  %v51 = vunpack.c.h.bf16 %v45
  %v52 = vunpack.c.l.bf16 %v46
  %v53 = vunpack.c.h.bf16 %v46
  %v54 = vunpack.c.l.bf16 %v47
  %v55 = vunpack.c.h.bf16 %v47
  %v56 = vld [vmem:[%s4] sm:$0xff]
  %v57 = vld [vmem:[%s4 + $0x8] sm:$0xff]
  %v58 = vld [vmem:[%s4 + $0x10] sm:$0xff]
  %v59 = vld [vmem:[%s4 + $0x18] sm:$0xff]
  %v60 = vld [vmem:[%s4 + $0x20] sm:$0xff]
  %v61 = vld [vmem:[%s4 + $0x28] sm:$0xff]
  %v62 = vld [vmem:[%s4 + $0x30] sm:$0xff]
  %v63 = vld [vmem:[%s4 + $0x38] sm:$0xff]
  %vm64 = vcmp.ge.f32.partialorder %v56, 0.2
  %vm65 = vcmp.ge.f32.partialorder %v57, 0.2
  %vm66 = vcmp.ge.f32.partialorder %v58, 0.2
  %vm67 = vcmp.ge.f32.partialorder %v59, 0.2
  %vm68 = vcmp.ge.f32.partialorder %v60, 0.2
  %vm69 = vcmp.ge.f32.partialorder %v61, 0.2
  %vm70 = vcmp.ge.f32.partialorder %v62, 0.2
  %vm71 = vcmp.ge.f32.partialorder %v63, 0.2
  %v72 = vmul.f32 %v48, 1.25
  %v73 = vmul.f32 %v49, 1.25
  %v74 = vmul.f32 %v50, 1.25
  %v75 = vmul.f32 %v51, 1.25
  %v76 = vmul.f32 %v52, 1.25
  %v77 = vmul.f32 %v53, 1.25
  %v78 = vmul.f32 %v54, 1.25
  %v79 = vmul.f32 %v55, 1.25
  %v80 = vsel %vm64, %v72, 0.0
  %v81 = vsel %vm65, %v73, 0.0
  %v82 = vsel %vm66, %v74, 0.0
  %v83 = vsel %vm67, %v75, 0.0
  %v84 = vsel %vm68, %v76, 0.0
  %v85 = vsel %vm69, %v77, 0.0
  %v86 = vsel %vm70, %v78, 0.0
  %v87 = vsel %vm71, %v79, 0.0
  %v88 = vpack.c.bf16 %v82, %v80
  %v89 = vpack.c.bf16 %v83, %v81
  %v90 = vpack.c.bf16 %v86, %v84
  %v91 = vpack.c.bf16 %v87, %v85
  %v96 = vunpack.c.l.b16 %v88
  %v97 = vunpack.c.l.b16 %v89
  %v98 = vunpack.c.h.b16 %v88
  %v99 = vunpack.c.h.b16 %v89
  %v100 = vunpack.c.l.b16 %v90
  %v101 = vunpack.c.l.b16 %v91
  %v102 = vunpack.c.h.b16 %v90
  %v103 = vunpack.c.h.b16 %v91
  %v104 = vpack.c.b16 %v97, %v96
  %v105 = vpack.c.b16 %v99, %v98
  %v106 = vpack.c.b16 %v101, %v100
  %v107 = vpack.c.b16 %v103, %v102
  %112 = vst [vmem:[%s5] sm:$0xff] %v104
  %113 = vst [vmem:[%s5 + $0x8] sm:$0xff] %v105
  %114 = vst [vmem:[%s5 + $0x10] sm:$0xff] %v106
  %115 = vst [vmem:[%s5 + $0x18] sm:$0xff] %v107
  // Predicated region
  $region22: #{net_forward.15} parent=0 // pred_check
    _
  $region23: #{net_forward.15} parent=0 // pred_check_branch
    %117 = sbr.rel (0) target = $region25
  $region24: #{net_forward.15} parent=0 // pred_region
    _
  $region25: #{net_forward.15} parent=0 // pred_fallthru
    _
  // Predicated region
  $region26: #{net_forward.15} parent=0 // pred_check
    _
  $region27: #{net_forward.15} parent=0 // pred_check_branch
    %119 = sbr.rel (0) target = $region29
  $region28: #{net_forward.15} parent=0 // pred_region
    _
  $region29: #{net_forward.15} parent=0 // pred_fallthru
    _

// kernel: net_forward.14
$region0: #{net_forward.14}
  #allocation0 [shape = 'u32[]', space=smem, size = 0x4, offset = 0x4, fixed_abs, tag = 'smem constant byte address 0x4 - core index']
  #allocation1 [shape = 'u32[144,128]{1,0:T(1,128)}', space=vmem, size = 0x12000, scoped, tag = 'internal scratch']
  #allocation2 [shape = 'f32[128,256]{1,0:T(8,128)}', space=vmem, size = 0x20000, scoped, tag = 'scratch operand']
  %s0 = inlined_call_operand.vmem [shape: bf16[128,1152], index: 0, kind: input, shape index: {}]
  %s1 = inlined_call_operand.vmem [shape: bf16[1152,256], index: 1, kind: input, shape index: {}]
  %s2 = inlined_call_operand.vmem [shape: f32[1,256], index: 2, kind: input, shape index: {}]
  %s3 = inlined_call_operand.vmem [shape: bf16[128,256], index: 3, kind: output, shape index: {}]
  %s4 = sld [smem:[#allocation0]]
  $region30: #{net_forward.14} parent=0
    _
  %s6 = ssub.s32 1, %s4
  %s7 = scalar_select 0, %s6, %s4
  // Predicated region
  $region2: #{net_forward.14} parent=0 // pred_check
    _
  $region3: #{net_forward.14} parent=0 // pred_check_branch
    %9 = sbr.rel (0) target = $region5
  $region4: #{net_forward.14} parent=0 // pred_region
    _
  $region5: #{net_forward.14} parent=0 // pred_fallthru
    _
  // Predicated region
  $region6: #{net_forward.14} parent=0 // pred_check
    _
  $region7: #{net_forward.14} parent=0 // pred_check_branch
    %11 = sbr.rel (0) target = $region9
  $region8: #{net_forward.14} parent=0 // pred_region
    _
  $region9: #{net_forward.14} parent=0 // pred_fallthru
    _
  // Predicated region
  $region10: #{net_forward.14} parent=0 // pred_check
    _
  $region11: #{net_forward.14} parent=0 // pred_check_branch
    %13 = sbr.rel (0) target = $region13
  $region12: #{net_forward.14} parent=0 // pred_region
    _
  $region13: #{net_forward.14} parent=0 // pred_fallthru
    _
  %p15 = scmp.eq.s32.totalorder 0, 0
  // Predicated region
  $region14: #{net_forward.14} parent=0 // pred_check
    %p16 = pneg %p15
  $region15: #{net_forward.14} parent=0 // pred_check_branch
    %18 = sbr.rel (%p16) target = $region17
  $region16: #{net_forward.14} parent=0 // pred_region
    %19 = vst [vmem:[#allocation2] sm:$0xff] 0.0
    %20 = vst [vmem:[#allocation2 + $0x8] sm:$0xff] 0.0
    %21 = vst [vmem:[#allocation2 + $0x10] sm:$0xff] 0.0
    %22 = vst [vmem:[#allocation2 + $0x18] sm:$0xff] 0.0
    %23 = vst [vmem:[#allocation2 + $0x20] sm:$0xff] 0.0
    %24 = vst [vmem:[#allocation2 + $0x28] sm:$0xff] 0.0
    %25 = vst [vmem:[#allocation2 + $0x30] sm:$0xff] 0.0
    %26 = vst [vmem:[#allocation2 + $0x38] sm:$0xff] 0.0
    %27 = vst [vmem:[#allocation2 + $0x40] sm:$0xff] 0.0
    %28 = vst [vmem:[#allocation2 + $0x48] sm:$0xff] 0.0
    %29 = vst [vmem:[#allocation2 + $0x50] sm:$0xff] 0.0
    %30 = vst [vmem:[#allocation2 + $0x58] sm:$0xff] 0.0
    %31 = vst [vmem:[#allocation2 + $0x60] sm:$0xff] 0.0
    %32 = vst [vmem:[#allocation2 + $0x68] sm:$0xff] 0.0
    %33 = vst [vmem:[#allocation2 + $0x70] sm:$0xff] 0.0
    %34 = vst [vmem:[#allocation2 + $0x78] sm:$0xff] 0.0
    %35 = vst [vmem:[#allocation2 + $0x80] sm:$0xff] 0.0
    %36 = vst [vmem:[#allocation2 + $0x88] sm:$0xff] 0.0
    %37 = vst [vmem:[#allocation2 + $0x90] sm:$0xff] 0.0
    %38 = vst [vmem:[#allocation2 + $0x98] sm:$0xff] 0.0
    %39 = vst [vmem:[#allocation2 + $0xa0] sm:$0xff] 0.0
    %40 = vst [vmem:[#allocation2 + $0xa8] sm:$0xff] 0.0
    %41 = vst [vmem:[#allocation2 + $0xb0] sm:$0xff] 0.0
    %42 = vst [vmem:[#allocation2 + $0xb8] sm:$0xff] 0.0
    %43 = vst [vmem:[#allocation2 + $0xc0] sm:$0xff] 0.0
    %44 = vst [vmem:[#allocation2 + $0xc8] sm:$0xff] 0.0
    %45 = vst [vmem:[#allocation2 + $0xd0] sm:$0xff] 0.0
    %46 = vst [vmem:[#allocation2 + $0xd8] sm:$0xff] 0.0
    %47 = vst [vmem:[#allocation2 + $0xe0] sm:$0xff] 0.0
    %48 = vst [vmem:[#allocation2 + $0xe8] sm:$0xff] 0.0
    %49 = vst [vmem:[#allocation2 + $0xf0] sm:$0xff] 0.0
    %50 = vst [vmem:[#allocation2 + $0xf8] sm:$0xff] 0.0
  $region17: #{net_forward.14} parent=0 // pred_fallthru
    _
  %v51 = vld [vmem:[#allocation2] sm:$0xff]
  %v52 = vld [vmem:[#allocation2 + $0x8] sm:$0xff]
  %v53 = vld [vmem:[#allocation2 + $0x10] sm:$0xff]
  %v54 = vld [vmem:[#allocation2 + $0x18] sm:$0xff]
  %v55 = vld [vmem:[#allocation2 + $0x20] sm:$0xff]
  %v56 = vld [vmem:[#allocation2 + $0x28] sm:$0xff]
  %v57 = vld [vmem:[#allocation2 + $0x30] sm:$0xff]
  %v58 = vld [vmem:[#allocation2 + $0x38] sm:$0xff]
  %v59 = vld [vmem:[#allocation2 + $0x40] sm:$0xff]
  %v60 = vld [vmem:[#allocation2 + $0x48] sm:$0xff]
  %v61 = vld [vmem:[#allocation2 + $0x50] sm:$0xff]
  %v62 = vld [vmem:[#allocation2 + $0x58] sm:$0xff]
  %v63 = vld [vmem:[#allocation2 + $0x60] sm:$0xff]
  %v64 = vld [vmem:[#allocation2 + $0x68] sm:$0xff]
  %v65 = vld [vmem:[#allocation2 + $0x70] sm:$0xff]
  %v66 = vld [vmem:[#allocation2 + $0x78] sm:$0xff]
  %v67 = vld [vmem:[#allocation2 + $0x80] sm:$0xff]
  %v68 = vld [vmem:[#allocation2 + $0x88] sm:$0xff]
  %v69 = vld [vmem:[#allocation2 + $0x90] sm:$0xff]
  %v70 = vld [vmem:[#allocation2 + $0x98] sm:$0xff]
  %v71 = vld [vmem:[#allocation2 + $0xa0] sm:$0xff]
  %v72 = vld [vmem:[#allocation2 + $0xa8] sm:$0xff]
  %v73 = vld [vmem:[#allocation2 + $0xb0] sm:$0xff]
  %v74 = vld [vmem:[#allocation2 + $0xb8] sm:$0xff]
  %v75 = vld [vmem:[#allocation2 + $0xc0] sm:$0xff]
  %v76 = vld [vmem:[#allocation2 + $0xc8] sm:$0xff]
  %v77 = vld [vmem:[#allocation2 + $0xd0] sm:$0xff]
  %v78 = vld [vmem:[#allocation2 + $0xd8] sm:$0xff]
  %v79 = vld [vmem:[#allocation2 + $0xe0] sm:$0xff]
  %v80 = vld [vmem:[#allocation2 + $0xe8] sm:$0xff]
  %v81 = vld [vmem:[#allocation2 + $0xf0] sm:$0xff]
  %v82 = vld [vmem:[#allocation2 + $0xf8] sm:$0xff]
  %v83 = vld [vmem:[%s0] sm:$0xff]
  %v84 = vld [vmem:[%s0 + $0x8] sm:$0xff]
  %v85 = vld [vmem:[%s0 + $0x10] sm:$0xff]
  %v86 = vld [vmem:[%s0 + $0x18] sm:$0xff]
  %v87 = vld [vmem:[%s0 + $0x20] sm:$0xf]
  %v88 = vld [vmem:[%s0 + $0x24] sm:$0xff]
  %v89 = vld [vmem:[%s0 + $0x2c] sm:$0xff]
  %v90 = vld [vmem:[%s0 + $0x34] sm:$0xff]
  %v91 = vld [vmem:[%s0 + $0x3c] sm:$0xff]
  %v92 = vld [vmem:[%s0 + $0x44] sm:$0xf]
  %v93 = vld [vmem:[%s0 + $0x48] sm:$0xff]
  %v94 = vld [vmem:[%s0 + $0x50] sm:$0xff]
  %v95 = vld [vmem:[%s0 + $0x58] sm:$0xff]
  %v96 = vld [vmem:[%s0 + $0x60] sm:$0xff]
  %v97 = vld [vmem:[%s0 + $0x68] sm:$0xf]
  %v98 = vld [vmem:[%s0 + $0x6c] sm:$0xff]
  %v99 = vld [vmem:[%s0 + $0x74] sm:$0xff]
  %v100 = vld [vmem:[%s0 + $0x7c] sm:$0xff]
  %v101 = vld [vmem:[%s0 + $0x84] sm:$0xff]
  %v102 = vld [vmem:[%s0 + $0x8c] sm:$0xf]
  %v103 = vld [vmem:[%s0 + $0x90] sm:$0xff]
  %v104 = vld [vmem:[%s0 + $0x98] sm:$0xff]
  %v105 = vld [vmem:[%s0 + $0xa0] sm:$0xff]
  %v106 = vld [vmem:[%s0 + $0xa8] sm:$0xff]
  %v107 = vld [vmem:[%s0 + $0xb0] sm:$0xf]
  %v108 = vld [vmem:[%s0 + $0xb4] sm:$0xff]
  %v109 = vld [vmem:[%s0 + $0xbc] sm:$0xff]
  %v110 = vld [vmem:[%s0 + $0xc4] sm:$0xff]
  %v111 = vld [vmem:[%s0 + $0xcc] sm:$0xff]
  %v112 = vld [vmem:[%s0 + $0xd4] sm:$0xf]
  %v113 = vld [vmem:[%s0 + $0xd8] sm:$0xff]
  %v114 = vld [vmem:[%s0 + $0xe0] sm:$0xff]
  %v115 = vld [vmem:[%s0 + $0xe8] sm:$0xff]
  %v116 = vld [vmem:[%s0 + $0xf0] sm:$0xff]
  %v117 = vld [vmem:[%s0 + $0xf8] sm:$0xf]
  %v118 = vld [vmem:[%s0 + $0xfc] sm:$0xff]
  %v119 = vld [vmem:[%s0 + $0x104] sm:$0xff]
  %v120 = vld [vmem:[%s0 + $0x10c] sm:$0xff]
  %v121 = vld [vmem:[%s0 + $0x114] sm:$0xff]
  %v122 = vld [vmem:[%s0 + $0x11c] sm:$0xf]
  %v123 = vld [vmem:[%s0 + $0x120] sm:$0xff]
  %v124 = vld [vmem:[%s0 + $0x128] sm:$0xff]
  %v125 = vld [vmem:[%s0 + $0x130] sm:$0xff]
  %v126 = vld [vmem:[%s0 + $0x138] sm:$0xff]
  %v127 = vld [vmem:[%s0 + $0x140] sm:$0xf]
  %v128 = vld [vmem:[%s0 + $0x144] sm:$0xff]
  %v129 = vld [vmem:[%s0 + $0x14c] sm:$0xff]
  %v130 = vld [vmem:[%s0 + $0x154] sm:$0xff]
  %v131 = vld [vmem:[%s0 + $0x15c] sm:$0xff]
  %v132 = vld [vmem:[%s0 + $0x164] sm:$0xf]
  %v133 = vld [vmem:[%s0 + $0x168] sm:$0xff]
  %v134 = vld [vmem:[%s0 + $0x170] sm:$0xff]
  %v135 = vld [vmem:[%s0 + $0x178] sm:$0xff]
  %v136 = vld [vmem:[%s0 + $0x180] sm:$0xff]
  %v137 = vld [vmem:[%s0 + $0x188] sm:$0xf]
  %v138 = vld [vmem:[%s0 + $0x18c] sm:$0xff]
  %v139 = vld [vmem:[%s0 + $0x194] sm:$0xff]
  %v140 = vld [vmem:[%s0 + $0x19c] sm:$0xff]
  %v141 = vld [vmem:[%s0 + $0x1a4] sm:$0xff]
  %v142 = vld [vmem:[%s0 + $0x1ac] sm:$0xf]
  %v143 = vld [vmem:[%s0 + $0x1b0] sm:$0xff]
  %v144 = vld [vmem:[%s0 + $0x1b8] sm:$0xff]
  %v145 = vld [vmem:[%s0 + $0x1c0] sm:$0xff]
  %v146 = vld [vmem:[%s0 + $0x1c8] sm:$0xff]
  %v147 = vld [vmem:[%s0 + $0x1d0] sm:$0xf]
  %v148 = vld [vmem:[%s0 + $0x1d4] sm:$0xff]
  %v149 = vld [vmem:[%s0 + $0x1dc] sm:$0xff]
  %v150 = vld [vmem:[%s0 + $0x1e4] sm:$0xff]
  %v151 = vld [vmem:[%s0 + $0x1ec] sm:$0xff]
  %v152 = vld [vmem:[%s0 + $0x1f4] sm:$0xf]
  %v153 = vld [vmem:[%s0 + $0x1f8] sm:$0xff]
  %v154 = vld [vmem:[%s0 + $0x200] sm:$0xff]
  %v155 = vld [vmem:[%s0 + $0x208] sm:$0xff]
  %v156 = vld [vmem:[%s0 + $0x210] sm:$0xff]
  %v157 = vld [vmem:[%s0 + $0x218] sm:$0xf]
  %v158 = vld [vmem:[%s0 + $0x21c] sm:$0xff]
  %v159 = vld [vmem:[%s0 + $0x224] sm:$0xff]
  %v160 = vld [vmem:[%s0 + $0x22c] sm:$0xff]
  %v161 = vld [vmem:[%s0 + $0x234] sm:$0xff]
  %v162 = vld [vmem:[%s0 + $0x23c] sm:$0xf]
  %v163 = vld [vmem:[%s1] sm:$0xff]
  %v164 = vld [vmem:[%s1 + $0x8] sm:$0xff]
  %v165 = vld [vmem:[%s1 + $0x10] sm:$0xff]
  %v166 = vld [vmem:[%s1 + $0x18] sm:$0xff]
  %v167 = vld [vmem:[%s1 + $0x20] sm:$0xff]
  %v168 = vld [vmem:[%s1 + $0x28] sm:$0xff]
  %v169 = vld [vmem:[%s1 + $0x30] sm:$0xff]
  %v170 = vld [vmem:[%s1 + $0x38] sm:$0xff]
  %v171 = vld [vmem:[%s1 + $0x40] sm:$0xff]
  %v172 = vld [vmem:[%s1 + $0x48] sm:$0xff]
  %v173 = vld [vmem:[%s1 + $0x50] sm:$0xff]
  %v174 = vld [vmem:[%s1 + $0x58] sm:$0xff]
  %v175 = vld [vmem:[%s1 + $0x60] sm:$0xff]
  %v176 = vld [vmem:[%s1 + $0x68] sm:$0xff]
  %v177 = vld [vmem:[%s1 + $0x70] sm:$0xff]
  %v178 = vld [vmem:[%s1 + $0x78] sm:$0xff]
  %v179 = vld [vmem:[%s1 + $0x80] sm:$0xff]
  %v180 = vld [vmem:[%s1 + $0x88] sm:$0xff]
  %v181 = vld [vmem:[%s1 + $0x90] sm:$0xff]
  %v182 = vld [vmem:[%s1 + $0x98] sm:$0xff]
  %v183 = vld [vmem:[%s1 + $0xa0] sm:$0xff]
  %v184 = vld [vmem:[%s1 + $0xa8] sm:$0xff]
  %v185 = vld [vmem:[%s1 + $0xb0] sm:$0xff]
  %v186 = vld [vmem:[%s1 + $0xb8] sm:$0xff]
  %v187 = vld [vmem:[%s1 + $0xc0] sm:$0xff]
  %v188 = vld [vmem:[%s1 + $0xc8] sm:$0xff]
  %v189 = vld [vmem:[%s1 + $0xd0] sm:$0xff]
  %v190 = vld [vmem:[%s1 + $0xd8] sm:$0xff]
  %v191 = vld [vmem:[%s1 + $0xe0] sm:$0xff]
  %v192 = vld [vmem:[%s1 + $0xe8] sm:$0xff]
  %v193 = vld [vmem:[%s1 + $0xf0] sm:$0xff]
  %v194 = vld [vmem:[%s1 + $0xf8] sm:$0xff]
  %v195 = vld [vmem:[%s1 + $0x100] sm:$0xff]
  %v196 = vld [vmem:[%s1 + $0x108] sm:$0xff]
  %v197 = vld [vmem:[%s1 + $0x110] sm:$0xff]
  %v198 = vld [vmem:[%s1 + $0x118] sm:$0xff]
  %v199 = vld [vmem:[%s1 + $0x120] sm:$0xff]
  %v200 = vld [vmem:[%s1 + $0x128] sm:$0xff]
  %v201 = vld [vmem:[%s1 + $0x130] sm:$0xff]
  %v202 = vld [vmem:[%s1 + $0x138] sm:$0xff]
  %v203 = vld [vmem:[%s1 + $0x140] sm:$0xff]
  %v204 = vld [vmem:[%s1 + $0x148] sm:$0xff]
  %v205 = vld [vmem:[%s1 + $0x150] sm:$0xff]
  %v206 = vld [vmem:[%s1 + $0x158] sm:$0xff]
  %v207 = vld [vmem:[%s1 + $0x160] sm:$0xff]
  %v208 = vld [vmem:[%s1 + $0x168] sm:$0xff]
  %v209 = vld [vmem:[%s1 + $0x170] sm:$0xff]
  %v210 = vld [vmem:[%s1 + $0x178] sm:$0xff]
  %v211 = vld [vmem:[%s1 + $0x180] sm:$0xff]
  %v212 = vld [vmem:[%s1 + $0x188] sm:$0xff]
  %v213 = vld [vmem:[%s1 + $0x190] sm:$0xff]
  %v214 = vld [vmem:[%s1 + $0x198] sm:$0xff]
  %v215 = vld [vmem:[%s1 + $0x1a0] sm:$0xff]
  %v216 = vld [vmem:[%s1 + $0x1a8] sm:$0xff]
  %v217 = vld [vmem:[%s1 + $0x1b0] sm:$0xff]
  %v218 = vld [vmem:[%s1 + $0x1b8] sm:$0xff]
  %v219 = vld [vmem:[%s1 + $0x1c0] sm:$0xff]
  %v220 = vld [vmem:[%s1 + $0x1c8] sm:$0xff]
  %v221 = vld [vmem:[%s1 + $0x1d0] sm:$0xff]
  %v222 = vld [vmem:[%s1 + $0x1d8] sm:$0xff]
  %v223 = vld [vmem:[%s1 + $0x1e0] sm:$0xff]
  %v224 = vld [vmem:[%s1 + $0x1e8] sm:$0xff]
  %v225 = vld [vmem:[%s1 + $0x1f0] sm:$0xff]
  %v226 = vld [vmem:[%s1 + $0x1f8] sm:$0xff]
  %v227 = vld [vmem:[%s1 + $0x200] sm:$0xff]
  %v228 = vld [vmem:[%s1 + $0x208] sm:$0xff]
  %v229 = vld [vmem:[%s1 + $0x210] sm:$0xff]
  %v230 = vld [vmem:[%s1 + $0x218] sm:$0xff]
  %v231 = vld [vmem:[%s1 + $0x220] sm:$0xff]
  %v232 = vld [vmem:[%s1 + $0x228] sm:$0xff]
  %v233 = vld [vmem:[%s1 + $0x230] sm:$0xff]
  %v234 = vld [vmem:[%s1 + $0x238] sm:$0xff]
  %v235 = vld [vmem:[%s1 + $0x240] sm:$0xff]
  %v236 = vld [vmem:[%s1 + $0x248] sm:$0xff]
  %v237 = vld [vmem:[%s1 + $0x250] sm:$0xff]
  %v238 = vld [vmem:[%s1 + $0x258] sm:$0xff]
  %v239 = vld [vmem:[%s1 + $0x260] sm:$0xff]
  %v240 = vld [vmem:[%s1 + $0x268] sm:$0xff]
  %v241 = vld [vmem:[%s1 + $0x270] sm:$0xff]
  %v242 = vld [vmem:[%s1 + $0x278] sm:$0xff]
  %v243 = vld [vmem:[%s1 + $0x280] sm:$0xff]
  %v244 = vld [vmem:[%s1 + $0x288] sm:$0xff]
  %v245 = vld [vmem:[%s1 + $0x290] sm:$0xff]
  %v246 = vld [vmem:[%s1 + $0x298] sm:$0xff]
  %v247 = vld [vmem:[%s1 + $0x2a0] sm:$0xff]
  %v248 = vld [vmem:[%s1 + $0x2a8] sm:$0xff]
  %v249 = vld [vmem:[%s1 + $0x2b0] sm:$0xff]
  %v250 = vld [vmem:[%s1 + $0x2b8] sm:$0xff]
  %v251 = vld [vmem:[%s1 + $0x2c0] sm:$0xff]
  %v252 = vld [vmem:[%s1 + $0x2c8] sm:$0xff]
  %v253 = vld [vmem:[%s1 + $0x2d0] sm:$0xff]
  %v254 = vld [vmem:[%s1 + $0x2d8] sm:$0xff]
  %v255 = vld [vmem:[%s1 + $0x2e0] sm:$0xff]
  %v256 = vld [vmem:[%s1 + $0x2e8] sm:$0xff]
  %v257 = vld [vmem:[%s1 + $0x2f0] sm:$0xff]
  %v258 = vld [vmem:[%s1 + $0x2f8] sm:$0xff]
  %v259 = vld [vmem:[%s1 + $0x300] sm:$0xff]
  %v260 = vld [vmem:[%s1 + $0x308] sm:$0xff]
  %v261 = vld [vmem:[%s1 + $0x310] sm:$0xff]
  %v262 = vld [vmem:[%s1 + $0x318] sm:$0xff]
  %v263 = vld [vmem:[%s1 + $0x320] sm:$0xff]
  %v264 = vld [vmem:[%s1 + $0x328] sm:$0xff]
  %v265 = vld [vmem:[%s1 + $0x330] sm:$0xff]
  %v266 = vld [vmem:[%s1 + $0x338] sm:$0xff]
  %v267 = vld [vmem:[%s1 + $0x340] sm:$0xff]
  %v268 = vld [vmem:[%s1 + $0x348] sm:$0xff]
  %v269 = vld [vmem:[%s1 + $0x350] sm:$0xff]
  %v270 = vld [vmem:[%s1 + $0x358] sm:$0xff]
  %v271 = vld [vmem:[%s1 + $0x360] sm:$0xff]
  %v272 = vld [vmem:[%s1 + $0x368] sm:$0xff]
  %v273 = vld [vmem:[%s1 + $0x370] sm:$0xff]
  %v274 = vld [vmem:[%s1 + $0x378] sm:$0xff]
  %v275 = vld [vmem:[%s1 + $0x380] sm:$0xff]
  %v276 = vld [vmem:[%s1 + $0x388] sm:$0xff]
  %v277 = vld [vmem:[%s1 + $0x390] sm:$0xff]
  %v278 = vld [vmem:[%s1 + $0x398] sm:$0xff]
  %v279 = vld [vmem:[%s1 + $0x3a0] sm:$0xff]
  %v280 = vld [vmem:[%s1 + $0x3a8] sm:$0xff]
  %v281 = vld [vmem:[%s1 + $0x3b0] sm:$0xff]
  %v282 = vld [vmem:[%s1 + $0x3b8] sm:$0xff]
  %v283 = vld [vmem:[%s1 + $0x3c0] sm:$0xff]
  %v284 = vld [vmem:[%s1 + $0x3c8] sm:$0xff]
  %v285 = vld [vmem:[%s1 + $0x3d0] sm:$0xff]
  %v286 = vld [vmem:[%s1 + $0x3d8] sm:$0xff]
  %v287 = vld [vmem:[%s1 + $0x3e0] sm:$0xff]
  %v288 = vld [vmem:[%s1 + $0x3e8] sm:$0xff]
  %v289 = vld [vmem:[%s1 + $0x3f0] sm:$0xff]
  %v290 = vld [vmem:[%s1 + $0x3f8] sm:$0xff]
  %v291 = vld [vmem:[%s1 + $0x400] sm:$0xff]
  %v292 = vld [vmem:[%s1 + $0x408] sm:$0xff]
  %v293 = vld [vmem:[%s1 + $0x410] sm:$0xff]
  %v294 = vld [vmem:[%s1 + $0x418] sm:$0xff]
  %v295 = vld [vmem:[%s1 + $0x420] sm:$0xff]
  %v296 = vld [vmem:[%s1 + $0x428] sm:$0xff]
  %v297 = vld [vmem:[%s1 + $0x430] sm:$0xff]
  %v298 = vld [vmem:[%s1 + $0x438] sm:$0xff]
  %v299 = vld [vmem:[%s1 + $0x440] sm:$0xff]
  %v300 = vld [vmem:[%s1 + $0x448] sm:$0xff]
  %v301 = vld [vmem:[%s1 + $0x450] sm:$0xff]
  %v302 = vld [vmem:[%s1 + $0x458] sm:$0xff]
  %v303 = vld [vmem:[%s1 + $0x460] sm:$0xff]
  %v304 = vld [vmem:[%s1 + $0x468] sm:$0xff]
  %v305 = vld [vmem:[%s1 + $0x470] sm:$0xff]
  %v306 = vld [vmem:[%s1 + $0x478] sm:$0xff]
  %v387 = vunpack.c.l.b16 %v83
  %v388 = vunpack.c.h.b16 %v83
  %v389 = vunpack.c.l.b16 %v84
  %v390 = vunpack.c.h.b16 %v84
  %v391 = vunpack.c.l.b16 %v85
  %v392 = vunpack.c.h.b16 %v85
  %v393 = vunpack.c.l.b16 %v86
  %v394 = vunpack.c.h.b16 %v86
  %v395 = vunpack.c.l.b16 %v87
  %v396 = vunpack.c.l.b16 %v88
  %v397 = vunpack.c.h.b16 %v88
  %v398 = vunpack.c.l.b16 %v89
  %v399 = vunpack.c.h.b16 %v89
  %v400 = vunpack.c.l.b16 %v90
  %v401 = vunpack.c.h.b16 %v90
  %v402 = vunpack.c.l.b16 %v91
  %v403 = vunpack.c.h.b16 %v91
  %v404 = vunpack.c.l.b16 %v92
  %v405 = vunpack.c.l.b16 %v93
  %v406 = vunpack.c.h.b16 %v93
  %v407 = vunpack.c.l.b16 %v94
  %v408 = vunpack.c.h.b16 %v94
  %v409 = vunpack.c.l.b16 %v95
  %v410 = vunpack.c.h.b16 %v95
  %v411 = vunpack.c.l.b16 %v96
  %v412 = vunpack.c.h.b16 %v96
  %v413 = vunpack.c.l.b16 %v97
  %v414 = vunpack.c.l.b16 %v98
  %v415 = vunpack.c.h.b16 %v98
  %v416 = vunpack.c.l.b16 %v99
  %v417 = vunpack.c.h.b16 %v99
  %v418 = vunpack.c.l.b16 %v100
  %v419 = vunpack.c.h.b16 %v100
  %v420 = vunpack.c.l.b16 %v101
  %v421 = vunpack.c.h.b16 %v101
  %v422 = vunpack.c.l.b16 %v102
  %v423 = vunpack.c.l.b16 %v103
  %v424 = vunpack.c.h.b16 %v103
  %v425 = vunpack.c.l.b16 %v104
  %v426 = vunpack.c.h.b16 %v104
  %v427 = vunpack.c.l.b16 %v105
  %v428 = vunpack.c.h.b16 %v105
  %v429 = vunpack.c.l.b16 %v106
  %v430 = vunpack.c.h.b16 %v106
  %v431 = vunpack.c.l.b16 %v107
  %v432 = vunpack.c.l.b16 %v108
  %v433 = vunpack.c.h.b16 %v108
  %v434 = vunpack.c.l.b16 %v109
  %v435 = vunpack.c.h.b16 %v109
  %v436 = vunpack.c.l.b16 %v110
  %v437 = vunpack.c.h.b16 %v110
  %v438 = vunpack.c.l.b16 %v111
  %v439 = vunpack.c.h.b16 %v111
  %v440 = vunpack.c.l.b16 %v112
  %v441 = vunpack.c.l.b16 %v113
  %v442 = vunpack.c.h.b16 %v113
  %v443 = vunpack.c.l.b16 %v114
  %v444 = vunpack.c.h.b16 %v114
  %v445 = vunpack.c.l.b16 %v115
  %v446 = vunpack.c.h.b16 %v115
  %v447 = vunpack.c.l.b16 %v116
  %v448 = vunpack.c.h.b16 %v116
  %v449 = vunpack.c.l.b16 %v117
  %v450 = vunpack.c.l.b16 %v118
  %v451 = vunpack.c.h.b16 %v118
  %v452 = vunpack.c.l.b16 %v119
  %v453 = vunpack.c.h.b16 %v119
  %v454 = vunpack.c.l.b16 %v120
  %v455 = vunpack.c.h.b16 %v120
  %v456 = vunpack.c.l.b16 %v121
  %v457 = vunpack.c.h.b16 %v121
  %v458 = vunpack.c.l.b16 %v122
  %v459 = vunpack.c.l.b16 %v123
  %v460 = vunpack.c.h.b16 %v123
  %v461 = vunpack.c.l.b16 %v124
  %v462 = vunpack.c.h.b16 %v124
  %v463 = vunpack.c.l.b16 %v125
  %v464 = vunpack.c.h.b16 %v125
  %v465 = vunpack.c.l.b16 %v126
  %v466 = vunpack.c.h.b16 %v126
  %v467 = vunpack.c.l.b16 %v127
  %v468 = vunpack.c.l.b16 %v128
  %v469 = vunpack.c.h.b16 %v128
  %v470 = vunpack.c.l.b16 %v129
  %v471 = vunpack.c.h.b16 %v129
  %v472 = vunpack.c.l.b16 %v130
  %v473 = vunpack.c.h.b16 %v130
  %v474 = vunpack.c.l.b16 %v131
  %v475 = vunpack.c.h.b16 %v131
  %v476 = vunpack.c.l.b16 %v132
  %v477 = vunpack.c.l.b16 %v133
  %v478 = vunpack.c.h.b16 %v133
  %v479 = vunpack.c.l.b16 %v134
  %v480 = vunpack.c.h.b16 %v134
  %v481 = vunpack.c.l.b16 %v135
  %v482 = vunpack.c.h.b16 %v135
  %v483 = vunpack.c.l.b16 %v136
  %v484 = vunpack.c.h.b16 %v136
  %v485 = vunpack.c.l.b16 %v137
  %v486 = vunpack.c.l.b16 %v138
  %v487 = vunpack.c.h.b16 %v138
  %v488 = vunpack.c.l.b16 %v139
  %v489 = vunpack.c.h.b16 %v139
  %v490 = vunpack.c.l.b16 %v140
  %v491 = vunpack.c.h.b16 %v140
  %v492 = vunpack.c.l.b16 %v141
  %v493 = vunpack.c.h.b16 %v141
  %v494 = vunpack.c.l.b16 %v142
  %v495 = vunpack.c.l.b16 %v143
  %v496 = vunpack.c.h.b16 %v143
  %v497 = vunpack.c.l.b16 %v144
  %v498 = vunpack.c.h.b16 %v144
  %v499 = vunpack.c.l.b16 %v145
  %v500 = vunpack.c.h.b16 %v145
  %v501 = vunpack.c.l.b16 %v146
  %v502 = vunpack.c.h.b16 %v146
  %v503 = vunpack.c.l.b16 %v147
  %v504 = vunpack.c.l.b16 %v148
  %v505 = vunpack.c.h.b16 %v148
  %v506 = vunpack.c.l.b16 %v149
  %v507 = vunpack.c.h.b16 %v149
  %v508 = vunpack.c.l.b16 %v150
  %v509 = vunpack.c.h.b16 %v150
  %v510 = vunpack.c.l.b16 %v151
  %v511 = vunpack.c.h.b16 %v151
  %v512 = vunpack.c.l.b16 %v152
  %v513 = vunpack.c.l.b16 %v153
  %v514 = vunpack.c.h.b16 %v153
  %v515 = vunpack.c.l.b16 %v154
  %v516 = vunpack.c.h.b16 %v154
  %v517 = vunpack.c.l.b16 %v155
  %v518 = vunpack.c.h.b16 %v155
  %v519 = vunpack.c.l.b16 %v156
  %v520 = vunpack.c.h.b16 %v156
  %v521 = vunpack.c.l.b16 %v157
  %v522 = vunpack.c.l.b16 %v158
  %v523 = vunpack.c.h.b16 %v158
  %v524 = vunpack.c.l.b16 %v159
  %v525 = vunpack.c.h.b16 %v159
  %v526 = vunpack.c.l.b16 %v160
  %v527 = vunpack.c.h.b16 %v160
  %v528 = vunpack.c.l.b16 %v161
  %v529 = vunpack.c.h.b16 %v161
  %v530 = vunpack.c.l.b16 %v162
  %v531 = vpack.c.b16 %v396, %v387
  %v532 = vpack.c.b16 %v397, %v388
  %v533 = vpack.c.b16 %v398, %v389
  %v534 = vpack.c.b16 %v399, %v390
  %v535 = vpack.c.b16 %v400, %v391
  %v536 = vpack.c.b16 %v401, %v392
  %v537 = vpack.c.b16 %v402, %v393
  %v538 = vpack.c.b16 %v403, %v394
  %v539 = vpack.c.b16 %v404, %v395
  %v540 = vpack.c.b16 %v414, %v405
  %v541 = vpack.c.b16 %v415, %v406
  %v542 = vpack.c.b16 %v416, %v407
  %v543 = vpack.c.b16 %v417, %v408
  %v544 = vpack.c.b16 %v418, %v409
  %v545 = vpack.c.b16 %v419, %v410
  %v546 = vpack.c.b16 %v420, %v411
  %v547 = vpack.c.b16 %v421, %v412
  %v548 = vpack.c.b16 %v422, %v413
  %v549 = vpack.c.b16 %v432, %v423
  %v550 = vpack.c.b16 %v433, %v424
  %v551 = vpack.c.b16 %v434, %v425
  %v552 = vpack.c.b16 %v435, %v426
  %v553 = vpack.c.b16 %v436, %v427
  %v554 = vpack.c.b16 %v437, %v428
  %v555 = vpack.c.b16 %v438, %v429
  %v556 = vpack.c.b16 %v439, %v430
  %v557 = vpack.c.b16 %v440, %v431
  %v558 = vpack.c.b16 %v450, %v441
  %v559 = vpack.c.b16 %v451, %v442
  %v560 = vpack.c.b16 %v452, %v443
  %v561 = vpack.c.b16 %v453, %v444
  %v562 = vpack.c.b16 %v454, %v445
  %v563 = vpack.c.b16 %v455, %v446
  %v564 = vpack.c.b16 %v456, %v447
  %v565 = vpack.c.b16 %v457, %v448
  %v566 = vpack.c.b16 %v458, %v449
  %v567 = vpack.c.b16 %v468, %v459
  %v568 = vpack.c.b16 %v469, %v460
  %v569 = vpack.c.b16 %v470, %v461
  %v570 = vpack.c.b16 %v471, %v462
  %v571 = vpack.c.b16 %v472, %v463
  %v572 = vpack.c.b16 %v473, %v464
  %v573 = vpack.c.b16 %v474, %v465
  %v574 = vpack.c.b16 %v475, %v466
  %v575 = vpack.c.b16 %v476, %v467
  %v576 = vpack.c.b16 %v486, %v477
  %v577 = vpack.c.b16 %v487, %v478
  %v578 = vpack.c.b16 %v488, %v479
  %v579 = vpack.c.b16 %v489, %v480
  %v580 = vpack.c.b16 %v490, %v481
  %v581 = vpack.c.b16 %v491, %v482
  %v582 = vpack.c.b16 %v492, %v483
  %v583 = vpack.c.b16 %v493, %v484
  %v584 = vpack.c.b16 %v494, %v485
  %v585 = vpack.c.b16 %v504, %v495
  %v586 = vpack.c.b16 %v505, %v496
  %v587 = vpack.c.b16 %v506, %v497
  %v588 = vpack.c.b16 %v507, %v498
  %v589 = vpack.c.b16 %v508, %v499
  %v590 = vpack.c.b16 %v509, %v500
  %v591 = vpack.c.b16 %v510, %v501
  %v592 = vpack.c.b16 %v511, %v502
  %v593 = vpack.c.b16 %v512, %v503
  %v594 = vpack.c.b16 %v522, %v513
  %v595 = vpack.c.b16 %v523, %v514
  %v596 = vpack.c.b16 %v524, %v515
  %v597 = vpack.c.b16 %v525, %v516
  %v598 = vpack.c.b16 %v526, %v517
  %v599 = vpack.c.b16 %v527, %v518
  %v600 = vpack.c.b16 %v528, %v519
  %v601 = vpack.c.b16 %v529, %v520
  %v602 = vpack.c.b16 %v530, %v521
  %v819 = vunpack.c.l.b16 %v163
  %v820 = vunpack.c.h.b16 %v163
  %v821 = vunpack.c.l.b16 %v164
  %v822 = vunpack.c.h.b16 %v164
  %v823 = vunpack.c.l.b16 %v165
  %v824 = vunpack.c.h.b16 %v165
  %v825 = vunpack.c.l.b16 %v166
  %v826 = vunpack.c.h.b16 %v166
  %v827 = vunpack.c.l.b16 %v167
  %v828 = vunpack.c.h.b16 %v167
  %v829 = vunpack.c.l.b16 %v168
  %v830 = vunpack.c.h.b16 %v168
  %v831 = vunpack.c.l.b16 %v169
  %v832 = vunpack.c.h.b16 %v169
  %v833 = vunpack.c.l.b16 %v170
  %v834 = vunpack.c.h.b16 %v170
  %v835 = vunpack.c.l.b16 %v171
  %v836 = vunpack.c.h.b16 %v171
  %v837 = vunpack.c.l.b16 %v172
  %v838 = vunpack.c.h.b16 %v172
  %v839 = vunpack.c.l.b16 %v173
  %v840 = vunpack.c.h.b16 %v173
  %v841 = vunpack.c.l.b16 %v174
  %v842 = vunpack.c.h.b16 %v174
  %v843 = vunpack.c.l.b16 %v175
  %v844 = vunpack.c.h.b16 %v175
  %v845 = vunpack.c.l.b16 %v176
  %v846 = vunpack.c.h.b16 %v176
  %v847 = vunpack.c.l.b16 %v177
  %v848 = vunpack.c.h.b16 %v177
  %v849 = vunpack.c.l.b16 %v178
  %v850 = vunpack.c.h.b16 %v178
  %v851 = vunpack.c.l.b16 %v179
  %v852 = vunpack.c.h.b16 %v179
  %v853 = vunpack.c.l.b16 %v180
  %v854 = vunpack.c.h.b16 %v180
  %v855 = vunpack.c.l.b16 %v181
  %v856 = vunpack.c.h.b16 %v181
  %v857 = vunpack.c.l.b16 %v182
  %v858 = vunpack.c.h.b16 %v182
  %v859 = vunpack.c.l.b16 %v183
  %v860 = vunpack.c.h.b16 %v183
  %v861 = vunpack.c.l.b16 %v184
  %v862 = vunpack.c.h.b16 %v184
  %v863 = vunpack.c.l.b16 %v185
  %v864 = vunpack.c.h.b16 %v185
  %v865 = vunpack.c.l.b16 %v186
  %v866 = vunpack.c.h.b16 %v186
  %v867 = vunpack.c.l.b16 %v187
  %v868 = vunpack.c.h.b16 %v187
  %v869 = vunpack.c.l.b16 %v188
  %v870 = vunpack.c.h.b16 %v188
  %v871 = vunpack.c.l.b16 %v189
  %v872 = vunpack.c.h.b16 %v189
  %v873 = vunpack.c.l.b16 %v190
  %v874 = vunpack.c.h.b16 %v190
  %v875 = vunpack.c.l.b16 %v191
  %v876 = vunpack.c.h.b16 %v191
  %v877 = vunpack.c.l.b16 %v192
  %v878 = vunpack.c.h.b16 %v192
  %v879 = vunpack.c.l.b16 %v193
  %v880 = vunpack.c.h.b16 %v193
  %v881 = vunpack.c.l.b16 %v194
  %v882 = vunpack.c.h.b16 %v194
  %v883 = vunpack.c.l.b16 %v195
  %v884 = vunpack.c.h.b16 %v195
  %v885 = vunpack.c.l.b16 %v196
  %v886 = vunpack.c.h.b16 %v196
  %v887 = vunpack.c.l.b16 %v197
  %v888 = vunpack.c.h.b16 %v197
  %v889 = vunpack.c.l.b16 %v198
  %v890 = vunpack.c.h.b16 %v198
  %v891 = vunpack.c.l.b16 %v199
  %v892 = vunpack.c.h.b16 %v199
  %v893 = vunpack.c.l.b16 %v200
  %v894 = vunpack.c.h.b16 %v200
  %v895 = vunpack.c.l.b16 %v201
  %v896 = vunpack.c.h.b16 %v201
  %v897 = vunpack.c.l.b16 %v202
  %v898 = vunpack.c.h.b16 %v202
  %v899 = vunpack.c.l.b16 %v203
  %v900 = vunpack.c.h.b16 %v203
  %v901 = vunpack.c.l.b16 %v204
  %v902 = vunpack.c.h.b16 %v204
  %v903 = vunpack.c.l.b16 %v205
  %v904 = vunpack.c.h.b16 %v205
  %v905 = vunpack.c.l.b16 %v206
  %v906 = vunpack.c.h.b16 %v206
  %v907 = vunpack.c.l.b16 %v207
  %v908 = vunpack.c.h.b16 %v207
  %v909 = vunpack.c.l.b16 %v208
  %v910 = vunpack.c.h.b16 %v208
  %v911 = vunpack.c.l.b16 %v209
  %v912 = vunpack.c.h.b16 %v209
  %v913 = vunpack.c.l.b16 %v210
  %v914 = vunpack.c.h.b16 %v210
  %v915 = vunpack.c.l.b16 %v211
  %v916 = vunpack.c.h.b16 %v211
  %v917 = vunpack.c.l.b16 %v212
  %v918 = vunpack.c.h.b16 %v212
  %v919 = vunpack.c.l.b16 %v213
  %v920 = vunpack.c.h.b16 %v213
  %v921 = vunpack.c.l.b16 %v214
  %v922 = vunpack.c.h.b16 %v214
  %v923 = vunpack.c.l.b16 %v215
  %v924 = vunpack.c.h.b16 %v215
  %v925 = vunpack.c.l.b16 %v216
  %v926 = vunpack.c.h.b16 %v216
  %v927 = vunpack.c.l.b16 %v217
  %v928 = vunpack.c.h.b16 %v217
  %v929 = vunpack.c.l.b16 %v218
  %v930 = vunpack.c.h.b16 %v218
  %v931 = vunpack.c.l.b16 %v219
  %v932 = vunpack.c.h.b16 %v219
  %v933 = vunpack.c.l.b16 %v220
  %v934 = vunpack.c.h.b16 %v220
  %v935 = vunpack.c.l.b16 %v221
  %v936 = vunpack.c.h.b16 %v221
  %v937 = vunpack.c.l.b16 %v222
  %v938 = vunpack.c.h.b16 %v222
  %v939 = vunpack.c.l.b16 %v223
  %v940 = vunpack.c.h.b16 %v223
  %v941 = vunpack.c.l.b16 %v224
  %v942 = vunpack.c.h.b16 %v224
  %v943 = vunpack.c.l.b16 %v225
  %v944 = vunpack.c.h.b16 %v225
  %v945 = vunpack.c.l.b16 %v226
  %v946 = vunpack.c.h.b16 %v226
  %v947 = vunpack.c.l.b16 %v227
  %v948 = vunpack.c.h.b16 %v227
  %v949 = vunpack.c.l.b16 %v228
  %v950 = vunpack.c.h.b16 %v228
  %v951 = vunpack.c.l.b16 %v229
  %v952 = vunpack.c.h.b16 %v229
  %v953 = vunpack.c.l.b16 %v230
  %v954 = vunpack.c.h.b16 %v230
  %v955 = vunpack.c.l.b16 %v231
  %v956 = vunpack.c.h.b16 %v231
  %v957 = vunpack.c.l.b16 %v232
  %v958 = vunpack.c.h.b16 %v232
  %v959 = vunpack.c.l.b16 %v233
  %v960 = vunpack.c.h.b16 %v233
  %v961 = vunpack.c.l.b16 %v234
  %v962 = vunpack.c.h.b16 %v234
  %v963 = vunpack.c.l.b16 %v235
  %v964 = vunpack.c.h.b16 %v235
  %v965 = vunpack.c.l.b16 %v236
  %v966 = vunpack.c.h.b16 %v236
  %v967 = vunpack.c.l.b16 %v237
  %v968 = vunpack.c.h.b16 %v237
  %v969 = vunpack.c.l.b16 %v238
  %v970 = vunpack.c.h.b16 %v238
  %v971 = vunpack.c.l.b16 %v239
  %v972 = vunpack.c.h.b16 %v239
  %v973 = vunpack.c.l.b16 %v240
  %v974 = vunpack.c.h.b16 %v240
  %v975 = vunpack.c.l.b16 %v241
  %v976 = vunpack.c.h.b16 %v241
  %v977 = vunpack.c.l.b16 %v242
  %v978 = vunpack.c.h.b16 %v242
  %v979 = vunpack.c.l.b16 %v243
  %v980 = vunpack.c.h.b16 %v243
  %v981 = vunpack.c.l.b16 %v244
  %v982 = vunpack.c.h.b16 %v244
  %v983 = vunpack.c.l.b16 %v245
  %v984 = vunpack.c.h.b16 %v245
  %v985 = vunpack.c.l.b16 %v246
  %v986 = vunpack.c.h.b16 %v246
  %v987 = vunpack.c.l.b16 %v247
  %v988 = vunpack.c.h.b16 %v247
  %v989 = vunpack.c.l.b16 %v248
  %v990 = vunpack.c.h.b16 %v248
  %v991 = vunpack.c.l.b16 %v249
  %v992 = vunpack.c.h.b16 %v249
  %v993 = vunpack.c.l.b16 %v250
  %v994 = vunpack.c.h.b16 %v250
  %v995 = vunpack.c.l.b16 %v251
  %v996 = vunpack.c.h.b16 %v251
  %v997 = vunpack.c.l.b16 %v252
  %v998 = vunpack.c.h.b16 %v252
  %v999 = vunpack.c.l.b16 %v253
  %v1000 = vunpack.c.h.b16 %v253
  %v1001 = vunpack.c.l.b16 %v254
  %v1002 = vunpack.c.h.b16 %v254
  %v1003 = vunpack.c.l.b16 %v255
  %v1004 = vunpack.c.h.b16 %v255
  %v1005 = vunpack.c.l.b16 %v256
  %v1006 = vunpack.c.h.b16 %v256
  %v1007 = vunpack.c.l.b16 %v257
  %v1008 = vunpack.c.h.b16 %v257
  %v1009 = vunpack.c.l.b16 %v258
  %v1010 = vunpack.c.h.b16 %v258
  %v1011 = vunpack.c.l.b16 %v259
  %v1012 = vunpack.c.h.b16 %v259
  %v1013 = vunpack.c.l.b16 %v260
  %v1014 = vunpack.c.h.b16 %v260
  %v1015 = vunpack.c.l.b16 %v261
  %v1016 = vunpack.c.h.b16 %v261
  %v1017 = vunpack.c.l.b16 %v262
  %v1018 = vunpack.c.h.b16 %v262
  %v1019 = vunpack.c.l.b16 %v263
  %v1020 = vunpack.c.h.b16 %v263
  %v1021 = vunpack.c.l.b16 %v264
  %v1022 = vunpack.c.h.b16 %v264
  %v1023 = vunpack.c.l.b16 %v265
  %v1024 = vunpack.c.h.b16 %v265
  %v1025 = vunpack.c.l.b16 %v266
  %v1026 = vunpack.c.h.b16 %v266
  %v1027 = vunpack.c.l.b16 %v267
  %v1028 = vunpack.c.h.b16 %v267
  %v1029 = vunpack.c.l.b16 %v268
  %v1030 = vunpack.c.h.b16 %v268
  %v1031 = vunpack.c.l.b16 %v269
  %v1032 = vunpack.c.h.b16 %v269
  %v1033 = vunpack.c.l.b16 %v270
  %v1034 = vunpack.c.h.b16 %v270
  %v1035 = vunpack.c.l.b16 %v271
  %v1036 = vunpack.c.h.b16 %v271
  %v1037 = vunpack.c.l.b16 %v272
  %v1038 = vunpack.c.h.b16 %v272
  %v1039 = vunpack.c.l.b16 %v273
  %v1040 = vunpack.c.h.b16 %v273
  %v1041 = vunpack.c.l.b16 %v274
  %v1042 = vunpack.c.h.b16 %v274
  %v1043 = vunpack.c.l.b16 %v275
  %v1044 = vunpack.c.h.b16 %v275
  %v1045 = vunpack.c.l.b16 %v276
  %v1046 = vunpack.c.h.b16 %v276
  %v1047 = vunpack.c.l.b16 %v277
  %v1048 = vunpack.c.h.b16 %v277
  %v1049 = vunpack.c.l.b16 %v278
  %v1050 = vunpack.c.h.b16 %v278
  %v1051 = vunpack.c.l.b16 %v279
  %v1052 = vunpack.c.h.b16 %v279
  %v1053 = vunpack.c.l.b16 %v280
  %v1054 = vunpack.c.h.b16 %v280
  %v1055 = vunpack.c.l.b16 %v281
  %v1056 = vunpack.c.h.b16 %v281
  %v1057 = vunpack.c.l.b16 %v282
  %v1058 = vunpack.c.h.b16 %v282
  %v1059 = vunpack.c.l.b16 %v283
  %v1060 = vunpack.c.h.b16 %v283
  %v1061 = vunpack.c.l.b16 %v284
  %v1062 = vunpack.c.h.b16 %v284
  %v1063 = vunpack.c.l.b16 %v285
  %v1064 = vunpack.c.h.b16 %v285
  %v1065 = vunpack.c.l.b16 %v286
  %v1066 = vunpack.c.h.b16 %v286
  %v1067 = vunpack.c.l.b16 %v287
  %v1068 = vunpack.c.h.b16 %v287
  %v1069 = vunpack.c.l.b16 %v288
  %v1070 = vunpack.c.h.b16 %v288
  %v1071 = vunpack.c.l.b16 %v289
  %v1072 = vunpack.c.h.b16 %v289
  %v1073 = vunpack.c.l.b16 %v290
  %v1074 = vunpack.c.h.b16 %v290
  %v1075 = vunpack.c.l.b16 %v291
  %v1076 = vunpack.c.h.b16 %v291
  %v1077 = vunpack.c.l.b16 %v292
  %v1078 = vunpack.c.h.b16 %v292
  %v1079 = vunpack.c.l.b16 %v293
  %v1080 = vunpack.c.h.b16 %v293
  %v1081 = vunpack.c.l.b16 %v294
  %v1082 = vunpack.c.h.b16 %v294
  %v1083 = vunpack.c.l.b16 %v295
  %v1084 = vunpack.c.h.b16 %v295
  %v1085 = vunpack.c.l.b16 %v296
  %v1086 = vunpack.c.h.b16 %v296
  %v1087 = vunpack.c.l.b16 %v297
  %v1088 = vunpack.c.h.b16 %v297
  %v1089 = vunpack.c.l.b16 %v298
  %v1090 = vunpack.c.h.b16 %v298
  %v1091 = vunpack.c.l.b16 %v299
  %v1092 = vunpack.c.h.b16 %v299
  %v1093 = vunpack.c.l.b16 %v300
  %v1094 = vunpack.c.h.b16 %v300
  %v1095 = vunpack.c.l.b16 %v301
  %v1096 = vunpack.c.h.b16 %v301
  %v1097 = vunpack.c.l.b16 %v302
  %v1098 = vunpack.c.h.b16 %v302
  %v1099 = vunpack.c.l.b16 %v303
  %v1100 = vunpack.c.h.b16 %v303
  %v1101 = vunpack.c.l.b16 %v304
  %v1102 = vunpack.c.h.b16 %v304
  %v1103 = vunpack.c.l.b16 %v305
  %v1104 = vunpack.c.h.b16 %v305
  %v1105 = vunpack.c.l.b16 %v306
  %v1106 = vunpack.c.h.b16 %v306
  %v1107 = vpack.c.b16 %v821, %v819
  %v1108 = vpack.c.b16 %v822, %v820
  %v1109 = vpack.c.b16 %v825, %v823
  %v1110 = vpack.c.b16 %v826, %v824
  %v1111 = vpack.c.b16 %v829, %v827
  %v1112 = vpack.c.b16 %v830, %v828
  %v1113 = vpack.c.b16 %v833, %v831
  %v1114 = vpack.c.b16 %v834, %v832
  %v1115 = vpack.c.b16 %v837, %v835
  %v1116 = vpack.c.b16 %v838, %v836
  %v1117 = vpack.c.b16 %v841, %v839
  %v1118 = vpack.c.b16 %v842, %v840
  %v1119 = vpack.c.b16 %v845, %v843
  %v1120 = vpack.c.b16 %v846, %v844
  %v1121 = vpack.c.b16 %v849, %v847
  %v1122 = vpack.c.b16 %v850, %v848
  %v1123 = vpack.c.b16 %v853, %v851
  %v1124 = vpack.c.b16 %v854, %v852
  %v1125 = vpack.c.b16 %v857, %v855
  %v1126 = vpack.c.b16 %v858, %v856
  %v1127 = vpack.c.b16 %v861, %v859
  %v1128 = vpack.c.b16 %v862, %v860
  %v1129 = vpack.c.b16 %v865, %v863
  %v1130 = vpack.c.b16 %v866, %v864
  %v1131 = vpack.c.b16 %v869, %v867
  %v1132 = vpack.c.b16 %v870, %v868
  %v1133 = vpack.c.b16 %v873, %v871
  %v1134 = vpack.c.b16 %v874, %v872
  %v1135 = vpack.c.b16 %v877, %v875
  %v1136 = vpack.c.b16 %v878, %v876
  %v1137 = vpack.c.b16 %v881, %v879
  %v1138 = vpack.c.b16 %v882, %v880
  %v1139 = vpack.c.b16 %v885, %v883
  %v1140 = vpack.c.b16 %v886, %v884
  %v1141 = vpack.c.b16 %v889, %v887
  %v1142 = vpack.c.b16 %v890, %v888
  %v1143 = vpack.c.b16 %v893, %v891
  %v1144 = vpack.c.b16 %v894, %v892
  %v1145 = vpack.c.b16 %v897, %v895
  %v1146 = vpack.c.b16 %v898, %v896
  %v1147 = vpack.c.b16 %v901, %v899
  %v1148 = vpack.c.b16 %v902, %v900
  %v1149 = vpack.c.b16 %v905, %v903
  %v1150 = vpack.c.b16 %v906, %v904
  %v1151 = vpack.c.b16 %v909, %v907
  %v1152 = vpack.c.b16 %v910, %v908
  %v1153 = vpack.c.b16 %v913, %v911
  %v1154 = vpack.c.b16 %v914, %v912
  %v1155 = vpack.c.b16 %v917, %v915
  %v1156 = vpack.c.b16 %v918, %v916
  %v1157 = vpack.c.b16 %v921, %v919
  %v1158 = vpack.c.b16 %v922, %v920
  %v1159 = vpack.c.b16 %v925, %v923
  %v1160 = vpack.c.b16 %v926, %v924
  %v1161 = vpack.c.b16 %v929, %v927
  %v1162 = vpack.c.b16 %v930, %v928
  %v1163 = vpack.c.b16 %v933, %v931
  %v1164 = vpack.c.b16 %v934, %v932
  %v1165 = vpack.c.b16 %v937, %v935
  %v1166 = vpack.c.b16 %v938, %v936
  %v1167 = vpack.c.b16 %v941, %v939
  %v1168 = vpack.c.b16 %v942, %v940
  %v1169 = vpack.c.b16 %v945, %v943
  %v1170 = vpack.c.b16 %v946, %v944
  %v1171 = vpack.c.b16 %v949, %v947
  %v1172 = vpack.c.b16 %v950, %v948
  %v1173 = vpack.c.b16 %v953, %v951
  %v1174 = vpack.c.b16 %v954, %v952
  %v1175 = vpack.c.b16 %v957, %v955
  %v1176 = vpack.c.b16 %v958, %v956
  %v1177 = vpack.c.b16 %v961, %v959
  %v1178 = vpack.c.b16 %v962, %v960
  %v1179 = vpack.c.b16 %v965, %v963
  %v1180 = vpack.c.b16 %v966, %v964
  %v1181 = vpack.c.b16 %v969, %v967
  %v1182 = vpack.c.b16 %v970, %v968
  %v1183 = vpack.c.b16 %v973, %v971
  %v1184 = vpack.c.b16 %v974, %v972
  %v1185 = vpack.c.b16 %v977, %v975
  %v1186 = vpack.c.b16 %v978, %v976
  %v1187 = vpack.c.b16 %v981, %v979
  %v1188 = vpack.c.b16 %v982, %v980
  %v1189 = vpack.c.b16 %v985, %v983
  %v1190 = vpack.c.b16 %v986, %v984
  %v1191 = vpack.c.b16 %v989, %v987
  %v1192 = vpack.c.b16 %v990, %v988
  %v1193 = vpack.c.b16 %v993, %v991
  %v1194 = vpack.c.b16 %v994, %v992
  %v1195 = vpack.c.b16 %v997, %v995
  %v1196 = vpack.c.b16 %v998, %v996
  %v1197 = vpack.c.b16 %v1001, %v999
  %v1198 = vpack.c.b16 %v1002, %v1000
  %v1199 = vpack.c.b16 %v1005, %v1003
  %v1200 = vpack.c.b16 %v1006, %v1004
  %v1201 = vpack.c.b16 %v1009, %v1007
  %v1202 = vpack.c.b16 %v1010, %v1008
  %v1203 = vpack.c.b16 %v1013, %v1011
  %v1204 = vpack.c.b16 %v1014, %v1012
  %v1205 = vpack.c.b16 %v1017, %v1015
  %v1206 = vpack.c.b16 %v1018, %v1016
  %v1207 = vpack.c.b16 %v1021, %v1019
  %v1208 = vpack.c.b16 %v1022, %v1020
  %v1209 = vpack.c.b16 %v1025, %v1023
  %v1210 = vpack.c.b16 %v1026, %v1024
  %v1211 = vpack.c.b16 %v1029, %v1027
  %v1212 = vpack.c.b16 %v1030, %v1028
  %v1213 = vpack.c.b16 %v1033, %v1031
  %v1214 = vpack.c.b16 %v1034, %v1032
  %v1215 = vpack.c.b16 %v1037, %v1035
  %v1216 = vpack.c.b16 %v1038, %v1036
  %v1217 = vpack.c.b16 %v1041, %v1039
  %v1218 = vpack.c.b16 %v1042, %v1040
  %v1219 = vpack.c.b16 %v1045, %v1043
  %v1220 = vpack.c.b16 %v1046, %v1044
  %v1221 = vpack.c.b16 %v1049, %v1047
  %v1222 = vpack.c.b16 %v1050, %v1048
  %v1223 = vpack.c.b16 %v1053, %v1051
  %v1224 = vpack.c.b16 %v1054, %v1052
  %v1225 = vpack.c.b16 %v1057, %v1055
  %v1226 = vpack.c.b16 %v1058, %v1056
  %v1227 = vpack.c.b16 %v1061, %v1059
  %v1228 = vpack.c.b16 %v1062, %v1060
  %v1229 = vpack.c.b16 %v1065, %v1063
  %v1230 = vpack.c.b16 %v1066, %v1064
  %v1231 = vpack.c.b16 %v1069, %v1067
  %v1232 = vpack.c.b16 %v1070, %v1068
  %v1233 = vpack.c.b16 %v1073, %v1071
  %v1234 = vpack.c.b16 %v1074, %v1072
  %v1235 = vpack.c.b16 %v1077, %v1075
  %v1236 = vpack.c.b16 %v1078, %v1076
  %v1237 = vpack.c.b16 %v1081, %v1079
  %v1238 = vpack.c.b16 %v1082, %v1080
  %v1239 = vpack.c.b16 %v1085, %v1083
  %v1240 = vpack.c.b16 %v1086, %v1084
  %v1241 = vpack.c.b16 %v1089, %v1087
  %v1242 = vpack.c.b16 %v1090, %v1088
  %v1243 = vpack.c.b16 %v1093, %v1091
  %v1244 = vpack.c.b16 %v1094, %v1092
  %v1245 = vpack.c.b16 %v1097, %v1095
  %v1246 = vpack.c.b16 %v1098, %v1096
  %v1247 = vpack.c.b16 %v1101, %v1099
  %v1248 = vpack.c.b16 %v1102, %v1100
  %v1249 = vpack.c.b16 %v1105, %v1103
  %v1250 = vpack.c.b16 %v1106, %v1104
  %1395 = vmatprep.subr.bf16.mxu0 %v1122
  %1396 = vmatpush1.bf16.msra.mxu0 %v1121
  %1397 = vmatprep.subr.bf16.mxu0 %v1120
  %1398 = vmatpush1.bf16.msra.mxu0 %v1119
  %1399 = vmatprep.subr.bf16.mxu0 %v1118
  %1400 = vmatpush1.bf16.msra.mxu0 %v1117
  %1401 = vmatprep.subr.bf16.mxu0 %v1116
  %1402 = vmatpush1.bf16.msra.mxu0 %v1115
  %1403 = vmatprep.subr.bf16.mxu0 %v1114
  %1404 = vmatpush1.bf16.msra.mxu0 %v1113
  %1405 = vmatprep.subr.bf16.mxu0 %v1112
  %1406 = vmatpush1.bf16.msra.mxu0 %v1111
  %1407 = vmatprep.subr.bf16.mxu0 %v1110
  %1408 = vmatpush1.bf16.msra.mxu0 %v1109
  %1409 = vmatprep.subr.bf16.mxu0 %v1108
  %1410 = vmatpush1.bf16.msra.mxu0 %v1107
  %1411 = vmatprep.subr.bf16.mxu0 %v1138
  %1412 = vmatpush2.bf16.msra.mxu0 %v1137
  %1413 = vmatprep.subr.bf16.mxu0 %v1136
  %1414 = vmatpush2.bf16.msra.mxu0 %v1135
  %1415 = vmatprep.subr.bf16.mxu0 %v1134
  %1416 = vmatpush2.bf16.msra.mxu0 %v1133
  %1417 = vmatprep.subr.bf16.mxu0 %v1132
  %1418 = vmatpush2.bf16.msra.mxu0 %v1131
  %1419 = vmatprep.subr.bf16.mxu0 %v1130
  %1420 = vmatpush2.bf16.msra.mxu0 %v1129
  %1421 = vmatprep.subr.bf16.mxu0 %v1128
  %1422 = vmatpush2.bf16.msra.mxu0 %v1127
  %1423 = vmatprep.subr.bf16.mxu0 %v1126
  %1424 = vmatpush2.bf16.msra.mxu0 %v1125
  %1425 = vmatprep.subr.bf16.mxu0 %v1124
  %1426 = vmatpush2.bf16.msra.mxu0 %v1123
  %1427 = vmatprep.mubr.bf16.mxu0 %v532
  %1428 = vmatmul.mubr.bf16.gmra.mxu0 %v531
  %v1429 = vpop.f32.mrf.mxu0
  %v1430 = vadd.f32 0.0, %v1429
  %v1431 = vpop.f32.mrf.mxu0
  %v1432 = vadd.f32 0.0, %v1431
  %v1433 = vpop.f32.mrf.mxu0
  %v1434 = vadd.f32 0.0, %v1433
  %v1435 = vpop.f32.mrf.mxu0
  %v1436 = vadd.f32 0.0, %v1435
  %1437 = vmatprep.mubr.bf16.mxu0 %v541
  %1438 = vmatmul.mubr.bf16.gmra.mxu0 %v540
  %v1439 = vpop.f32.mrf.mxu0
  %v1440 = vadd.f32 0.0, %v1439
  %v1441 = vpop.f32.mrf.mxu0
  %v1442 = vadd.f32 0.0, %v1441
  %v1443 = vpop.f32.mrf.mxu0
  %v1444 = vadd.f32 0.0, %v1443
  %v1445 = vpop.f32.mrf.mxu0
  %v1446 = vadd.f32 0.0, %v1445
  %1447 = vmatprep.mubr.bf16.mxu0 %v550
  %1448 = vmatmul.mubr.bf16.gmra.mxu0 %v549
  %v1449 = vpop.f32.mrf.mxu0
  %v1450 = vadd.f32 0.0, %v1449
  %v1451 = vpop.f32.mrf.mxu0
  %v1452 = vadd.f32 0.0, %v1451
  %v1453 = vpop.f32.mrf.mxu0
  %v1454 = vadd.f32 0.0, %v1453
  %v1455 = vpop.f32.mrf.mxu0
  %v1456 = vadd.f32 0.0, %v1455
  %1457 = vmatprep.mubr.bf16.mxu0 %v559
  %1458 = vmatmul.mubr.bf16.gmra.mxu0 %v558
  %v1459 = vpop.f32.mrf.mxu0
  %v1460 = vadd.f32 0.0, %v1459
  %v1461 = vpop.f32.mrf.mxu0
  %v1462 = vadd.f32 0.0, %v1461
  %v1463 = vpop.f32.mrf.mxu0
  %v1464 = vadd.f32 0.0, %v1463
  %v1465 = vpop.f32.mrf.mxu0
  %v1466 = vadd.f32 0.0, %v1465
  %1467 = vmatprep.mubr.bf16.mxu0 %v568
  %1468 = vmatmul.mubr.bf16.gmra.mxu0 %v567
  %v1469 = vpop.f32.mrf.mxu0
  %v1470 = vadd.f32 0.0, %v1469
  %v1471 = vpop.f32.mrf.mxu0
  %v1472 = vadd.f32 0.0, %v1471
  %v1473 = vpop.f32.mrf.mxu0
  %v1474 = vadd.f32 0.0, %v1473
  %v1475 = vpop.f32.mrf.mxu0
  %v1476 = vadd.f32 0.0, %v1475
  %1477 = vmatprep.mubr.bf16.mxu0 %v577
  %1478 = vmatmul.mubr.bf16.gmra.mxu0 %v576
  %v1479 = vpop.f32.mrf.mxu0
  %v1480 = vadd.f32 0.0, %v1479
  %v1481 = vpop.f32.mrf.mxu0
  %v1482 = vadd.f32 0.0, %v1481
  %v1483 = vpop.f32.mrf.mxu0
  %v1484 = vadd.f32 0.0, %v1483
  %v1485 = vpop.f32.mrf.mxu0
  %v1486 = vadd.f32 0.0, %v1485
  %1487 = vmatprep.mubr.bf16.mxu0 %v586
  %1488 = vmatmul.mubr.bf16.gmra.mxu0 %v585
  %v1489 = vpop.f32.mrf.mxu0
  %v1490 = vadd.f32 0.0, %v1489
  %v1491 = vpop.f32.mrf.mxu0
  %v1492 = vadd.f32 0.0, %v1491
  %v1493 = vpop.f32.mrf.mxu0
  %v1494 = vadd.f32 0.0, %v1493
  %v1495 = vpop.f32.mrf.mxu0
  %v1496 = vadd.f32 0.0, %v1495
  %1497 = vmatprep.mubr.bf16.mxu0 %v595
  %1498 = vmatmul.mubr.bf16.gmra.mxu0 %v594
  %v1499 = vpop.f32.mrf.mxu0
  %v1500 = vadd.f32 0.0, %v1499
  %v1501 = vpop.f32.mrf.mxu0
  %v1502 = vadd.f32 0.0, %v1501
  %v1503 = vpop.f32.mrf.mxu0
  %v1504 = vadd.f32 0.0, %v1503
  %v1505 = vpop.f32.mrf.mxu0
  %v1506 = vadd.f32 0.0, %v1505
  %1507 = vdwg.mxu0
  %1508 = vmatprep.subr.bf16.mxu0 %v1154
  %1509 = vmatpush1.bf16.msra.mxu0 %v1153
  %1510 = vmatprep.subr.bf16.mxu0 %v1152
  %1511 = vmatpush1.bf16.msra.mxu0 %v1151
  %1512 = vmatprep.subr.bf16.mxu0 %v1150
  %1513 = vmatpush1.bf16.msra.mxu0 %v1149
  %1514 = vmatprep.subr.bf16.mxu0 %v1148
  %1515 = vmatpush1.bf16.msra.mxu0 %v1147
  %1516 = vmatprep.subr.bf16.mxu0 %v1146
  %1517 = vmatpush1.bf16.msra.mxu0 %v1145
  %1518 = vmatprep.subr.bf16.mxu0 %v1144
  %1519 = vmatpush1.bf16.msra.mxu0 %v1143
  %1520 = vmatprep.subr.bf16.mxu0 %v1142
  %1521 = vmatpush1.bf16.msra.mxu0 %v1141
  %1522 = vmatprep.subr.bf16.mxu0 %v1140
  %1523 = vmatpush1.bf16.msra.mxu0 %v1139
  %1524 = vmatprep.subr.bf16.mxu0 %v1170
  %1525 = vmatpush2.bf16.msra.mxu0 %v1169
  %1526 = vmatprep.subr.bf16.mxu0 %v1168
  %1527 = vmatpush2.bf16.msra.mxu0 %v1167
  %1528 = vmatprep.subr.bf16.mxu0 %v1166
  %1529 = vmatpush2.bf16.msra.mxu0 %v1165
  %1530 = vmatprep.subr.bf16.mxu0 %v1164
  %1531 = vmatpush2.bf16.msra.mxu0 %v1163
  %1532 = vmatprep.subr.bf16.mxu0 %v1162
  %1533 = vmatpush2.bf16.msra.mxu0 %v1161
  %1534 = vmatprep.subr.bf16.mxu0 %v1160
  %1535 = vmatpush2.bf16.msra.mxu0 %v1159
  %1536 = vmatprep.subr.bf16.mxu0 %v1158
  %1537 = vmatpush2.bf16.msra.mxu0 %v1157
  %1538 = vmatprep.subr.bf16.mxu0 %v1156
  %1539 = vmatpush2.bf16.msra.mxu0 %v1155
  %1540 = vmatprep.mubr.bf16.mxu0 %v534
  %1541 = vmatmul.mubr.bf16.gmra.mxu0 %v533
  %v1542 = vpop.f32.mrf.mxu0
  %v1543 = vadd.f32 %v1430, %v1542
  %v1544 = vpop.f32.mrf.mxu0
  %v1545 = vadd.f32 %v1432, %v1544
  %v1546 = vpop.f32.mrf.mxu0
  %v1547 = vadd.f32 %v1434, %v1546
  %v1548 = vpop.f32.mrf.mxu0
  %v1549 = vadd.f32 %v1436, %v1548
  %1550 = vmatprep.mubr.bf16.mxu0 %v543
  %1551 = vmatmul.mubr.bf16.gmra.mxu0 %v542
  %v1552 = vpop.f32.mrf.mxu0
  %v1553 = vadd.f32 %v1440, %v1552
  %v1554 = vpop.f32.mrf.mxu0
  %v1555 = vadd.f32 %v1442, %v1554
  %v1556 = vpop.f32.mrf.mxu0
  %v1557 = vadd.f32 %v1444, %v1556
  %v1558 = vpop.f32.mrf.mxu0
  %v1559 = vadd.f32 %v1446, %v1558
  %1560 = vmatprep.mubr.bf16.mxu0 %v552
  %1561 = vmatmul.mubr.bf16.gmra.mxu0 %v551
  %v1562 = vpop.f32.mrf.mxu0
  %v1563 = vadd.f32 %v1450, %v1562
  %v1564 = vpop.f32.mrf.mxu0
  %v1565 = vadd.f32 %v1452, %v1564
  %v1566 = vpop.f32.mrf.mxu0
  %v1567 = vadd.f32 %v1454, %v1566
  %v1568 = vpop.f32.mrf.mxu0
  %v1569 = vadd.f32 %v1456, %v1568
  %1570 = vmatprep.mubr.bf16.mxu0 %v561
  %1571 = vmatmul.mubr.bf16.gmra.mxu0 %v560
  %v1572 = vpop.f32.mrf.mxu0
  %v1573 = vadd.f32 %v1460, %v1572
  %v1574 = vpop.f32.mrf.mxu0
  %v1575 = vadd.f32 %v1462, %v1574
  %v1576 = vpop.f32.mrf.mxu0
  %v1577 = vadd.f32 %v1464, %v1576
  %v1578 = vpop.f32.mrf.mxu0
  %v1579 = vadd.f32 %v1466, %v1578
  %1580 = vmatprep.mubr.bf16.mxu0 %v570
  %1581 = vmatmul.mubr.bf16.gmra.mxu0 %v569
  %v1582 = vpop.f32.mrf.mxu0
  %v1583 = vadd.f32 %v1470, %v1582
  %v1584 = vpop.f32.mrf.mxu0
  %v1585 = vadd.f32 %v1472, %v1584
  %v1586 = vpop.f32.mrf.mxu0
  %v1587 = vadd.f32 %v1474, %v1586
  %v1588 = vpop.f32.mrf.mxu0
  %v1589 = vadd.f32 %v1476, %v1588
  %1590 = vmatprep.mubr.bf16.mxu0 %v579
  %1591 = vmatmul.mubr.bf16.gmra.mxu0 %v578
  %v1592 = vpop.f32.mrf.mxu0
  %v1593 = vadd.f32 %v1480, %v1592
  %v1594 = vpop.f32.mrf.mxu0
  %v1595 = vadd.f32 %v1482, %v1594
  %v1596 = vpop.f32.mrf.mxu0
  %v1597 = vadd.f32 %v1484, %v1596
  %v1598 = vpop.f32.mrf.mxu0
  %v1599 = vadd.f32 %v1486, %v1598
  %1600 = vmatprep.mubr.bf16.mxu0 %v588
  %1601 = vmatmul.mubr.bf16.gmra.mxu0 %v587
  %v1602 = vpop.f32.mrf.mxu0
  %v1603 = vadd.f32 %v1490, %v1602
  %v1604 = vpop.f32.mrf.mxu0
  %v1605 = vadd.f32 %v1492, %v1604
  %v1606 = vpop.f32.mrf.mxu0
  %v1607 = vadd.f32 %v1494, %v1606
  %v1608 = vpop.f32.mrf.mxu0
  %v1609 = vadd.f32 %v1496, %v1608
  %1610 = vmatprep.mubr.bf16.mxu0 %v597
  %1611 = vmatmul.mubr.bf16.gmra.mxu0 %v596
  %v1612 = vpop.f32.mrf.mxu0
  %v1613 = vadd.f32 %v1500, %v1612
  %v1614 = vpop.f32.mrf.mxu0
  %v1615 = vadd.f32 %v1502, %v1614
  %v1616 = vpop.f32.mrf.mxu0
  %v1617 = vadd.f32 %v1504, %v1616
  %v1618 = vpop.f32.mrf.mxu0
  %v1619 = vadd.f32 %v1506, %v1618
  %1620 = vdwg.mxu0
  %1621 = vmatprep.subr.bf16.mxu0 %v1186
  %1622 = vmatpush1.bf16.msra.mxu0 %v1185
  %1623 = vmatprep.subr.bf16.mxu0 %v1184
  %1624 = vmatpush1.bf16.msra.mxu0 %v1183
  %1625 = vmatprep.subr.bf16.mxu0 %v1182
  %1626 = vmatpush1.bf16.msra.mxu0 %v1181
  %1627 = vmatprep.subr.bf16.mxu0 %v1180
  %1628 = vmatpush1.bf16.msra.mxu0 %v1179
  %1629 = vmatprep.subr.bf16.mxu0 %v1178
  %1630 = vmatpush1.bf16.msra.mxu0 %v1177
  %1631 = vmatprep.subr.bf16.mxu0 %v1176
  %1632 = vmatpush1.bf16.msra.mxu0 %v1175
  %1633 = vmatprep.subr.bf16.mxu0 %v1174
  %1634 = vmatpush1.bf16.msra.mxu0 %v1173
  %1635 = vmatprep.subr.bf16.mxu0 %v1172
  %1636 = vmatpush1.bf16.msra.mxu0 %v1171
  %1637 = vmatprep.subr.bf16.mxu0 %v1202
  %1638 = vmatpush2.bf16.msra.mxu0 %v1201
  %1639 = vmatprep.subr.bf16.mxu0 %v1200
  %1640 = vmatpush2.bf16.msra.mxu0 %v1199
  %1641 = vmatprep.subr.bf16.mxu0 %v1198
  %1642 = vmatpush2.bf16.msra.mxu0 %v1197
  %1643 = vmatprep.subr.bf16.mxu0 %v1196
  %1644 = vmatpush2.bf16.msra.mxu0 %v1195
  %1645 = vmatprep.subr.bf16.mxu0 %v1194
  %1646 = vmatpush2.bf16.msra.mxu0 %v1193
  %1647 = vmatprep.subr.bf16.mxu0 %v1192
  %1648 = vmatpush2.bf16.msra.mxu0 %v1191
  %1649 = vmatprep.subr.bf16.mxu0 %v1190
  %1650 = vmatpush2.bf16.msra.mxu0 %v1189
  %1651 = vmatprep.subr.bf16.mxu0 %v1188
  %1652 = vmatpush2.bf16.msra.mxu0 %v1187
  %1653 = vmatprep.mubr.bf16.mxu0 %v536
  %1654 = vmatmul.mubr.bf16.gmra.mxu0 %v535
  %v1655 = vpop.f32.mrf.mxu0
  %v1656 = vadd.f32 %v1543, %v1655
  %v1657 = vpop.f32.mrf.mxu0
  %v1658 = vadd.f32 %v1545, %v1657
  %v1659 = vpop.f32.mrf.mxu0
  %v1660 = vadd.f32 %v1547, %v1659
  %v1661 = vpop.f32.mrf.mxu0
  %v1662 = vadd.f32 %v1549, %v1661
  %1663 = vmatprep.mubr.bf16.mxu0 %v545
  %1664 = vmatmul.mubr.bf16.gmra.mxu0 %v544
  %v1665 = vpop.f32.mrf.mxu0
  %v1666 = vadd.f32 %v1553, %v1665
  %v1667 = vpop.f32.mrf.mxu0
  %v1668 = vadd.f32 %v1555, %v1667
  %v1669 = vpop.f32.mrf.mxu0
  %v1670 = vadd.f32 %v1557, %v1669
  %v1671 = vpop.f32.mrf.mxu0
  %v1672 = vadd.f32 %v1559, %v1671
  %1673 = vmatprep.mubr.bf16.mxu0 %v554
  %1674 = vmatmul.mubr.bf16.gmra.mxu0 %v553
  %v1675 = vpop.f32.mrf.mxu0
  %v1676 = vadd.f32 %v1563, %v1675
  %v1677 = vpop.f32.mrf.mxu0
  %v1678 = vadd.f32 %v1565, %v1677
  %v1679 = vpop.f32.mrf.mxu0
  %v1680 = vadd.f32 %v1567, %v1679
  %v1681 = vpop.f32.mrf.mxu0
  %v1682 = vadd.f32 %v1569, %v1681
  %1683 = vmatprep.mubr.bf16.mxu0 %v563
  %1684 = vmatmul.mubr.bf16.gmra.mxu0 %v562
  %v1685 = vpop.f32.mrf.mxu0
  %v1686 = vadd.f32 %v1573, %v1685
  %v1687 = vpop.f32.mrf.mxu0
  %v1688 = vadd.f32 %v1575, %v1687
  %v1689 = vpop.f32.mrf.mxu0
  %v1690 = vadd.f32 %v1577, %v1689
  %v1691 = vpop.f32.mrf.mxu0
  %v1692 = vadd.f32 %v1579, %v1691
  %1693 = vmatprep.mubr.bf16.mxu0 %v572
  %1694 = vmatmul.mubr.bf16.gmra.mxu0 %v571
  %v1695 = vpop.f32.mrf.mxu0
  %v1696 = vadd.f32 %v1583, %v1695
  %v1697 = vpop.f32.mrf.mxu0
  %v1698 = vadd.f32 %v1585, %v1697
  %v1699 = vpop.f32.mrf.mxu0
  %v1700 = vadd.f32 %v1587, %v1699
  %v1701 = vpop.f32.mrf.mxu0
  %v1702 = vadd.f32 %v1589, %v1701
  %1703 = vmatprep.mubr.bf16.mxu0 %v581
  %1704 = vmatmul.mubr.bf16.gmra.mxu0 %v580
  %v1705 = vpop.f32.mrf.mxu0
  %v1706 = vadd.f32 %v1593, %v1705
  %v1707 = vpop.f32.mrf.mxu0
  %v1708 = vadd.f32 %v1595, %v1707
  %v1709 = vpop.f32.mrf.mxu0
  %v1710 = vadd.f32 %v1597, %v1709
  %v1711 = vpop.f32.mrf.mxu0
  %v1712 = vadd.f32 %v1599, %v1711
  %1713 = vmatprep.mubr.bf16.mxu0 %v590
  %1714 = vmatmul.mubr.bf16.gmra.mxu0 %v589
  %v1715 = vpop.f32.mrf.mxu0
  %v1716 = vadd.f32 %v1603, %v1715
  %v1717 = vpop.f32.mrf.mxu0
  %v1718 = vadd.f32 %v1605, %v1717
  %v1719 = vpop.f32.mrf.mxu0
  %v1720 = vadd.f32 %v1607, %v1719
  %v1721 = vpop.f32.mrf.mxu0
  %v1722 = vadd.f32 %v1609, %v1721
  %1723 = vmatprep.mubr.bf16.mxu0 %v599
  %1724 = vmatmul.mubr.bf16.gmra.mxu0 %v598
  %v1725 = vpop.f32.mrf.mxu0
  %v1726 = vadd.f32 %v1613, %v1725
  %v1727 = vpop.f32.mrf.mxu0
  %v1728 = vadd.f32 %v1615, %v1727
  %v1729 = vpop.f32.mrf.mxu0
  %v1730 = vadd.f32 %v1617, %v1729
  %v1731 = vpop.f32.mrf.mxu0
  %v1732 = vadd.f32 %v1619, %v1731
  %1733 = vdwg.mxu0
  %1734 = vmatprep.subr.bf16.mxu0 %v1218
  %1735 = vmatpush1.bf16.msra.mxu0 %v1217
  %1736 = vmatprep.subr.bf16.mxu0 %v1216
  %1737 = vmatpush1.bf16.msra.mxu0 %v1215
  %1738 = vmatprep.subr.bf16.mxu0 %v1214
  %1739 = vmatpush1.bf16.msra.mxu0 %v1213
  %1740 = vmatprep.subr.bf16.mxu0 %v1212
  %1741 = vmatpush1.bf16.msra.mxu0 %v1211
  %1742 = vmatprep.subr.bf16.mxu0 %v1210
  %1743 = vmatpush1.bf16.msra.mxu0 %v1209
  %1744 = vmatprep.subr.bf16.mxu0 %v1208
  %1745 = vmatpush1.bf16.msra.mxu0 %v1207
  %1746 = vmatprep.subr.bf16.mxu0 %v1206
  %1747 = vmatpush1.bf16.msra.mxu0 %v1205
  %1748 = vmatprep.subr.bf16.mxu0 %v1204
  %1749 = vmatpush1.bf16.msra.mxu0 %v1203
  %1750 = vmatprep.subr.bf16.mxu0 %v1234
  %1751 = vmatpush2.bf16.msra.mxu0 %v1233
  %1752 = vmatprep.subr.bf16.mxu0 %v1232
  %1753 = vmatpush2.bf16.msra.mxu0 %v1231
  %1754 = vmatprep.subr.bf16.mxu0 %v1230
  %1755 = vmatpush2.bf16.msra.mxu0 %v1229
  %1756 = vmatprep.subr.bf16.mxu0 %v1228
  %1757 = vmatpush2.bf16.msra.mxu0 %v1227
  %1758 = vmatprep.subr.bf16.mxu0 %v1226
  %1759 = vmatpush2.bf16.msra.mxu0 %v1225
  %1760 = vmatprep.subr.bf16.mxu0 %v1224
  %1761 = vmatpush2.bf16.msra.mxu0 %v1223
  %1762 = vmatprep.subr.bf16.mxu0 %v1222
  %1763 = vmatpush2.bf16.msra.mxu0 %v1221
  %1764 = vmatprep.subr.bf16.mxu0 %v1220
  %1765 = vmatpush2.bf16.msra.mxu0 %v1219
  %1766 = vmatprep.mubr.bf16.mxu0 %v538
  %1767 = vmatmul.mubr.bf16.gmra.mxu0 %v537
  %v1768 = vpop.f32.mrf.mxu0
  %v1769 = vadd.f32 %v1656, %v1768
  %v1770 = vpop.f32.mrf.mxu0
  %v1771 = vadd.f32 %v1658, %v1770
  %v1772 = vpop.f32.mrf.mxu0
  %v1773 = vadd.f32 %v1660, %v1772
  %v1774 = vpop.f32.mrf.mxu0
  %v1775 = vadd.f32 %v1662, %v1774
  %1776 = vmatprep.mubr.bf16.mxu0 %v547
  %1777 = vmatmul.mubr.bf16.gmra.mxu0 %v546
  %v1778 = vpop.f32.mrf.mxu0
  %v1779 = vadd.f32 %v1666, %v1778
  %v1780 = vpop.f32.mrf.mxu0
  %v1781 = vadd.f32 %v1668, %v1780
  %v1782 = vpop.f32.mrf.mxu0
  %v1783 = vadd.f32 %v1670, %v1782
  %v1784 = vpop.f32.mrf.mxu0
  %v1785 = vadd.f32 %v1672, %v1784
  %1786 = vmatprep.mubr.bf16.mxu0 %v556
  %1787 = vmatmul.mubr.bf16.gmra.mxu0 %v555
  %v1788 = vpop.f32.mrf.mxu0
  %v1789 = vadd.f32 %v1676, %v1788
  %v1790 = vpop.f32.mrf.mxu0
  %v1791 = vadd.f32 %v1678, %v1790
  %v1792 = vpop.f32.mrf.mxu0
  %v1793 = vadd.f32 %v1680, %v1792
  %v1794 = vpop.f32.mrf.mxu0
  %v1795 = vadd.f32 %v1682, %v1794
  %1796 = vmatprep.mubr.bf16.mxu0 %v565
  %1797 = vmatmul.mubr.bf16.gmra.mxu0 %v564
  %v1798 = vpop.f32.mrf.mxu0
  %v1799 = vadd.f32 %v1686, %v1798
  %v1800 = vpop.f32.mrf.mxu0
  %v1801 = vadd.f32 %v1688, %v1800
  %v1802 = vpop.f32.mrf.mxu0
  %v1803 = vadd.f32 %v1690, %v1802
  %v1804 = vpop.f32.mrf.mxu0
  %v1805 = vadd.f32 %v1692, %v1804
  %1806 = vmatprep.mubr.bf16.mxu0 %v574
  %1807 = vmatmul.mubr.bf16.gmra.mxu0 %v573
  %v1808 = vpop.f32.mrf.mxu0
  %v1809 = vadd.f32 %v1696, %v1808
  %v1810 = vpop.f32.mrf.mxu0
  %v1811 = vadd.f32 %v1698, %v1810
  %v1812 = vpop.f32.mrf.mxu0
  %v1813 = vadd.f32 %v1700, %v1812
  %v1814 = vpop.f32.mrf.mxu0
  %v1815 = vadd.f32 %v1702, %v1814
  %1816 = vmatprep.mubr.bf16.mxu0 %v583
  %1817 = vmatmul.mubr.bf16.gmra.mxu0 %v582
  %v1818 = vpop.f32.mrf.mxu0
  %v1819 = vadd.f32 %v1706, %v1818
  %v1820 = vpop.f32.mrf.mxu0
  %v1821 = vadd.f32 %v1708, %v1820
  %v1822 = vpop.f32.mrf.mxu0
  %v1823 = vadd.f32 %v1710, %v1822
  %v1824 = vpop.f32.mrf.mxu0
  %v1825 = vadd.f32 %v1712, %v1824
  %1826 = vmatprep.mubr.bf16.mxu0 %v592
  %1827 = vmatmul.mubr.bf16.gmra.mxu0 %v591
  %v1828 = vpop.f32.mrf.mxu0
  %v1829 = vadd.f32 %v1716, %v1828
  %v1830 = vpop.f32.mrf.mxu0
  %v1831 = vadd.f32 %v1718, %v1830
  %v1832 = vpop.f32.mrf.mxu0
  %v1833 = vadd.f32 %v1720, %v1832
  %v1834 = vpop.f32.mrf.mxu0
  %v1835 = vadd.f32 %v1722, %v1834
  %1836 = vmatprep.mubr.bf16.mxu0 %v601
  %1837 = vmatmul.mubr.bf16.gmra.mxu0 %v600
  %v1838 = vpop.f32.mrf.mxu0
  %v1839 = vadd.f32 %v1726, %v1838
  %v1840 = vpop.f32.mrf.mxu0
  %v1841 = vadd.f32 %v1728, %v1840
  %v1842 = vpop.f32.mrf.mxu0
  %v1843 = vadd.f32 %v1730, %v1842
  %v1844 = vpop.f32.mrf.mxu0
  %v1845 = vadd.f32 %v1732, %v1844
  %1846 = vdwg.mxu0
  %1847 = vmatprep.subr.bf16.mxu0 %v1250
  %1848 = vmatpush1.bf16.msra.mxu0 %v1249
  %1849 = vmatprep.subr.bf16.mxu0 %v1248
  %1850 = vmatpush1.bf16.msra.mxu0 %v1247
  %1851 = vmatprep.subr.bf16.mxu0 %v1246
  %1852 = vmatpush1.bf16.msra.mxu0 %v1245
  %1853 = vmatprep.subr.bf16.mxu0 %v1244
  %1854 = vmatpush1.bf16.msra.mxu0 %v1243
  %1855 = vmatprep.subr.bf16.mxu0 %v1242
  %1856 = vmatpush1.bf16.msra.mxu0 %v1241
  %1857 = vmatprep.subr.bf16.mxu0 %v1240
  %1858 = vmatpush1.bf16.msra.mxu0 %v1239
  %1859 = vmatprep.subr.bf16.mxu0 %v1238
  %1860 = vmatpush1.bf16.msra.mxu0 %v1237
  %1861 = vmatprep.subr.bf16.mxu0 %v1236
  %1862 = vmatpush1.bf16.msra.mxu0 %v1235
  %1863 = vmatprep.subr.bf16.mxu0 0
  %1864 = vmatpush2.bf16.msra.mxu0 0
  %1865 = vmatprep.subr.bf16.mxu0 0
  %1866 = vmatpush2.bf16.msra.mxu0 0
  %1867 = vmatprep.subr.bf16.mxu0 0
  %1868 = vmatpush2.bf16.msra.mxu0 0
  %1869 = vmatprep.subr.bf16.mxu0 0
  %1870 = vmatpush2.bf16.msra.mxu0 0
  %1871 = vmatprep.subr.bf16.mxu0 0
  %1872 = vmatpush2.bf16.msra.mxu0 0
  %1873 = vmatprep.subr.bf16.mxu0 0
  %1874 = vmatpush2.bf16.msra.mxu0 0
  %1875 = vmatprep.subr.bf16.mxu0 0
  %1876 = vmatpush2.bf16.msra.mxu0 0
  %1877 = vmatprep.subr.bf16.mxu0 0
  %1878 = vmatpush2.bf16.msra.mxu0 0
  %1879 = vmatprep.mubr.bf16.mxu0 0
  %1880 = vmatmul.mubr.bf16.gmra.mxu0 %v539
  %v1881 = vpop.f32.mrf.mxu0
  %v1882 = vadd.f32 %v1769, %v1881
  %v1883 = vpop.f32.mrf.mxu0
  %v1884 = vadd.f32 %v1771, %v1883
  %v1885 = vpop.f32.mrf.mxu0
  %v1886 = vadd.f32 %v1773, %v1885
  %v1887 = vpop.f32.mrf.mxu0
  %v1888 = vadd.f32 %v1775, %v1887
  %1889 = vmatprep.mubr.bf16.mxu0 0
  %1890 = vmatmul.mubr.bf16.gmra.mxu0 %v548
  %v1891 = vpop.f32.mrf.mxu0
  %v1892 = vadd.f32 %v1779, %v1891
  %v1893 = vpop.f32.mrf.mxu0
  %v1894 = vadd.f32 %v1781, %v1893
  %v1895 = vpop.f32.mrf.mxu0
  %v1896 = vadd.f32 %v1783, %v1895
  %v1897 = vpop.f32.mrf.mxu0
  %v1898 = vadd.f32 %v1785, %v1897
  %1899 = vmatprep.mubr.bf16.mxu0 0
  %1900 = vmatmul.mubr.bf16.gmra.mxu0 %v557
  %v1901 = vpop.f32.mrf.mxu0
  %v1902 = vadd.f32 %v1789, %v1901
  %v1903 = vpop.f32.mrf.mxu0
  %v1904 = vadd.f32 %v1791, %v1903
  %v1905 = vpop.f32.mrf.mxu0
  %v1906 = vadd.f32 %v1793, %v1905
  %v1907 = vpop.f32.mrf.mxu0
  %v1908 = vadd.f32 %v1795, %v1907
  %1909 = vmatprep.mubr.bf16.mxu0 0
  %1910 = vmatmul.mubr.bf16.gmra.mxu0 %v566
  %v1911 = vpop.f32.mrf.mxu0
  %v1912 = vadd.f32 %v1799, %v1911
  %v1913 = vpop.f32.mrf.mxu0
  %v1914 = vadd.f32 %v1801, %v1913
  %v1915 = vpop.f32.mrf.mxu0
  %v1916 = vadd.f32 %v1803, %v1915
  %v1917 = vpop.f32.mrf.mxu0
  %v1918 = vadd.f32 %v1805, %v1917
  %1919 = vmatprep.mubr.bf16.mxu0 0
  %1920 = vmatmul.mubr.bf16.gmra.mxu0 %v575
  %v1921 = vpop.f32.mrf.mxu0
  %v1922 = vadd.f32 %v1809, %v1921
  %v1923 = vpop.f32.mrf.mxu0
  %v1924 = vadd.f32 %v1811, %v1923
  %v1925 = vpop.f32.mrf.mxu0
  %v1926 = vadd.f32 %v1813, %v1925
  %v1927 = vpop.f32.mrf.mxu0
  %v1928 = vadd.f32 %v1815, %v1927
  %1929 = vmatprep.mubr.bf16.mxu0 0
  %1930 = vmatmul.mubr.bf16.gmra.mxu0 %v584
  %v1931 = vpop.f32.mrf.mxu0
  %v1932 = vadd.f32 %v1819, %v1931
  %v1933 = vpop.f32.mrf.mxu0
  %v1934 = vadd.f32 %v1821, %v1933
  %v1935 = vpop.f32.mrf.mxu0
  %v1936 = vadd.f32 %v1823, %v1935
  %v1937 = vpop.f32.mrf.mxu0
  %v1938 = vadd.f32 %v1825, %v1937
  %1939 = vmatprep.mubr.bf16.mxu0 0
  %1940 = vmatmul.mubr.bf16.gmra.mxu0 %v593
  %v1941 = vpop.f32.mrf.mxu0
  %v1942 = vadd.f32 %v1829, %v1941
  %v1943 = vpop.f32.mrf.mxu0
  %v1944 = vadd.f32 %v1831, %v1943
  %v1945 = vpop.f32.mrf.mxu0
  %v1946 = vadd.f32 %v1833, %v1945
  %v1947 = vpop.f32.mrf.mxu0
  %v1948 = vadd.f32 %v1835, %v1947
  %1949 = vmatprep.mubr.bf16.mxu0 0
  %1950 = vmatmul.mubr.bf16.gmra.mxu0 %v602
  %v1951 = vpop.f32.mrf.mxu0
  %v1952 = vadd.f32 %v1839, %v1951
  %v1953 = vpop.f32.mrf.mxu0
  %v1954 = vadd.f32 %v1841, %v1953
  %v1955 = vpop.f32.mrf.mxu0
  %v1956 = vadd.f32 %v1843, %v1955
  %v1957 = vpop.f32.mrf.mxu0
  %v1958 = vadd.f32 %v1845, %v1957
  %1959 = vdwg.mxu0
  %v1960 = vadd.f32 %v51, %v1882
  %v1961 = vadd.f32 %v52, %v1884
  %v1962 = vadd.f32 %v53, %v1886
  %v1963 = vadd.f32 %v54, %v1888
  %v1964 = vadd.f32 %v55, %v1892
  %v1965 = vadd.f32 %v56, %v1894
  %v1966 = vadd.f32 %v57, %v1896
  %v1967 = vadd.f32 %v58, %v1898
  %v1968 = vadd.f32 %v59, %v1902
  %v1969 = vadd.f32 %v60, %v1904
  %v1970 = vadd.f32 %v61, %v1906
  %v1971 = vadd.f32 %v62, %v1908
  %v1972 = vadd.f32 %v63, %v1912
  %v1973 = vadd.f32 %v64, %v1914
  %v1974 = vadd.f32 %v65, %v1916
  %v1975 = vadd.f32 %v66, %v1918
  %v1976 = vadd.f32 %v67, %v1922
  %v1977 = vadd.f32 %v68, %v1924
  %v1978 = vadd.f32 %v69, %v1926
  %v1979 = vadd.f32 %v70, %v1928
  %v1980 = vadd.f32 %v71, %v1932
  %v1981 = vadd.f32 %v72, %v1934
  %v1982 = vadd.f32 %v73, %v1936
  %v1983 = vadd.f32 %v74, %v1938
  %v1984 = vadd.f32 %v75, %v1942
  %v1985 = vadd.f32 %v76, %v1944
  %v1986 = vadd.f32 %v77, %v1946
  %v1987 = vadd.f32 %v78, %v1948
  %v1988 = vadd.f32 %v79, %v1952
  %v1989 = vadd.f32 %v80, %v1954
  %v1990 = vadd.f32 %v81, %v1956
  %v1991 = vadd.f32 %v82, %v1958
  %1992 = vst [vmem:[#allocation2] sm:$0xff] %v1960
  %1993 = vst [vmem:[#allocation2 + $0x8] sm:$0xff] %v1961
  %1994 = vst [vmem:[#allocation2 + $0x10] sm:$0xff] %v1962
  %1995 = vst [vmem:[#allocation2 + $0x18] sm:$0xff] %v1963
  %1996 = vst [vmem:[#allocation2 + $0x20] sm:$0xff] %v1964
  %1997 = vst [vmem:[#allocation2 + $0x28] sm:$0xff] %v1965
  %1998 = vst [vmem:[#allocation2 + $0x30] sm:$0xff] %v1966
  %1999 = vst [vmem:[#allocation2 + $0x38] sm:$0xff] %v1967
  %2000 = vst [vmem:[#allocation2 + $0x40] sm:$0xff] %v1968
  %2001 = vst [vmem:[#allocation2 + $0x48] sm:$0xff] %v1969
  %2002 = vst [vmem:[#allocation2 + $0x50] sm:$0xff] %v1970
  %2003 = vst [vmem:[#allocation2 + $0x58] sm:$0xff] %v1971
  %2004 = vst [vmem:[#allocation2 + $0x60] sm:$0xff] %v1972
  %2005 = vst [vmem:[#allocation2 + $0x68] sm:$0xff] %v1973
  %2006 = vst [vmem:[#allocation2 + $0x70] sm:$0xff] %v1974
  %2007 = vst [vmem:[#allocation2 + $0x78] sm:$0xff] %v1975
  %2008 = vst [vmem:[#allocation2 + $0x80] sm:$0xff] %v1976
  %2009 = vst [vmem:[#allocation2 + $0x88] sm:$0xff] %v1977
  %2010 = vst [vmem:[#allocation2 + $0x90] sm:$0xff] %v1978
  %2011 = vst [vmem:[#allocation2 + $0x98] sm:$0xff] %v1979
  %2012 = vst [vmem:[#allocation2 + $0xa0] sm:$0xff] %v1980
  %2013 = vst [vmem:[#allocation2 + $0xa8] sm:$0xff] %v1981
  %2014 = vst [vmem:[#allocation2 + $0xb0] sm:$0xff] %v1982
  %2015 = vst [vmem:[#allocation2 + $0xb8] sm:$0xff] %v1983
  %2016 = vst [vmem:[#allocation2 + $0xc0] sm:$0xff] %v1984
  %2017 = vst [vmem:[#allocation2 + $0xc8] sm:$0xff] %v1985
  %2018 = vst [vmem:[#allocation2 + $0xd0] sm:$0xff] %v1986
  %2019 = vst [vmem:[#allocation2 + $0xd8] sm:$0xff] %v1987
  %2020 = vst [vmem:[#allocation2 + $0xe0] sm:$0xff] %v1988
  %2021 = vst [vmem:[#allocation2 + $0xe8] sm:$0xff] %v1989
  %2022 = vst [vmem:[#allocation2 + $0xf0] sm:$0xff] %v1990
  %2023 = vst [vmem:[#allocation2 + $0xf8] sm:$0xff] %v1991
  // Predicated region
  $region18: #{net_forward.14} parent=0 // pred_check
    %p2024 = pneg %p15
  $region19: #{net_forward.14} parent=0 // pred_check_branch
    %2026 = sbr.rel (%p2024) target = $region21
  $region20: #{net_forward.14} parent=0 // pred_region
    %v2027 = vld [vmem:[#allocation2] sm:$0xff]
    %v2028 = vld [vmem:[#allocation2 + $0x8] sm:$0xff]
    %v2029 = vld [vmem:[#allocation2 + $0x10] sm:$0xff]
    %v2030 = vld [vmem:[#allocation2 + $0x18] sm:$0xff]
    %v2031 = vld [vmem:[#allocation2 + $0x20] sm:$0xff]
    %v2032 = vld [vmem:[#allocation2 + $0x28] sm:$0xff]
    %v2033 = vld [vmem:[#allocation2 + $0x30] sm:$0xff]
    %v2034 = vld [vmem:[#allocation2 + $0x38] sm:$0xff]
    %v2035 = vld [vmem:[#allocation2 + $0x40] sm:$0xff]
    %v2036 = vld [vmem:[#allocation2 + $0x48] sm:$0xff]
    %v2037 = vld [vmem:[#allocation2 + $0x50] sm:$0xff]
    %v2038 = vld [vmem:[#allocation2 + $0x58] sm:$0xff]
    %v2039 = vld [vmem:[#allocation2 + $0x60] sm:$0xff]
    %v2040 = vld [vmem:[#allocation2 + $0x68] sm:$0xff]
    %v2041 = vld [vmem:[#allocation2 + $0x70] sm:$0xff]
    %v2042 = vld [vmem:[#allocation2 + $0x78] sm:$0xff]
    %v2043 = vld [vmem:[#allocation2 + $0x80] sm:$0xff]
    %v2044 = vld [vmem:[#allocation2 + $0x88] sm:$0xff]
    %v2045 = vld [vmem:[#allocation2 + $0x90] sm:$0xff]
    %v2046 = vld [vmem:[#allocation2 + $0x98] sm:$0xff]
    %v2047 = vld [vmem:[#allocation2 + $0xa0] sm:$0xff]
    %v2048 = vld [vmem:[#allocation2 + $0xa8] sm:$0xff]
    %v2049 = vld [vmem:[#allocation2 + $0xb0] sm:$0xff]
    %v2050 = vld [vmem:[#allocation2 + $0xb8] sm:$0xff]
    %v2051 = vld [vmem:[#allocation2 + $0xc0] sm:$0xff]
    %v2052 = vld [vmem:[#allocation2 + $0xc8] sm:$0xff]
    %v2053 = vld [vmem:[#allocation2 + $0xd0] sm:$0xff]
    %v2054 = vld [vmem:[#allocation2 + $0xd8] sm:$0xff]
    %v2055 = vld [vmem:[#allocation2 + $0xe0] sm:$0xff]
    %v2056 = vld [vmem:[#allocation2 + $0xe8] sm:$0xff]
    %v2057 = vld [vmem:[#allocation2 + $0xf0] sm:$0xff]
    %v2058 = vld [vmem:[#allocation2 + $0xf8] sm:$0xff]
    %v2059 = vld [vmem:[%s2] sm:$0x3]
    %v2061 = vlaneseq
    %v2062 = vshrl.u32 %v2061, 7
    %v2063 = vsub.s32 0, %v2062
    %v2064 = vrot.slane %v2059, %v2063
    %v2065 = vlaneseq
    %v2066 = vshrl.u32 %v2065, 7
    %v2067 = vsub.s32 1, %v2066
    %v2068 = vrot.slane %v2059, %v2067
    %v2071 = vadd.f32 %v2027, %v2064
    %v2072 = vadd.f32 %v2028, %v2068
    %v2073 = vadd.f32 %v2029, %v2064
    %v2074 = vadd.f32 %v2030, %v2068
    %v2075 = vadd.f32 %v2031, %v2064
    %v2076 = vadd.f32 %v2032, %v2068
    %v2077 = vadd.f32 %v2033, %v2064
    %v2078 = vadd.f32 %v2034, %v2068
    %v2079 = vadd.f32 %v2035, %v2064
    %v2080 = vadd.f32 %v2036, %v2068
    %v2081 = vadd.f32 %v2037, %v2064
    %v2082 = vadd.f32 %v2038, %v2068
    %v2083 = vadd.f32 %v2039, %v2064
    %v2084 = vadd.f32 %v2040, %v2068
    %v2085 = vadd.f32 %v2041, %v2064
    %v2086 = vadd.f32 %v2042, %v2068
    %v2087 = vadd.f32 %v2043, %v2064
    %v2088 = vadd.f32 %v2044, %v2068
    %v2089 = vadd.f32 %v2045, %v2064
    %v2090 = vadd.f32 %v2046, %v2068
    %v2091 = vadd.f32 %v2047, %v2064
    %v2092 = vadd.f32 %v2048, %v2068
    %v2093 = vadd.f32 %v2049, %v2064
    %v2094 = vadd.f32 %v2050, %v2068
    %v2095 = vadd.f32 %v2051, %v2064
    %v2096 = vadd.f32 %v2052, %v2068
    %v2097 = vadd.f32 %v2053, %v2064
    %v2098 = vadd.f32 %v2054, %v2068
    %v2099 = vadd.f32 %v2055, %v2064
    %v2100 = vadd.f32 %v2056, %v2068
    %v2101 = vadd.f32 %v2057, %v2064
    %v2102 = vadd.f32 %v2058, %v2068
    %v2103 = vmax.f32 %v2071, 0.0
    %v2104 = vmax.f32 %v2072, 0.0
    %v2105 = vmax.f32 %v2073, 0.0
    %v2106 = vmax.f32 %v2074, 0.0
    %v2107 = vmax.f32 %v2075, 0.0
    %v2108 = vmax.f32 %v2076, 0.0
    %v2109 = vmax.f32 %v2077, 0.0
    %v2110 = vmax.f32 %v2078, 0.0
    %v2111 = vmax.f32 %v2079, 0.0
    %v2112 = vmax.f32 %v2080, 0.0
    %v2113 = vmax.f32 %v2081, 0.0
    %v2114 = vmax.f32 %v2082, 0.0
    %v2115 = vmax.f32 %v2083, 0.0
    %v2116 = vmax.f32 %v2084, 0.0
    %v2117 = vmax.f32 %v2085, 0.0
    %v2118 = vmax.f32 %v2086, 0.0
    %v2119 = vmax.f32 %v2087, 0.0
    %v2120 = vmax.f32 %v2088, 0.0
    %v2121 = vmax.f32 %v2089, 0.0
    %v2122 = vmax.f32 %v2090, 0.0
    %v2123 = vmax.f32 %v2091, 0.0
    %v2124 = vmax.f32 %v2092, 0.0
    %v2125 = vmax.f32 %v2093, 0.0
    %v2126 = vmax.f32 %v2094, 0.0
    %v2127 = vmax.f32 %v2095, 0.0
    %v2128 = vmax.f32 %v2096, 0.0
    %v2129 = vmax.f32 %v2097, 0.0
    %v2130 = vmax.f32 %v2098, 0.0
    %v2131 = vmax.f32 %v2099, 0.0
    %v2132 = vmax.f32 %v2100, 0.0
    %v2133 = vmax.f32 %v2101, 0.0
    %v2134 = vmax.f32 %v2102, 0.0
    %v2135 = vpack.c.bf16 %v2105, %v2103
    %v2136 = vpack.c.bf16 %v2106, %v2104
    %v2137 = vpack.c.bf16 %v2109, %v2107
    %v2138 = vpack.c.bf16 %v2110, %v2108
    %v2139 = vpack.c.bf16 %v2113, %v2111
    %v2140 = vpack.c.bf16 %v2114, %v2112
    %v2141 = vpack.c.bf16 %v2117, %v2115
    %v2142 = vpack.c.bf16 %v2118, %v2116
    %v2143 = vpack.c.bf16 %v2121, %v2119
    %v2144 = vpack.c.bf16 %v2122, %v2120
    %v2145 = vpack.c.bf16 %v2125, %v2123
    %v2146 = vpack.c.bf16 %v2126, %v2124
    %v2147 = vpack.c.bf16 %v2129, %v2127
    %v2148 = vpack.c.bf16 %v2130, %v2128
    %v2149 = vpack.c.bf16 %v2133, %v2131
    %v2150 = vpack.c.bf16 %v2134, %v2132
    %v2167 = vunpack.c.l.b16 %v2135
    %v2168 = vunpack.c.l.b16 %v2136
    %v2169 = vunpack.c.h.b16 %v2135
    %v2170 = vunpack.c.h.b16 %v2136
    %v2171 = vunpack.c.l.b16 %v2137
    %v2172 = vunpack.c.l.b16 %v2138
    %v2173 = vunpack.c.h.b16 %v2137
    %v2174 = vunpack.c.h.b16 %v2138
    %v2175 = vunpack.c.l.b16 %v2139
    %v2176 = vunpack.c.l.b16 %v2140
    %v2177 = vunpack.c.h.b16 %v2139
    %v2178 = vunpack.c.h.b16 %v2140
    %v2179 = vunpack.c.l.b16 %v2141
    %v2180 = vunpack.c.l.b16 %v2142
    %v2181 = vunpack.c.h.b16 %v2141
    %v2182 = vunpack.c.h.b16 %v2142
    %v2183 = vunpack.c.l.b16 %v2143
    %v2184 = vunpack.c.l.b16 %v2144
    %v2185 = vunpack.c.h.b16 %v2143
    %v2186 = vunpack.c.h.b16 %v2144
    %v2187 = vunpack.c.l.b16 %v2145
    %v2188 = vunpack.c.l.b16 %v2146
    %v2189 = vunpack.c.h.b16 %v2145
    %v2190 = vunpack.c.h.b16 %v2146
    %v2191 = vunpack.c.l.b16 %v2147
    %v2192 = vunpack.c.l.b16 %v2148
    %v2193 = vunpack.c.h.b16 %v2147
    %v2194 = vunpack.c.h.b16 %v2148
    %v2195 = vunpack.c.l.b16 %v2149
    %v2196 = vunpack.c.l.b16 %v2150
    %v2197 = vunpack.c.h.b16 %v2149
    %v2198 = vunpack.c.h.b16 %v2150
    %v2199 = vpack.c.b16 %v2168, %v2167
    %v2200 = vpack.c.b16 %v2170, %v2169
    %v2201 = vpack.c.b16 %v2172, %v2171
    %v2202 = vpack.c.b16 %v2174, %v2173
    %v2203 = vpack.c.b16 %v2176, %v2175
    %v2204 = vpack.c.b16 %v2178, %v2177
    %v2205 = vpack.c.b16 %v2180, %v2179
    %v2206 = vpack.c.b16 %v2182, %v2181
    %v2207 = vpack.c.b16 %v2184, %v2183
    %v2208 = vpack.c.b16 %v2186, %v2185
    %v2209 = vpack.c.b16 %v2188, %v2187
    %v2210 = vpack.c.b16 %v2190, %v2189
    %v2211 = vpack.c.b16 %v2192, %v2191
    %v2212 = vpack.c.b16 %v2194, %v2193
    %v2213 = vpack.c.b16 %v2196, %v2195
    %v2214 = vpack.c.b16 %v2198, %v2197
    %2231 = vst [vmem:[%s3] sm:$0xff] %v2199
    %2232 = vst [vmem:[%s3 + $0x8] sm:$0xff] %v2200
    %2233 = vst [vmem:[%s3 + $0x10] sm:$0xff] %v2201
    %2234 = vst [vmem:[%s3 + $0x18] sm:$0xff] %v2202
    %2235 = vst [vmem:[%s3 + $0x20] sm:$0xff] %v2203
    %2236 = vst [vmem:[%s3 + $0x28] sm:$0xff] %v2204
    %2237 = vst [vmem:[%s3 + $0x30] sm:$0xff] %v2205
    %2238 = vst [vmem:[%s3 + $0x38] sm:$0xff] %v2206
    %2239 = vst [vmem:[%s3 + $0x40] sm:$0xff] %v2207
    %2240 = vst [vmem:[%s3 + $0x48] sm:$0xff] %v2208
    %2241 = vst [vmem:[%s3 + $0x50] sm:$0xff] %v2209
    %2242 = vst [vmem:[%s3 + $0x58] sm:$0xff] %v2210
    %2243 = vst [vmem:[%s3 + $0x60] sm:$0xff] %v2211
    %2244 = vst [vmem:[%s3 + $0x68] sm:$0xff] %v2212
    %2245 = vst [vmem:[%s3 + $0x70] sm:$0xff] %v2213
    %2246 = vst [vmem:[%s3 + $0x78] sm:$0xff] %v2214
  $region21: #{net_forward.14} parent=0 // pred_fallthru
    _
  // Predicated region
  $region22: #{net_forward.14} parent=0 // pred_check
    _
  $region23: #{net_forward.14} parent=0 // pred_check_branch
    %2248 = sbr.rel (0) target = $region25
  $region24: #{net_forward.14} parent=0 // pred_region
    _
  $region25: #{net_forward.14} parent=0 // pred_fallthru
    _
  // Predicated region
  $region26: #{net_forward.14} parent=0 // pred_check
    _
  $region27: #{net_forward.14} parent=0 // pred_check_branch
    %2250 = sbr.rel (0) target = $region29
  $region28: #{net_forward.14} parent=0 // pred_region
    _
  $region29: #{net_forward.14} parent=0 // pred_fallthru
    _

// kernel: net_forward.16
$region0: #{net_forward.16}
  #allocation0 [shape = 'u32[]', space=smem, size = 0x4, offset = 0x4, fixed_abs, tag = 'smem constant byte address 0x4 - core index']
  #allocation1 [shape = 'u32[144,128]{1,0:T(1,128)}', space=vmem, size = 0x12000, scoped, tag = 'internal scratch']
  #allocation2 [shape = 'f32[8,128]{1,0:T(8,128)}', space=vmem, size = 0x1000, scoped, tag = 'scratch operand']
  %s0 = inlined_call_operand.vmem [shape: bf16[8,4096], index: 0, kind: input, shape index: {}]
  %s1 = inlined_call_operand.vmem [shape: bf16[4096,128], index: 1, kind: input, shape index: {}]
  %s2 = inlined_call_operand.vmem [shape: f32[1,128], index: 2, kind: input, shape index: {}]
  %s3 = inlined_call_operand.vmem [shape: bf16[8,128], index: 3, kind: output, shape index: {}]
  %s4 = sld [smem:[#allocation0]]
  $region53: #{net_forward.16} parent=0
    _
  %s6 = ssub.s32 1, %s4
  %s7 = scalar_select 0, %s6, %s4
  loop: start=0, step=1, limit=10
  $region2: #{net_forward.16} parent=0 // loop_pre_header
    _
  $region3: #{net_forward.16} parent=0 // loop_header
    %s9 = sphi 0, %s13
    %p10 = scmp.ge.s32.totalorder %s9, 10
    %s16 = sphi 0, %s28
    %s17 = sphi 0, %s24
    %s18 = sphi 0, %s16
    %s19 = sphi 0, %s17
    %s20 = sphi 0, %s18
    %s21 = sphi 0, %s19
    %s33 = sphi 0, %s35
    %s36 = sphi 0, %s33
    %s37 = sphi 0, %s36
    %s53 = sphi 0, %s37
    %s59 = sphi 0, %s61
    %s62 = sphi 0, %s59
    %s63 = sphi 0, %s62
    %s79 = sphi 0, %s63
    %s83 = sphi 0, %s83
    %s85 = sphi 0, %s83
    %s86 = sphi 0, %s85
    %s100 = sphi 0, %s86
    %s106 = sphi 0, %s108
    %s109 = sphi 0, %s106
    %s110 = sphi 0, %s109
    %s126 = sphi 0, %s110
  $region4: #{net_forward.16} parent=0 // loop_header_branch
    %12 = sbr.rel (%p10) target = $region8
  $region5: #{net_forward.16} parent=0 // loop_body
    %s14 = ssub.s32 %s9, 1
    %s15 = ssub.s32 %s9, 2
    %s22 = sadd.s32 1, %s17
    %p23 = scmp.ge.s32.totalorder %s22, 8
    %s24 = scalar_select %p23, 0, %s22
    %s25 = sadd.s32 1, %s16
    %s26 = scalar_select %p23, %s25, %s16
    %p27 = scmp.ge.s32.totalorder %s26, 1
    %s28 = scalar_select %p27, 0, %s26
    %s29 = ssub.s32 %s16, %s28
    %s30 = ssub.s32 %s17, %s24
    %s31 = sor.u32 %s29, %s30
    %p32 = scmp.eq.s32.totalorder %s31, 0
    %s34 = sadd.s32 %s33, 1
    %s35 = scalar_select %p32, %s33, %s34
    %p38 = pneg %p32
    %p39 = scmp.eq.s32.totalorder %s9, 7
    %p40 = por %p38, %p39
    %p41 = scmp.ne.s32.totalorder %s33, %s36
    %p42 = scmp.eq.s32.totalorder %s9, 0
    %p43 = por %p41, %p42
    %p44 = scmp.ne.s32.totalorder %s33, %s36
    %p45 = scmp.eq.s32.totalorder %s14, 7
    %p46 = por %p44, %p45
    %p47 = scmp.ne.s32.totalorder %s36, %s37
    %p48 = scmp.eq.s32.totalorder %s14, 0
    %p49 = por %p47, %p48
    %p50 = scmp.ne.s32.totalorder %s36, %s37
    %p51 = scmp.eq.s32.totalorder %s15, 7
    %p52 = por %p50, %p51
    %p54 = scmp.ne.s32.totalorder %s37, %s53
    %p55 = scmp.eq.s32.totalorder %s15, 0
    %p56 = por %p54, %p55
    %s57 = ssub.s32 %s17, %s24
    %p58 = scmp.eq.s32.totalorder %s57, 0
    %s60 = sadd.s32 %s59, 1
    %s61 = scalar_select %p58, %s59, %s60
    %p64 = pneg %p58
    %p65 = scmp.eq.s32.totalorder %s9, 7
    %p66 = por %p64, %p65
    %p67 = scmp.ne.s32.totalorder %s59, %s62
    %p68 = scmp.eq.s32.totalorder %s9, 0
    %p69 = por %p67, %p68
    %p70 = scmp.ne.s32.totalorder %s59, %s62
    %p71 = scmp.eq.s32.totalorder %s14, 7
    %p72 = por %p70, %p71
    %p73 = scmp.ne.s32.totalorder %s62, %s63
    %p74 = scmp.eq.s32.totalorder %s14, 0
    %p75 = por %p73, %p74
    %p76 = scmp.ne.s32.totalorder %s62, %s63
    %p77 = scmp.eq.s32.totalorder %s15, 7
    %p78 = por %p76, %p77
    %p80 = scmp.ne.s32.totalorder %s63, %s79
    %p81 = scmp.eq.s32.totalorder %s15, 0
    %p82 = por %p80, %p81
    %s84 = sadd.s32 %s83, 1
    %p87 = scmp.eq.s32.totalorder %s9, 7
    %p88 = scmp.ne.s32.totalorder %s83, %s85
    %p89 = scmp.eq.s32.totalorder %s9, 0
    %p90 = por %p88, %p89
    %p91 = scmp.ne.s32.totalorder %s83, %s85
    %p92 = scmp.eq.s32.totalorder %s14, 7
    %p93 = por %p91, %p92
    %p94 = scmp.ne.s32.totalorder %s85, %s86
    %p95 = scmp.eq.s32.totalorder %s14, 0
    %p96 = por %p94, %p95
    %p97 = scmp.ne.s32.totalorder %s85, %s86
    %p98 = scmp.eq.s32.totalorder %s15, 7
    %p99 = por %p97, %p98
    %p101 = scmp.ne.s32.totalorder %s86, %s100
    %p102 = scmp.eq.s32.totalorder %s15, 0
    %p103 = por %p101, %p102
    %s104 = ssub.s32 %s16, %s28
    %p105 = scmp.eq.s32.totalorder %s104, 0
    %s107 = sadd.s32 %s106, 1
    %s108 = scalar_select %p105, %s106, %s107
    %p111 = pneg %p105
    %p112 = scmp.eq.s32.totalorder %s9, 7
    %p113 = por %p111, %p112
    %p114 = scmp.ne.s32.totalorder %s106, %s109
    %p115 = scmp.eq.s32.totalorder %s9, 0
    %p116 = por %p114, %p115
    %p117 = scmp.ne.s32.totalorder %s106, %s109
    %p118 = scmp.eq.s32.totalorder %s14, 7
    %p119 = por %p117, %p118
    %p120 = scmp.ne.s32.totalorder %s109, %s110
    %p121 = scmp.eq.s32.totalorder %s14, 0
    %p122 = por %p120, %p121
    %p123 = scmp.ne.s32.totalorder %s109, %s110
    %p124 = scmp.eq.s32.totalorder %s15, 7
    %p125 = por %p123, %p124
    %p127 = scmp.ne.s32.totalorder %s110, %s126
    %p128 = scmp.eq.s32.totalorder %s15, 0
    %p129 = por %p127, %p128
    %p130 = scmp.le.s32.totalorder 1, %s9
    %p131 = scmp.lt.s32.totalorder %s9, 9
    %p132 = pnand %p130, %p131
    %p133 = pneg %p132
    // Predicated region
    $region9: #{net_forward.16} parent=5 // pred_check
      _
    $region10: #{net_forward.16} parent=5 // pred_check_branch
      %135 = sbr.rel (%p132) target = $region12
    $region11: #{net_forward.16} parent=5 // pred_region
      %s136 = ssub.s32 %s9, 1
      // Predicated region
      $region13: #{net_forward.16} parent=11 // pred_check
        %p137 = pneg %p96
      $region14: #{net_forward.16} parent=11 // pred_check_branch
        %139 = sbr.rel (%p137) target = $region16
      $region15: #{net_forward.16} parent=11 // pred_region
        _
      $region16: #{net_forward.16} parent=11 // pred_fallthru
        _
    $region12: #{net_forward.16} parent=5 // pred_fallthru
      _
    %p140 = scmp.lt.s32.totalorder %s9, 8
    // Predicated region
    $region17: #{net_forward.16} parent=5 // pred_check
      %p141 = pneg %p140
    $region18: #{net_forward.16} parent=5 // pred_check_branch
      %143 = sbr.rel (%p141) target = $region20
    $region19: #{net_forward.16} parent=5 // pred_region
      // Predicated region
      $region21: #{net_forward.16} parent=19 // pred_check
        %p144 = pneg %p43
      $region22: #{net_forward.16} parent=19 // pred_check_branch
        %146 = sbr.rel (%p144) target = $region24
      $region23: #{net_forward.16} parent=19 // pred_region
        %s147 = smul.u32 4, %s17
        %p148 = scmp.lt.s32.totalorder %s16, 0
        %s149 = scalar_select %p148, %s16, 0
        %p150 = scmp.lt.s32.totalorder %s147, 31
        %s151 = scalar_select %p150, %s147, 31
        %s152 = smul.addr %s149, 32
        %s153 = sadd.s32 %s151, %s152
        %s154 = smul.addr %s153, 4
        %s155 = scalar_lea.vmem %s0, %s154
        %s156 = smul.u32 4, %s17
      $region24: #{net_forward.16} parent=19 // pred_fallthru
        _
      // Predicated region
      $region25: #{net_forward.16} parent=19 // pred_check
        %p157 = pneg %p69
      $region26: #{net_forward.16} parent=19 // pred_check_branch
        %159 = sbr.rel (%p157) target = $region28
      $region27: #{net_forward.16} parent=19 // pred_region
        %s160 = smul.u32 64, %s17
        %p161 = scmp.lt.s32.totalorder %s160, 511
        %s162 = scalar_select %p161, %s160, 511
        %s163 = smul.addr %s162, 4
        %s164 = scalar_lea.vmem %s1, %s163
        %s165 = smul.u32 64, %s17
      $region28: #{net_forward.16} parent=19 // pred_fallthru
        _
    $region20: #{net_forward.16} parent=5 // pred_fallthru
      _
    %p166 = scmp.le.s32.totalorder 1, %s9
    %p167 = scmp.lt.s32.totalorder %s9, 9
    %p168 = pnand %p166, %p167
    %p169 = pneg %p168
    // Predicated region
    $region29: #{net_forward.16} parent=5 // pred_check
      _
    $region30: #{net_forward.16} parent=5 // pred_check_branch
      %171 = sbr.rel (%p168) target = $region32
    $region31: #{net_forward.16} parent=5 // pred_region
      %s172 = ssub.s32 %s9, 1
      %s173 = smul.u32 4, %s19
      %p174 = scmp.lt.s32.totalorder %s18, 0
      %s175 = scalar_select %p174, %s18, 0
      %p176 = scmp.lt.s32.totalorder %s173, 31
      %s177 = scalar_select %p176, %s173, 31
      %s178 = smul.addr %s175, 32
      %s179 = sadd.s32 %s177, %s178
      %s180 = smul.addr %s179, 4
      %s181 = scalar_lea.vmem %s0, %s180
      %p182 = pneg %p49
      %p183 = pneg %p46
      %s184 = smul.u32 64, %s19
      %p185 = scmp.lt.s32.totalorder %s184, 511
      %s186 = scalar_select %p185, %s184, 511
      %s187 = smul.addr %s186, 4
      %s188 = scalar_lea.vmem %s1, %s187
      %p189 = pneg %p75
      %p190 = pneg %p72
      %p191 = pneg %p96
      %p192 = pneg %p93
      %p193 = pneg %p122
      %p194 = pneg %p119
      %p195 = scmp.lt.s32.totalorder %s18, 0
      %s196 = scalar_select %p195, %s18, 0
      %s197 = smul.addr %s196, 4
      %s198 = scalar_lea.vmem %s3, %s197
      %s199 = smul.u32 4, %s19
      %p200 = scmp.lt.s32.totalorder %s18, 0
      %s201 = scalar_select %p200, %s18, 0
      %p202 = scmp.lt.s32.totalorder %s199, 31
      %s203 = scalar_select %p202, %s199, 31
      %s204 = smul.addr %s201, 32
      %s205 = sadd.s32 %s203, %s204
      %s206 = smul.addr %s205, 4
      %s207 = scalar_lea.vmem %s0, %s206
      %s208 = smul.u32 4, %s19
      %s209 = smul.u32 64, %s19
      %p210 = scmp.lt.s32.totalorder %s209, 511
      %s211 = scalar_select %p210, %s209, 511
      %s212 = smul.addr %s211, 4
      %s213 = scalar_lea.vmem %s1, %s212
      %s214 = smul.u32 64, %s19
      %p215 = scmp.lt.s32.totalorder %s18, 0
      %s216 = scalar_select %p215, %s18, 0
      %s217 = smul.addr %s216, 4
      %s218 = scalar_lea.vmem %s3, %s217
      %p220 = scmp.eq.s32.totalorder %s19, 0
      // Predicated region
      $region33: #{net_forward.16} parent=31 // pred_check
        %p221 = pneg %p220
      $region34: #{net_forward.16} parent=31 // pred_check_branch
        %223 = sbr.rel (%p221) target = $region36
      $region35: #{net_forward.16} parent=31 // pred_region
        %224 = vst [vmem:[#allocation2] sm:$0xff] 0.0
      $region36: #{net_forward.16} parent=31 // pred_fallthru
        _
      %v225 = vld [vmem:[#allocation2] sm:$0xff]
      %v226 = vld [vmem:[%s207] sm:$0xff]
      %v227 = vld [vmem:[%s207 + $0x8] sm:$0xff]
      %v228 = vld [vmem:[%s213] sm:$0xf]
      %v229 = vld [vmem:[%s213 + $0x4] sm:$0xf]
      %v230 = vld [vmem:[%s213 + $0x8] sm:$0xf]
      %v231 = vld [vmem:[%s213 + $0xc] sm:$0xf]
      %v232 = vld [vmem:[%s213 + $0x10] sm:$0xf]
      %v233 = vld [vmem:[%s213 + $0x14] sm:$0xf]
      %v234 = vld [vmem:[%s213 + $0x18] sm:$0xf]
      %v235 = vld [vmem:[%s213 + $0x1c] sm:$0xf]
      %v236 = vld [vmem:[%s213 + $0x20] sm:$0xf]
      %v237 = vld [vmem:[%s213 + $0x24] sm:$0xf]
      %v238 = vld [vmem:[%s213 + $0x28] sm:$0xf]
      %v239 = vld [vmem:[%s213 + $0x2c] sm:$0xf]
      %v240 = vld [vmem:[%s213 + $0x30] sm:$0xf]
      %v241 = vld [vmem:[%s213 + $0x34] sm:$0xf]
      %v242 = vld [vmem:[%s213 + $0x38] sm:$0xf]
      %v243 = vld [vmem:[%s213 + $0x3c] sm:$0xf]
      %v244 = vld [vmem:[%s213 + $0x40] sm:$0xf]
      %v245 = vld [vmem:[%s213 + $0x44] sm:$0xf]
      %v246 = vld [vmem:[%s213 + $0x48] sm:$0xf]
      %v247 = vld [vmem:[%s213 + $0x4c] sm:$0xf]
      %v248 = vld [vmem:[%s213 + $0x50] sm:$0xf]
      %v249 = vld [vmem:[%s213 + $0x54] sm:$0xf]
      %v250 = vld [vmem:[%s213 + $0x58] sm:$0xf]
      %v251 = vld [vmem:[%s213 + $0x5c] sm:$0xf]
      %v252 = vld [vmem:[%s213 + $0x60] sm:$0xf]
      %v253 = vld [vmem:[%s213 + $0x64] sm:$0xf]
      %v254 = vld [vmem:[%s213 + $0x68] sm:$0xf]
      %v255 = vld [vmem:[%s213 + $0x6c] sm:$0xf]
      %v256 = vld [vmem:[%s213 + $0x70] sm:$0xf]
      %v257 = vld [vmem:[%s213 + $0x74] sm:$0xf]
      %v258 = vld [vmem:[%s213 + $0x78] sm:$0xf]
      %v259 = vld [vmem:[%s213 + $0x7c] sm:$0xf]
      %v260 = vld [vmem:[%s213 + $0x80] sm:$0xf]
      %v261 = vld [vmem:[%s213 + $0x84] sm:$0xf]
      %v262 = vld [vmem:[%s213 + $0x88] sm:$0xf]
      %v263 = vld [vmem:[%s213 + $0x8c] sm:$0xf]
      %v264 = vld [vmem:[%s213 + $0x90] sm:$0xf]
      %v265 = vld [vmem:[%s213 + $0x94] sm:$0xf]
      %v266 = vld [vmem:[%s213 + $0x98] sm:$0xf]
      %v267 = vld [vmem:[%s213 + $0x9c] sm:$0xf]
      %v268 = vld [vmem:[%s213 + $0xa0] sm:$0xf]
      %v269 = vld [vmem:[%s213 + $0xa4] sm:$0xf]
      %v270 = vld [vmem:[%s213 + $0xa8] sm:$0xf]
      %v271 = vld [vmem:[%s213 + $0xac] sm:$0xf]
      %v272 = vld [vmem:[%s213 + $0xb0] sm:$0xf]
      %v273 = vld [vmem:[%s213 + $0xb4] sm:$0xf]
      %v274 = vld [vmem:[%s213 + $0xb8] sm:$0xf]
      %v275 = vld [vmem:[%s213 + $0xbc] sm:$0xf]
      %v276 = vld [vmem:[%s213 + $0xc0] sm:$0xf]
      %v277 = vld [vmem:[%s213 + $0xc4] sm:$0xf]
      %v278 = vld [vmem:[%s213 + $0xc8] sm:$0xf]
      %v279 = vld [vmem:[%s213 + $0xcc] sm:$0xf]
      %v280 = vld [vmem:[%s213 + $0xd0] sm:$0xf]
      %v281 = vld [vmem:[%s213 + $0xd4] sm:$0xf]
      %v282 = vld [vmem:[%s213 + $0xd8] sm:$0xf]
      %v283 = vld [vmem:[%s213 + $0xdc] sm:$0xf]
      %v284 = vld [vmem:[%s213 + $0xe0] sm:$0xf]
      %v285 = vld [vmem:[%s213 + $0xe4] sm:$0xf]
      %v286 = vld [vmem:[%s213 + $0xe8] sm:$0xf]
      %v287 = vld [vmem:[%s213 + $0xec] sm:$0xf]
      %v288 = vld [vmem:[%s213 + $0xf0] sm:$0xf]
      %v289 = vld [vmem:[%s213 + $0xf4] sm:$0xf]
      %v290 = vld [vmem:[%s213 + $0xf8] sm:$0xf]
      %v291 = vld [vmem:[%s213 + $0xfc] sm:$0xf]
      %v294 = vunpack.c.l.b16 %v226
      %v295 = vunpack.c.h.b16 %v226
      %v296 = vunpack.c.l.b16 %v227
      %v297 = vunpack.c.h.b16 %v227
      %v298 = vpack.c.b16 %v294, %v294
      %v299 = vpack.c.b16 %v295, %v295
      %v300 = vpack.c.b16 %v296, %v296
      %v301 = vpack.c.b16 %v297, %v297
      %v370 = vunpack.c.l.b16 %v228
      %v371 = vunpack.c.l.b16 %v229
      %v372 = vunpack.c.l.b16 %v230
      %v373 = vunpack.c.l.b16 %v231
      %v374 = vunpack.c.l.b16 %v232
      %v375 = vunpack.c.l.b16 %v233
      %v376 = vunpack.c.l.b16 %v234
      %v377 = vunpack.c.l.b16 %v235
      %v378 = vunpack.c.l.b16 %v236
      %v379 = vunpack.c.l.b16 %v237
      %v380 = vunpack.c.l.b16 %v238
      %v381 = vunpack.c.l.b16 %v239
      %v382 = vunpack.c.l.b16 %v240
      %v383 = vunpack.c.l.b16 %v241
      %v384 = vunpack.c.l.b16 %v242
      %v385 = vunpack.c.l.b16 %v243
      %v386 = vunpack.c.l.b16 %v244
      %v387 = vunpack.c.l.b16 %v245
      %v388 = vunpack.c.l.b16 %v246
      %v389 = vunpack.c.l.b16 %v247
      %v390 = vunpack.c.l.b16 %v248
      %v391 = vunpack.c.l.b16 %v249
      %v392 = vunpack.c.l.b16 %v250
      %v393 = vunpack.c.l.b16 %v251
      %v394 = vunpack.c.l.b16 %v252
      %v395 = vunpack.c.l.b16 %v253
      %v396 = vunpack.c.l.b16 %v254
      %v397 = vunpack.c.l.b16 %v255
      %v398 = vunpack.c.l.b16 %v256
      %v399 = vunpack.c.l.b16 %v257
      %v400 = vunpack.c.l.b16 %v258
      %v401 = vunpack.c.l.b16 %v259
      %v402 = vunpack.c.l.b16 %v260
      %v403 = vunpack.c.l.b16 %v261
      %v404 = vunpack.c.l.b16 %v262
      %v405 = vunpack.c.l.b16 %v263
      %v406 = vunpack.c.l.b16 %v264
      %v407 = vunpack.c.l.b16 %v265
      %v408 = vunpack.c.l.b16 %v266
      %v409 = vunpack.c.l.b16 %v267
      %v410 = vunpack.c.l.b16 %v268
      %v411 = vunpack.c.l.b16 %v269
      %v412 = vunpack.c.l.b16 %v270
      %v413 = vunpack.c.l.b16 %v271
      %v414 = vunpack.c.l.b16 %v272
      %v415 = vunpack.c.l.b16 %v273
      %v416 = vunpack.c.l.b16 %v274
      %v417 = vunpack.c.l.b16 %v275
      %v418 = vunpack.c.l.b16 %v276
      %v419 = vunpack.c.l.b16 %v277
      %v420 = vunpack.c.l.b16 %v278
      %v421 = vunpack.c.l.b16 %v279
      %v422 = vunpack.c.l.b16 %v280
      %v423 = vunpack.c.l.b16 %v281
      %v424 = vunpack.c.l.b16 %v282
      %v425 = vunpack.c.l.b16 %v283
      %v426 = vunpack.c.l.b16 %v284
      %v427 = vunpack.c.l.b16 %v285
      %v428 = vunpack.c.l.b16 %v286
      %v429 = vunpack.c.l.b16 %v287
      %v430 = vunpack.c.l.b16 %v288
      %v431 = vunpack.c.l.b16 %v289
      %v432 = vunpack.c.l.b16 %v290
      %v433 = vunpack.c.l.b16 %v291
      %v434 = vpack.c.b16 %v371, %v370
      %v435 = vpack.c.b16 %v373, %v372
      %v436 = vpack.c.b16 %v375, %v374
      %v437 = vpack.c.b16 %v377, %v376
      %v438 = vpack.c.b16 %v379, %v378
      %v439 = vpack.c.b16 %v381, %v380
      %v440 = vpack.c.b16 %v383, %v382
      %v441 = vpack.c.b16 %v385, %v384
      %v442 = vpack.c.b16 %v387, %v386
      %v443 = vpack.c.b16 %v389, %v388
      %v444 = vpack.c.b16 %v391, %v390
      %v445 = vpack.c.b16 %v393, %v392
      %v446 = vpack.c.b16 %v395, %v394
      %v447 = vpack.c.b16 %v397, %v396
      %v448 = vpack.c.b16 %v399, %v398
      %v449 = vpack.c.b16 %v401, %v400
      %v450 = vpack.c.b16 %v403, %v402
      %v451 = vpack.c.b16 %v405, %v404
      %v452 = vpack.c.b16 %v407, %v406
      %v453 = vpack.c.b16 %v409, %v408
      %v454 = vpack.c.b16 %v411, %v410
      %v455 = vpack.c.b16 %v413, %v412
      %v456 = vpack.c.b16 %v415, %v414
      %v457 = vpack.c.b16 %v417, %v416
      %v458 = vpack.c.b16 %v419, %v418
      %v459 = vpack.c.b16 %v421, %v420
      %v460 = vpack.c.b16 %v423, %v422
      %v461 = vpack.c.b16 %v425, %v424
      %v462 = vpack.c.b16 %v427, %v426
      %v463 = vpack.c.b16 %v429, %v428
      %v464 = vpack.c.b16 %v431, %v430
      %v465 = vpack.c.b16 %v433, %v432
      %498 = vmatprep.subr.bf16.mxu0 0
      %499 = vmatpush1.bf16.msra.mxu0 %v441
      %500 = vmatprep.subr.bf16.mxu0 0
      %501 = vmatpush1.bf16.msra.mxu0 %v440
      %502 = vmatprep.subr.bf16.mxu0 0
      %503 = vmatpush1.bf16.msra.mxu0 %v439
      %504 = vmatprep.subr.bf16.mxu0 0
      %505 = vmatpush1.bf16.msra.mxu0 %v438
      %506 = vmatprep.subr.bf16.mxu0 0
      %507 = vmatpush1.bf16.msra.mxu0 %v437
      %508 = vmatprep.subr.bf16.mxu0 0
      %509 = vmatpush1.bf16.msra.mxu0 %v436
      %510 = vmatprep.subr.bf16.mxu0 0
      %511 = vmatpush1.bf16.msra.mxu0 %v435
      %512 = vmatprep.subr.bf16.mxu0 0
      %513 = vmatpush1.bf16.msra.mxu0 %v434
      %514 = vmatprep.subr.bf16.mxu0 0
      %515 = vmatpush2.bf16.msra.mxu0 %v449
      %516 = vmatprep.subr.bf16.mxu0 0
      %517 = vmatpush2.bf16.msra.mxu0 %v448
      %518 = vmatprep.subr.bf16.mxu0 0
      %519 = vmatpush2.bf16.msra.mxu0 %v447
      %520 = vmatprep.subr.bf16.mxu0 0
      %521 = vmatpush2.bf16.msra.mxu0 %v446
      %522 = vmatprep.subr.bf16.mxu0 0
      %523 = vmatpush2.bf16.msra.mxu0 %v445
      %524 = vmatprep.subr.bf16.mxu0 0
      %525 = vmatpush2.bf16.msra.mxu0 %v444
      %526 = vmatprep.subr.bf16.mxu0 0
      %527 = vmatpush2.bf16.msra.mxu0 %v443
      %528 = vmatprep.subr.bf16.mxu0 0
      %529 = vmatpush2.bf16.msra.mxu0 %v442
      %530 = vmatprep.mubr.bf16.mxu0 %v299
      %531 = vmatmul.mubr.bf16.gmra.mxu0 %v298
      %v532 = vpop.f32.mrf.mxu0
      %v533 = vadd.f32 0.0, %v532
      %v534 = vpop.f32.mrf.mxu0
      %v535 = vpop.f32.mrf.mxu0
      %v536 = vpop.f32.mrf.mxu0
      %537 = vdwg.mxu0
      %538 = vmatprep.subr.bf16.mxu0 0
      %539 = vmatpush1.bf16.msra.mxu0 %v457
      %540 = vmatprep.subr.bf16.mxu0 0
      %541 = vmatpush1.bf16.msra.mxu0 %v456
      %542 = vmatprep.subr.bf16.mxu0 0
      %543 = vmatpush1.bf16.msra.mxu0 %v455
      %544 = vmatprep.subr.bf16.mxu0 0
      %545 = vmatpush1.bf16.msra.mxu0 %v454
      %546 = vmatprep.subr.bf16.mxu0 0
      %547 = vmatpush1.bf16.msra.mxu0 %v453
      %548 = vmatprep.subr.bf16.mxu0 0
      %549 = vmatpush1.bf16.msra.mxu0 %v452
      %550 = vmatprep.subr.bf16.mxu0 0
      %551 = vmatpush1.bf16.msra.mxu0 %v451
      %552 = vmatprep.subr.bf16.mxu0 0
      %553 = vmatpush1.bf16.msra.mxu0 %v450
      %554 = vmatprep.subr.bf16.mxu0 0
      %555 = vmatpush2.bf16.msra.mxu0 %v465
      %556 = vmatprep.subr.bf16.mxu0 0
      %557 = vmatpush2.bf16.msra.mxu0 %v464
      %558 = vmatprep.subr.bf16.mxu0 0
      %559 = vmatpush2.bf16.msra.mxu0 %v463
      %560 = vmatprep.subr.bf16.mxu0 0
      %561 = vmatpush2.bf16.msra.mxu0 %v462
      %562 = vmatprep.subr.bf16.mxu0 0
      %563 = vmatpush2.bf16.msra.mxu0 %v461
      %564 = vmatprep.subr.bf16.mxu0 0
      %565 = vmatpush2.bf16.msra.mxu0 %v460
      %566 = vmatprep.subr.bf16.mxu0 0
      %567 = vmatpush2.bf16.msra.mxu0 %v459
      %568 = vmatprep.subr.bf16.mxu0 0
      %569 = vmatpush2.bf16.msra.mxu0 %v458
      %570 = vmatprep.mubr.bf16.mxu0 %v301
      %571 = vmatmul.mubr.bf16.gmra.mxu0 %v300
      %v572 = vpop.f32.mrf.mxu0
      %v573 = vadd.f32 %v533, %v572
      %v574 = vpop.f32.mrf.mxu0
      %v575 = vpop.f32.mrf.mxu0
      %v576 = vpop.f32.mrf.mxu0
      %577 = vdwg.mxu0
      %v578 = vadd.f32 %v225, %v573
      %579 = vst [vmem:[#allocation2] sm:$0xff] %v578
      %p580 = scmp.eq.s32.totalorder %s19, 7
      // Predicated region
      $region37: #{net_forward.16} parent=31 // pred_check
        %p581 = pneg %p580
      $region38: #{net_forward.16} parent=31 // pred_check_branch
        %583 = sbr.rel (%p581) target = $region40
      $region39: #{net_forward.16} parent=31 // pred_region
        %v584 = vld [vmem:[#allocation2] sm:$0xff]
        %v585 = vld [vmem:[%s2] sm:$0x1]
        %v587 = vlaneseq
        %v588 = vshrl.u32 %v587, 7
        %v589 = vsub.s32 0, %v588
        %v590 = vrot.slane %v585, %v589
        %v592 = vadd.f32 %v584, %v590
        %v593 = vmax.f32 %v592, 0.0
        %v594 = vpack.c.bf16 %v593, %v593
        %595 = vst [vmem:[%s218] sm:$0xf] %v594
      $region40: #{net_forward.16} parent=31 // pred_fallthru
        _
      %p596 = scmp.lt.s32.totalorder %s18, 0
      %s597 = scalar_select %p596, %s18, 0
      %s598 = smul.addr %s597, 4
      %s599 = scalar_lea.vmem %s3, %s598
      // Predicated region
      $region41: #{net_forward.16} parent=31 // pred_check
        %p600 = pneg %p119
      $region42: #{net_forward.16} parent=31 // pred_check_branch
        %602 = sbr.rel (%p600) target = $region44
      $region43: #{net_forward.16} parent=31 // pred_region
        _
      $region44: #{net_forward.16} parent=31 // pred_fallthru
        _
      // Predicated region
      $region45: #{net_forward.16} parent=31 // pred_check
        %p603 = pneg %p119
      $region46: #{net_forward.16} parent=31 // pred_check_branch
        %605 = sbr.rel (%p603) target = $region48
      $region47: #{net_forward.16} parent=31 // pred_region
        %p606 = scmp.lt.s32.totalorder %s18, 0
        %s607 = scalar_select %p606, %s18, 0
        %s608 = smul.addr %s607, 4
        %s609 = scalar_lea.vmem %s3, %s608
      $region48: #{net_forward.16} parent=31 // pred_fallthru
        _
    $region32: #{net_forward.16} parent=5 // pred_fallthru
      _
    %p610 = scmp.le.s32.totalorder 2, %s9
    // Predicated region
    $region49: #{net_forward.16} parent=5 // pred_check
      %p611 = pneg %p610
    $region50: #{net_forward.16} parent=5 // pred_check_branch
      %613 = sbr.rel (%p611) target = $region52
    $region51: #{net_forward.16} parent=5 // pred_region
      %s614 = ssub.s32 %s9, 2
    $region52: #{net_forward.16} parent=5 // pred_fallthru
      _
  $region6: #{net_forward.16} parent=0 // loop_footer
    %s13 = sadd.s32 1, %s9
  $region7: #{net_forward.16} parent=0 // loop_footer_branch
    %8 = sbr.rel target = $region3
  $region8: #{net_forward.16} parent=0 // loop_exit
    _

// kernel: net_forward.17
$region0: #{net_forward.17}
  #allocation0 [shape = 'u32[]', space=smem, size = 0x4, offset = 0x4, fixed_abs, tag = 'smem constant byte address 0x4 - core index']
  #allocation1 [shape = 'u32[144,128]{1,0:T(1,128)}', space=vmem, size = 0x12000, scoped, tag = 'internal scratch']
  #allocation2 [shape = 'f32[8,10]{1,0:T(8,128)}', space=vmem, size = 0x1000, scoped, tag = 'scratch operand']
  %s0 = inlined_call_operand.vmem [shape: bf16[8,128], index: 0, kind: input, shape index: {}]
  %s1 = inlined_call_operand.vmem [shape: bf16[128,10], index: 1, kind: input, shape index: {}]
  %s2 = inlined_call_operand.vmem [shape: f32[1,10], index: 2, kind: input, shape index: {}]
  %s3 = inlined_call_operand.vmem [shape: f32[8,10], index: 3, kind: output, shape index: {}]
  %s4 = sld [smem:[#allocation0]]
  $region30: #{net_forward.17} parent=0
    _
  %s6 = ssub.s32 1, %s4
  %s7 = scalar_select 0, %s6, %s4
  // Predicated region
  $region2: #{net_forward.17} parent=0 // pred_check
    _
  $region3: #{net_forward.17} parent=0 // pred_check_branch
    %9 = sbr.rel (0) target = $region5
  $region4: #{net_forward.17} parent=0 // pred_region
    _
  $region5: #{net_forward.17} parent=0 // pred_fallthru
    _
  // Predicated region
  $region6: #{net_forward.17} parent=0 // pred_check
    _
  $region7: #{net_forward.17} parent=0 // pred_check_branch
    %11 = sbr.rel (0) target = $region9
  $region8: #{net_forward.17} parent=0 // pred_region
    _
  $region9: #{net_forward.17} parent=0 // pred_fallthru
    _
  // Predicated region
  $region10: #{net_forward.17} parent=0 // pred_check
    _
  $region11: #{net_forward.17} parent=0 // pred_check_branch
    %13 = sbr.rel (0) target = $region13
  $region12: #{net_forward.17} parent=0 // pred_region
    _
  $region13: #{net_forward.17} parent=0 // pred_fallthru
    _
  %p15 = scmp.eq.s32.totalorder 0, 0
  // Predicated region
  $region14: #{net_forward.17} parent=0 // pred_check
    %p16 = pneg %p15
  $region15: #{net_forward.17} parent=0 // pred_check_branch
    %18 = sbr.rel (%p16) target = $region17
  $region16: #{net_forward.17} parent=0 // pred_region
    %vm19 = vcmask 80896
    %20 = vst.msk [vmem:[#allocation2] sm:$0xff] %vm19, 0.0
  $region17: #{net_forward.17} parent=0 // pred_fallthru
    _
  %v21 = vld [vmem:[#allocation2] sm:$0xff]
  %v22 = vld [vmem:[%s0] sm:$0xf]
  %v23 = vld [vmem:[%s1] sm:$0xf]
  %v24 = vld [vmem:[%s1 + $0x4] sm:$0xf]
  %v25 = vld [vmem:[%s1 + $0x8] sm:$0xf]
  %v26 = vld [vmem:[%s1 + $0xc] sm:$0xf]
  %v27 = vld [vmem:[%s1 + $0x10] sm:$0xf]
  %v28 = vld [vmem:[%s1 + $0x14] sm:$0xf]
  %v29 = vld [vmem:[%s1 + $0x18] sm:$0xf]
  %v30 = vld [vmem:[%s1 + $0x1c] sm:$0xf]
  %v31 = vld [vmem:[%s1 + $0x20] sm:$0xf]
  %v32 = vld [vmem:[%s1 + $0x24] sm:$0xf]
  %v33 = vld [vmem:[%s1 + $0x28] sm:$0xf]
  %v34 = vld [vmem:[%s1 + $0x2c] sm:$0xf]
  %v35 = vld [vmem:[%s1 + $0x30] sm:$0xf]
  %v36 = vld [vmem:[%s1 + $0x34] sm:$0xf]
  %v37 = vld [vmem:[%s1 + $0x38] sm:$0xf]
  %v38 = vld [vmem:[%s1 + $0x3c] sm:$0xf]
  %v55 = vunpack.c.l.b16 %v23
  %v56 = vunpack.c.l.b16 %v24
  %v57 = vunpack.c.l.b16 %v25
  %v58 = vunpack.c.l.b16 %v26
  %v59 = vunpack.c.l.b16 %v27
  %v60 = vunpack.c.l.b16 %v28
  %v61 = vunpack.c.l.b16 %v29
  %v62 = vunpack.c.l.b16 %v30
  %v63 = vunpack.c.l.b16 %v31
  %v64 = vunpack.c.l.b16 %v32
  %v65 = vunpack.c.l.b16 %v33
  %v66 = vunpack.c.l.b16 %v34
  %v67 = vunpack.c.l.b16 %v35
  %v68 = vunpack.c.l.b16 %v36
  %v69 = vunpack.c.l.b16 %v37
  %v70 = vunpack.c.l.b16 %v38
  %v71 = vpack.c.b16 %v56, %v55
  %v72 = vpack.c.b16 %v58, %v57
  %v73 = vpack.c.b16 %v60, %v59
  %v74 = vpack.c.b16 %v62, %v61
  %v75 = vpack.c.b16 %v64, %v63
  %v76 = vpack.c.b16 %v66, %v65
  %v77 = vpack.c.b16 %v68, %v67
  %v78 = vpack.c.b16 %v70, %v69
  %87 = vmatprep.subr.bf16.mxu0 0
  %88 = vmatpush1.bf16.msra.mxu0 %v78
  %89 = vmatprep.subr.bf16.mxu0 0
  %90 = vmatpush1.bf16.msra.mxu0 %v77
  %91 = vmatprep.subr.bf16.mxu0 0
  %92 = vmatpush1.bf16.msra.mxu0 %v76
  %93 = vmatprep.subr.bf16.mxu0 0
  %94 = vmatpush1.bf16.msra.mxu0 %v75
  %95 = vmatprep.subr.bf16.mxu0 0
  %96 = vmatpush1.bf16.msra.mxu0 %v74
  %97 = vmatprep.subr.bf16.mxu0 0
  %98 = vmatpush1.bf16.msra.mxu0 %v73
  %99 = vmatprep.subr.bf16.mxu0 0
  %100 = vmatpush1.bf16.msra.mxu0 %v72
  %101 = vmatprep.subr.bf16.mxu0 0
  %102 = vmatpush1.bf16.msra.mxu0 %v71
  %103 = vmatprep.subr.bf16.mxu0 0
  %104 = vmatpush2.bf16.msra.mxu0 0
  %105 = vmatprep.subr.bf16.mxu0 0
  %106 = vmatpush2.bf16.msra.mxu0 0
  %107 = vmatprep.subr.bf16.mxu0 0
  %108 = vmatpush2.bf16.msra.mxu0 0
  %109 = vmatprep.subr.bf16.mxu0 0
  %110 = vmatpush2.bf16.msra.mxu0 0
  %111 = vmatprep.subr.bf16.mxu0 0
  %112 = vmatpush2.bf16.msra.mxu0 0
  %113 = vmatprep.subr.bf16.mxu0 0
  %114 = vmatpush2.bf16.msra.mxu0 0
  %115 = vmatprep.subr.bf16.mxu0 0
  %116 = vmatpush2.bf16.msra.mxu0 0
  %117 = vmatprep.subr.bf16.mxu0 0
  %118 = vmatpush2.bf16.msra.mxu0 0
  %119 = vmatprep.mubr.bf16.mxu0 0
  %120 = vmatmul.mubr.bf16.gmra.mxu0 %v22
  %v121 = vpop.f32.mrf.mxu0
  %v122 = vadd.f32 0.0, %v121
  %v123 = vpop.f32.mrf.mxu0
  %v124 = vpop.f32.mrf.mxu0
  %v125 = vpop.f32.mrf.mxu0
  %126 = vdwg.mxu0
  %v127 = vadd.f32 %v21, %v122
  %vm128 = vcmask 80896
  %129 = vst.msk [vmem:[#allocation2] sm:$0xff] %vm128, %v127
  // Predicated region
  $region18: #{net_forward.17} parent=0 // pred_check
    %p130 = pneg %p15
  $region19: #{net_forward.17} parent=0 // pred_check_branch
    %132 = sbr.rel (%p130) target = $region21
  $region20: #{net_forward.17} parent=0 // pred_region
    %v133 = vld [vmem:[#allocation2] sm:$0xff]
    %v134 = vld [vmem:[%s2] sm:$0x1]
    %v136 = vlaneseq
    %v137 = vshrl.u32 %v136, 7
    %v138 = vsub.s32 0, %v137
    %v139 = vrot.slane %v134, %v138
    %v141 = vadd.f32 %v133, %v139
    %142 = vst.msk [vmem:[%s3] sm:$0xff] %vm128, %v141
  $region21: #{net_forward.17} parent=0 // pred_fallthru
    _
  // Predicated region
  $region22: #{net_forward.17} parent=0 // pred_check
    _
  $region23: #{net_forward.17} parent=0 // pred_check_branch
    %144 = sbr.rel (0) target = $region25
  $region24: #{net_forward.17} parent=0 // pred_region
    _
  $region25: #{net_forward.17} parent=0 // pred_fallthru
    _
  // Predicated region
  $region26: #{net_forward.17} parent=0 // pred_check
    _
  $region27: #{net_forward.17} parent=0 // pred_check_branch
    %146 = sbr.rel (0) target = $region29
  $region28: #{net_forward.17} parent=0 // pred_region
    _
  $region29: #{net_forward.17} parent=0 // pred_fallthru
    _

</llo_original>
